<compile_context>
chip_gen: v7x
topology: tpu7x:2x2x1
jax: 0.10.0
libtpu: 0.0.40
codegen_flags: <defaults>
</compile_context>

<pallas_src>
import jax
import jax.numpy as jnp
from jax.experimental import pallas as pl
from jax.experimental.pallas import tpu as pltpu


# ------------------------------- fused kernel --------------------------------

def _fused_featuremap_kernel(p1_ref, w1_ref, b1_ref, w2_ref, b2_ref,
                             w3_ref, b3_ref, o_ref,
                             ypad_ref, pat_ref, y3_ref):
    # p1_ref : (M, 32)  bf16   layer-1 im2col patches (K padded 27->32)
    # w*_ref : bf16 weights with BN scale folded in;  b*_ref : (1, C) f32 bias
    # o_ref  : (N, Po, Qo, 128) f32 pooled output
    # ypad   : (N, Ho+2, Wo+2, 64) f32  zero-padded intermediate (reused L1->L2, L2->L3)
    # pat    : (M, 576) f32  in-VMEM im2col patch matrix (reused for L2 and L3)
    # y3     : (N, Ho, Wo, 128) f32  conv3 output kept resident for the pool
    N, Po, Qo, _ = o_ref.shape
    Ho = ypad_ref.shape[1] - 2
    Wo = ypad_ref.shape[2] - 2
    C = ypad_ref.shape[3]                       # 64

    def conv_bn_relu(lhs, w_ref, b_ref):
        acc = jnp.dot(lhs, w_ref[...], preferred_element_type=jnp.float32)
        return jnp.maximum(acc + b_ref[...], 0.0)          # f32 epilogue

    def scatter_padded(flat):
        # (N*Ho*Wo, C) f32 -> zero-padded (N, Ho+2, Wo+2, C) scratch (halo = 0).
        ypad_ref[...] = jnp.zeros(ypad_ref.shape, ypad_ref.dtype)
        for n in range(N):
            for h in range(Ho):
                r = (n * Ho + h) * Wo
                ypad_ref[n, 1 + h, 1:1 + Wo, :] = flat[r:r + Wo, :]

    def build_patches():
        # In-VMEM im2col: (N*Ho*Wo, 9*C) from the padded scratch (static slices
        # only; the halo never round-trips HBM).
        for kh in range(3):
            for kw in range(3):
                t = kh * 3 + kw
                for n in range(N):
                    for h in range(Ho):
                        r = (n * Ho + h) * Wo
                        pat_ref[r:r + Wo, t * C:(t + 1) * C] = (
                            ypad_ref[n, h + kh, kw:kw + Wo, :])

    # ---- layer 1: (M, 32) @ (32, 64) on the MXU ----
    y = conv_bn_relu(p1_ref[...], w1_ref, b1_ref)           # (M, 64) f32

    # ---- layer 2: (M, 576) @ (576, 64) ----
    scatter_padded(y)
    build_patches()
    y = conv_bn_relu(pat_ref[...].astype(jnp.bfloat16), w2_ref, b2_ref)

    # ---- layer 3: (M, 576) @ (576, 128) ----
    scatter_padded(y)                                        # scratch reuse
    build_patches()
    y = conv_bn_relu(pat_ref[...].astype(jnp.bfloat16), w3_ref, b3_ref)

    # ---- maxpool 3x3 / stride 2 / pad 1, fused over the VMEM-resident conv3 ----
    for n in range(N):
        for h in range(Ho):
            r = (n * Ho + h) * Wo
            y3_ref[n, h, :, :] = y[r:r + Wo, :]
    for po in range(Po):
        r0, r1 = max(0, 2 * po - 1), min(Ho, 2 * po + 2)     # -inf-pad == drop pad
        for qo in range(Qo):
            c0, c1 = max(0, 2 * qo - 1), min(Wo, 2 * qo + 2)
            win = y3_ref[:, r0:r1, c0:c1, :]                 # (N, <=3, <=3, 128)
            m = win[:, 0:1, 0:1, :]
            for a in range(r1 - r0):
                for b in range(c1 - c0):
                    m = jnp.maximum(m, win[:, a:a + 1, b:b + 1, :])
            o_ref[:, po:po + 1, qo:qo + 1, :] = m


# ------------------------------ host-side wrapper -----------------------------

def feature_map_convolution(x, kparams):
    """x: (N,H,W,3) f32.  Returns (N, H//4, W//4, 128) f32 (NHWC)."""
    w1f, b1, w2f, b2, w3f, b3 = kparams
    N, H, W, Cin = x.shape
    Ho, Wo = H // 2, W // 2                  # conv1: k3, s2, p1
    Po, Qo = Ho // 2, Wo // 2                # maxpool: k3, s2, p1
    Cmid = w2f.shape[1]                      # 64
    Cout = w3f.shape[1]                      # 128
    K1 = w1f.shape[0]                        # 32 (27 zero-padded)
    M = N * Ho * Wo
    Kt = 9 * Cmid

    # Layer-1 im2col in XLA (Cin=3 only -> tiny; avoids strided reads in-kernel).
    xp = jnp.pad(x, ((0, 0), (1, 1), (1, 1), (0, 0)))
    cols = [xp[:, kh:kh + 2 * Ho:2, kw:kw + 2 * Wo:2, :]
            for kh in range(3) for kw in range(3)]
    p1 = jnp.stack(cols, axis=3).reshape(M, 9 * Cin)
    p1 = jnp.pad(p1, ((0, 0), (0, K1 - 9 * Cin))).astype(jnp.bfloat16)

    return pl.pallas_call(
        _fused_featuremap_kernel,
        out_shape=jax.ShapeDtypeStruct((N, Po, Qo, Cout), jnp.float32),
        grid=(1,),
        in_specs=[
            pl.BlockSpec((M, K1), lambda i: (0, 0)),        # layer-1 patches
            pl.BlockSpec((K1, Cmid), lambda i: (0, 0)),     # w1 (scale folded)
            pl.BlockSpec((1, Cmid), lambda i: (0, 0)),      # b1
            pl.BlockSpec((Kt, Cmid), lambda i: (0, 0)),     # w2
            pl.BlockSpec((1, Cmid), lambda i: (0, 0)),      # b2
            pl.BlockSpec((Kt, Cout), lambda i: (0, 0)),     # w3
            pl.BlockSpec((1, Cout), lambda i: (0, 0)),      # b3
        ],
        out_specs=pl.BlockSpec((N, Po, Qo, Cout), lambda i: (0, 0, 0, 0)),
        scratch_shapes=[
            pltpu.VMEM((N, Ho + 2, Wo + 2, Cmid), jnp.float32),  # padded interm.
            pltpu.VMEM((M, Kt), jnp.float32),                    # VMEM im2col
            pltpu.VMEM((N, Ho, Wo, Cout), jnp.float32),          # conv3 for pool
        ],
        compiler_params=pltpu.CompilerParams(
            dimension_semantics=("arbitrary",)),
    )(p1, w1f, b1, w2f, b2, w3f, b3)


# ------------------------------ parameter setup -------------------------------

def init_params(key):
    """Deterministic synthetic params for the three Conv+BN blocks (f32)."""
    eps = 1e-5
    cfgs = [(3, 64, 2), (64, 64, 1), (64, 128, 1)]   # (Cin, Cout, stride)
    layers = []
    for i, (cin, cout, stride) in enumerate(cfgs):
        k = jax.random.fold_in(key, i)
        kw_, kg, kb, km, kv = jax.random.split(k, 5)
        w = jax.random.normal(kw_, (3, 3, cin, cout), jnp.float32) * 0.05
        gamma = 1.0 + 0.1 * jax.random.normal(kg, (cout,), jnp.float32)
        beta = 0.1 * jax.random.normal(kb, (cout,), jnp.float32)
        mean = 0.1 * jax.random.normal(km, (cout,), jnp.float32)
        var = jnp.abs(jax.random.normal(kv, (cout,), jnp.float32)) + 0.5
        scale = gamma / jnp.sqrt(var + eps)
        bias = beta - mean * scale
        layers.append((w, scale, bias, stride))
    return layers


def prepare_kernel_params(layers):
    """Fold BN scale into flattened bf16 weights; keep biases in f32."""
    (w1, s1, b1, _), (w2, s2, b2, _), (w3, s3, b3, _) = layers
    k1 = w1.shape[0] * w1.shape[1] * w1.shape[2]          # 27
    w1f = w1.reshape(k1, -1) * s1[None, :]
    w1f = jnp.pad(w1f, ((0, 32 - k1), (0, 0))).astype(jnp.bfloat16)
    w2f = (w2.reshape(-1, w2.shape[-1]) * s2[None, :]).astype(jnp.bfloat16)
    w3f = (w3.reshape(-1, w3.shape[-1]) * s3[None, :]).astype(jnp.bfloat16)
    return (w1f, b1.reshape(1, -1), w2f, b2.reshape(1, -1),
            w3f, b3.reshape(1, -1))


# ------------------------------ f32 reference ---------------------------------

def reference_forward(x, layers):
    for (w, scale, bias, stride) in layers:
        y = jax.lax.conv_general_dilated(
            x, w, window_strides=(stride, stride), padding=((1, 1), (1, 1)),
            dimension_numbers=("NHWC", "HWIO", "NHWC"),
            precision=jax.lax.Precision.HIGHEST)
        x = jnp.maximum(y * scale + bias, 0.0)
    return jax.lax.reduce_window(
        x, -jnp.inf, jax.lax.max,
        (1, 3, 3, 1), (1, 2, 2, 1), ((0, 0), (1, 1), (1, 1), (0, 0)))


# ----------------------------------- main --------------------------------------

if __name__ == "__main__":
    key = jax.random.PRNGKey(0)
    kx, kp = jax.random.split(key)

    # PyTorch-style NCHW input (Cin=3), transposed to NHWC for the kernel.
    x_nchw = jax.random.normal(kx, (2, 3, 16, 16), jnp.float32)
    x = jnp.transpose(x_nchw, (0, 2, 3, 1))

    layers = init_params(kp)
    kparams = prepare_kernel_params(layers)

    fwd = jax.jit(feature_map_convolution)
    out = fwd(x, kparams)
    jax.block_until_ready(out)

    # (2,16,16,3) -> conv s2 -> (2,8,8,64) -> (2,8,8,64) -> (2,8,8,128)
    # -> maxpool s2 -> (2,4,4,128)
    assert out.shape == (2, 4, 4, 128), out.shape

    # Real correctness check against an f32 XLA reference (bf16 MXU tolerance).
    ref = reference_forward(x, layers)
    max_err = float(jnp.max(jnp.abs(out - ref)))
    assert max_err < 8e-2, f"max abs err vs f32 reference: {max_err}"

    print("KERNEL_OK")
</pallas_src>

<mosaic_0001>
module attributes {stable_mosaic.version = 11 : i64} {
  func.func @_fused_featuremap_kernel(%arg0: i32, %arg1: memref<128x32xbf16, #tpu.memory_space<vmem>>, %arg2: memref<32x64xbf16, #tpu.memory_space<vmem>>, %arg3: memref<1x64xf32, #tpu.memory_space<vmem>>, %arg4: memref<576x64xbf16, #tpu.memory_space<vmem>>, %arg5: memref<1x64xf32, #tpu.memory_space<vmem>>, %arg6: memref<576x128xbf16, #tpu.memory_space<vmem>>, %arg7: memref<1x128xf32, #tpu.memory_space<vmem>>, %arg8: memref<2x4x4x128xf32, #tpu.memory_space<vmem>>, %arg9: memref<2x10x10x64xf32, #tpu.memory_space<vmem>>, %arg10: memref<128x576xf32, #tpu.memory_space<vmem>>, %arg11: memref<2x8x8x128xf32, #tpu.memory_space<vmem>>) attributes {dimension_semantics = [#tpu.dimension_semantics<arbitrary>], iteration_bounds = array<i64: 1>, scalar_prefetch = 0 : i64, scratch_operands = 3 : i64, tpu.core_type = #tpu.core_type<tc>, window_params = [{pipeline_mode = #tpu.pipeline_mode<synchronous>, transform_indices = @transform_0, window_bounds = array<i64: 128, 32>}, {pipeline_mode = #tpu.pipeline_mode<synchronous>, transform_indices = @transform_1, window_bounds = array<i64: 32, 64>}, {pipeline_mode = #tpu.pipeline_mode<synchronous>, transform_indices = @transform_2, window_bounds = array<i64: 1, 64>}, {pipeline_mode = #tpu.pipeline_mode<synchronous>, transform_indices = @transform_3, window_bounds = array<i64: 576, 64>}, {pipeline_mode = #tpu.pipeline_mode<synchronous>, transform_indices = @transform_4, window_bounds = array<i64: 1, 64>}, {pipeline_mode = #tpu.pipeline_mode<synchronous>, transform_indices = @transform_5, window_bounds = array<i64: 576, 128>}, {pipeline_mode = #tpu.pipeline_mode<synchronous>, transform_indices = @transform_6, window_bounds = array<i64: 1, 128>}, {pipeline_mode = #tpu.pipeline_mode<synchronous>, transform_indices = @transform_7, window_bounds = array<i64: 2, 4, 4, 128>}]} {
    %c0 = arith.constant 0 : index
    %c0_0 = arith.constant 0 : index
    %0 = vector.load %arg1[%c0, %c0_0] : memref<128x32xbf16, #tpu.memory_space<vmem>>, vector<128x32xbf16>
    %c0_1 = arith.constant 0 : index
    %c0_2 = arith.constant 0 : index
    %1 = vector.load %arg2[%c0_1, %c0_2] : memref<32x64xbf16, #tpu.memory_space<vmem>>, vector<32x64xbf16>
    %cst = arith.constant dense<0.000000e+00> : vector<128x64xf32>
    %2 = tpu.matmul %0, %1, %cst {dimension_numbers = #tpu.dot_dimension_numbers<[1], [0], [0], [1], [0, 0, 1, 1], [], []>} : vector<128x32xbf16>, vector<32x64xbf16>, vector<128x64xf32> -> vector<128x64xf32>
    %c0_3 = arith.constant 0 : index
    %c0_4 = arith.constant 0 : index
    %3 = vector.load %arg3[%c0_3, %c0_4] : memref<1x64xf32, #tpu.memory_space<vmem>>, vector<1x64xf32>
    %4 = vector.broadcast %3 : vector<1x64xf32> to vector<128x64xf32>
    %5 = arith.addf %2, %4 : vector<128x64xf32>
    %cst_5 = arith.constant 0.000000e+00 : f32
    %6 = vector.broadcast %cst_5 : f32 to vector<128x64xf32>
    %7 = arith.maximumf %5, %6 : vector<128x64xf32>
    %cst_6 = arith.constant 0.000000e+00 : f32
    %8 = vector.broadcast %cst_6 : f32 to vector<2x10x10x64xf32>
    %c0_7 = arith.constant 0 : index
    %c0_8 = arith.constant 0 : index
    %c0_9 = arith.constant 0 : index
    %c0_10 = arith.constant 0 : index
    %9 = vector.load %arg9[%c0_7, %c0_8, %c0_9, %c0_10] : memref<2x10x10x64xf32, #tpu.memory_space<vmem>>, vector<2x10x10x64xf32>
    tpu.vector_store %arg9[%c0_7, %c0_8, %c0_9, %c0_10], %8 {strides = array<i32>} : memref<2x10x10x64xf32, #tpu.memory_space<vmem>>, vector<2x10x10x64xf32>,
    %10 = vector.extract_strided_slice %7 {offsets = [0, 0], sizes = [8, 64], strides = [1, 1]} : vector<128x64xf32> to vector<8x64xf32>
    %c0_11 = arith.constant 0 : index
    %c1 = arith.constant 1 : index
    %c1_12 = arith.constant 1 : index
    %c0_13 = arith.constant 0 : index
    %11 = vector.load %arg9[%c0_11, %c1, %c1_12, %c0_13] : memref<2x10x10x64xf32, #tpu.memory_space<vmem>>, vector<1x1x8x64xf32>
    %12 = vector.shape_cast %11 : vector<1x1x8x64xf32> to vector<8x64xf32>
    %13 = vector.shape_cast %10 : vector<8x64xf32> to vector<1x1x8x64xf32>
    tpu.vector_store %arg9[%c0_11, %c1, %c1_12, %c0_13], %13 {strides = array<i32>} : memref<2x10x10x64xf32, #tpu.memory_space<vmem>>, vector<1x1x8x64xf32>,
    %14 = vector.extract_strided_slice %7 {offsets = [8, 0], sizes = [8, 64], strides = [1, 1]} : vector<128x64xf32> to vector<8x64xf32>
    %c0_14 = arith.constant 0 : index
    %c2 = arith.constant 2 : index
    %c1_15 = arith.constant 1 : index
    %c0_16 = arith.constant 0 : index
    %15 = vector.load %arg9[%c0_14, %c2, %c1_15, %c0_16] : memref<2x10x10x64xf32, #tpu.memory_space<vmem>>, vector<1x1x8x64xf32>
    %16 = vector.shape_cast %15 : vector<1x1x8x64xf32> to vector<8x64xf32>
    %17 = vector.shape_cast %14 : vector<8x64xf32> to vector<1x1x8x64xf32>
    tpu.vector_store %arg9[%c0_14, %c2, %c1_15, %c0_16], %17 {strides = array<i32>} : memref<2x10x10x64xf32, #tpu.memory_space<vmem>>, vector<1x1x8x64xf32>,
    %18 = vector.extract_strided_slice %7 {offsets = [16, 0], sizes = [8, 64], strides = [1, 1]} : vector<128x64xf32> to vector<8x64xf32>
    %c0_17 = arith.constant 0 : index
    %c3 = arith.constant 3 : index
    %c1_18 = arith.constant 1 : index
    %c0_19 = arith.constant 0 : index
    %19 = vector.load %arg9[%c0_17, %c3, %c1_18, %c0_19] : memref<2x10x10x64xf32, #tpu.memory_space<vmem>>, vector<1x1x8x64xf32>
    %20 = vector.shape_cast %19 : vector<1x1x8x64xf32> to vector<8x64xf32>
    %21 = vector.shape_cast %18 : vector<8x64xf32> to vector<1x1x8x64xf32>
    tpu.vector_store %arg9[%c0_17, %c3, %c1_18, %c0_19], %21 {strides = array<i32>} : memref<2x10x10x64xf32, #tpu.memory_space<vmem>>, vector<1x1x8x64xf32>,
    %22 = vector.extract_strided_slice %7 {offsets = [24, 0], sizes = [8, 64], strides = [1, 1]} : vector<128x64xf32> to vector<8x64xf32>
    %c0_20 = arith.constant 0 : index
    %c4 = arith.constant 4 : index
    %c1_21 = arith.constant 1 : index
    %c0_22 = arith.constant 0 : index
    %23 = vector.load %arg9[%c0_20, %c4, %c1_21, %c0_22] : memref<2x10x10x64xf32, #tpu.memory_space<vmem>>, vector<1x1x8x64xf32>
    %24 = vector.shape_cast %23 : vector<1x1x8x64xf32> to vector<8x64xf32>
    %25 = vector.shape_cast %22 : vector<8x64xf32> to vector<1x1x8x64xf32>
    tpu.vector_store %arg9[%c0_20, %c4, %c1_21, %c0_22], %25 {strides = array<i32>} : memref<2x10x10x64xf32, #tpu.memory_space<vmem>>, vector<1x1x8x64xf32>,
    %26 = vector.extract_strided_slice %7 {offsets = [32, 0], sizes = [8, 64], strides = [1, 1]} : vector<128x64xf32> to vector<8x64xf32>
    %c0_23 = arith.constant 0 : index
    %c5 = arith.constant 5 : index
    %c1_24 = arith.constant 1 : index
    %c0_25 = arith.constant 0 : index
    %27 = vector.load %arg9[%c0_23, %c5, %c1_24, %c0_25] : memref<2x10x10x64xf32, #tpu.memory_space<vmem>>, vector<1x1x8x64xf32>
    %28 = vector.shape_cast %27 : vector<1x1x8x64xf32> to vector<8x64xf32>
    %29 = vector.shape_cast %26 : vector<8x64xf32> to vector<1x1x8x64xf32>
    tpu.vector_store %arg9[%c0_23, %c5, %c1_24, %c0_25], %29 {strides = array<i32>} : memref<2x10x10x64xf32, #tpu.memory_space<vmem>>, vector<1x1x8x64xf32>,
    %30 = vector.extract_strided_slice %7 {offsets = [40, 0], sizes = [8, 64], strides = [1, 1]} : vector<128x64xf32> to vector<8x64xf32>
    %c0_26 = arith.constant 0 : index
    %c6 = arith.constant 6 : index
    %c1_27 = arith.constant 1 : index
    %c0_28 = arith.constant 0 : index
    %31 = vector.load %arg9[%c0_26, %c6, %c1_27, %c0_28] : memref<2x10x10x64xf32, #tpu.memory_space<vmem>>, vector<1x1x8x64xf32>
    %32 = vector.shape_cast %31 : vector<1x1x8x64xf32> to vector<8x64xf32>
    %33 = vector.shape_cast %30 : vector<8x64xf32> to vector<1x1x8x64xf32>
    tpu.vector_store %arg9[%c0_26, %c6, %c1_27, %c0_28], %33 {strides = array<i32>} : memref<2x10x10x64xf32, #tpu.memory_space<vmem>>, vector<1x1x8x64xf32>,
    %34 = vector.extract_strided_slice %7 {offsets = [48, 0], sizes = [8, 64], strides = [1, 1]} : vector<128x64xf32> to vector<8x64xf32>
    %c0_29 = arith.constant 0 : index
    %c7 = arith.constant 7 : index
    %c1_30 = arith.constant 1 : index
    %c0_31 = arith.constant 0 : index
    %35 = vector.load %arg9[%c0_29, %c7, %c1_30, %c0_31] : memref<2x10x10x64xf32, #tpu.memory_space<vmem>>, vector<1x1x8x64xf32>
    %36 = vector.shape_cast %35 : vector<1x1x8x64xf32> to vector<8x64xf32>
    %37 = vector.shape_cast %34 : vector<8x64xf32> to vector<1x1x8x64xf32>
    tpu.vector_store %arg9[%c0_29, %c7, %c1_30, %c0_31], %37 {strides = array<i32>} : memref<2x10x10x64xf32, #tpu.memory_space<vmem>>, vector<1x1x8x64xf32>,
    %38 = vector.extract_strided_slice %7 {offsets = [56, 0], sizes = [8, 64], strides = [1, 1]} : vector<128x64xf32> to vector<8x64xf32>
    %c0_32 = arith.constant 0 : index
    %c8 = arith.constant 8 : index
    %c1_33 = arith.constant 1 : index
    %c0_34 = arith.constant 0 : index
    %39 = vector.load %arg9[%c0_32, %c8, %c1_33, %c0_34] : memref<2x10x10x64xf32, #tpu.memory_space<vmem>>, vector<1x1x8x64xf32>
    %40 = vector.shape_cast %39 : vector<1x1x8x64xf32> to vector<8x64xf32>
    %41 = vector.shape_cast %38 : vector<8x64xf32> to vector<1x1x8x64xf32>
    tpu.vector_store %arg9[%c0_32, %c8, %c1_33, %c0_34], %41 {strides = array<i32>} : memref<2x10x10x64xf32, #tpu.memory_space<vmem>>, vector<1x1x8x64xf32>,
    %42 = vector.extract_strided_slice %7 {offsets = [64, 0], sizes = [8, 64], strides = [1, 1]} : vector<128x64xf32> to vector<8x64xf32>
    %c1_35 = arith.constant 1 : index
    %c1_36 = arith.constant 1 : index
    %c1_37 = arith.constant 1 : index
    %c0_38 = arith.constant 0 : index
    %43 = vector.load %arg9[%c1_35, %c1_36, %c1_37, %c0_38] : memref<2x10x10x64xf32, #tpu.memory_space<vmem>>, vector<1x1x8x64xf32>
    %44 = vector.shape_cast %43 : vector<1x1x8x64xf32> to vector<8x64xf32>
    %45 = vector.shape_cast %42 : vector<8x64xf32> to vector<1x1x8x64xf32>
    tpu.vector_store %arg9[%c1_35, %c1_36, %c1_37, %c0_38], %45 {strides = array<i32>} : memref<2x10x10x64xf32, #tpu.memory_space<vmem>>, vector<1x1x8x64xf32>,
    %46 = vector.extract_strided_slice %7 {offsets = [72, 0], sizes = [8, 64], strides = [1, 1]} : vector<128x64xf32> to vector<8x64xf32>
    %c1_39 = arith.constant 1 : index
    %c2_40 = arith.constant 2 : index
    %c1_41 = arith.constant 1 : index
    %c0_42 = arith.constant 0 : index
    %47 = vector.load %arg9[%c1_39, %c2_40, %c1_41, %c0_42] : memref<2x10x10x64xf32, #tpu.memory_space<vmem>>, vector<1x1x8x64xf32>
    %48 = vector.shape_cast %47 : vector<1x1x8x64xf32> to vector<8x64xf32>
    %49 = vector.shape_cast %46 : vector<8x64xf32> to vector<1x1x8x64xf32>
    tpu.vector_store %arg9[%c1_39, %c2_40, %c1_41, %c0_42], %49 {strides = array<i32>} : memref<2x10x10x64xf32, #tpu.memory_space<vmem>>, vector<1x1x8x64xf32>,
    %50 = vector.extract_strided_slice %7 {offsets = [80, 0], sizes = [8, 64], strides = [1, 1]} : vector<128x64xf32> to vector<8x64xf32>
    %c1_43 = arith.constant 1 : index
    %c3_44 = arith.constant 3 : index
    %c1_45 = arith.constant 1 : index
    %c0_46 = arith.constant 0 : index
    %51 = vector.load %arg9[%c1_43, %c3_44, %c1_45, %c0_46] : memref<2x10x10x64xf32, #tpu.memory_space<vmem>>, vector<1x1x8x64xf32>
    %52 = vector.shape_cast %51 : vector<1x1x8x64xf32> to vector<8x64xf32>
    %53 = vector.shape_cast %50 : vector<8x64xf32> to vector<1x1x8x64xf32>
    tpu.vector_store %arg9[%c1_43, %c3_44, %c1_45, %c0_46], %53 {strides = array<i32>} : memref<2x10x10x64xf32, #tpu.memory_space<vmem>>, vector<1x1x8x64xf32>,
    %54 = vector.extract_strided_slice %7 {offsets = [88, 0], sizes = [8, 64], strides = [1, 1]} : vector<128x64xf32> to vector<8x64xf32>
    %c1_47 = arith.constant 1 : index
    %c4_48 = arith.constant 4 : index
    %c1_49 = arith.constant 1 : index
    %c0_50 = arith.constant 0 : index
    %55 = vector.load %arg9[%c1_47, %c4_48, %c1_49, %c0_50] : memref<2x10x10x64xf32, #tpu.memory_space<vmem>>, vector<1x1x8x64xf32>
    %56 = vector.shape_cast %55 : vector<1x1x8x64xf32> to vector<8x64xf32>
    %57 = vector.shape_cast %54 : vector<8x64xf32> to vector<1x1x8x64xf32>
    tpu.vector_store %arg9[%c1_47, %c4_48, %c1_49, %c0_50], %57 {strides = array<i32>} : memref<2x10x10x64xf32, #tpu.memory_space<vmem>>, vector<1x1x8x64xf32>,
    %58 = vector.extract_strided_slice %7 {offsets = [96, 0], sizes = [8, 64], strides = [1, 1]} : vector<128x64xf32> to vector<8x64xf32>
    %c1_51 = arith.constant 1 : index
    %c5_52 = arith.constant 5 : index
    %c1_53 = arith.constant 1 : index
    %c0_54 = arith.constant 0 : index
    %59 = vector.load %arg9[%c1_51, %c5_52, %c1_53, %c0_54] : memref<2x10x10x64xf32, #tpu.memory_space<vmem>>, vector<1x1x8x64xf32>
    %60 = vector.shape_cast %59 : vector<1x1x8x64xf32> to vector<8x64xf32>
    %61 = vector.shape_cast %58 : vector<8x64xf32> to vector<1x1x8x64xf32>
    tpu.vector_store %arg9[%c1_51, %c5_52, %c1_53, %c0_54], %61 {strides = array<i32>} : memref<2x10x10x64xf32, #tpu.memory_space<vmem>>, vector<1x1x8x64xf32>,
    %62 = vector.extract_strided_slice %7 {offsets = [104, 0], sizes = [8, 64], strides = [1, 1]} : vector<128x64xf32> to vector<8x64xf32>
    %c1_55 = arith.constant 1 : index
    %c6_56 = arith.constant 6 : index
    %c1_57 = arith.constant 1 : index
    %c0_58 = arith.constant 0 : index
    %63 = vector.load %arg9[%c1_55, %c6_56, %c1_57, %c0_58] : memref<2x10x10x64xf32, #tpu.memory_space<vmem>>, vector<1x1x8x64xf32>
    %64 = vector.shape_cast %63 : vector<1x1x8x64xf32> to vector<8x64xf32>
    %65 = vector.shape_cast %62 : vector<8x64xf32> to vector<1x1x8x64xf32>
    tpu.vector_store %arg9[%c1_55, %c6_56, %c1_57, %c0_58], %65 {strides = array<i32>} : memref<2x10x10x64xf32, #tpu.memory_space<vmem>>, vector<1x1x8x64xf32>,
    %66 = vector.extract_strided_slice %7 {offsets = [112, 0], sizes = [8, 64], strides = [1, 1]} : vector<128x64xf32> to vector<8x64xf32>
    %c1_59 = arith.constant 1 : index
    %c7_60 = arith.constant 7 : index
    %c1_61 = arith.constant 1 : index
    %c0_62 = arith.constant 0 : index
    %67 = vector.load %arg9[%c1_59, %c7_60, %c1_61, %c0_62] : memref<2x10x10x64xf32, #tpu.memory_space<vmem>>, vector<1x1x8x64xf32>
    %68 = vector.shape_cast %67 : vector<1x1x8x64xf32> to vector<8x64xf32>
    %69 = vector.shape_cast %66 : vector<8x64xf32> to vector<1x1x8x64xf32>
    tpu.vector_store %arg9[%c1_59, %c7_60, %c1_61, %c0_62], %69 {strides = array<i32>} : memref<2x10x10x64xf32, #tpu.memory_space<vmem>>, vector<1x1x8x64xf32>,
    %70 = vector.extract_strided_slice %7 {offsets = [120, 0], sizes = [8, 64], strides = [1, 1]} : vector<128x64xf32> to vector<8x64xf32>
    %c1_63 = arith.constant 1 : index
    %c8_64 = arith.constant 8 : index
    %c1_65 = arith.constant 1 : index
    %c0_66 = arith.constant 0 : index
    %71 = vector.load %arg9[%c1_63, %c8_64, %c1_65, %c0_66] : memref<2x10x10x64xf32, #tpu.memory_space<vmem>>, vector<1x1x8x64xf32>
    %72 = vector.shape_cast %71 : vector<1x1x8x64xf32> to vector<8x64xf32>
    %73 = vector.shape_cast %70 : vector<8x64xf32> to vector<1x1x8x64xf32>
    tpu.vector_store %arg9[%c1_63, %c8_64, %c1_65, %c0_66], %73 {strides = array<i32>} : memref<2x10x10x64xf32, #tpu.memory_space<vmem>>, vector<1x1x8x64xf32>,
    %c0_67 = arith.constant 0 : index
    %c0_68 = arith.constant 0 : index
    %c0_69 = arith.constant 0 : index
    %c0_70 = arith.constant 0 : index
    %74 = vector.load %arg9[%c0_67, %c0_68, %c0_69, %c0_70] : memref<2x10x10x64xf32, #tpu.memory_space<vmem>>, vector<1x1x8x64xf32>
    %75 = vector.shape_cast %74 : vector<1x1x8x64xf32> to vector<8x64xf32>
    %c0_71 = arith.constant 0 : index
    %c0_72 = arith.constant 0 : index
    %76 = vector.load %arg10[%c0_71, %c0_72] : memref<128x576xf32, #tpu.memory_space<vmem>>, vector<8x64xf32>
    tpu.vector_store %arg10[%c0_71, %c0_72], %75 {strides = array<i32>} : memref<128x576xf32, #tpu.memory_space<vmem>>, vector<8x64xf32>,
    %c0_73 = arith.constant 0 : index
    %c1_74 = arith.constant 1 : index
    %c0_75 = arith.constant 0 : index
    %c0_76 = arith.constant 0 : index
    %77 = vector.load %arg9[%c0_73, %c1_74, %c0_75, %c0_76] : memref<2x10x10x64xf32, #tpu.memory_space<vmem>>, vector<1x1x8x64xf32>
    %78 = vector.shape_cast %77 : vector<1x1x8x64xf32> to vector<8x64xf32>
    %c8_77 = arith.constant 8 : index
    %c0_78 = arith.constant 0 : index
    %79 = vector.load %arg10[%c8_77, %c0_78] : memref<128x576xf32, #tpu.memory_space<vmem>>, vector<8x64xf32>
    tpu.vector_store %arg10[%c8_77, %c0_78], %78 {strides = array<i32>} : memref<128x576xf32, #tpu.memory_space<vmem>>, vector<8x64xf32>,
    %c0_79 = arith.constant 0 : index
    %c2_80 = arith.constant 2 : index
    %c0_81 = arith.constant 0 : index
    %c0_82 = arith.constant 0 : index
    %80 = vector.load %arg9[%c0_79, %c2_80, %c0_81, %c0_82] : memref<2x10x10x64xf32, #tpu.memory_space<vmem>>, vector<1x1x8x64xf32>
    %81 = vector.shape_cast %80 : vector<1x1x8x64xf32> to vector<8x64xf32>
    %c16 = arith.constant 16 : index
    %c0_83 = arith.constant 0 : index
    %82 = vector.load %arg10[%c16, %c0_83] : memref<128x576xf32, #tpu.memory_space<vmem>>, vector<8x64xf32>
    tpu.vector_store %arg10[%c16, %c0_83], %81 {strides = array<i32>} : memref<128x576xf32, #tpu.memory_space<vmem>>, vector<8x64xf32>,
    %c0_84 = arith.constant 0 : index
    %c3_85 = arith.constant 3 : index
    %c0_86 = arith.constant 0 : index
    %c0_87 = arith.constant 0 : index
    %83 = vector.load %arg9[%c0_84, %c3_85, %c0_86, %c0_87] : memref<2x10x10x64xf32, #tpu.memory_space<vmem>>, vector<1x1x8x64xf32>
    %84 = vector.shape_cast %83 : vector<1x1x8x64xf32> to vector<8x64xf32>
    %c24 = arith.constant 24 : index
    %c0_88 = arith.constant 0 : index
    %85 = vector.load %arg10[%c24, %c0_88] : memref<128x576xf32, #tpu.memory_space<vmem>>, vector<8x64xf32>
    tpu.vector_store %arg10[%c24, %c0_88], %84 {strides = array<i32>} : memref<128x576xf32, #tpu.memory_space<vmem>>, vector<8x64xf32>,
    %c0_89 = arith.constant 0 : index
    %c4_90 = arith.constant 4 : index
    %c0_91 = arith.constant 0 : index
    %c0_92 = arith.constant 0 : index
    %86 = vector.load %arg9[%c0_89, %c4_90, %c0_91, %c0_92] : memref<2x10x10x64xf32, #tpu.memory_space<vmem>>, vector<1x1x8x64xf32>
    %87 = vector.shape_cast %86 : vector<1x1x8x64xf32> to vector<8x64xf32>
    %c32 = arith.constant 32 : index
    %c0_93 = arith.constant 0 : index
    %88 = vector.load %arg10[%c32, %c0_93] : memref<128x576xf32, #tpu.memory_space<vmem>>, vector<8x64xf32>
    tpu.vector_store %arg10[%c32, %c0_93], %87 {strides = array<i32>} : memref<128x576xf32, #tpu.memory_space<vmem>>, vector<8x64xf32>,
    %c0_94 = arith.constant 0 : index
    %c5_95 = arith.constant 5 : index
    %c0_96 = arith.constant 0 : index
    %c0_97 = arith.constant 0 : index
    %89 = vector.load %arg9[%c0_94, %c5_95, %c0_96, %c0_97] : memref<2x10x10x64xf32, #tpu.memory_space<vmem>>, vector<1x1x8x64xf32>
    %90 = vector.shape_cast %89 : vector<1x1x8x64xf32> to vector<8x64xf32>
    %c40 = arith.constant 40 : index
    %c0_98 = arith.constant 0 : index
    %91 = vector.load %arg10[%c40, %c0_98] : memref<128x576xf32, #tpu.memory_space<vmem>>, vector<8x64xf32>
    tpu.vector_store %arg10[%c40, %c0_98], %90 {strides = array<i32>} : memref<128x576xf32, #tpu.memory_space<vmem>>, vector<8x64xf32>,
    %c0_99 = arith.constant 0 : index
    %c6_100 = arith.constant 6 : index
    %c0_101 = arith.constant 0 : index
    %c0_102 = arith.constant 0 : index
    %92 = vector.load %arg9[%c0_99, %c6_100, %c0_101, %c0_102] : memref<2x10x10x64xf32, #tpu.memory_space<vmem>>, vector<1x1x8x64xf32>
    %93 = vector.shape_cast %92 : vector<1x1x8x64xf32> to vector<8x64xf32>
    %c48 = arith.constant 48 : index
    %c0_103 = arith.constant 0 : index
    %94 = vector.load %arg10[%c48, %c0_103] : memref<128x576xf32, #tpu.memory_space<vmem>>, vector<8x64xf32>
    tpu.vector_store %arg10[%c48, %c0_103], %93 {strides = array<i32>} : memref<128x576xf32, #tpu.memory_space<vmem>>, vector<8x64xf32>,
    %c0_104 = arith.constant 0 : index
    %c7_105 = arith.constant 7 : index
    %c0_106 = arith.constant 0 : index
    %c0_107 = arith.constant 0 : index
    %95 = vector.load %arg9[%c0_104, %c7_105, %c0_106, %c0_107] : memref<2x10x10x64xf32, #tpu.memory_space<vmem>>, vector<1x1x8x64xf32>
    %96 = vector.shape_cast %95 : vector<1x1x8x64xf32> to vector<8x64xf32>
    %c56 = arith.constant 56 : index
    %c0_108 = arith.constant 0 : index
    %97 = vector.load %arg10[%c56, %c0_108] : memref<128x576xf32, #tpu.memory_space<vmem>>, vector<8x64xf32>
    tpu.vector_store %arg10[%c56, %c0_108], %96 {strides = array<i32>} : memref<128x576xf32, #tpu.memory_space<vmem>>, vector<8x64xf32>,
    %c1_109 = arith.constant 1 : index
    %c0_110 = arith.constant 0 : index
    %c0_111 = arith.constant 0 : index
    %c0_112 = arith.constant 0 : index
    %98 = vector.load %arg9[%c1_109, %c0_110, %c0_111, %c0_112] : memref<2x10x10x64xf32, #tpu.memory_space<vmem>>, vector<1x1x8x64xf32>
    %99 = vector.shape_cast %98 : vector<1x1x8x64xf32> to vector<8x64xf32>
    %c64 = arith.constant 64 : index
    %c0_113 = arith.constant 0 : index
    %100 = vector.load %arg10[%c64, %c0_113] : memref<128x576xf32, #tpu.memory_space<vmem>>, vector<8x64xf32>
    tpu.vector_store %arg10[%c64, %c0_113], %99 {strides = array<i32>} : memref<128x576xf32, #tpu.memory_space<vmem>>, vector<8x64xf32>,
    %c1_114 = arith.constant 1 : index
    %c1_115 = arith.constant 1 : index
    %c0_116 = arith.constant 0 : index
    %c0_117 = arith.constant 0 : index
    %101 = vector.load %arg9[%c1_114, %c1_115, %c0_116, %c0_117] : memref<2x10x10x64xf32, #tpu.memory_space<vmem>>, vector<1x1x8x64xf32>
    %102 = vector.shape_cast %101 : vector<1x1x8x64xf32> to vector<8x64xf32>
    %c72 = arith.constant 72 : index
    %c0_118 = arith.constant 0 : index
    %103 = vector.load %arg10[%c72, %c0_118] : memref<128x576xf32, #tpu.memory_space<vmem>>, vector<8x64xf32>
    tpu.vector_store %arg10[%c72, %c0_118], %102 {strides = array<i32>} : memref<128x576xf32, #tpu.memory_space<vmem>>, vector<8x64xf32>,
    %c1_119 = arith.constant 1 : index
    %c2_120 = arith.constant 2 : index
    %c0_121 = arith.constant 0 : index
    %c0_122 = arith.constant 0 : index
    %104 = vector.load %arg9[%c1_119, %c2_120, %c0_121, %c0_122] : memref<2x10x10x64xf32, #tpu.memory_space<vmem>>, vector<1x1x8x64xf32>
    %105 = vector.shape_cast %104 : vector<1x1x8x64xf32> to vector<8x64xf32>
    %c80 = arith.constant 80 : index
    %c0_123 = arith.constant 0 : index
    %106 = vector.load %arg10[%c80, %c0_123] : memref<128x576xf32, #tpu.memory_space<vmem>>, vector<8x64xf32>
    tpu.vector_store %arg10[%c80, %c0_123], %105 {strides = array<i32>} : memref<128x576xf32, #tpu.memory_space<vmem>>, vector<8x64xf32>,
    %c1_124 = arith.constant 1 : index
    %c3_125 = arith.constant 3 : index
    %c0_126 = arith.constant 0 : index
    %c0_127 = arith.constant 0 : index
    %107 = vector.load %arg9[%c1_124, %c3_125, %c0_126, %c0_127] : memref<2x10x10x64xf32, #tpu.memory_space<vmem>>, vector<1x1x8x64xf32>
    %108 = vector.shape_cast %107 : vector<1x1x8x64xf32> to vector<8x64xf32>
    %c88 = arith.constant 88 : index
    %c0_128 = arith.constant 0 : index
    %109 = vector.load %arg10[%c88, %c0_128] : memref<128x576xf32, #tpu.memory_space<vmem>>, vector<8x64xf32>
    tpu.vector_store %arg10[%c88, %c0_128], %108 {strides = array<i32>} : memref<128x576xf32, #tpu.memory_space<vmem>>, vector<8x64xf32>,
    %c1_129 = arith.constant 1 : index
    %c4_130 = arith.constant 4 : index
    %c0_131 = arith.constant 0 : index
    %c0_132 = arith.constant 0 : index
    %110 = vector.load %arg9[%c1_129, %c4_130, %c0_131, %c0_132] : memref<2x10x10x64xf32, #tpu.memory_space<vmem>>, vector<1x1x8x64xf32>
    %111 = vector.shape_cast %110 : vector<1x1x8x64xf32> to vector<8x64xf32>
    %c96 = arith.constant 96 : index
    %c0_133 = arith.constant 0 : index
    %112 = vector.load %arg10[%c96, %c0_133] : memref<128x576xf32, #tpu.memory_space<vmem>>, vector<8x64xf32>
    tpu.vector_store %arg10[%c96, %c0_133], %111 {strides = array<i32>} : memref<128x576xf32, #tpu.memory_space<vmem>>, vector<8x64xf32>,
    %c1_134 = arith.constant 1 : index
    %c5_135 = arith.constant 5 : index
    %c0_136 = arith.constant 0 : index
    %c0_137 = arith.constant 0 : index
    %113 = vector.load %arg9[%c1_134, %c5_135, %c0_136, %c0_137] : memref<2x10x10x64xf32, #tpu.memory_space<vmem>>, vector<1x1x8x64xf32>
    %114 = vector.shape_cast %113 : vector<1x1x8x64xf32> to vector<8x64xf32>
    %c104 = arith.constant 104 : index
    %c0_138 = arith.constant 0 : index
    %115 = vector.load %arg10[%c104, %c0_138] : memref<128x576xf32, #tpu.memory_space<vmem>>, vector<8x64xf32>
    tpu.vector_store %arg10[%c104, %c0_138], %114 {strides = array<i32>} : memref<128x576xf32, #tpu.memory_space<vmem>>, vector<8x64xf32>,
    %c1_139 = arith.constant 1 : index
    %c6_140 = arith.constant 6 : index
    %c0_141 = arith.constant 0 : index
    %c0_142 = arith.constant 0 : index
    %116 = vector.load %arg9[%c1_139, %c6_140, %c0_141, %c0_142] : memref<2x10x10x64xf32, #tpu.memory_space<vmem>>, vector<1x1x8x64xf32>
    %117 = vector.shape_cast %116 : vector<1x1x8x64xf32> to vector<8x64xf32>
    %c112 = arith.constant 112 : index
    %c0_143 = arith.constant 0 : index
    %118 = vector.load %arg10[%c112, %c0_143] : memref<128x576xf32, #tpu.memory_space<vmem>>, vector<8x64xf32>
    tpu.vector_store %arg10[%c112, %c0_143], %117 {strides = array<i32>} : memref<128x576xf32, #tpu.memory_space<vmem>>, vector<8x64xf32>,
    %c1_144 = arith.constant 1 : index
    %c7_145 = arith.constant 7 : index
    %c0_146 = arith.constant 0 : index
    %c0_147 = arith.constant 0 : index
    %119 = vector.load %arg9[%c1_144, %c7_145, %c0_146, %c0_147] : memref<2x10x10x64xf32, #tpu.memory_space<vmem>>, vector<1x1x8x64xf32>
    %120 = vector.shape_cast %119 : vector<1x1x8x64xf32> to vector<8x64xf32>
    %c120 = arith.constant 120 : index
    %c0_148 = arith.constant 0 : index
    %121 = vector.load %arg10[%c120, %c0_148] : memref<128x576xf32, #tpu.memory_space<vmem>>, vector<8x64xf32>
    tpu.vector_store %arg10[%c120, %c0_148], %120 {strides = array<i32>} : memref<128x576xf32, #tpu.memory_space<vmem>>, vector<8x64xf32>,
    %c0_149 = arith.constant 0 : index
    %c0_150 = arith.constant 0 : index
    %c1_151 = arith.constant 1 : index
    %c0_152 = arith.constant 0 : index
    %122 = vector.load %arg9[%c0_149, %c0_150, %c1_151, %c0_152] : memref<2x10x10x64xf32, #tpu.memory_space<vmem>>, vector<1x1x8x64xf32>
    %123 = vector.shape_cast %122 : vector<1x1x8x64xf32> to vector<8x64xf32>
    %c0_153 = arith.constant 0 : index
    %c64_154 = arith.constant 64 : index
    %124 = vector.load %arg10[%c0_153, %c64_154] : memref<128x576xf32, #tpu.memory_space<vmem>>, vector<8x64xf32>
    tpu.vector_store %arg10[%c0_153, %c64_154], %123 {strides = array<i32>} : memref<128x576xf32, #tpu.memory_space<vmem>>, vector<8x64xf32>,
    %c0_155 = arith.constant 0 : index
    %c1_156 = arith.constant 1 : index
    %c1_157 = arith.constant 1 : index
    %c0_158 = arith.constant 0 : index
    %125 = vector.load %arg9[%c0_155, %c1_156, %c1_157, %c0_158] : memref<2x10x10x64xf32, #tpu.memory_space<vmem>>, vector<1x1x8x64xf32>
    %126 = vector.shape_cast %125 : vector<1x1x8x64xf32> to vector<8x64xf32>
    %c8_159 = arith.constant 8 : index
    %c64_160 = arith.constant 64 : index
    %127 = vector.load %arg10[%c8_159, %c64_160] : memref<128x576xf32, #tpu.memory_space<vmem>>, vector<8x64xf32>
    tpu.vector_store %arg10[%c8_159, %c64_160], %126 {strides = array<i32>} : memref<128x576xf32, #tpu.memory_space<vmem>>, vector<8x64xf32>,
    %c0_161 = arith.constant 0 : index
    %c2_162 = arith.constant 2 : index
    %c1_163 = arith.constant 1 : index
    %c0_164 = arith.constant 0 : index
    %128 = vector.load %arg9[%c0_161, %c2_162, %c1_163, %c0_164] : memref<2x10x10x64xf32, #tpu.memory_space<vmem>>, vector<1x1x8x64xf32>
    %129 = vector.shape_cast %128 : vector<1x1x8x64xf32> to vector<8x64xf32>
    %c16_165 = arith.constant 16 : index
    %c64_166 = arith.constant 64 : index
    %130 = vector.load %arg10[%c16_165, %c64_166] : memref<128x576xf32, #tpu.memory_space<vmem>>, vector<8x64xf32>
    tpu.vector_store %arg10[%c16_165, %c64_166], %129 {strides = array<i32>} : memref<128x576xf32, #tpu.memory_space<vmem>>, vector<8x64xf32>,
    %c0_167 = arith.constant 0 : index
    %c3_168 = arith.constant 3 : index
    %c1_169 = arith.constant 1 : index
    %c0_170 = arith.constant 0 : index
    %131 = vector.load %arg9[%c0_167, %c3_168, %c1_169, %c0_170] : memref<2x10x10x64xf32, #tpu.memory_space<vmem>>, vector<1x1x8x64xf32>
    %132 = vector.shape_cast %131 : vector<1x1x8x64xf32> to vector<8x64xf32>
    %c24_171 = arith.constant 24 : index
    %c64_172 = arith.constant 64 : index
    %133 = vector.load %arg10[%c24_171, %c64_172] : memref<128x576xf32, #tpu.memory_space<vmem>>, vector<8x64xf32>
    tpu.vector_store %arg10[%c24_171, %c64_172], %132 {strides = array<i32>} : memref<128x576xf32, #tpu.memory_space<vmem>>, vector<8x64xf32>,
    %c0_173 = arith.constant 0 : index
    %c4_174 = arith.constant 4 : index
    %c1_175 = arith.constant 1 : index
    %c0_176 = arith.constant 0 : index
    %134 = vector.load %arg9[%c0_173, %c4_174, %c1_175, %c0_176] : memref<2x10x10x64xf32, #tpu.memory_space<vmem>>, vector<1x1x8x64xf32>
    %135 = vector.shape_cast %134 : vector<1x1x8x64xf32> to vector<8x64xf32>
    %c32_177 = arith.constant 32 : index
    %c64_178 = arith.constant 64 : index
    %136 = vector.load %arg10[%c32_177, %c64_178] : memref<128x576xf32, #tpu.memory_space<vmem>>, vector<8x64xf32>
    tpu.vector_store %arg10[%c32_177, %c64_178], %135 {strides = array<i32>} : memref<128x576xf32, #tpu.memory_space<vmem>>, vector<8x64xf32>,
    %c0_179 = arith.constant 0 : index
    %c5_180 = arith.constant 5 : index
    %c1_181 = arith.constant 1 : index
    %c0_182 = arith.constant 0 : index
    %137 = vector.load %arg9[%c0_179, %c5_180, %c1_181, %c0_182] : memref<2x10x10x64xf32, #tpu.memory_space<vmem>>, vector<1x1x8x64xf32>
    %138 = vector.shape_cast %137 : vector<1x1x8x64xf32> to vector<8x64xf32>
    %c40_183 = arith.constant 40 : index
    %c64_184 = arith.constant 64 : index
    %139 = vector.load %arg10[%c40_183, %c64_184] : memref<128x576xf32, #tpu.memory_space<vmem>>, vector<8x64xf32>
    tpu.vector_store %arg10[%c40_183, %c64_184], %138 {strides = array<i32>} : memref<128x576xf32, #tpu.memory_space<vmem>>, vector<8x64xf32>,
    %c0_185 = arith.constant 0 : index
    %c6_186 = arith.constant 6 : index
    %c1_187 = arith.constant 1 : index
    %c0_188 = arith.constant 0 : index
    %140 = vector.load %arg9[%c0_185, %c6_186, %c1_187, %c0_188] : memref<2x10x10x64xf32, #tpu.memory_space<vmem>>, vector<1x1x8x64xf32>
    %141 = vector.shape_cast %140 : vector<1x1x8x64xf32> to vector<8x64xf32>
    %c48_189 = arith.constant 48 : index
    %c64_190 = arith.constant 64 : index
    %142 = vector.load %arg10[%c48_189, %c64_190] : memref<128x576xf32, #tpu.memory_space<vmem>>, vector<8x64xf32>
    tpu.vector_store %arg10[%c48_189, %c64_190], %141 {strides = array<i32>} : memref<128x576xf32, #tpu.memory_space<vmem>>, vector<8x64xf32>,
    %c0_191 = arith.constant 0 : index
    %c7_192 = arith.constant 7 : index
    %c1_193 = arith.constant 1 : index
    %c0_194 = arith.constant 0 : index
    %143 = vector.load %arg9[%c0_191, %c7_192, %c1_193, %c0_194] : memref<2x10x10x64xf32, #tpu.memory_space<vmem>>, vector<1x1x8x64xf32>
    %144 = vector.shape_cast %143 : vector<1x1x8x64xf32> to vector<8x64xf32>
    %c56_195 = arith.constant 56 : index
    %c64_196 = arith.constant 64 : index
    %145 = vector.load %arg10[%c56_195, %c64_196] : memref<128x576xf32, #tpu.memory_space<vmem>>, vector<8x64xf32>
    tpu.vector_store %arg10[%c56_195, %c64_196], %144 {strides = array<i32>} : memref<128x576xf32, #tpu.memory_space<vmem>>, vector<8x64xf32>,
    %c1_197 = arith.constant 1 : index
    %c0_198 = arith.constant 0 : index
    %c1_199 = arith.constant 1 : index
    %c0_200 = arith.constant 0 : index
    %146 = vector.load %arg9[%c1_197, %c0_198, %c1_199, %c0_200] : memref<2x10x10x64xf32, #tpu.memory_space<vmem>>, vector<1x1x8x64xf32>
    %147 = vector.shape_cast %146 : vector<1x1x8x64xf32> to vector<8x64xf32>
    %c64_201 = arith.constant 64 : index
    %c64_202 = arith.constant 64 : index
    %148 = vector.load %arg10[%c64_201, %c64_202] : memref<128x576xf32, #tpu.memory_space<vmem>>, vector<8x64xf32>
    tpu.vector_store %arg10[%c64_201, %c64_202], %147 {strides = array<i32>} : memref<128x576xf32, #tpu.memory_space<vmem>>, vector<8x64xf32>,
    %c1_203 = arith.constant 1 : index
    %c1_204 = arith.constant 1 : index
    %c1_205 = arith.constant 1 : index
    %c0_206 = arith.constant 0 : index
    %149 = vector.load %arg9[%c1_203, %c1_204, %c1_205, %c0_206] : memref<2x10x10x64xf32, #tpu.memory_space<vmem>>, vector<1x1x8x64xf32>
    %150 = vector.shape_cast %149 : vector<1x1x8x64xf32> to vector<8x64xf32>
    %c72_207 = arith.constant 72 : index
    %c64_208 = arith.constant 64 : index
    %151 = vector.load %arg10[%c72_207, %c64_208] : memref<128x576xf32, #tpu.memory_space<vmem>>, vector<8x64xf32>
    tpu.vector_store %arg10[%c72_207, %c64_208], %150 {strides = array<i32>} : memref<128x576xf32, #tpu.memory_space<vmem>>, vector<8x64xf32>,
    %c1_209 = arith.constant 1 : index
    %c2_210 = arith.constant 2 : index
    %c1_211 = arith.constant 1 : index
    %c0_212 = arith.constant 0 : index
    %152 = vector.load %arg9[%c1_209, %c2_210, %c1_211, %c0_212] : memref<2x10x10x64xf32, #tpu.memory_space<vmem>>, vector<1x1x8x64xf32>
    %153 = vector.shape_cast %152 : vector<1x1x8x64xf32> to vector<8x64xf32>
    %c80_213 = arith.constant 80 : index
    %c64_214 = arith.constant 64 : index
    %154 = vector.load %arg10[%c80_213, %c64_214] : memref<128x576xf32, #tpu.memory_space<vmem>>, vector<8x64xf32>
    tpu.vector_store %arg10[%c80_213, %c64_214], %153 {strides = array<i32>} : memref<128x576xf32, #tpu.memory_space<vmem>>, vector<8x64xf32>,
    %c1_215 = arith.constant 1 : index
    %c3_216 = arith.constant 3 : index
    %c1_217 = arith.constant 1 : index
    %c0_218 = arith.constant 0 : index
    %155 = vector.load %arg9[%c1_215, %c3_216, %c1_217, %c0_218] : memref<2x10x10x64xf32, #tpu.memory_space<vmem>>, vector<1x1x8x64xf32>
    %156 = vector.shape_cast %155 : vector<1x1x8x64xf32> to vector<8x64xf32>
    %c88_219 = arith.constant 88 : index
    %c64_220 = arith.constant 64 : index
    %157 = vector.load %arg10[%c88_219, %c64_220] : memref<128x576xf32, #tpu.memory_space<vmem>>, vector<8x64xf32>
    tpu.vector_store %arg10[%c88_219, %c64_220], %156 {strides = array<i32>} : memref<128x576xf32, #tpu.memory_space<vmem>>, vector<8x64xf32>,
    %c1_221 = arith.constant 1 : index
    %c4_222 = arith.constant 4 : index
    %c1_223 = arith.constant 1 : index
    %c0_224 = arith.constant 0 : index
    %158 = vector.load %arg9[%c1_221, %c4_222, %c1_223, %c0_224] : memref<2x10x10x64xf32, #tpu.memory_space<vmem>>, vector<1x1x8x64xf32>
    %159 = vector.shape_cast %158 : vector<1x1x8x64xf32> to vector<8x64xf32>
    %c96_225 = arith.constant 96 : index
    %c64_226 = arith.constant 64 : index
    %160 = vector.load %arg10[%c96_225, %c64_226] : memref<128x576xf32, #tpu.memory_space<vmem>>, vector<8x64xf32>
    tpu.vector_store %arg10[%c96_225, %c64_226], %159 {strides = array<i32>} : memref<128x576xf32, #tpu.memory_space<vmem>>, vector<8x64xf32>,
    %c1_227 = arith.constant 1 : index
    %c5_228 = arith.constant 5 : index
    %c1_229 = arith.constant 1 : index
    %c0_230 = arith.constant 0 : index
    %161 = vector.load %arg9[%c1_227, %c5_228, %c1_229, %c0_230] : memref<2x10x10x64xf32, #tpu.memory_space<vmem>>, vector<1x1x8x64xf32>
    %162 = vector.shape_cast %161 : vector<1x1x8x64xf32> to vector<8x64xf32>
    %c104_231 = arith.constant 104 : index
    %c64_232 = arith.constant 64 : index
    %163 = vector.load %arg10[%c104_231, %c64_232] : memref<128x576xf32, #tpu.memory_space<vmem>>, vector<8x64xf32>
    tpu.vector_store %arg10[%c104_231, %c64_232], %162 {strides = array<i32>} : memref<128x576xf32, #tpu.memory_space<vmem>>, vector<8x64xf32>,
    %c1_233 = arith.constant 1 : index
    %c6_234 = arith.constant 6 : index
    %c1_235 = arith.constant 1 : index
    %c0_236 = arith.constant 0 : index
    %164 = vector.load %arg9[%c1_233, %c6_234, %c1_235, %c0_236] : memref<2x10x10x64xf32, #tpu.memory_space<vmem>>, vector<1x1x8x64xf32>
    %165 = vector.shape_cast %164 : vector<1x1x8x64xf32> to vector<8x64xf32>
    %c112_237 = arith.constant 112 : index
    %c64_238 = arith.constant 64 : index
    %166 = vector.load %arg10[%c112_237, %c64_238] : memref<128x576xf32, #tpu.memory_space<vmem>>, vector<8x64xf32>
    tpu.vector_store %arg10[%c112_237, %c64_238], %165 {strides = array<i32>} : memref<128x576xf32, #tpu.memory_space<vmem>>, vector<8x64xf32>,
    %c1_239 = arith.constant 1 : index
    %c7_240 = arith.constant 7 : index
    %c1_241 = arith.constant 1 : index
    %c0_242 = arith.constant 0 : index
    %167 = vector.load %arg9[%c1_239, %c7_240, %c1_241, %c0_242] : memref<2x10x10x64xf32, #tpu.memory_space<vmem>>, vector<1x1x8x64xf32>
    %168 = vector.shape_cast %167 : vector<1x1x8x64xf32> to vector<8x64xf32>
    %c120_243 = arith.constant 120 : index
    %c64_244 = arith.constant 64 : index
    %169 = vector.load %arg10[%c120_243, %c64_244] : memref<128x576xf32, #tpu.memory_space<vmem>>, vector<8x64xf32>
    tpu.vector_store %arg10[%c120_243, %c64_244], %168 {strides = array<i32>} : memref<128x576xf32, #tpu.memory_space<vmem>>, vector<8x64xf32>,
    %c0_245 = arith.constant 0 : index
    %c0_246 = arith.constant 0 : index
    %c2_247 = arith.constant 2 : index
    %c0_248 = arith.constant 0 : index
    %170 = vector.load %arg9[%c0_245, %c0_246, %c2_247, %c0_248] : memref<2x10x10x64xf32, #tpu.memory_space<vmem>>, vector<1x1x8x64xf32>
    %171 = vector.shape_cast %170 : vector<1x1x8x64xf32> to vector<8x64xf32>
    %c0_249 = arith.constant 0 : index
    %c128 = arith.constant 128 : index
    %172 = vector.load %arg10[%c0_249, %c128] : memref<128x576xf32, #tpu.memory_space<vmem>>, vector<8x64xf32>
    tpu.vector_store %arg10[%c0_249, %c128], %171 {strides = array<i32>} : memref<128x576xf32, #tpu.memory_space<vmem>>, vector<8x64xf32>,
    %c0_250 = arith.constant 0 : index
    %c1_251 = arith.constant 1 : index
    %c2_252 = arith.constant 2 : index
    %c0_253 = arith.constant 0 : index
    %173 = vector.load %arg9[%c0_250, %c1_251, %c2_252, %c0_253] : memref<2x10x10x64xf32, #tpu.memory_space<vmem>>, vector<1x1x8x64xf32>
    %174 = vector.shape_cast %173 : vector<1x1x8x64xf32> to vector<8x64xf32>
    %c8_254 = arith.constant 8 : index
    %c128_255 = arith.constant 128 : index
    %175 = vector.load %arg10[%c8_254, %c128_255] : memref<128x576xf32, #tpu.memory_space<vmem>>, vector<8x64xf32>
    tpu.vector_store %arg10[%c8_254, %c128_255], %174 {strides = array<i32>} : memref<128x576xf32, #tpu.memory_space<vmem>>, vector<8x64xf32>,
    %c0_256 = arith.constant 0 : index
    %c2_257 = arith.constant 2 : index
    %c2_258 = arith.constant 2 : index
    %c0_259 = arith.constant 0 : index
    %176 = vector.load %arg9[%c0_256, %c2_257, %c2_258, %c0_259] : memref<2x10x10x64xf32, #tpu.memory_space<vmem>>, vector<1x1x8x64xf32>
    %177 = vector.shape_cast %176 : vector<1x1x8x64xf32> to vector<8x64xf32>
    %c16_260 = arith.constant 16 : index
    %c128_261 = arith.constant 128 : index
    %178 = vector.load %arg10[%c16_260, %c128_261] : memref<128x576xf32, #tpu.memory_space<vmem>>, vector<8x64xf32>
    tpu.vector_store %arg10[%c16_260, %c128_261], %177 {strides = array<i32>} : memref<128x576xf32, #tpu.memory_space<vmem>>, vector<8x64xf32>,
    %c0_262 = arith.constant 0 : index
    %c3_263 = arith.constant 3 : index
    %c2_264 = arith.constant 2 : index
    %c0_265 = arith.constant 0 : index
    %179 = vector.load %arg9[%c0_262, %c3_263, %c2_264, %c0_265] : memref<2x10x10x64xf32, #tpu.memory_space<vmem>>, vector<1x1x8x64xf32>
    %180 = vector.shape_cast %179 : vector<1x1x8x64xf32> to vector<8x64xf32>
    %c24_266 = arith.constant 24 : index
    %c128_267 = arith.constant 128 : index
    %181 = vector.load %arg10[%c24_266, %c128_267] : memref<128x576xf32, #tpu.memory_space<vmem>>, vector<8x64xf32>
    tpu.vector_store %arg10[%c24_266, %c128_267], %180 {strides = array<i32>} : memref<128x576xf32, #tpu.memory_space<vmem>>, vector<8x64xf32>,
    %c0_268 = arith.constant 0 : index
    %c4_269 = arith.constant 4 : index
    %c2_270 = arith.constant 2 : index
    %c0_271 = arith.constant 0 : index
    %182 = vector.load %arg9[%c0_268, %c4_269, %c2_270, %c0_271] : memref<2x10x10x64xf32, #tpu.memory_space<vmem>>, vector<1x1x8x64xf32>
    %183 = vector.shape_cast %182 : vector<1x1x8x64xf32> to vector<8x64xf32>
    %c32_272 = arith.constant 32 : index
    %c128_273 = arith.constant 128 : index
    %184 = vector.load %arg10[%c32_272, %c128_273] : memref<128x576xf32, #tpu.memory_space<vmem>>, vector<8x64xf32>
    tpu.vector_store %arg10[%c32_272, %c128_273], %183 {strides = array<i32>} : memref<128x576xf32, #tpu.memory_space<vmem>>, vector<8x64xf32>,
    %c0_274 = arith.constant 0 : index
    %c5_275 = arith.constant 5 : index
    %c2_276 = arith.constant 2 : index
    %c0_277 = arith.constant 0 : index
    %185 = vector.load %arg9[%c0_274, %c5_275, %c2_276, %c0_277] : memref<2x10x10x64xf32, #tpu.memory_space<vmem>>, vector<1x1x8x64xf32>
    %186 = vector.shape_cast %185 : vector<1x1x8x64xf32> to vector<8x64xf32>
    %c40_278 = arith.constant 40 : index
    %c128_279 = arith.constant 128 : index
    %187 = vector.load %arg10[%c40_278, %c128_279] : memref<128x576xf32, #tpu.memory_space<vmem>>, vector<8x64xf32>
    tpu.vector_store %arg10[%c40_278, %c128_279], %186 {strides = array<i32>} : memref<128x576xf32, #tpu.memory_space<vmem>>, vector<8x64xf32>,
    %c0_280 = arith.constant 0 : index
    %c6_281 = arith.constant 6 : index
    %c2_282 = arith.constant 2 : index
    %c0_283 = arith.constant 0 : index
    %188 = vector.load %arg9[%c0_280, %c6_281, %c2_282, %c0_283] : memref<2x10x10x64xf32, #tpu.memory_space<vmem>>, vector<1x1x8x64xf32>
    %189 = vector.shape_cast %188 : vector<1x1x8x64xf32> to vector<8x64xf32>
    %c48_284 = arith.constant 48 : index
    %c128_285 = arith.constant 128 : index
    %190 = vector.load %arg10[%c48_284, %c128_285] : memref<128x576xf32, #tpu.memory_space<vmem>>, vector<8x64xf32>
    tpu.vector_store %arg10[%c48_284, %c128_285], %189 {strides = array<i32>} : memref<128x576xf32, #tpu.memory_space<vmem>>, vector<8x64xf32>,
    %c0_286 = arith.constant 0 : index
    %c7_287 = arith.constant 7 : index
    %c2_288 = arith.constant 2 : index
    %c0_289 = arith.constant 0 : index
    %191 = vector.load %arg9[%c0_286, %c7_287, %c2_288, %c0_289] : memref<2x10x10x64xf32, #tpu.memory_space<vmem>>, vector<1x1x8x64xf32>
    %192 = vector.shape_cast %191 : vector<1x1x8x64xf32> to vector<8x64xf32>
    %c56_290 = arith.constant 56 : index
    %c128_291 = arith.constant 128 : index
    %193 = vector.load %arg10[%c56_290, %c128_291] : memref<128x576xf32, #tpu.memory_space<vmem>>, vector<8x64xf32>
    tpu.vector_store %arg10[%c56_290, %c128_291], %192 {strides = array<i32>} : memref<128x576xf32, #tpu.memory_space<vmem>>, vector<8x64xf32>,
    %c1_292 = arith.constant 1 : index
    %c0_293 = arith.constant 0 : index
    %c2_294 = arith.constant 2 : index
    %c0_295 = arith.constant 0 : index
    %194 = vector.load %arg9[%c1_292, %c0_293, %c2_294, %c0_295] : memref<2x10x10x64xf32, #tpu.memory_space<vmem>>, vector<1x1x8x64xf32>
    %195 = vector.shape_cast %194 : vector<1x1x8x64xf32> to vector<8x64xf32>
    %c64_296 = arith.constant 64 : index
    %c128_297 = arith.constant 128 : index
    %196 = vector.load %arg10[%c64_296, %c128_297] : memref<128x576xf32, #tpu.memory_space<vmem>>, vector<8x64xf32>
    tpu.vector_store %arg10[%c64_296, %c128_297], %195 {strides = array<i32>} : memref<128x576xf32, #tpu.memory_space<vmem>>, vector<8x64xf32>,
    %c1_298 = arith.constant 1 : index
    %c1_299 = arith.constant 1 : index
    %c2_300 = arith.constant 2 : index
    %c0_301 = arith.constant 0 : index
    %197 = vector.load %arg9[%c1_298, %c1_299, %c2_300, %c0_301] : memref<2x10x10x64xf32, #tpu.memory_space<vmem>>, vector<1x1x8x64xf32>
    %198 = vector.shape_cast %197 : vector<1x1x8x64xf32> to vector<8x64xf32>
    %c72_302 = arith.constant 72 : index
    %c128_303 = arith.constant 128 : index
    %199 = vector.load %arg10[%c72_302, %c128_303] : memref<128x576xf32, #tpu.memory_space<vmem>>, vector<8x64xf32>
    tpu.vector_store %arg10[%c72_302, %c128_303], %198 {strides = array<i32>} : memref<128x576xf32, #tpu.memory_space<vmem>>, vector<8x64xf32>,
    %c1_304 = arith.constant 1 : index
    %c2_305 = arith.constant 2 : index
    %c2_306 = arith.constant 2 : index
    %c0_307 = arith.constant 0 : index
    %200 = vector.load %arg9[%c1_304, %c2_305, %c2_306, %c0_307] : memref<2x10x10x64xf32, #tpu.memory_space<vmem>>, vector<1x1x8x64xf32>
    %201 = vector.shape_cast %200 : vector<1x1x8x64xf32> to vector<8x64xf32>
    %c80_308 = arith.constant 80 : index
    %c128_309 = arith.constant 128 : index
    %202 = vector.load %arg10[%c80_308, %c128_309] : memref<128x576xf32, #tpu.memory_space<vmem>>, vector<8x64xf32>
    tpu.vector_store %arg10[%c80_308, %c128_309], %201 {strides = array<i32>} : memref<128x576xf32, #tpu.memory_space<vmem>>, vector<8x64xf32>,
    %c1_310 = arith.constant 1 : index
    %c3_311 = arith.constant 3 : index
    %c2_312 = arith.constant 2 : index
    %c0_313 = arith.constant 0 : index
    %203 = vector.load %arg9[%c1_310, %c3_311, %c2_312, %c0_313] : memref<2x10x10x64xf32, #tpu.memory_space<vmem>>, vector<1x1x8x64xf32>
    %204 = vector.shape_cast %203 : vector<1x1x8x64xf32> to vector<8x64xf32>
    %c88_314 = arith.constant 88 : index
    %c128_315 = arith.constant 128 : index
    %205 = vector.load %arg10[%c88_314, %c128_315] : memref<128x576xf32, #tpu.memory_space<vmem>>, vector<8x64xf32>
    tpu.vector_store %arg10[%c88_314, %c128_315], %204 {strides = array<i32>} : memref<128x576xf32, #tpu.memory_space<vmem>>, vector<8x64xf32>,
    %c1_316 = arith.constant 1 : index
    %c4_317 = arith.constant 4 : index
    %c2_318 = arith.constant 2 : index
    %c0_319 = arith.constant 0 : index
    %206 = vector.load %arg9[%c1_316, %c4_317, %c2_318, %c0_319] : memref<2x10x10x64xf32, #tpu.memory_space<vmem>>, vector<1x1x8x64xf32>
    %207 = vector.shape_cast %206 : vector<1x1x8x64xf32> to vector<8x64xf32>
    %c96_320 = arith.constant 96 : index
    %c128_321 = arith.constant 128 : index
    %208 = vector.load %arg10[%c96_320, %c128_321] : memref<128x576xf32, #tpu.memory_space<vmem>>, vector<8x64xf32>
    tpu.vector_store %arg10[%c96_320, %c128_321], %207 {strides = array<i32>} : memref<128x576xf32, #tpu.memory_space<vmem>>, vector<8x64xf32>,
    %c1_322 = arith.constant 1 : index
    %c5_323 = arith.constant 5 : index
    %c2_324 = arith.constant 2 : index
    %c0_325 = arith.constant 0 : index
    %209 = vector.load %arg9[%c1_322, %c5_323, %c2_324, %c0_325] : memref<2x10x10x64xf32, #tpu.memory_space<vmem>>, vector<1x1x8x64xf32>
    %210 = vector.shape_cast %209 : vector<1x1x8x64xf32> to vector<8x64xf32>
    %c104_326 = arith.constant 104 : index
    %c128_327 = arith.constant 128 : index
    %211 = vector.load %arg10[%c104_326, %c128_327] : memref<128x576xf32, #tpu.memory_space<vmem>>, vector<8x64xf32>
    tpu.vector_store %arg10[%c104_326, %c128_327], %210 {strides = array<i32>} : memref<128x576xf32, #tpu.memory_space<vmem>>, vector<8x64xf32>,
    %c1_328 = arith.constant 1 : index
    %c6_329 = arith.constant 6 : index
    %c2_330 = arith.constant 2 : index
    %c0_331 = arith.constant 0 : index
    %212 = vector.load %arg9[%c1_328, %c6_329, %c2_330, %c0_331] : memref<2x10x10x64xf32, #tpu.memory_space<vmem>>, vector<1x1x8x64xf32>
    %213 = vector.shape_cast %212 : vector<1x1x8x64xf32> to vector<8x64xf32>
    %c112_332 = arith.constant 112 : index
    %c128_333 = arith.constant 128 : index
    %214 = vector.load %arg10[%c112_332, %c128_333] : memref<128x576xf32, #tpu.memory_space<vmem>>, vector<8x64xf32>
    tpu.vector_store %arg10[%c112_332, %c128_333], %213 {strides = array<i32>} : memref<128x576xf32, #tpu.memory_space<vmem>>, vector<8x64xf32>,
    %c1_334 = arith.constant 1 : index
    %c7_335 = arith.constant 7 : index
    %c2_336 = arith.constant 2 : index
    %c0_337 = arith.constant 0 : index
    %215 = vector.load %arg9[%c1_334, %c7_335, %c2_336, %c0_337] : memref<2x10x10x64xf32, #tpu.memory_space<vmem>>, vector<1x1x8x64xf32>
    %216 = vector.shape_cast %215 : vector<1x1x8x64xf32> to vector<8x64xf32>
    %c120_338 = arith.constant 120 : index
    %c128_339 = arith.constant 128 : index
    %217 = vector.load %arg10[%c120_338, %c128_339] : memref<128x576xf32, #tpu.memory_space<vmem>>, vector<8x64xf32>
    tpu.vector_store %arg10[%c120_338, %c128_339], %216 {strides = array<i32>} : memref<128x576xf32, #tpu.memory_space<vmem>>, vector<8x64xf32>,
    %c0_340 = arith.constant 0 : index
    %c1_341 = arith.constant 1 : index
    %c0_342 = arith.constant 0 : index
    %c0_343 = arith.constant 0 : index
    %218 = vector.load %arg9[%c0_340, %c1_341, %c0_342, %c0_343] : memref<2x10x10x64xf32, #tpu.memory_space<vmem>>, vector<1x1x8x64xf32>
    %219 = vector.shape_cast %218 : vector<1x1x8x64xf32> to vector<8x64xf32>
    %c0_344 = arith.constant 0 : index
    %c192 = arith.constant 192 : index
    %220 = vector.load %arg10[%c0_344, %c192] : memref<128x576xf32, #tpu.memory_space<vmem>>, vector<8x64xf32>
    tpu.vector_store %arg10[%c0_344, %c192], %219 {strides = array<i32>} : memref<128x576xf32, #tpu.memory_space<vmem>>, vector<8x64xf32>,
    %c0_345 = arith.constant 0 : index
    %c2_346 = arith.constant 2 : index
    %c0_347 = arith.constant 0 : index
    %c0_348 = arith.constant 0 : index
    %221 = vector.load %arg9[%c0_345, %c2_346, %c0_347, %c0_348] : memref<2x10x10x64xf32, #tpu.memory_space<vmem>>, vector<1x1x8x64xf32>
    %222 = vector.shape_cast %221 : vector<1x1x8x64xf32> to vector<8x64xf32>
    %c8_349 = arith.constant 8 : index
    %c192_350 = arith.constant 192 : index
    %223 = vector.load %arg10[%c8_349, %c192_350] : memref<128x576xf32, #tpu.memory_space<vmem>>, vector<8x64xf32>
    tpu.vector_store %arg10[%c8_349, %c192_350], %222 {strides = array<i32>} : memref<128x576xf32, #tpu.memory_space<vmem>>, vector<8x64xf32>,
    %c0_351 = arith.constant 0 : index
    %c3_352 = arith.constant 3 : index
    %c0_353 = arith.constant 0 : index
    %c0_354 = arith.constant 0 : index
    %224 = vector.load %arg9[%c0_351, %c3_352, %c0_353, %c0_354] : memref<2x10x10x64xf32, #tpu.memory_space<vmem>>, vector<1x1x8x64xf32>
    %225 = vector.shape_cast %224 : vector<1x1x8x64xf32> to vector<8x64xf32>
    %c16_355 = arith.constant 16 : index
    %c192_356 = arith.constant 192 : index
    %226 = vector.load %arg10[%c16_355, %c192_356] : memref<128x576xf32, #tpu.memory_space<vmem>>, vector<8x64xf32>
    tpu.vector_store %arg10[%c16_355, %c192_356], %225 {strides = array<i32>} : memref<128x576xf32, #tpu.memory_space<vmem>>, vector<8x64xf32>,
    %c0_357 = arith.constant 0 : index
    %c4_358 = arith.constant 4 : index
    %c0_359 = arith.constant 0 : index
    %c0_360 = arith.constant 0 : index
    %227 = vector.load %arg9[%c0_357, %c4_358, %c0_359, %c0_360] : memref<2x10x10x64xf32, #tpu.memory_space<vmem>>, vector<1x1x8x64xf32>
    %228 = vector.shape_cast %227 : vector<1x1x8x64xf32> to vector<8x64xf32>
    %c24_361 = arith.constant 24 : index
    %c192_362 = arith.constant 192 : index
    %229 = vector.load %arg10[%c24_361, %c192_362] : memref<128x576xf32, #tpu.memory_space<vmem>>, vector<8x64xf32>
    tpu.vector_store %arg10[%c24_361, %c192_362], %228 {strides = array<i32>} : memref<128x576xf32, #tpu.memory_space<vmem>>, vector<8x64xf32>,
    %c0_363 = arith.constant 0 : index
    %c5_364 = arith.constant 5 : index
    %c0_365 = arith.constant 0 : index
    %c0_366 = arith.constant 0 : index
    %230 = vector.load %arg9[%c0_363, %c5_364, %c0_365, %c0_366] : memref<2x10x10x64xf32, #tpu.memory_space<vmem>>, vector<1x1x8x64xf32>
    %231 = vector.shape_cast %230 : vector<1x1x8x64xf32> to vector<8x64xf32>
    %c32_367 = arith.constant 32 : index
    %c192_368 = arith.constant 192 : index
    %232 = vector.load %arg10[%c32_367, %c192_368] : memref<128x576xf32, #tpu.memory_space<vmem>>, vector<8x64xf32>
    tpu.vector_store %arg10[%c32_367, %c192_368], %231 {strides = array<i32>} : memref<128x576xf32, #tpu.memory_space<vmem>>, vector<8x64xf32>,
    %c0_369 = arith.constant 0 : index
    %c6_370 = arith.constant 6 : index
    %c0_371 = arith.constant 0 : index
    %c0_372 = arith.constant 0 : index
    %233 = vector.load %arg9[%c0_369, %c6_370, %c0_371, %c0_372] : memref<2x10x10x64xf32, #tpu.memory_space<vmem>>, vector<1x1x8x64xf32>
    %234 = vector.shape_cast %233 : vector<1x1x8x64xf32> to vector<8x64xf32>
    %c40_373 = arith.constant 40 : index
    %c192_374 = arith.constant 192 : index
    %235 = vector.load %arg10[%c40_373, %c192_374] : memref<128x576xf32, #tpu.memory_space<vmem>>, vector<8x64xf32>
    tpu.vector_store %arg10[%c40_373, %c192_374], %234 {strides = array<i32>} : memref<128x576xf32, #tpu.memory_space<vmem>>, vector<8x64xf32>,
    %c0_375 = arith.constant 0 : index
    %c7_376 = arith.constant 7 : index
    %c0_377 = arith.constant 0 : index
    %c0_378 = arith.constant 0 : index
    %236 = vector.load %arg9[%c0_375, %c7_376, %c0_377, %c0_378] : memref<2x10x10x64xf32, #tpu.memory_space<vmem>>, vector<1x1x8x64xf32>
    %237 = vector.shape_cast %236 : vector<1x1x8x64xf32> to vector<8x64xf32>
    %c48_379 = arith.constant 48 : index
    %c192_380 = arith.constant 192 : index
    %238 = vector.load %arg10[%c48_379, %c192_380] : memref<128x576xf32, #tpu.memory_space<vmem>>, vector<8x64xf32>
    tpu.vector_store %arg10[%c48_379, %c192_380], %237 {strides = array<i32>} : memref<128x576xf32, #tpu.memory_space<vmem>>, vector<8x64xf32>,
    %c0_381 = arith.constant 0 : index
    %c8_382 = arith.constant 8 : index
    %c0_383 = arith.constant 0 : index
    %c0_384 = arith.constant 0 : index
    %239 = vector.load %arg9[%c0_381, %c8_382, %c0_383, %c0_384] : memref<2x10x10x64xf32, #tpu.memory_space<vmem>>, vector<1x1x8x64xf32>
    %240 = vector.shape_cast %239 : vector<1x1x8x64xf32> to vector<8x64xf32>
    %c56_385 = arith.constant 56 : index
    %c192_386 = arith.constant 192 : index
    %241 = vector.load %arg10[%c56_385, %c192_386] : memref<128x576xf32, #tpu.memory_space<vmem>>, vector<8x64xf32>
    tpu.vector_store %arg10[%c56_385, %c192_386], %240 {strides = array<i32>} : memref<128x576xf32, #tpu.memory_space<vmem>>, vector<8x64xf32>,
    %c1_387 = arith.constant 1 : index
    %c1_388 = arith.constant 1 : index
    %c0_389 = arith.constant 0 : index
    %c0_390 = arith.constant 0 : index
    %242 = vector.load %arg9[%c1_387, %c1_388, %c0_389, %c0_390] : memref<2x10x10x64xf32, #tpu.memory_space<vmem>>, vector<1x1x8x64xf32>
    %243 = vector.shape_cast %242 : vector<1x1x8x64xf32> to vector<8x64xf32>
    %c64_391 = arith.constant 64 : index
    %c192_392 = arith.constant 192 : index
    %244 = vector.load %arg10[%c64_391, %c192_392] : memref<128x576xf32, #tpu.memory_space<vmem>>, vector<8x64xf32>
    tpu.vector_store %arg10[%c64_391, %c192_392], %243 {strides = array<i32>} : memref<128x576xf32, #tpu.memory_space<vmem>>, vector<8x64xf32>,
    %c1_393 = arith.constant 1 : index
    %c2_394 = arith.constant 2 : index
    %c0_395 = arith.constant 0 : index
    %c0_396 = arith.constant 0 : index
    %245 = vector.load %arg9[%c1_393, %c2_394, %c0_395, %c0_396] : memref<2x10x10x64xf32, #tpu.memory_space<vmem>>, vector<1x1x8x64xf32>
    %246 = vector.shape_cast %245 : vector<1x1x8x64xf32> to vector<8x64xf32>
    %c72_397 = arith.constant 72 : index
    %c192_398 = arith.constant 192 : index
    %247 = vector.load %arg10[%c72_397, %c192_398] : memref<128x576xf32, #tpu.memory_space<vmem>>, vector<8x64xf32>
    tpu.vector_store %arg10[%c72_397, %c192_398], %246 {strides = array<i32>} : memref<128x576xf32, #tpu.memory_space<vmem>>, vector<8x64xf32>,
    %c1_399 = arith.constant 1 : index
    %c3_400 = arith.constant 3 : index
    %c0_401 = arith.constant 0 : index
    %c0_402 = arith.constant 0 : index
    %248 = vector.load %arg9[%c1_399, %c3_400, %c0_401, %c0_402] : memref<2x10x10x64xf32, #tpu.memory_space<vmem>>, vector<1x1x8x64xf32>
    %249 = vector.shape_cast %248 : vector<1x1x8x64xf32> to vector<8x64xf32>
    %c80_403 = arith.constant 80 : index
    %c192_404 = arith.constant 192 : index
    %250 = vector.load %arg10[%c80_403, %c192_404] : memref<128x576xf32, #tpu.memory_space<vmem>>, vector<8x64xf32>
    tpu.vector_store %arg10[%c80_403, %c192_404], %249 {strides = array<i32>} : memref<128x576xf32, #tpu.memory_space<vmem>>, vector<8x64xf32>,
    %c1_405 = arith.constant 1 : index
    %c4_406 = arith.constant 4 : index
    %c0_407 = arith.constant 0 : index
    %c0_408 = arith.constant 0 : index
    %251 = vector.load %arg9[%c1_405, %c4_406, %c0_407, %c0_408] : memref<2x10x10x64xf32, #tpu.memory_space<vmem>>, vector<1x1x8x64xf32>
    %252 = vector.shape_cast %251 : vector<1x1x8x64xf32> to vector<8x64xf32>
    %c88_409 = arith.constant 88 : index
    %c192_410 = arith.constant 192 : index
    %253 = vector.load %arg10[%c88_409, %c192_410] : memref<128x576xf32, #tpu.memory_space<vmem>>, vector<8x64xf32>
    tpu.vector_store %arg10[%c88_409, %c192_410], %252 {strides = array<i32>} : memref<128x576xf32, #tpu.memory_space<vmem>>, vector<8x64xf32>,
    %c1_411 = arith.constant 1 : index
    %c5_412 = arith.constant 5 : index
    %c0_413 = arith.constant 0 : index
    %c0_414 = arith.constant 0 : index
    %254 = vector.load %arg9[%c1_411, %c5_412, %c0_413, %c0_414] : memref<2x10x10x64xf32, #tpu.memory_space<vmem>>, vector<1x1x8x64xf32>
    %255 = vector.shape_cast %254 : vector<1x1x8x64xf32> to vector<8x64xf32>
    %c96_415 = arith.constant 96 : index
    %c192_416 = arith.constant 192 : index
    %256 = vector.load %arg10[%c96_415, %c192_416] : memref<128x576xf32, #tpu.memory_space<vmem>>, vector<8x64xf32>
    tpu.vector_store %arg10[%c96_415, %c192_416], %255 {strides = array<i32>} : memref<128x576xf32, #tpu.memory_space<vmem>>, vector<8x64xf32>,
    %c1_417 = arith.constant 1 : index
    %c6_418 = arith.constant 6 : index
    %c0_419 = arith.constant 0 : index
    %c0_420 = arith.constant 0 : index
    %257 = vector.load %arg9[%c1_417, %c6_418, %c0_419, %c0_420] : memref<2x10x10x64xf32, #tpu.memory_space<vmem>>, vector<1x1x8x64xf32>
    %258 = vector.shape_cast %257 : vector<1x1x8x64xf32> to vector<8x64xf32>
    %c104_421 = arith.constant 104 : index
    %c192_422 = arith.constant 192 : index
    %259 = vector.load %arg10[%c104_421, %c192_422] : memref<128x576xf32, #tpu.memory_space<vmem>>, vector<8x64xf32>
    tpu.vector_store %arg10[%c104_421, %c192_422], %258 {strides = array<i32>} : memref<128x576xf32, #tpu.memory_space<vmem>>, vector<8x64xf32>,
    %c1_423 = arith.constant 1 : index
    %c7_424 = arith.constant 7 : index
    %c0_425 = arith.constant 0 : index
    %c0_426 = arith.constant 0 : index
    %260 = vector.load %arg9[%c1_423, %c7_424, %c0_425, %c0_426] : memref<2x10x10x64xf32, #tpu.memory_space<vmem>>, vector<1x1x8x64xf32>
    %261 = vector.shape_cast %260 : vector<1x1x8x64xf32> to vector<8x64xf32>
    %c112_427 = arith.constant 112 : index
    %c192_428 = arith.constant 192 : index
    %262 = vector.load %arg10[%c112_427, %c192_428] : memref<128x576xf32, #tpu.memory_space<vmem>>, vector<8x64xf32>
    tpu.vector_store %arg10[%c112_427, %c192_428], %261 {strides = array<i32>} : memref<128x576xf32, #tpu.memory_space<vmem>>, vector<8x64xf32>,
    %c1_429 = arith.constant 1 : index
    %c8_430 = arith.constant 8 : index
    %c0_431 = arith.constant 0 : index
    %c0_432 = arith.constant 0 : index
    %263 = vector.load %arg9[%c1_429, %c8_430, %c0_431, %c0_432] : memref<2x10x10x64xf32, #tpu.memory_space<vmem>>, vector<1x1x8x64xf32>
    %264 = vector.shape_cast %263 : vector<1x1x8x64xf32> to vector<8x64xf32>
    %c120_433 = arith.constant 120 : index
    %c192_434 = arith.constant 192 : index
    %265 = vector.load %arg10[%c120_433, %c192_434] : memref<128x576xf32, #tpu.memory_space<vmem>>, vector<8x64xf32>
    tpu.vector_store %arg10[%c120_433, %c192_434], %264 {strides = array<i32>} : memref<128x576xf32, #tpu.memory_space<vmem>>, vector<8x64xf32>,
    %c0_435 = arith.constant 0 : index
    %c1_436 = arith.constant 1 : index
    %c1_437 = arith.constant 1 : index
    %c0_438 = arith.constant 0 : index
    %266 = vector.load %arg9[%c0_435, %c1_436, %c1_437, %c0_438] : memref<2x10x10x64xf32, #tpu.memory_space<vmem>>, vector<1x1x8x64xf32>
    %267 = vector.shape_cast %266 : vector<1x1x8x64xf32> to vector<8x64xf32>
    %c0_439 = arith.constant 0 : index
    %c256 = arith.constant 256 : index
    %268 = vector.load %arg10[%c0_439, %c256] : memref<128x576xf32, #tpu.memory_space<vmem>>, vector<8x64xf32>
    tpu.vector_store %arg10[%c0_439, %c256], %267 {strides = array<i32>} : memref<128x576xf32, #tpu.memory_space<vmem>>, vector<8x64xf32>,
    %c0_440 = arith.constant 0 : index
    %c2_441 = arith.constant 2 : index
    %c1_442 = arith.constant 1 : index
    %c0_443 = arith.constant 0 : index
    %269 = vector.load %arg9[%c0_440, %c2_441, %c1_442, %c0_443] : memref<2x10x10x64xf32, #tpu.memory_space<vmem>>, vector<1x1x8x64xf32>
    %270 = vector.shape_cast %269 : vector<1x1x8x64xf32> to vector<8x64xf32>
    %c8_444 = arith.constant 8 : index
    %c256_445 = arith.constant 256 : index
    %271 = vector.load %arg10[%c8_444, %c256_445] : memref<128x576xf32, #tpu.memory_space<vmem>>, vector<8x64xf32>
    tpu.vector_store %arg10[%c8_444, %c256_445], %270 {strides = array<i32>} : memref<128x576xf32, #tpu.memory_space<vmem>>, vector<8x64xf32>,
    %c0_446 = arith.constant 0 : index
    %c3_447 = arith.constant 3 : index
    %c1_448 = arith.constant 1 : index
    %c0_449 = arith.constant 0 : index
    %272 = vector.load %arg9[%c0_446, %c3_447, %c1_448, %c0_449] : memref<2x10x10x64xf32, #tpu.memory_space<vmem>>, vector<1x1x8x64xf32>
    %273 = vector.shape_cast %272 : vector<1x1x8x64xf32> to vector<8x64xf32>
    %c16_450 = arith.constant 16 : index
    %c256_451 = arith.constant 256 : index
    %274 = vector.load %arg10[%c16_450, %c256_451] : memref<128x576xf32, #tpu.memory_space<vmem>>, vector<8x64xf32>
    tpu.vector_store %arg10[%c16_450, %c256_451], %273 {strides = array<i32>} : memref<128x576xf32, #tpu.memory_space<vmem>>, vector<8x64xf32>,
    %c0_452 = arith.constant 0 : index
    %c4_453 = arith.constant 4 : index
    %c1_454 = arith.constant 1 : index
    %c0_455 = arith.constant 0 : index
    %275 = vector.load %arg9[%c0_452, %c4_453, %c1_454, %c0_455] : memref<2x10x10x64xf32, #tpu.memory_space<vmem>>, vector<1x1x8x64xf32>
    %276 = vector.shape_cast %275 : vector<1x1x8x64xf32> to vector<8x64xf32>
    %c24_456 = arith.constant 24 : index
    %c256_457 = arith.constant 256 : index
    %277 = vector.load %arg10[%c24_456, %c256_457] : memref<128x576xf32, #tpu.memory_space<vmem>>, vector<8x64xf32>
    tpu.vector_store %arg10[%c24_456, %c256_457], %276 {strides = array<i32>} : memref<128x576xf32, #tpu.memory_space<vmem>>, vector<8x64xf32>,
    %c0_458 = arith.constant 0 : index
    %c5_459 = arith.constant 5 : index
    %c1_460 = arith.constant 1 : index
    %c0_461 = arith.constant 0 : index
    %278 = vector.load %arg9[%c0_458, %c5_459, %c1_460, %c0_461] : memref<2x10x10x64xf32, #tpu.memory_space<vmem>>, vector<1x1x8x64xf32>
    %279 = vector.shape_cast %278 : vector<1x1x8x64xf32> to vector<8x64xf32>
    %c32_462 = arith.constant 32 : index
    %c256_463 = arith.constant 256 : index
    %280 = vector.load %arg10[%c32_462, %c256_463] : memref<128x576xf32, #tpu.memory_space<vmem>>, vector<8x64xf32>
    tpu.vector_store %arg10[%c32_462, %c256_463], %279 {strides = array<i32>} : memref<128x576xf32, #tpu.memory_space<vmem>>, vector<8x64xf32>,
    %c0_464 = arith.constant 0 : index
    %c6_465 = arith.constant 6 : index
    %c1_466 = arith.constant 1 : index
    %c0_467 = arith.constant 0 : index
    %281 = vector.load %arg9[%c0_464, %c6_465, %c1_466, %c0_467] : memref<2x10x10x64xf32, #tpu.memory_space<vmem>>, vector<1x1x8x64xf32>
    %282 = vector.shape_cast %281 : vector<1x1x8x64xf32> to vector<8x64xf32>
    %c40_468 = arith.constant 40 : index
    %c256_469 = arith.constant 256 : index
    %283 = vector.load %arg10[%c40_468, %c256_469] : memref<128x576xf32, #tpu.memory_space<vmem>>, vector<8x64xf32>
    tpu.vector_store %arg10[%c40_468, %c256_469], %282 {strides = array<i32>} : memref<128x576xf32, #tpu.memory_space<vmem>>, vector<8x64xf32>,
    %c0_470 = arith.constant 0 : index
    %c7_471 = arith.constant 7 : index
    %c1_472 = arith.constant 1 : index
    %c0_473 = arith.constant 0 : index
    %284 = vector.load %arg9[%c0_470, %c7_471, %c1_472, %c0_473] : memref<2x10x10x64xf32, #tpu.memory_space<vmem>>, vector<1x1x8x64xf32>
    %285 = vector.shape_cast %284 : vector<1x1x8x64xf32> to vector<8x64xf32>
    %c48_474 = arith.constant 48 : index
    %c256_475 = arith.constant 256 : index
    %286 = vector.load %arg10[%c48_474, %c256_475] : memref<128x576xf32, #tpu.memory_space<vmem>>, vector<8x64xf32>
    tpu.vector_store %arg10[%c48_474, %c256_475], %285 {strides = array<i32>} : memref<128x576xf32, #tpu.memory_space<vmem>>, vector<8x64xf32>,
    %c0_476 = arith.constant 0 : index
    %c8_477 = arith.constant 8 : index
    %c1_478 = arith.constant 1 : index
    %c0_479 = arith.constant 0 : index
    %287 = vector.load %arg9[%c0_476, %c8_477, %c1_478, %c0_479] : memref<2x10x10x64xf32, #tpu.memory_space<vmem>>, vector<1x1x8x64xf32>
    %288 = vector.shape_cast %287 : vector<1x1x8x64xf32> to vector<8x64xf32>
    %c56_480 = arith.constant 56 : index
    %c256_481 = arith.constant 256 : index
    %289 = vector.load %arg10[%c56_480, %c256_481] : memref<128x576xf32, #tpu.memory_space<vmem>>, vector<8x64xf32>
    tpu.vector_store %arg10[%c56_480, %c256_481], %288 {strides = array<i32>} : memref<128x576xf32, #tpu.memory_space<vmem>>, vector<8x64xf32>,
    %c1_482 = arith.constant 1 : index
    %c1_483 = arith.constant 1 : index
    %c1_484 = arith.constant 1 : index
    %c0_485 = arith.constant 0 : index
    %290 = vector.load %arg9[%c1_482, %c1_483, %c1_484, %c0_485] : memref<2x10x10x64xf32, #tpu.memory_space<vmem>>, vector<1x1x8x64xf32>
    %291 = vector.shape_cast %290 : vector<1x1x8x64xf32> to vector<8x64xf32>
    %c64_486 = arith.constant 64 : index
    %c256_487 = arith.constant 256 : index
    %292 = vector.load %arg10[%c64_486, %c256_487] : memref<128x576xf32, #tpu.memory_space<vmem>>, vector<8x64xf32>
    tpu.vector_store %arg10[%c64_486, %c256_487], %291 {strides = array<i32>} : memref<128x576xf32, #tpu.memory_space<vmem>>, vector<8x64xf32>,
    %c1_488 = arith.constant 1 : index
    %c2_489 = arith.constant 2 : index
    %c1_490 = arith.constant 1 : index
    %c0_491 = arith.constant 0 : index
    %293 = vector.load %arg9[%c1_488, %c2_489, %c1_490, %c0_491] : memref<2x10x10x64xf32, #tpu.memory_space<vmem>>, vector<1x1x8x64xf32>
    %294 = vector.shape_cast %293 : vector<1x1x8x64xf32> to vector<8x64xf32>
    %c72_492 = arith.constant 72 : index
    %c256_493 = arith.constant 256 : index
    %295 = vector.load %arg10[%c72_492, %c256_493] : memref<128x576xf32, #tpu.memory_space<vmem>>, vector<8x64xf32>
    tpu.vector_store %arg10[%c72_492, %c256_493], %294 {strides = array<i32>} : memref<128x576xf32, #tpu.memory_space<vmem>>, vector<8x64xf32>,
    %c1_494 = arith.constant 1 : index
    %c3_495 = arith.constant 3 : index
    %c1_496 = arith.constant 1 : index
    %c0_497 = arith.constant 0 : index
    %296 = vector.load %arg9[%c1_494, %c3_495, %c1_496, %c0_497] : memref<2x10x10x64xf32, #tpu.memory_space<vmem>>, vector<1x1x8x64xf32>
    %297 = vector.shape_cast %296 : vector<1x1x8x64xf32> to vector<8x64xf32>
    %c80_498 = arith.constant 80 : index
    %c256_499 = arith.constant 256 : index
    %298 = vector.load %arg10[%c80_498, %c256_499] : memref<128x576xf32, #tpu.memory_space<vmem>>, vector<8x64xf32>
    tpu.vector_store %arg10[%c80_498, %c256_499], %297 {strides = array<i32>} : memref<128x576xf32, #tpu.memory_space<vmem>>, vector<8x64xf32>,
    %c1_500 = arith.constant 1 : index
    %c4_501 = arith.constant 4 : index
    %c1_502 = arith.constant 1 : index
    %c0_503 = arith.constant 0 : index
    %299 = vector.load %arg9[%c1_500, %c4_501, %c1_502, %c0_503] : memref<2x10x10x64xf32, #tpu.memory_space<vmem>>, vector<1x1x8x64xf32>
    %300 = vector.shape_cast %299 : vector<1x1x8x64xf32> to vector<8x64xf32>
    %c88_504 = arith.constant 88 : index
    %c256_505 = arith.constant 256 : index
    %301 = vector.load %arg10[%c88_504, %c256_505] : memref<128x576xf32, #tpu.memory_space<vmem>>, vector<8x64xf32>
    tpu.vector_store %arg10[%c88_504, %c256_505], %300 {strides = array<i32>} : memref<128x576xf32, #tpu.memory_space<vmem>>, vector<8x64xf32>,
    %c1_506 = arith.constant 1 : index
    %c5_507 = arith.constant 5 : index
    %c1_508 = arith.constant 1 : index
    %c0_509 = arith.constant 0 : index
    %302 = vector.load %arg9[%c1_506, %c5_507, %c1_508, %c0_509] : memref<2x10x10x64xf32, #tpu.memory_space<vmem>>, vector<1x1x8x64xf32>
    %303 = vector.shape_cast %302 : vector<1x1x8x64xf32> to vector<8x64xf32>
    %c96_510 = arith.constant 96 : index
    %c256_511 = arith.constant 256 : index
    %304 = vector.load %arg10[%c96_510, %c256_511] : memref<128x576xf32, #tpu.memory_space<vmem>>, vector<8x64xf32>
    tpu.vector_store %arg10[%c96_510, %c256_511], %303 {strides = array<i32>} : memref<128x576xf32, #tpu.memory_space<vmem>>, vector<8x64xf32>,
    %c1_512 = arith.constant 1 : index
    %c6_513 = arith.constant 6 : index
    %c1_514 = arith.constant 1 : index
    %c0_515 = arith.constant 0 : index
    %305 = vector.load %arg9[%c1_512, %c6_513, %c1_514, %c0_515] : memref<2x10x10x64xf32, #tpu.memory_space<vmem>>, vector<1x1x8x64xf32>
    %306 = vector.shape_cast %305 : vector<1x1x8x64xf32> to vector<8x64xf32>
    %c104_516 = arith.constant 104 : index
    %c256_517 = arith.constant 256 : index
    %307 = vector.load %arg10[%c104_516, %c256_517] : memref<128x576xf32, #tpu.memory_space<vmem>>, vector<8x64xf32>
    tpu.vector_store %arg10[%c104_516, %c256_517], %306 {strides = array<i32>} : memref<128x576xf32, #tpu.memory_space<vmem>>, vector<8x64xf32>,
    %c1_518 = arith.constant 1 : index
    %c7_519 = arith.constant 7 : index
    %c1_520 = arith.constant 1 : index
    %c0_521 = arith.constant 0 : index
    %308 = vector.load %arg9[%c1_518, %c7_519, %c1_520, %c0_521] : memref<2x10x10x64xf32, #tpu.memory_space<vmem>>, vector<1x1x8x64xf32>
    %309 = vector.shape_cast %308 : vector<1x1x8x64xf32> to vector<8x64xf32>
    %c112_522 = arith.constant 112 : index
    %c256_523 = arith.constant 256 : index
    %310 = vector.load %arg10[%c112_522, %c256_523] : memref<128x576xf32, #tpu.memory_space<vmem>>, vector<8x64xf32>
    tpu.vector_store %arg10[%c112_522, %c256_523], %309 {strides = array<i32>} : memref<128x576xf32, #tpu.memory_space<vmem>>, vector<8x64xf32>,
    %c1_524 = arith.constant 1 : index
    %c8_525 = arith.constant 8 : index
    %c1_526 = arith.constant 1 : index
    %c0_527 = arith.constant 0 : index
    %311 = vector.load %arg9[%c1_524, %c8_525, %c1_526, %c0_527] : memref<2x10x10x64xf32, #tpu.memory_space<vmem>>, vector<1x1x8x64xf32>
    %312 = vector.shape_cast %311 : vector<1x1x8x64xf32> to vector<8x64xf32>
    %c120_528 = arith.constant 120 : index
    %c256_529 = arith.constant 256 : index
    %313 = vector.load %arg10[%c120_528, %c256_529] : memref<128x576xf32, #tpu.memory_space<vmem>>, vector<8x64xf32>
    tpu.vector_store %arg10[%c120_528, %c256_529], %312 {strides = array<i32>} : memref<128x576xf32, #tpu.memory_space<vmem>>, vector<8x64xf32>,
    %c0_530 = arith.constant 0 : index
    %c1_531 = arith.constant 1 : index
    %c2_532 = arith.constant 2 : index
    %c0_533 = arith.constant 0 : index
    %314 = vector.load %arg9[%c0_530, %c1_531, %c2_532, %c0_533] : memref<2x10x10x64xf32, #tpu.memory_space<vmem>>, vector<1x1x8x64xf32>
    %315 = vector.shape_cast %314 : vector<1x1x8x64xf32> to vector<8x64xf32>
    %c0_534 = arith.constant 0 : index
    %c320 = arith.constant 320 : index
    %316 = vector.load %arg10[%c0_534, %c320] : memref<128x576xf32, #tpu.memory_space<vmem>>, vector<8x64xf32>
    tpu.vector_store %arg10[%c0_534, %c320], %315 {strides = array<i32>} : memref<128x576xf32, #tpu.memory_space<vmem>>, vector<8x64xf32>,
    %c0_535 = arith.constant 0 : index
    %c2_536 = arith.constant 2 : index
    %c2_537 = arith.constant 2 : index
    %c0_538 = arith.constant 0 : index
    %317 = vector.load %arg9[%c0_535, %c2_536, %c2_537, %c0_538] : memref<2x10x10x64xf32, #tpu.memory_space<vmem>>, vector<1x1x8x64xf32>
    %318 = vector.shape_cast %317 : vector<1x1x8x64xf32> to vector<8x64xf32>
    %c8_539 = arith.constant 8 : index
    %c320_540 = arith.constant 320 : index
    %319 = vector.load %arg10[%c8_539, %c320_540] : memref<128x576xf32, #tpu.memory_space<vmem>>, vector<8x64xf32>
    tpu.vector_store %arg10[%c8_539, %c320_540], %318 {strides = array<i32>} : memref<128x576xf32, #tpu.memory_space<vmem>>, vector<8x64xf32>,
    %c0_541 = arith.constant 0 : index
    %c3_542 = arith.constant 3 : index
    %c2_543 = arith.constant 2 : index
    %c0_544 = arith.constant 0 : index
    %320 = vector.load %arg9[%c0_541, %c3_542, %c2_543, %c0_544] : memref<2x10x10x64xf32, #tpu.memory_space<vmem>>, vector<1x1x8x64xf32>
    %321 = vector.shape_cast %320 : vector<1x1x8x64xf32> to vector<8x64xf32>
    %c16_545 = arith.constant 16 : index
    %c320_546 = arith.constant 320 : index
    %322 = vector.load %arg10[%c16_545, %c320_546] : memref<128x576xf32, #tpu.memory_space<vmem>>, vector<8x64xf32>
    tpu.vector_store %arg10[%c16_545, %c320_546], %321 {strides = array<i32>} : memref<128x576xf32, #tpu.memory_space<vmem>>, vector<8x64xf32>,
    %c0_547 = arith.constant 0 : index
    %c4_548 = arith.constant 4 : index
    %c2_549 = arith.constant 2 : index
    %c0_550 = arith.constant 0 : index
    %323 = vector.load %arg9[%c0_547, %c4_548, %c2_549, %c0_550] : memref<2x10x10x64xf32, #tpu.memory_space<vmem>>, vector<1x1x8x64xf32>
    %324 = vector.shape_cast %323 : vector<1x1x8x64xf32> to vector<8x64xf32>
    %c24_551 = arith.constant 24 : index
    %c320_552 = arith.constant 320 : index
    %325 = vector.load %arg10[%c24_551, %c320_552] : memref<128x576xf32, #tpu.memory_space<vmem>>, vector<8x64xf32>
    tpu.vector_store %arg10[%c24_551, %c320_552], %324 {strides = array<i32>} : memref<128x576xf32, #tpu.memory_space<vmem>>, vector<8x64xf32>,
    %c0_553 = arith.constant 0 : index
    %c5_554 = arith.constant 5 : index
    %c2_555 = arith.constant 2 : index
    %c0_556 = arith.constant 0 : index
    %326 = vector.load %arg9[%c0_553, %c5_554, %c2_555, %c0_556] : memref<2x10x10x64xf32, #tpu.memory_space<vmem>>, vector<1x1x8x64xf32>
    %327 = vector.shape_cast %326 : vector<1x1x8x64xf32> to vector<8x64xf32>
    %c32_557 = arith.constant 32 : index
    %c320_558 = arith.constant 320 : index
    %328 = vector.load %arg10[%c32_557, %c320_558] : memref<128x576xf32, #tpu.memory_space<vmem>>, vector<8x64xf32>
    tpu.vector_store %arg10[%c32_557, %c320_558], %327 {strides = array<i32>} : memref<128x576xf32, #tpu.memory_space<vmem>>, vector<8x64xf32>,
    %c0_559 = arith.constant 0 : index
    %c6_560 = arith.constant 6 : index
    %c2_561 = arith.constant 2 : index
    %c0_562 = arith.constant 0 : index
    %329 = vector.load %arg9[%c0_559, %c6_560, %c2_561, %c0_562] : memref<2x10x10x64xf32, #tpu.memory_space<vmem>>, vector<1x1x8x64xf32>
    %330 = vector.shape_cast %329 : vector<1x1x8x64xf32> to vector<8x64xf32>
    %c40_563 = arith.constant 40 : index
    %c320_564 = arith.constant 320 : index
    %331 = vector.load %arg10[%c40_563, %c320_564] : memref<128x576xf32, #tpu.memory_space<vmem>>, vector<8x64xf32>
    tpu.vector_store %arg10[%c40_563, %c320_564], %330 {strides = array<i32>} : memref<128x576xf32, #tpu.memory_space<vmem>>, vector<8x64xf32>,
    %c0_565 = arith.constant 0 : index
    %c7_566 = arith.constant 7 : index
    %c2_567 = arith.constant 2 : index
    %c0_568 = arith.constant 0 : index
    %332 = vector.load %arg9[%c0_565, %c7_566, %c2_567, %c0_568] : memref<2x10x10x64xf32, #tpu.memory_space<vmem>>, vector<1x1x8x64xf32>
    %333 = vector.shape_cast %332 : vector<1x1x8x64xf32> to vector<8x64xf32>
    %c48_569 = arith.constant 48 : index
    %c320_570 = arith.constant 320 : index
    %334 = vector.load %arg10[%c48_569, %c320_570] : memref<128x576xf32, #tpu.memory_space<vmem>>, vector<8x64xf32>
    tpu.vector_store %arg10[%c48_569, %c320_570], %333 {strides = array<i32>} : memref<128x576xf32, #tpu.memory_space<vmem>>, vector<8x64xf32>,
    %c0_571 = arith.constant 0 : index
    %c8_572 = arith.constant 8 : index
    %c2_573 = arith.constant 2 : index
    %c0_574 = arith.constant 0 : index
    %335 = vector.load %arg9[%c0_571, %c8_572, %c2_573, %c0_574] : memref<2x10x10x64xf32, #tpu.memory_space<vmem>>, vector<1x1x8x64xf32>
    %336 = vector.shape_cast %335 : vector<1x1x8x64xf32> to vector<8x64xf32>
    %c56_575 = arith.constant 56 : index
    %c320_576 = arith.constant 320 : index
    %337 = vector.load %arg10[%c56_575, %c320_576] : memref<128x576xf32, #tpu.memory_space<vmem>>, vector<8x64xf32>
    tpu.vector_store %arg10[%c56_575, %c320_576], %336 {strides = array<i32>} : memref<128x576xf32, #tpu.memory_space<vmem>>, vector<8x64xf32>,
    %c1_577 = arith.constant 1 : index
    %c1_578 = arith.constant 1 : index
    %c2_579 = arith.constant 2 : index
    %c0_580 = arith.constant 0 : index
    %338 = vector.load %arg9[%c1_577, %c1_578, %c2_579, %c0_580] : memref<2x10x10x64xf32, #tpu.memory_space<vmem>>, vector<1x1x8x64xf32>
    %339 = vector.shape_cast %338 : vector<1x1x8x64xf32> to vector<8x64xf32>
    %c64_581 = arith.constant 64 : index
    %c320_582 = arith.constant 320 : index
    %340 = vector.load %arg10[%c64_581, %c320_582] : memref<128x576xf32, #tpu.memory_space<vmem>>, vector<8x64xf32>
    tpu.vector_store %arg10[%c64_581, %c320_582], %339 {strides = array<i32>} : memref<128x576xf32, #tpu.memory_space<vmem>>, vector<8x64xf32>,
    %c1_583 = arith.constant 1 : index
    %c2_584 = arith.constant 2 : index
    %c2_585 = arith.constant 2 : index
    %c0_586 = arith.constant 0 : index
    %341 = vector.load %arg9[%c1_583, %c2_584, %c2_585, %c0_586] : memref<2x10x10x64xf32, #tpu.memory_space<vmem>>, vector<1x1x8x64xf32>
    %342 = vector.shape_cast %341 : vector<1x1x8x64xf32> to vector<8x64xf32>
    %c72_587 = arith.constant 72 : index
    %c320_588 = arith.constant 320 : index
    %343 = vector.load %arg10[%c72_587, %c320_588] : memref<128x576xf32, #tpu.memory_space<vmem>>, vector<8x64xf32>
    tpu.vector_store %arg10[%c72_587, %c320_588], %342 {strides = array<i32>} : memref<128x576xf32, #tpu.memory_space<vmem>>, vector<8x64xf32>,
    %c1_589 = arith.constant 1 : index
    %c3_590 = arith.constant 3 : index
    %c2_591 = arith.constant 2 : index
    %c0_592 = arith.constant 0 : index
    %344 = vector.load %arg9[%c1_589, %c3_590, %c2_591, %c0_592] : memref<2x10x10x64xf32, #tpu.memory_space<vmem>>, vector<1x1x8x64xf32>
    %345 = vector.shape_cast %344 : vector<1x1x8x64xf32> to vector<8x64xf32>
    %c80_593 = arith.constant 80 : index
    %c320_594 = arith.constant 320 : index
    %346 = vector.load %arg10[%c80_593, %c320_594] : memref<128x576xf32, #tpu.memory_space<vmem>>, vector<8x64xf32>
    tpu.vector_store %arg10[%c80_593, %c320_594], %345 {strides = array<i32>} : memref<128x576xf32, #tpu.memory_space<vmem>>, vector<8x64xf32>,
    %c1_595 = arith.constant 1 : index
    %c4_596 = arith.constant 4 : index
    %c2_597 = arith.constant 2 : index
    %c0_598 = arith.constant 0 : index
    %347 = vector.load %arg9[%c1_595, %c4_596, %c2_597, %c0_598] : memref<2x10x10x64xf32, #tpu.memory_space<vmem>>, vector<1x1x8x64xf32>
    %348 = vector.shape_cast %347 : vector<1x1x8x64xf32> to vector<8x64xf32>
    %c88_599 = arith.constant 88 : index
    %c320_600 = arith.constant 320 : index
    %349 = vector.load %arg10[%c88_599, %c320_600] : memref<128x576xf32, #tpu.memory_space<vmem>>, vector<8x64xf32>
    tpu.vector_store %arg10[%c88_599, %c320_600], %348 {strides = array<i32>} : memref<128x576xf32, #tpu.memory_space<vmem>>, vector<8x64xf32>,
    %c1_601 = arith.constant 1 : index
    %c5_602 = arith.constant 5 : index
    %c2_603 = arith.constant 2 : index
    %c0_604 = arith.constant 0 : index
    %350 = vector.load %arg9[%c1_601, %c5_602, %c2_603, %c0_604] : memref<2x10x10x64xf32, #tpu.memory_space<vmem>>, vector<1x1x8x64xf32>
    %351 = vector.shape_cast %350 : vector<1x1x8x64xf32> to vector<8x64xf32>
    %c96_605 = arith.constant 96 : index
    %c320_606 = arith.constant 320 : index
    %352 = vector.load %arg10[%c96_605, %c320_606] : memref<128x576xf32, #tpu.memory_space<vmem>>, vector<8x64xf32>
    tpu.vector_store %arg10[%c96_605, %c320_606], %351 {strides = array<i32>} : memref<128x576xf32, #tpu.memory_space<vmem>>, vector<8x64xf32>,
    %c1_607 = arith.constant 1 : index
    %c6_608 = arith.constant 6 : index
    %c2_609 = arith.constant 2 : index
    %c0_610 = arith.constant 0 : index
    %353 = vector.load %arg9[%c1_607, %c6_608, %c2_609, %c0_610] : memref<2x10x10x64xf32, #tpu.memory_space<vmem>>, vector<1x1x8x64xf32>
    %354 = vector.shape_cast %353 : vector<1x1x8x64xf32> to vector<8x64xf32>
    %c104_611 = arith.constant 104 : index
    %c320_612 = arith.constant 320 : index
    %355 = vector.load %arg10[%c104_611, %c320_612] : memref<128x576xf32, #tpu.memory_space<vmem>>, vector<8x64xf32>
    tpu.vector_store %arg10[%c104_611, %c320_612], %354 {strides = array<i32>} : memref<128x576xf32, #tpu.memory_space<vmem>>, vector<8x64xf32>,
    %c1_613 = arith.constant 1 : index
    %c7_614 = arith.constant 7 : index
    %c2_615 = arith.constant 2 : index
    %c0_616 = arith.constant 0 : index
    %356 = vector.load %arg9[%c1_613, %c7_614, %c2_615, %c0_616] : memref<2x10x10x64xf32, #tpu.memory_space<vmem>>, vector<1x1x8x64xf32>
    %357 = vector.shape_cast %356 : vector<1x1x8x64xf32> to vector<8x64xf32>
    %c112_617 = arith.constant 112 : index
    %c320_618 = arith.constant 320 : index
    %358 = vector.load %arg10[%c112_617, %c320_618] : memref<128x576xf32, #tpu.memory_space<vmem>>, vector<8x64xf32>
    tpu.vector_store %arg10[%c112_617, %c320_618], %357 {strides = array<i32>} : memref<128x576xf32, #tpu.memory_space<vmem>>, vector<8x64xf32>,
    %c1_619 = arith.constant 1 : index
    %c8_620 = arith.constant 8 : index
    %c2_621 = arith.constant 2 : index
    %c0_622 = arith.constant 0 : index
    %359 = vector.load %arg9[%c1_619, %c8_620, %c2_621, %c0_622] : memref<2x10x10x64xf32, #tpu.memory_space<vmem>>, vector<1x1x8x64xf32>
    %360 = vector.shape_cast %359 : vector<1x1x8x64xf32> to vector<8x64xf32>
    %c120_623 = arith.constant 120 : index
    %c320_624 = arith.constant 320 : index
    %361 = vector.load %arg10[%c120_623, %c320_624] : memref<128x576xf32, #tpu.memory_space<vmem>>, vector<8x64xf32>
    tpu.vector_store %arg10[%c120_623, %c320_624], %360 {strides = array<i32>} : memref<128x576xf32, #tpu.memory_space<vmem>>, vector<8x64xf32>,
    %c0_625 = arith.constant 0 : index
    %c2_626 = arith.constant 2 : index
    %c0_627 = arith.constant 0 : index
    %c0_628 = arith.constant 0 : index
    %362 = vector.load %arg9[%c0_625, %c2_626, %c0_627, %c0_628] : memref<2x10x10x64xf32, #tpu.memory_space<vmem>>, vector<1x1x8x64xf32>
    %363 = vector.shape_cast %362 : vector<1x1x8x64xf32> to vector<8x64xf32>
    %c0_629 = arith.constant 0 : index
    %c384 = arith.constant 384 : index
    %364 = vector.load %arg10[%c0_629, %c384] : memref<128x576xf32, #tpu.memory_space<vmem>>, vector<8x64xf32>
    tpu.vector_store %arg10[%c0_629, %c384], %363 {strides = array<i32>} : memref<128x576xf32, #tpu.memory_space<vmem>>, vector<8x64xf32>,
    %c0_630 = arith.constant 0 : index
    %c3_631 = arith.constant 3 : index
    %c0_632 = arith.constant 0 : index
    %c0_633 = arith.constant 0 : index
    %365 = vector.load %arg9[%c0_630, %c3_631, %c0_632, %c0_633] : memref<2x10x10x64xf32, #tpu.memory_space<vmem>>, vector<1x1x8x64xf32>
    %366 = vector.shape_cast %365 : vector<1x1x8x64xf32> to vector<8x64xf32>
    %c8_634 = arith.constant 8 : index
    %c384_635 = arith.constant 384 : index
    %367 = vector.load %arg10[%c8_634, %c384_635] : memref<128x576xf32, #tpu.memory_space<vmem>>, vector<8x64xf32>
    tpu.vector_store %arg10[%c8_634, %c384_635], %366 {strides = array<i32>} : memref<128x576xf32, #tpu.memory_space<vmem>>, vector<8x64xf32>,
    %c0_636 = arith.constant 0 : index
    %c4_637 = arith.constant 4 : index
    %c0_638 = arith.constant 0 : index
    %c0_639 = arith.constant 0 : index
    %368 = vector.load %arg9[%c0_636, %c4_637, %c0_638, %c0_639] : memref<2x10x10x64xf32, #tpu.memory_space<vmem>>, vector<1x1x8x64xf32>
    %369 = vector.shape_cast %368 : vector<1x1x8x64xf32> to vector<8x64xf32>
    %c16_640 = arith.constant 16 : index
    %c384_641 = arith.constant 384 : index
    %370 = vector.load %arg10[%c16_640, %c384_641] : memref<128x576xf32, #tpu.memory_space<vmem>>, vector<8x64xf32>
    tpu.vector_store %arg10[%c16_640, %c384_641], %369 {strides = array<i32>} : memref<128x576xf32, #tpu.memory_space<vmem>>, vector<8x64xf32>,
    %c0_642 = arith.constant 0 : index
    %c5_643 = arith.constant 5 : index
    %c0_644 = arith.constant 0 : index
    %c0_645 = arith.constant 0 : index
    %371 = vector.load %arg9[%c0_642, %c5_643, %c0_644, %c0_645] : memref<2x10x10x64xf32, #tpu.memory_space<vmem>>, vector<1x1x8x64xf32>
    %372 = vector.shape_cast %371 : vector<1x1x8x64xf32> to vector<8x64xf32>
    %c24_646 = arith.constant 24 : index
    %c384_647 = arith.constant 384 : index
    %373 = vector.load %arg10[%c24_646, %c384_647] : memref<128x576xf32, #tpu.memory_space<vmem>>, vector<8x64xf32>
    tpu.vector_store %arg10[%c24_646, %c384_647], %372 {strides = array<i32>} : memref<128x576xf32, #tpu.memory_space<vmem>>, vector<8x64xf32>,
    %c0_648 = arith.constant 0 : index
    %c6_649 = arith.constant 6 : index
    %c0_650 = arith.constant 0 : index
    %c0_651 = arith.constant 0 : index
    %374 = vector.load %arg9[%c0_648, %c6_649, %c0_650, %c0_651] : memref<2x10x10x64xf32, #tpu.memory_space<vmem>>, vector<1x1x8x64xf32>
    %375 = vector.shape_cast %374 : vector<1x1x8x64xf32> to vector<8x64xf32>
    %c32_652 = arith.constant 32 : index
    %c384_653 = arith.constant 384 : index
    %376 = vector.load %arg10[%c32_652, %c384_653] : memref<128x576xf32, #tpu.memory_space<vmem>>, vector<8x64xf32>
    tpu.vector_store %arg10[%c32_652, %c384_653], %375 {strides = array<i32>} : memref<128x576xf32, #tpu.memory_space<vmem>>, vector<8x64xf32>,
    %c0_654 = arith.constant 0 : index
    %c7_655 = arith.constant 7 : index
    %c0_656 = arith.constant 0 : index
    %c0_657 = arith.constant 0 : index
    %377 = vector.load %arg9[%c0_654, %c7_655, %c0_656, %c0_657] : memref<2x10x10x64xf32, #tpu.memory_space<vmem>>, vector<1x1x8x64xf32>
    %378 = vector.shape_cast %377 : vector<1x1x8x64xf32> to vector<8x64xf32>
    %c40_658 = arith.constant 40 : index
    %c384_659 = arith.constant 384 : index
    %379 = vector.load %arg10[%c40_658, %c384_659] : memref<128x576xf32, #tpu.memory_space<vmem>>, vector<8x64xf32>
    tpu.vector_store %arg10[%c40_658, %c384_659], %378 {strides = array<i32>} : memref<128x576xf32, #tpu.memory_space<vmem>>, vector<8x64xf32>,
    %c0_660 = arith.constant 0 : index
    %c8_661 = arith.constant 8 : index
    %c0_662 = arith.constant 0 : index
    %c0_663 = arith.constant 0 : index
    %380 = vector.load %arg9[%c0_660, %c8_661, %c0_662, %c0_663] : memref<2x10x10x64xf32, #tpu.memory_space<vmem>>, vector<1x1x8x64xf32>
    %381 = vector.shape_cast %380 : vector<1x1x8x64xf32> to vector<8x64xf32>
    %c48_664 = arith.constant 48 : index
    %c384_665 = arith.constant 384 : index
    %382 = vector.load %arg10[%c48_664, %c384_665] : memref<128x576xf32, #tpu.memory_space<vmem>>, vector<8x64xf32>
    tpu.vector_store %arg10[%c48_664, %c384_665], %381 {strides = array<i32>} : memref<128x576xf32, #tpu.memory_space<vmem>>, vector<8x64xf32>,
    %c0_666 = arith.constant 0 : index
    %c9 = arith.constant 9 : index
    %c0_667 = arith.constant 0 : index
    %c0_668 = arith.constant 0 : index
    %383 = vector.load %arg9[%c0_666, %c9, %c0_667, %c0_668] : memref<2x10x10x64xf32, #tpu.memory_space<vmem>>, vector<1x1x8x64xf32>
    %384 = vector.shape_cast %383 : vector<1x1x8x64xf32> to vector<8x64xf32>
    %c56_669 = arith.constant 56 : index
    %c384_670 = arith.constant 384 : index
    %385 = vector.load %arg10[%c56_669, %c384_670] : memref<128x576xf32, #tpu.memory_space<vmem>>, vector<8x64xf32>
    tpu.vector_store %arg10[%c56_669, %c384_670], %384 {strides = array<i32>} : memref<128x576xf32, #tpu.memory_space<vmem>>, vector<8x64xf32>,
    %c1_671 = arith.constant 1 : index
    %c2_672 = arith.constant 2 : index
    %c0_673 = arith.constant 0 : index
    %c0_674 = arith.constant 0 : index
    %386 = vector.load %arg9[%c1_671, %c2_672, %c0_673, %c0_674] : memref<2x10x10x64xf32, #tpu.memory_space<vmem>>, vector<1x1x8x64xf32>
    %387 = vector.shape_cast %386 : vector<1x1x8x64xf32> to vector<8x64xf32>
    %c64_675 = arith.constant 64 : index
    %c384_676 = arith.constant 384 : index
    %388 = vector.load %arg10[%c64_675, %c384_676] : memref<128x576xf32, #tpu.memory_space<vmem>>, vector<8x64xf32>
    tpu.vector_store %arg10[%c64_675, %c384_676], %387 {strides = array<i32>} : memref<128x576xf32, #tpu.memory_space<vmem>>, vector<8x64xf32>,
    %c1_677 = arith.constant 1 : index
    %c3_678 = arith.constant 3 : index
    %c0_679 = arith.constant 0 : index
    %c0_680 = arith.constant 0 : index
    %389 = vector.load %arg9[%c1_677, %c3_678, %c0_679, %c0_680] : memref<2x10x10x64xf32, #tpu.memory_space<vmem>>, vector<1x1x8x64xf32>
    %390 = vector.shape_cast %389 : vector<1x1x8x64xf32> to vector<8x64xf32>
    %c72_681 = arith.constant 72 : index
    %c384_682 = arith.constant 384 : index
    %391 = vector.load %arg10[%c72_681, %c384_682] : memref<128x576xf32, #tpu.memory_space<vmem>>, vector<8x64xf32>
    tpu.vector_store %arg10[%c72_681, %c384_682], %390 {strides = array<i32>} : memref<128x576xf32, #tpu.memory_space<vmem>>, vector<8x64xf32>,
    %c1_683 = arith.constant 1 : index
    %c4_684 = arith.constant 4 : index
    %c0_685 = arith.constant 0 : index
    %c0_686 = arith.constant 0 : index
    %392 = vector.load %arg9[%c1_683, %c4_684, %c0_685, %c0_686] : memref<2x10x10x64xf32, #tpu.memory_space<vmem>>, vector<1x1x8x64xf32>
    %393 = vector.shape_cast %392 : vector<1x1x8x64xf32> to vector<8x64xf32>
    %c80_687 = arith.constant 80 : index
    %c384_688 = arith.constant 384 : index
    %394 = vector.load %arg10[%c80_687, %c384_688] : memref<128x576xf32, #tpu.memory_space<vmem>>, vector<8x64xf32>
    tpu.vector_store %arg10[%c80_687, %c384_688], %393 {strides = array<i32>} : memref<128x576xf32, #tpu.memory_space<vmem>>, vector<8x64xf32>,
    %c1_689 = arith.constant 1 : index
    %c5_690 = arith.constant 5 : index
    %c0_691 = arith.constant 0 : index
    %c0_692 = arith.constant 0 : index
    %395 = vector.load %arg9[%c1_689, %c5_690, %c0_691, %c0_692] : memref<2x10x10x64xf32, #tpu.memory_space<vmem>>, vector<1x1x8x64xf32>
    %396 = vector.shape_cast %395 : vector<1x1x8x64xf32> to vector<8x64xf32>
    %c88_693 = arith.constant 88 : index
    %c384_694 = arith.constant 384 : index
    %397 = vector.load %arg10[%c88_693, %c384_694] : memref<128x576xf32, #tpu.memory_space<vmem>>, vector<8x64xf32>
    tpu.vector_store %arg10[%c88_693, %c384_694], %396 {strides = array<i32>} : memref<128x576xf32, #tpu.memory_space<vmem>>, vector<8x64xf32>,
    %c1_695 = arith.constant 1 : index
    %c6_696 = arith.constant 6 : index
    %c0_697 = arith.constant 0 : index
    %c0_698 = arith.constant 0 : index
    %398 = vector.load %arg9[%c1_695, %c6_696, %c0_697, %c0_698] : memref<2x10x10x64xf32, #tpu.memory_space<vmem>>, vector<1x1x8x64xf32>
    %399 = vector.shape_cast %398 : vector<1x1x8x64xf32> to vector<8x64xf32>
    %c96_699 = arith.constant 96 : index
    %c384_700 = arith.constant 384 : index
    %400 = vector.load %arg10[%c96_699, %c384_700] : memref<128x576xf32, #tpu.memory_space<vmem>>, vector<8x64xf32>
    tpu.vector_store %arg10[%c96_699, %c384_700], %399 {strides = array<i32>} : memref<128x576xf32, #tpu.memory_space<vmem>>, vector<8x64xf32>,
    %c1_701 = arith.constant 1 : index
    %c7_702 = arith.constant 7 : index
    %c0_703 = arith.constant 0 : index
    %c0_704 = arith.constant 0 : index
    %401 = vector.load %arg9[%c1_701, %c7_702, %c0_703, %c0_704] : memref<2x10x10x64xf32, #tpu.memory_space<vmem>>, vector<1x1x8x64xf32>
    %402 = vector.shape_cast %401 : vector<1x1x8x64xf32> to vector<8x64xf32>
    %c104_705 = arith.constant 104 : index
    %c384_706 = arith.constant 384 : index
    %403 = vector.load %arg10[%c104_705, %c384_706] : memref<128x576xf32, #tpu.memory_space<vmem>>, vector<8x64xf32>
    tpu.vector_store %arg10[%c104_705, %c384_706], %402 {strides = array<i32>} : memref<128x576xf32, #tpu.memory_space<vmem>>, vector<8x64xf32>,
    %c1_707 = arith.constant 1 : index
    %c8_708 = arith.constant 8 : index
    %c0_709 = arith.constant 0 : index
    %c0_710 = arith.constant 0 : index
    %404 = vector.load %arg9[%c1_707, %c8_708, %c0_709, %c0_710] : memref<2x10x10x64xf32, #tpu.memory_space<vmem>>, vector<1x1x8x64xf32>
    %405 = vector.shape_cast %404 : vector<1x1x8x64xf32> to vector<8x64xf32>
    %c112_711 = arith.constant 112 : index
    %c384_712 = arith.constant 384 : index
    %406 = vector.load %arg10[%c112_711, %c384_712] : memref<128x576xf32, #tpu.memory_space<vmem>>, vector<8x64xf32>
    tpu.vector_store %arg10[%c112_711, %c384_712], %405 {strides = array<i32>} : memref<128x576xf32, #tpu.memory_space<vmem>>, vector<8x64xf32>,
    %c1_713 = arith.constant 1 : index
    %c9_714 = arith.constant 9 : index
    %c0_715 = arith.constant 0 : index
    %c0_716 = arith.constant 0 : index
    %407 = vector.load %arg9[%c1_713, %c9_714, %c0_715, %c0_716] : memref<2x10x10x64xf32, #tpu.memory_space<vmem>>, vector<1x1x8x64xf32>
    %408 = vector.shape_cast %407 : vector<1x1x8x64xf32> to vector<8x64xf32>
    %c120_717 = arith.constant 120 : index
    %c384_718 = arith.constant 384 : index
    %409 = vector.load %arg10[%c120_717, %c384_718] : memref<128x576xf32, #tpu.memory_space<vmem>>, vector<8x64xf32>
    tpu.vector_store %arg10[%c120_717, %c384_718], %408 {strides = array<i32>} : memref<128x576xf32, #tpu.memory_space<vmem>>, vector<8x64xf32>,
    %c0_719 = arith.constant 0 : index
    %c2_720 = arith.constant 2 : index
    %c1_721 = arith.constant 1 : index
    %c0_722 = arith.constant 0 : index
    %410 = vector.load %arg9[%c0_719, %c2_720, %c1_721, %c0_722] : memref<2x10x10x64xf32, #tpu.memory_space<vmem>>, vector<1x1x8x64xf32>
    %411 = vector.shape_cast %410 : vector<1x1x8x64xf32> to vector<8x64xf32>
    %c0_723 = arith.constant 0 : index
    %c448 = arith.constant 448 : index
    %412 = vector.load %arg10[%c0_723, %c448] : memref<128x576xf32, #tpu.memory_space<vmem>>, vector<8x64xf32>
    tpu.vector_store %arg10[%c0_723, %c448], %411 {strides = array<i32>} : memref<128x576xf32, #tpu.memory_space<vmem>>, vector<8x64xf32>,
    %c0_724 = arith.constant 0 : index
    %c3_725 = arith.constant 3 : index
    %c1_726 = arith.constant 1 : index
    %c0_727 = arith.constant 0 : index
    %413 = vector.load %arg9[%c0_724, %c3_725, %c1_726, %c0_727] : memref<2x10x10x64xf32, #tpu.memory_space<vmem>>, vector<1x1x8x64xf32>
    %414 = vector.shape_cast %413 : vector<1x1x8x64xf32> to vector<8x64xf32>
    %c8_728 = arith.constant 8 : index
    %c448_729 = arith.constant 448 : index
    %415 = vector.load %arg10[%c8_728, %c448_729] : memref<128x576xf32, #tpu.memory_space<vmem>>, vector<8x64xf32>
    tpu.vector_store %arg10[%c8_728, %c448_729], %414 {strides = array<i32>} : memref<128x576xf32, #tpu.memory_space<vmem>>, vector<8x64xf32>,
    %c0_730 = arith.constant 0 : index
    %c4_731 = arith.constant 4 : index
    %c1_732 = arith.constant 1 : index
    %c0_733 = arith.constant 0 : index
    %416 = vector.load %arg9[%c0_730, %c4_731, %c1_732, %c0_733] : memref<2x10x10x64xf32, #tpu.memory_space<vmem>>, vector<1x1x8x64xf32>
    %417 = vector.shape_cast %416 : vector<1x1x8x64xf32> to vector<8x64xf32>
    %c16_734 = arith.constant 16 : index
    %c448_735 = arith.constant 448 : index
    %418 = vector.load %arg10[%c16_734, %c448_735] : memref<128x576xf32, #tpu.memory_space<vmem>>, vector<8x64xf32>
    tpu.vector_store %arg10[%c16_734, %c448_735], %417 {strides = array<i32>} : memref<128x576xf32, #tpu.memory_space<vmem>>, vector<8x64xf32>,
    %c0_736 = arith.constant 0 : index
    %c5_737 = arith.constant 5 : index
    %c1_738 = arith.constant 1 : index
    %c0_739 = arith.constant 0 : index
    %419 = vector.load %arg9[%c0_736, %c5_737, %c1_738, %c0_739] : memref<2x10x10x64xf32, #tpu.memory_space<vmem>>, vector<1x1x8x64xf32>
    %420 = vector.shape_cast %419 : vector<1x1x8x64xf32> to vector<8x64xf32>
    %c24_740 = arith.constant 24 : index
    %c448_741 = arith.constant 448 : index
    %421 = vector.load %arg10[%c24_740, %c448_741] : memref<128x576xf32, #tpu.memory_space<vmem>>, vector<8x64xf32>
    tpu.vector_store %arg10[%c24_740, %c448_741], %420 {strides = array<i32>} : memref<128x576xf32, #tpu.memory_space<vmem>>, vector<8x64xf32>,
    %c0_742 = arith.constant 0 : index
    %c6_743 = arith.constant 6 : index
    %c1_744 = arith.constant 1 : index
    %c0_745 = arith.constant 0 : index
    %422 = vector.load %arg9[%c0_742, %c6_743, %c1_744, %c0_745] : memref<2x10x10x64xf32, #tpu.memory_space<vmem>>, vector<1x1x8x64xf32>
    %423 = vector.shape_cast %422 : vector<1x1x8x64xf32> to vector<8x64xf32>
    %c32_746 = arith.constant 32 : index
    %c448_747 = arith.constant 448 : index
    %424 = vector.load %arg10[%c32_746, %c448_747] : memref<128x576xf32, #tpu.memory_space<vmem>>, vector<8x64xf32>
    tpu.vector_store %arg10[%c32_746, %c448_747], %423 {strides = array<i32>} : memref<128x576xf32, #tpu.memory_space<vmem>>, vector<8x64xf32>,
    %c0_748 = arith.constant 0 : index
    %c7_749 = arith.constant 7 : index
    %c1_750 = arith.constant 1 : index
    %c0_751 = arith.constant 0 : index
    %425 = vector.load %arg9[%c0_748, %c7_749, %c1_750, %c0_751] : memref<2x10x10x64xf32, #tpu.memory_space<vmem>>, vector<1x1x8x64xf32>
    %426 = vector.shape_cast %425 : vector<1x1x8x64xf32> to vector<8x64xf32>
    %c40_752 = arith.constant 40 : index
    %c448_753 = arith.constant 448 : index
    %427 = vector.load %arg10[%c40_752, %c448_753] : memref<128x576xf32, #tpu.memory_space<vmem>>, vector<8x64xf32>
    tpu.vector_store %arg10[%c40_752, %c448_753], %426 {strides = array<i32>} : memref<128x576xf32, #tpu.memory_space<vmem>>, vector<8x64xf32>,
    %c0_754 = arith.constant 0 : index
    %c8_755 = arith.constant 8 : index
    %c1_756 = arith.constant 1 : index
    %c0_757 = arith.constant 0 : index
    %428 = vector.load %arg9[%c0_754, %c8_755, %c1_756, %c0_757] : memref<2x10x10x64xf32, #tpu.memory_space<vmem>>, vector<1x1x8x64xf32>
    %429 = vector.shape_cast %428 : vector<1x1x8x64xf32> to vector<8x64xf32>
    %c48_758 = arith.constant 48 : index
    %c448_759 = arith.constant 448 : index
    %430 = vector.load %arg10[%c48_758, %c448_759] : memref<128x576xf32, #tpu.memory_space<vmem>>, vector<8x64xf32>
    tpu.vector_store %arg10[%c48_758, %c448_759], %429 {strides = array<i32>} : memref<128x576xf32, #tpu.memory_space<vmem>>, vector<8x64xf32>,
    %c0_760 = arith.constant 0 : index
    %c9_761 = arith.constant 9 : index
    %c1_762 = arith.constant 1 : index
    %c0_763 = arith.constant 0 : index
    %431 = vector.load %arg9[%c0_760, %c9_761, %c1_762, %c0_763] : memref<2x10x10x64xf32, #tpu.memory_space<vmem>>, vector<1x1x8x64xf32>
    %432 = vector.shape_cast %431 : vector<1x1x8x64xf32> to vector<8x64xf32>
    %c56_764 = arith.constant 56 : index
    %c448_765 = arith.constant 448 : index
    %433 = vector.load %arg10[%c56_764, %c448_765] : memref<128x576xf32, #tpu.memory_space<vmem>>, vector<8x64xf32>
    tpu.vector_store %arg10[%c56_764, %c448_765], %432 {strides = array<i32>} : memref<128x576xf32, #tpu.memory_space<vmem>>, vector<8x64xf32>,
    %c1_766 = arith.constant 1 : index
    %c2_767 = arith.constant 2 : index
    %c1_768 = arith.constant 1 : index
    %c0_769 = arith.constant 0 : index
    %434 = vector.load %arg9[%c1_766, %c2_767, %c1_768, %c0_769] : memref<2x10x10x64xf32, #tpu.memory_space<vmem>>, vector<1x1x8x64xf32>
    %435 = vector.shape_cast %434 : vector<1x1x8x64xf32> to vector<8x64xf32>
    %c64_770 = arith.constant 64 : index
    %c448_771 = arith.constant 448 : index
    %436 = vector.load %arg10[%c64_770, %c448_771] : memref<128x576xf32, #tpu.memory_space<vmem>>, vector<8x64xf32>
    tpu.vector_store %arg10[%c64_770, %c448_771], %435 {strides = array<i32>} : memref<128x576xf32, #tpu.memory_space<vmem>>, vector<8x64xf32>,
    %c1_772 = arith.constant 1 : index
    %c3_773 = arith.constant 3 : index
    %c1_774 = arith.constant 1 : index
    %c0_775 = arith.constant 0 : index
    %437 = vector.load %arg9[%c1_772, %c3_773, %c1_774, %c0_775] : memref<2x10x10x64xf32, #tpu.memory_space<vmem>>, vector<1x1x8x64xf32>
    %438 = vector.shape_cast %437 : vector<1x1x8x64xf32> to vector<8x64xf32>
    %c72_776 = arith.constant 72 : index
    %c448_777 = arith.constant 448 : index
    %439 = vector.load %arg10[%c72_776, %c448_777] : memref<128x576xf32, #tpu.memory_space<vmem>>, vector<8x64xf32>
    tpu.vector_store %arg10[%c72_776, %c448_777], %438 {strides = array<i32>} : memref<128x576xf32, #tpu.memory_space<vmem>>, vector<8x64xf32>,
    %c1_778 = arith.constant 1 : index
    %c4_779 = arith.constant 4 : index
    %c1_780 = arith.constant 1 : index
    %c0_781 = arith.constant 0 : index
    %440 = vector.load %arg9[%c1_778, %c4_779, %c1_780, %c0_781] : memref<2x10x10x64xf32, #tpu.memory_space<vmem>>, vector<1x1x8x64xf32>
    %441 = vector.shape_cast %440 : vector<1x1x8x64xf32> to vector<8x64xf32>
    %c80_782 = arith.constant 80 : index
    %c448_783 = arith.constant 448 : index
    %442 = vector.load %arg10[%c80_782, %c448_783] : memref<128x576xf32, #tpu.memory_space<vmem>>, vector<8x64xf32>
    tpu.vector_store %arg10[%c80_782, %c448_783], %441 {strides = array<i32>} : memref<128x576xf32, #tpu.memory_space<vmem>>, vector<8x64xf32>,
    %c1_784 = arith.constant 1 : index
    %c5_785 = arith.constant 5 : index
    %c1_786 = arith.constant 1 : index
    %c0_787 = arith.constant 0 : index
    %443 = vector.load %arg9[%c1_784, %c5_785, %c1_786, %c0_787] : memref<2x10x10x64xf32, #tpu.memory_space<vmem>>, vector<1x1x8x64xf32>
    %444 = vector.shape_cast %443 : vector<1x1x8x64xf32> to vector<8x64xf32>
    %c88_788 = arith.constant 88 : index
    %c448_789 = arith.constant 448 : index
    %445 = vector.load %arg10[%c88_788, %c448_789] : memref<128x576xf32, #tpu.memory_space<vmem>>, vector<8x64xf32>
    tpu.vector_store %arg10[%c88_788, %c448_789], %444 {strides = array<i32>} : memref<128x576xf32, #tpu.memory_space<vmem>>, vector<8x64xf32>,
    %c1_790 = arith.constant 1 : index
    %c6_791 = arith.constant 6 : index
    %c1_792 = arith.constant 1 : index
    %c0_793 = arith.constant 0 : index
    %446 = vector.load %arg9[%c1_790, %c6_791, %c1_792, %c0_793] : memref<2x10x10x64xf32, #tpu.memory_space<vmem>>, vector<1x1x8x64xf32>
    %447 = vector.shape_cast %446 : vector<1x1x8x64xf32> to vector<8x64xf32>
    %c96_794 = arith.constant 96 : index
    %c448_795 = arith.constant 448 : index
    %448 = vector.load %arg10[%c96_794, %c448_795] : memref<128x576xf32, #tpu.memory_space<vmem>>, vector<8x64xf32>
    tpu.vector_store %arg10[%c96_794, %c448_795], %447 {strides = array<i32>} : memref<128x576xf32, #tpu.memory_space<vmem>>, vector<8x64xf32>,
    %c1_796 = arith.constant 1 : index
    %c7_797 = arith.constant 7 : index
    %c1_798 = arith.constant 1 : index
    %c0_799 = arith.constant 0 : index
    %449 = vector.load %arg9[%c1_796, %c7_797, %c1_798, %c0_799] : memref<2x10x10x64xf32, #tpu.memory_space<vmem>>, vector<1x1x8x64xf32>
    %450 = vector.shape_cast %449 : vector<1x1x8x64xf32> to vector<8x64xf32>
    %c104_800 = arith.constant 104 : index
    %c448_801 = arith.constant 448 : index
    %451 = vector.load %arg10[%c104_800, %c448_801] : memref<128x576xf32, #tpu.memory_space<vmem>>, vector<8x64xf32>
    tpu.vector_store %arg10[%c104_800, %c448_801], %450 {strides = array<i32>} : memref<128x576xf32, #tpu.memory_space<vmem>>, vector<8x64xf32>,
    %c1_802 = arith.constant 1 : index
    %c8_803 = arith.constant 8 : index
    %c1_804 = arith.constant 1 : index
    %c0_805 = arith.constant 0 : index
    %452 = vector.load %arg9[%c1_802, %c8_803, %c1_804, %c0_805] : memref<2x10x10x64xf32, #tpu.memory_space<vmem>>, vector<1x1x8x64xf32>
    %453 = vector.shape_cast %452 : vector<1x1x8x64xf32> to vector<8x64xf32>
    %c112_806 = arith.constant 112 : index
    %c448_807 = arith.constant 448 : index
    %454 = vector.load %arg10[%c112_806, %c448_807] : memref<128x576xf32, #tpu.memory_space<vmem>>, vector<8x64xf32>
    tpu.vector_store %arg10[%c112_806, %c448_807], %453 {strides = array<i32>} : memref<128x576xf32, #tpu.memory_space<vmem>>, vector<8x64xf32>,
    %c1_808 = arith.constant 1 : index
    %c9_809 = arith.constant 9 : index
    %c1_810 = arith.constant 1 : index
    %c0_811 = arith.constant 0 : index
    %455 = vector.load %arg9[%c1_808, %c9_809, %c1_810, %c0_811] : memref<2x10x10x64xf32, #tpu.memory_space<vmem>>, vector<1x1x8x64xf32>
    %456 = vector.shape_cast %455 : vector<1x1x8x64xf32> to vector<8x64xf32>
    %c120_812 = arith.constant 120 : index
    %c448_813 = arith.constant 448 : index
    %457 = vector.load %arg10[%c120_812, %c448_813] : memref<128x576xf32, #tpu.memory_space<vmem>>, vector<8x64xf32>
    tpu.vector_store %arg10[%c120_812, %c448_813], %456 {strides = array<i32>} : memref<128x576xf32, #tpu.memory_space<vmem>>, vector<8x64xf32>,
    %c0_814 = arith.constant 0 : index
    %c2_815 = arith.constant 2 : index
    %c2_816 = arith.constant 2 : index
    %c0_817 = arith.constant 0 : index
    %458 = vector.load %arg9[%c0_814, %c2_815, %c2_816, %c0_817] : memref<2x10x10x64xf32, #tpu.memory_space<vmem>>, vector<1x1x8x64xf32>
    %459 = vector.shape_cast %458 : vector<1x1x8x64xf32> to vector<8x64xf32>
    %c0_818 = arith.constant 0 : index
    %c512 = arith.constant 512 : index
    %460 = vector.load %arg10[%c0_818, %c512] : memref<128x576xf32, #tpu.memory_space<vmem>>, vector<8x64xf32>
    tpu.vector_store %arg10[%c0_818, %c512], %459 {strides = array<i32>} : memref<128x576xf32, #tpu.memory_space<vmem>>, vector<8x64xf32>,
    %c0_819 = arith.constant 0 : index
    %c3_820 = arith.constant 3 : index
    %c2_821 = arith.constant 2 : index
    %c0_822 = arith.constant 0 : index
    %461 = vector.load %arg9[%c0_819, %c3_820, %c2_821, %c0_822] : memref<2x10x10x64xf32, #tpu.memory_space<vmem>>, vector<1x1x8x64xf32>
    %462 = vector.shape_cast %461 : vector<1x1x8x64xf32> to vector<8x64xf32>
    %c8_823 = arith.constant 8 : index
    %c512_824 = arith.constant 512 : index
    %463 = vector.load %arg10[%c8_823, %c512_824] : memref<128x576xf32, #tpu.memory_space<vmem>>, vector<8x64xf32>
    tpu.vector_store %arg10[%c8_823, %c512_824], %462 {strides = array<i32>} : memref<128x576xf32, #tpu.memory_space<vmem>>, vector<8x64xf32>,
    %c0_825 = arith.constant 0 : index
    %c4_826 = arith.constant 4 : index
    %c2_827 = arith.constant 2 : index
    %c0_828 = arith.constant 0 : index
    %464 = vector.load %arg9[%c0_825, %c4_826, %c2_827, %c0_828] : memref<2x10x10x64xf32, #tpu.memory_space<vmem>>, vector<1x1x8x64xf32>
    %465 = vector.shape_cast %464 : vector<1x1x8x64xf32> to vector<8x64xf32>
    %c16_829 = arith.constant 16 : index
    %c512_830 = arith.constant 512 : index
    %466 = vector.load %arg10[%c16_829, %c512_830] : memref<128x576xf32, #tpu.memory_space<vmem>>, vector<8x64xf32>
    tpu.vector_store %arg10[%c16_829, %c512_830], %465 {strides = array<i32>} : memref<128x576xf32, #tpu.memory_space<vmem>>, vector<8x64xf32>,
    %c0_831 = arith.constant 0 : index
    %c5_832 = arith.constant 5 : index
    %c2_833 = arith.constant 2 : index
    %c0_834 = arith.constant 0 : index
    %467 = vector.load %arg9[%c0_831, %c5_832, %c2_833, %c0_834] : memref<2x10x10x64xf32, #tpu.memory_space<vmem>>, vector<1x1x8x64xf32>
    %468 = vector.shape_cast %467 : vector<1x1x8x64xf32> to vector<8x64xf32>
    %c24_835 = arith.constant 24 : index
    %c512_836 = arith.constant 512 : index
    %469 = vector.load %arg10[%c24_835, %c512_836] : memref<128x576xf32, #tpu.memory_space<vmem>>, vector<8x64xf32>
    tpu.vector_store %arg10[%c24_835, %c512_836], %468 {strides = array<i32>} : memref<128x576xf32, #tpu.memory_space<vmem>>, vector<8x64xf32>,
    %c0_837 = arith.constant 0 : index
    %c6_838 = arith.constant 6 : index
    %c2_839 = arith.constant 2 : index
    %c0_840 = arith.constant 0 : index
    %470 = vector.load %arg9[%c0_837, %c6_838, %c2_839, %c0_840] : memref<2x10x10x64xf32, #tpu.memory_space<vmem>>, vector<1x1x8x64xf32>
    %471 = vector.shape_cast %470 : vector<1x1x8x64xf32> to vector<8x64xf32>
    %c32_841 = arith.constant 32 : index
    %c512_842 = arith.constant 512 : index
    %472 = vector.load %arg10[%c32_841, %c512_842] : memref<128x576xf32, #tpu.memory_space<vmem>>, vector<8x64xf32>
    tpu.vector_store %arg10[%c32_841, %c512_842], %471 {strides = array<i32>} : memref<128x576xf32, #tpu.memory_space<vmem>>, vector<8x64xf32>,
    %c0_843 = arith.constant 0 : index
    %c7_844 = arith.constant 7 : index
    %c2_845 = arith.constant 2 : index
    %c0_846 = arith.constant 0 : index
    %473 = vector.load %arg9[%c0_843, %c7_844, %c2_845, %c0_846] : memref<2x10x10x64xf32, #tpu.memory_space<vmem>>, vector<1x1x8x64xf32>
    %474 = vector.shape_cast %473 : vector<1x1x8x64xf32> to vector<8x64xf32>
    %c40_847 = arith.constant 40 : index
    %c512_848 = arith.constant 512 : index
    %475 = vector.load %arg10[%c40_847, %c512_848] : memref<128x576xf32, #tpu.memory_space<vmem>>, vector<8x64xf32>
    tpu.vector_store %arg10[%c40_847, %c512_848], %474 {strides = array<i32>} : memref<128x576xf32, #tpu.memory_space<vmem>>, vector<8x64xf32>,
    %c0_849 = arith.constant 0 : index
    %c8_850 = arith.constant 8 : index
    %c2_851 = arith.constant 2 : index
    %c0_852 = arith.constant 0 : index
    %476 = vector.load %arg9[%c0_849, %c8_850, %c2_851, %c0_852] : memref<2x10x10x64xf32, #tpu.memory_space<vmem>>, vector<1x1x8x64xf32>
    %477 = vector.shape_cast %476 : vector<1x1x8x64xf32> to vector<8x64xf32>
    %c48_853 = arith.constant 48 : index
    %c512_854 = arith.constant 512 : index
    %478 = vector.load %arg10[%c48_853, %c512_854] : memref<128x576xf32, #tpu.memory_space<vmem>>, vector<8x64xf32>
    tpu.vector_store %arg10[%c48_853, %c512_854], %477 {strides = array<i32>} : memref<128x576xf32, #tpu.memory_space<vmem>>, vector<8x64xf32>,
    %c0_855 = arith.constant 0 : index
    %c9_856 = arith.constant 9 : index
    %c2_857 = arith.constant 2 : index
    %c0_858 = arith.constant 0 : index
    %479 = vector.load %arg9[%c0_855, %c9_856, %c2_857, %c0_858] : memref<2x10x10x64xf32, #tpu.memory_space<vmem>>, vector<1x1x8x64xf32>
    %480 = vector.shape_cast %479 : vector<1x1x8x64xf32> to vector<8x64xf32>
    %c56_859 = arith.constant 56 : index
    %c512_860 = arith.constant 512 : index
    %481 = vector.load %arg10[%c56_859, %c512_860] : memref<128x576xf32, #tpu.memory_space<vmem>>, vector<8x64xf32>
    tpu.vector_store %arg10[%c56_859, %c512_860], %480 {strides = array<i32>} : memref<128x576xf32, #tpu.memory_space<vmem>>, vector<8x64xf32>,
    %c1_861 = arith.constant 1 : index
    %c2_862 = arith.constant 2 : index
    %c2_863 = arith.constant 2 : index
    %c0_864 = arith.constant 0 : index
    %482 = vector.load %arg9[%c1_861, %c2_862, %c2_863, %c0_864] : memref<2x10x10x64xf32, #tpu.memory_space<vmem>>, vector<1x1x8x64xf32>
    %483 = vector.shape_cast %482 : vector<1x1x8x64xf32> to vector<8x64xf32>
    %c64_865 = arith.constant 64 : index
    %c512_866 = arith.constant 512 : index
    %484 = vector.load %arg10[%c64_865, %c512_866] : memref<128x576xf32, #tpu.memory_space<vmem>>, vector<8x64xf32>
    tpu.vector_store %arg10[%c64_865, %c512_866], %483 {strides = array<i32>} : memref<128x576xf32, #tpu.memory_space<vmem>>, vector<8x64xf32>,
    %c1_867 = arith.constant 1 : index
    %c3_868 = arith.constant 3 : index
    %c2_869 = arith.constant 2 : index
    %c0_870 = arith.constant 0 : index
    %485 = vector.load %arg9[%c1_867, %c3_868, %c2_869, %c0_870] : memref<2x10x10x64xf32, #tpu.memory_space<vmem>>, vector<1x1x8x64xf32>
    %486 = vector.shape_cast %485 : vector<1x1x8x64xf32> to vector<8x64xf32>
    %c72_871 = arith.constant 72 : index
    %c512_872 = arith.constant 512 : index
    %487 = vector.load %arg10[%c72_871, %c512_872] : memref<128x576xf32, #tpu.memory_space<vmem>>, vector<8x64xf32>
    tpu.vector_store %arg10[%c72_871, %c512_872], %486 {strides = array<i32>} : memref<128x576xf32, #tpu.memory_space<vmem>>, vector<8x64xf32>,
    %c1_873 = arith.constant 1 : index
    %c4_874 = arith.constant 4 : index
    %c2_875 = arith.constant 2 : index
    %c0_876 = arith.constant 0 : index
    %488 = vector.load %arg9[%c1_873, %c4_874, %c2_875, %c0_876] : memref<2x10x10x64xf32, #tpu.memory_space<vmem>>, vector<1x1x8x64xf32>
    %489 = vector.shape_cast %488 : vector<1x1x8x64xf32> to vector<8x64xf32>
    %c80_877 = arith.constant 80 : index
    %c512_878 = arith.constant 512 : index
    %490 = vector.load %arg10[%c80_877, %c512_878] : memref<128x576xf32, #tpu.memory_space<vmem>>, vector<8x64xf32>
    tpu.vector_store %arg10[%c80_877, %c512_878], %489 {strides = array<i32>} : memref<128x576xf32, #tpu.memory_space<vmem>>, vector<8x64xf32>,
    %c1_879 = arith.constant 1 : index
    %c5_880 = arith.constant 5 : index
    %c2_881 = arith.constant 2 : index
    %c0_882 = arith.constant 0 : index
    %491 = vector.load %arg9[%c1_879, %c5_880, %c2_881, %c0_882] : memref<2x10x10x64xf32, #tpu.memory_space<vmem>>, vector<1x1x8x64xf32>
    %492 = vector.shape_cast %491 : vector<1x1x8x64xf32> to vector<8x64xf32>
    %c88_883 = arith.constant 88 : index
    %c512_884 = arith.constant 512 : index
    %493 = vector.load %arg10[%c88_883, %c512_884] : memref<128x576xf32, #tpu.memory_space<vmem>>, vector<8x64xf32>
    tpu.vector_store %arg10[%c88_883, %c512_884], %492 {strides = array<i32>} : memref<128x576xf32, #tpu.memory_space<vmem>>, vector<8x64xf32>,
    %c1_885 = arith.constant 1 : index
    %c6_886 = arith.constant 6 : index
    %c2_887 = arith.constant 2 : index
    %c0_888 = arith.constant 0 : index
    %494 = vector.load %arg9[%c1_885, %c6_886, %c2_887, %c0_888] : memref<2x10x10x64xf32, #tpu.memory_space<vmem>>, vector<1x1x8x64xf32>
    %495 = vector.shape_cast %494 : vector<1x1x8x64xf32> to vector<8x64xf32>
    %c96_889 = arith.constant 96 : index
    %c512_890 = arith.constant 512 : index
    %496 = vector.load %arg10[%c96_889, %c512_890] : memref<128x576xf32, #tpu.memory_space<vmem>>, vector<8x64xf32>
    tpu.vector_store %arg10[%c96_889, %c512_890], %495 {strides = array<i32>} : memref<128x576xf32, #tpu.memory_space<vmem>>, vector<8x64xf32>,
    %c1_891 = arith.constant 1 : index
    %c7_892 = arith.constant 7 : index
    %c2_893 = arith.constant 2 : index
    %c0_894 = arith.constant 0 : index
    %497 = vector.load %arg9[%c1_891, %c7_892, %c2_893, %c0_894] : memref<2x10x10x64xf32, #tpu.memory_space<vmem>>, vector<1x1x8x64xf32>
    %498 = vector.shape_cast %497 : vector<1x1x8x64xf32> to vector<8x64xf32>
    %c104_895 = arith.constant 104 : index
    %c512_896 = arith.constant 512 : index
    %499 = vector.load %arg10[%c104_895, %c512_896] : memref<128x576xf32, #tpu.memory_space<vmem>>, vector<8x64xf32>
    tpu.vector_store %arg10[%c104_895, %c512_896], %498 {strides = array<i32>} : memref<128x576xf32, #tpu.memory_space<vmem>>, vector<8x64xf32>,
    %c1_897 = arith.constant 1 : index
    %c8_898 = arith.constant 8 : index
    %c2_899 = arith.constant 2 : index
    %c0_900 = arith.constant 0 : index
    %500 = vector.load %arg9[%c1_897, %c8_898, %c2_899, %c0_900] : memref<2x10x10x64xf32, #tpu.memory_space<vmem>>, vector<1x1x8x64xf32>
    %501 = vector.shape_cast %500 : vector<1x1x8x64xf32> to vector<8x64xf32>
    %c112_901 = arith.constant 112 : index
    %c512_902 = arith.constant 512 : index
    %502 = vector.load %arg10[%c112_901, %c512_902] : memref<128x576xf32, #tpu.memory_space<vmem>>, vector<8x64xf32>
    tpu.vector_store %arg10[%c112_901, %c512_902], %501 {strides = array<i32>} : memref<128x576xf32, #tpu.memory_space<vmem>>, vector<8x64xf32>,
    %c1_903 = arith.constant 1 : index
    %c9_904 = arith.constant 9 : index
    %c2_905 = arith.constant 2 : index
    %c0_906 = arith.constant 0 : index
    %503 = vector.load %arg9[%c1_903, %c9_904, %c2_905, %c0_906] : memref<2x10x10x64xf32, #tpu.memory_space<vmem>>, vector<1x1x8x64xf32>
    %504 = vector.shape_cast %503 : vector<1x1x8x64xf32> to vector<8x64xf32>
    %c120_907 = arith.constant 120 : index
    %c512_908 = arith.constant 512 : index
    %505 = vector.load %arg10[%c120_907, %c512_908] : memref<128x576xf32, #tpu.memory_space<vmem>>, vector<8x64xf32>
    tpu.vector_store %arg10[%c120_907, %c512_908], %504 {strides = array<i32>} : memref<128x576xf32, #tpu.memory_space<vmem>>, vector<8x64xf32>,
    %c0_909 = arith.constant 0 : index
    %c0_910 = arith.constant 0 : index
    %506 = vector.load %arg10[%c0_909, %c0_910] : memref<128x576xf32, #tpu.memory_space<vmem>>, vector<128x576xf32>
    %507 = arith.truncf %506 : vector<128x576xf32> to vector<128x576xbf16>
    %c0_911 = arith.constant 0 : index
    %c0_912 = arith.constant 0 : index
    %508 = vector.load %arg4[%c0_911, %c0_912] : memref<576x64xbf16, #tpu.memory_space<vmem>>, vector<576x64xbf16>
    %cst_913 = arith.constant dense<0.000000e+00> : vector<128x64xf32>
    %509 = tpu.matmul %507, %508, %cst_913 {dimension_numbers = #tpu.dot_dimension_numbers<[1], [0], [0], [1], [0, 0, 1, 1], [], []>} : vector<128x576xbf16>, vector<576x64xbf16>, vector<128x64xf32> -> vector<128x64xf32>
    %c0_914 = arith.constant 0 : index
    %c0_915 = arith.constant 0 : index
    %510 = vector.load %arg5[%c0_914, %c0_915] : memref<1x64xf32, #tpu.memory_space<vmem>>, vector<1x64xf32>
    %511 = vector.broadcast %510 : vector<1x64xf32> to vector<128x64xf32>
    %512 = arith.addf %509, %511 : vector<128x64xf32>
    %cst_916 = arith.constant 0.000000e+00 : f32
    %513 = vector.broadcast %cst_916 : f32 to vector<128x64xf32>
    %514 = arith.maximumf %512, %513 : vector<128x64xf32>
    %cst_917 = arith.constant 0.000000e+00 : f32
    %515 = vector.broadcast %cst_917 : f32 to vector<2x10x10x64xf32>
    %c0_918 = arith.constant 0 : index
    %c0_919 = arith.constant 0 : index
    %c0_920 = arith.constant 0 : index
    %c0_921 = arith.constant 0 : index
    %516 = vector.load %arg9[%c0_918, %c0_919, %c0_920, %c0_921] : memref<2x10x10x64xf32, #tpu.memory_space<vmem>>, vector<2x10x10x64xf32>
    tpu.vector_store %arg9[%c0_918, %c0_919, %c0_920, %c0_921], %515 {strides = array<i32>} : memref<2x10x10x64xf32, #tpu.memory_space<vmem>>, vector<2x10x10x64xf32>,
    %517 = vector.extract_strided_slice %514 {offsets = [0, 0], sizes = [8, 64], strides = [1, 1]} : vector<128x64xf32> to vector<8x64xf32>
    %c0_922 = arith.constant 0 : index
    %c1_923 = arith.constant 1 : index
    %c1_924 = arith.constant 1 : index
    %c0_925 = arith.constant 0 : index
    %518 = vector.load %arg9[%c0_922, %c1_923, %c1_924, %c0_925] : memref<2x10x10x64xf32, #tpu.memory_space<vmem>>, vector<1x1x8x64xf32>
    %519 = vector.shape_cast %518 : vector<1x1x8x64xf32> to vector<8x64xf32>
    %520 = vector.shape_cast %517 : vector<8x64xf32> to vector<1x1x8x64xf32>
    tpu.vector_store %arg9[%c0_922, %c1_923, %c1_924, %c0_925], %520 {strides = array<i32>} : memref<2x10x10x64xf32, #tpu.memory_space<vmem>>, vector<1x1x8x64xf32>,
    %521 = vector.extract_strided_slice %514 {offsets = [8, 0], sizes = [8, 64], strides = [1, 1]} : vector<128x64xf32> to vector<8x64xf32>
    %c0_926 = arith.constant 0 : index
    %c2_927 = arith.constant 2 : index
    %c1_928 = arith.constant 1 : index
    %c0_929 = arith.constant 0 : index
    %522 = vector.load %arg9[%c0_926, %c2_927, %c1_928, %c0_929] : memref<2x10x10x64xf32, #tpu.memory_space<vmem>>, vector<1x1x8x64xf32>
    %523 = vector.shape_cast %522 : vector<1x1x8x64xf32> to vector<8x64xf32>
    %524 = vector.shape_cast %521 : vector<8x64xf32> to vector<1x1x8x64xf32>
    tpu.vector_store %arg9[%c0_926, %c2_927, %c1_928, %c0_929], %524 {strides = array<i32>} : memref<2x10x10x64xf32, #tpu.memory_space<vmem>>, vector<1x1x8x64xf32>,
    %525 = vector.extract_strided_slice %514 {offsets = [16, 0], sizes = [8, 64], strides = [1, 1]} : vector<128x64xf32> to vector<8x64xf32>
    %c0_930 = arith.constant 0 : index
    %c3_931 = arith.constant 3 : index
    %c1_932 = arith.constant 1 : index
    %c0_933 = arith.constant 0 : index
    %526 = vector.load %arg9[%c0_930, %c3_931, %c1_932, %c0_933] : memref<2x10x10x64xf32, #tpu.memory_space<vmem>>, vector<1x1x8x64xf32>
    %527 = vector.shape_cast %526 : vector<1x1x8x64xf32> to vector<8x64xf32>
    %528 = vector.shape_cast %525 : vector<8x64xf32> to vector<1x1x8x64xf32>
    tpu.vector_store %arg9[%c0_930, %c3_931, %c1_932, %c0_933], %528 {strides = array<i32>} : memref<2x10x10x64xf32, #tpu.memory_space<vmem>>, vector<1x1x8x64xf32>,
    %529 = vector.extract_strided_slice %514 {offsets = [24, 0], sizes = [8, 64], strides = [1, 1]} : vector<128x64xf32> to vector<8x64xf32>
    %c0_934 = arith.constant 0 : index
    %c4_935 = arith.constant 4 : index
    %c1_936 = arith.constant 1 : index
    %c0_937 = arith.constant 0 : index
    %530 = vector.load %arg9[%c0_934, %c4_935, %c1_936, %c0_937] : memref<2x10x10x64xf32, #tpu.memory_space<vmem>>, vector<1x1x8x64xf32>
    %531 = vector.shape_cast %530 : vector<1x1x8x64xf32> to vector<8x64xf32>
    %532 = vector.shape_cast %529 : vector<8x64xf32> to vector<1x1x8x64xf32>
    tpu.vector_store %arg9[%c0_934, %c4_935, %c1_936, %c0_937], %532 {strides = array<i32>} : memref<2x10x10x64xf32, #tpu.memory_space<vmem>>, vector<1x1x8x64xf32>,
    %533 = vector.extract_strided_slice %514 {offsets = [32, 0], sizes = [8, 64], strides = [1, 1]} : vector<128x64xf32> to vector<8x64xf32>
    %c0_938 = arith.constant 0 : index
    %c5_939 = arith.constant 5 : index
    %c1_940 = arith.constant 1 : index
    %c0_941 = arith.constant 0 : index
    %534 = vector.load %arg9[%c0_938, %c5_939, %c1_940, %c0_941] : memref<2x10x10x64xf32, #tpu.memory_space<vmem>>, vector<1x1x8x64xf32>
    %535 = vector.shape_cast %534 : vector<1x1x8x64xf32> to vector<8x64xf32>
    %536 = vector.shape_cast %533 : vector<8x64xf32> to vector<1x1x8x64xf32>
    tpu.vector_store %arg9[%c0_938, %c5_939, %c1_940, %c0_941], %536 {strides = array<i32>} : memref<2x10x10x64xf32, #tpu.memory_space<vmem>>, vector<1x1x8x64xf32>,
    %537 = vector.extract_strided_slice %514 {offsets = [40, 0], sizes = [8, 64], strides = [1, 1]} : vector<128x64xf32> to vector<8x64xf32>
    %c0_942 = arith.constant 0 : index
    %c6_943 = arith.constant 6 : index
    %c1_944 = arith.constant 1 : index
    %c0_945 = arith.constant 0 : index
    %538 = vector.load %arg9[%c0_942, %c6_943, %c1_944, %c0_945] : memref<2x10x10x64xf32, #tpu.memory_space<vmem>>, vector<1x1x8x64xf32>
    %539 = vector.shape_cast %538 : vector<1x1x8x64xf32> to vector<8x64xf32>
    %540 = vector.shape_cast %537 : vector<8x64xf32> to vector<1x1x8x64xf32>
    tpu.vector_store %arg9[%c0_942, %c6_943, %c1_944, %c0_945], %540 {strides = array<i32>} : memref<2x10x10x64xf32, #tpu.memory_space<vmem>>, vector<1x1x8x64xf32>,
    %541 = vector.extract_strided_slice %514 {offsets = [48, 0], sizes = [8, 64], strides = [1, 1]} : vector<128x64xf32> to vector<8x64xf32>
    %c0_946 = arith.constant 0 : index
    %c7_947 = arith.constant 7 : index
    %c1_948 = arith.constant 1 : index
    %c0_949 = arith.constant 0 : index
    %542 = vector.load %arg9[%c0_946, %c7_947, %c1_948, %c0_949] : memref<2x10x10x64xf32, #tpu.memory_space<vmem>>, vector<1x1x8x64xf32>
    %543 = vector.shape_cast %542 : vector<1x1x8x64xf32> to vector<8x64xf32>
    %544 = vector.shape_cast %541 : vector<8x64xf32> to vector<1x1x8x64xf32>
    tpu.vector_store %arg9[%c0_946, %c7_947, %c1_948, %c0_949], %544 {strides = array<i32>} : memref<2x10x10x64xf32, #tpu.memory_space<vmem>>, vector<1x1x8x64xf32>,
    %545 = vector.extract_strided_slice %514 {offsets = [56, 0], sizes = [8, 64], strides = [1, 1]} : vector<128x64xf32> to vector<8x64xf32>
    %c0_950 = arith.constant 0 : index
    %c8_951 = arith.constant 8 : index
    %c1_952 = arith.constant 1 : index
    %c0_953 = arith.constant 0 : index
    %546 = vector.load %arg9[%c0_950, %c8_951, %c1_952, %c0_953] : memref<2x10x10x64xf32, #tpu.memory_space<vmem>>, vector<1x1x8x64xf32>
    %547 = vector.shape_cast %546 : vector<1x1x8x64xf32> to vector<8x64xf32>
    %548 = vector.shape_cast %545 : vector<8x64xf32> to vector<1x1x8x64xf32>
    tpu.vector_store %arg9[%c0_950, %c8_951, %c1_952, %c0_953], %548 {strides = array<i32>} : memref<2x10x10x64xf32, #tpu.memory_space<vmem>>, vector<1x1x8x64xf32>,
    %549 = vector.extract_strided_slice %514 {offsets = [64, 0], sizes = [8, 64], strides = [1, 1]} : vector<128x64xf32> to vector<8x64xf32>
    %c1_954 = arith.constant 1 : index
    %c1_955 = arith.constant 1 : index
    %c1_956 = arith.constant 1 : index
    %c0_957 = arith.constant 0 : index
    %550 = vector.load %arg9[%c1_954, %c1_955, %c1_956, %c0_957] : memref<2x10x10x64xf32, #tpu.memory_space<vmem>>, vector<1x1x8x64xf32>
    %551 = vector.shape_cast %550 : vector<1x1x8x64xf32> to vector<8x64xf32>
    %552 = vector.shape_cast %549 : vector<8x64xf32> to vector<1x1x8x64xf32>
    tpu.vector_store %arg9[%c1_954, %c1_955, %c1_956, %c0_957], %552 {strides = array<i32>} : memref<2x10x10x64xf32, #tpu.memory_space<vmem>>, vector<1x1x8x64xf32>,
    %553 = vector.extract_strided_slice %514 {offsets = [72, 0], sizes = [8, 64], strides = [1, 1]} : vector<128x64xf32> to vector<8x64xf32>
    %c1_958 = arith.constant 1 : index
    %c2_959 = arith.constant 2 : index
    %c1_960 = arith.constant 1 : index
    %c0_961 = arith.constant 0 : index
    %554 = vector.load %arg9[%c1_958, %c2_959, %c1_960, %c0_961] : memref<2x10x10x64xf32, #tpu.memory_space<vmem>>, vector<1x1x8x64xf32>
    %555 = vector.shape_cast %554 : vector<1x1x8x64xf32> to vector<8x64xf32>
    %556 = vector.shape_cast %553 : vector<8x64xf32> to vector<1x1x8x64xf32>
    tpu.vector_store %arg9[%c1_958, %c2_959, %c1_960, %c0_961], %556 {strides = array<i32>} : memref<2x10x10x64xf32, #tpu.memory_space<vmem>>, vector<1x1x8x64xf32>,
    %557 = vector.extract_strided_slice %514 {offsets = [80, 0], sizes = [8, 64], strides = [1, 1]} : vector<128x64xf32> to vector<8x64xf32>
    %c1_962 = arith.constant 1 : index
    %c3_963 = arith.constant 3 : index
    %c1_964 = arith.constant 1 : index
    %c0_965 = arith.constant 0 : index
    %558 = vector.load %arg9[%c1_962, %c3_963, %c1_964, %c0_965] : memref<2x10x10x64xf32, #tpu.memory_space<vmem>>, vector<1x1x8x64xf32>
    %559 = vector.shape_cast %558 : vector<1x1x8x64xf32> to vector<8x64xf32>
    %560 = vector.shape_cast %557 : vector<8x64xf32> to vector<1x1x8x64xf32>
    tpu.vector_store %arg9[%c1_962, %c3_963, %c1_964, %c0_965], %560 {strides = array<i32>} : memref<2x10x10x64xf32, #tpu.memory_space<vmem>>, vector<1x1x8x64xf32>,
    %561 = vector.extract_strided_slice %514 {offsets = [88, 0], sizes = [8, 64], strides = [1, 1]} : vector<128x64xf32> to vector<8x64xf32>
    %c1_966 = arith.constant 1 : index
    %c4_967 = arith.constant 4 : index
    %c1_968 = arith.constant 1 : index
    %c0_969 = arith.constant 0 : index
    %562 = vector.load %arg9[%c1_966, %c4_967, %c1_968, %c0_969] : memref<2x10x10x64xf32, #tpu.memory_space<vmem>>, vector<1x1x8x64xf32>
    %563 = vector.shape_cast %562 : vector<1x1x8x64xf32> to vector<8x64xf32>
    %564 = vector.shape_cast %561 : vector<8x64xf32> to vector<1x1x8x64xf32>
    tpu.vector_store %arg9[%c1_966, %c4_967, %c1_968, %c0_969], %564 {strides = array<i32>} : memref<2x10x10x64xf32, #tpu.memory_space<vmem>>, vector<1x1x8x64xf32>,
    %565 = vector.extract_strided_slice %514 {offsets = [96, 0], sizes = [8, 64], strides = [1, 1]} : vector<128x64xf32> to vector<8x64xf32>
    %c1_970 = arith.constant 1 : index
    %c5_971 = arith.constant 5 : index
    %c1_972 = arith.constant 1 : index
    %c0_973 = arith.constant 0 : index
    %566 = vector.load %arg9[%c1_970, %c5_971, %c1_972, %c0_973] : memref<2x10x10x64xf32, #tpu.memory_space<vmem>>, vector<1x1x8x64xf32>
    %567 = vector.shape_cast %566 : vector<1x1x8x64xf32> to vector<8x64xf32>
    %568 = vector.shape_cast %565 : vector<8x64xf32> to vector<1x1x8x64xf32>
    tpu.vector_store %arg9[%c1_970, %c5_971, %c1_972, %c0_973], %568 {strides = array<i32>} : memref<2x10x10x64xf32, #tpu.memory_space<vmem>>, vector<1x1x8x64xf32>,
    %569 = vector.extract_strided_slice %514 {offsets = [104, 0], sizes = [8, 64], strides = [1, 1]} : vector<128x64xf32> to vector<8x64xf32>
    %c1_974 = arith.constant 1 : index
    %c6_975 = arith.constant 6 : index
    %c1_976 = arith.constant 1 : index
    %c0_977 = arith.constant 0 : index
    %570 = vector.load %arg9[%c1_974, %c6_975, %c1_976, %c0_977] : memref<2x10x10x64xf32, #tpu.memory_space<vmem>>, vector<1x1x8x64xf32>
    %571 = vector.shape_cast %570 : vector<1x1x8x64xf32> to vector<8x64xf32>
    %572 = vector.shape_cast %569 : vector<8x64xf32> to vector<1x1x8x64xf32>
    tpu.vector_store %arg9[%c1_974, %c6_975, %c1_976, %c0_977], %572 {strides = array<i32>} : memref<2x10x10x64xf32, #tpu.memory_space<vmem>>, vector<1x1x8x64xf32>,
    %573 = vector.extract_strided_slice %514 {offsets = [112, 0], sizes = [8, 64], strides = [1, 1]} : vector<128x64xf32> to vector<8x64xf32>
    %c1_978 = arith.constant 1 : index
    %c7_979 = arith.constant 7 : index
    %c1_980 = arith.constant 1 : index
    %c0_981 = arith.constant 0 : index
    %574 = vector.load %arg9[%c1_978, %c7_979, %c1_980, %c0_981] : memref<2x10x10x64xf32, #tpu.memory_space<vmem>>, vector<1x1x8x64xf32>
    %575 = vector.shape_cast %574 : vector<1x1x8x64xf32> to vector<8x64xf32>
    %576 = vector.shape_cast %573 : vector<8x64xf32> to vector<1x1x8x64xf32>
    tpu.vector_store %arg9[%c1_978, %c7_979, %c1_980, %c0_981], %576 {strides = array<i32>} : memref<2x10x10x64xf32, #tpu.memory_space<vmem>>, vector<1x1x8x64xf32>,
    %577 = vector.extract_strided_slice %514 {offsets = [120, 0], sizes = [8, 64], strides = [1, 1]} : vector<128x64xf32> to vector<8x64xf32>
    %c1_982 = arith.constant 1 : index
    %c8_983 = arith.constant 8 : index
    %c1_984 = arith.constant 1 : index
    %c0_985 = arith.constant 0 : index
    %578 = vector.load %arg9[%c1_982, %c8_983, %c1_984, %c0_985] : memref<2x10x10x64xf32, #tpu.memory_space<vmem>>, vector<1x1x8x64xf32>
    %579 = vector.shape_cast %578 : vector<1x1x8x64xf32> to vector<8x64xf32>
    %580 = vector.shape_cast %577 : vector<8x64xf32> to vector<1x1x8x64xf32>
    tpu.vector_store %arg9[%c1_982, %c8_983, %c1_984, %c0_985], %580 {strides = array<i32>} : memref<2x10x10x64xf32, #tpu.memory_space<vmem>>, vector<1x1x8x64xf32>,
    %c0_986 = arith.constant 0 : index
    %c0_987 = arith.constant 0 : index
    %c0_988 = arith.constant 0 : index
    %c0_989 = arith.constant 0 : index
    %581 = vector.load %arg9[%c0_986, %c0_987, %c0_988, %c0_989] : memref<2x10x10x64xf32, #tpu.memory_space<vmem>>, vector<1x1x8x64xf32>
    %582 = vector.shape_cast %581 : vector<1x1x8x64xf32> to vector<8x64xf32>
    %c0_990 = arith.constant 0 : index
    %c0_991 = arith.constant 0 : index
    %583 = vector.load %arg10[%c0_990, %c0_991] : memref<128x576xf32, #tpu.memory_space<vmem>>, vector<8x64xf32>
    tpu.vector_store %arg10[%c0_990, %c0_991], %582 {strides = array<i32>} : memref<128x576xf32, #tpu.memory_space<vmem>>, vector<8x64xf32>,
    %c0_992 = arith.constant 0 : index
    %c1_993 = arith.constant 1 : index
    %c0_994 = arith.constant 0 : index
    %c0_995 = arith.constant 0 : index
    %584 = vector.load %arg9[%c0_992, %c1_993, %c0_994, %c0_995] : memref<2x10x10x64xf32, #tpu.memory_space<vmem>>, vector<1x1x8x64xf32>
    %585 = vector.shape_cast %584 : vector<1x1x8x64xf32> to vector<8x64xf32>
    %c8_996 = arith.constant 8 : index
    %c0_997 = arith.constant 0 : index
    %586 = vector.load %arg10[%c8_996, %c0_997] : memref<128x576xf32, #tpu.memory_space<vmem>>, vector<8x64xf32>
    tpu.vector_store %arg10[%c8_996, %c0_997], %585 {strides = array<i32>} : memref<128x576xf32, #tpu.memory_space<vmem>>, vector<8x64xf32>,
    %c0_998 = arith.constant 0 : index
    %c2_999 = arith.constant 2 : index
    %c0_1000 = arith.constant 0 : index
    %c0_1001 = arith.constant 0 : index
    %587 = vector.load %arg9[%c0_998, %c2_999, %c0_1000, %c0_1001] : memref<2x10x10x64xf32, #tpu.memory_space<vmem>>, vector<1x1x8x64xf32>
    %588 = vector.shape_cast %587 : vector<1x1x8x64xf32> to vector<8x64xf32>
    %c16_1002 = arith.constant 16 : index
    %c0_1003 = arith.constant 0 : index
    %589 = vector.load %arg10[%c16_1002, %c0_1003] : memref<128x576xf32, #tpu.memory_space<vmem>>, vector<8x64xf32>
    tpu.vector_store %arg10[%c16_1002, %c0_1003], %588 {strides = array<i32>} : memref<128x576xf32, #tpu.memory_space<vmem>>, vector<8x64xf32>,
    %c0_1004 = arith.constant 0 : index
    %c3_1005 = arith.constant 3 : index
    %c0_1006 = arith.constant 0 : index
    %c0_1007 = arith.constant 0 : index
    %590 = vector.load %arg9[%c0_1004, %c3_1005, %c0_1006, %c0_1007] : memref<2x10x10x64xf32, #tpu.memory_space<vmem>>, vector<1x1x8x64xf32>
    %591 = vector.shape_cast %590 : vector<1x1x8x64xf32> to vector<8x64xf32>
    %c24_1008 = arith.constant 24 : index
    %c0_1009 = arith.constant 0 : index
    %592 = vector.load %arg10[%c24_1008, %c0_1009] : memref<128x576xf32, #tpu.memory_space<vmem>>, vector<8x64xf32>
    tpu.vector_store %arg10[%c24_1008, %c0_1009], %591 {strides = array<i32>} : memref<128x576xf32, #tpu.memory_space<vmem>>, vector<8x64xf32>,
    %c0_1010 = arith.constant 0 : index
    %c4_1011 = arith.constant 4 : index
    %c0_1012 = arith.constant 0 : index
    %c0_1013 = arith.constant 0 : index
    %593 = vector.load %arg9[%c0_1010, %c4_1011, %c0_1012, %c0_1013] : memref<2x10x10x64xf32, #tpu.memory_space<vmem>>, vector<1x1x8x64xf32>
    %594 = vector.shape_cast %593 : vector<1x1x8x64xf32> to vector<8x64xf32>
    %c32_1014 = arith.constant 32 : index
    %c0_1015 = arith.constant 0 : index
    %595 = vector.load %arg10[%c32_1014, %c0_1015] : memref<128x576xf32, #tpu.memory_space<vmem>>, vector<8x64xf32>
    tpu.vector_store %arg10[%c32_1014, %c0_1015], %594 {strides = array<i32>} : memref<128x576xf32, #tpu.memory_space<vmem>>, vector<8x64xf32>,
    %c0_1016 = arith.constant 0 : index
    %c5_1017 = arith.constant 5 : index
    %c0_1018 = arith.constant 0 : index
    %c0_1019 = arith.constant 0 : index
    %596 = vector.load %arg9[%c0_1016, %c5_1017, %c0_1018, %c0_1019] : memref<2x10x10x64xf32, #tpu.memory_space<vmem>>, vector<1x1x8x64xf32>
    %597 = vector.shape_cast %596 : vector<1x1x8x64xf32> to vector<8x64xf32>
    %c40_1020 = arith.constant 40 : index
    %c0_1021 = arith.constant 0 : index
    %598 = vector.load %arg10[%c40_1020, %c0_1021] : memref<128x576xf32, #tpu.memory_space<vmem>>, vector<8x64xf32>
    tpu.vector_store %arg10[%c40_1020, %c0_1021], %597 {strides = array<i32>} : memref<128x576xf32, #tpu.memory_space<vmem>>, vector<8x64xf32>,
    %c0_1022 = arith.constant 0 : index
    %c6_1023 = arith.constant 6 : index
    %c0_1024 = arith.constant 0 : index
    %c0_1025 = arith.constant 0 : index
    %599 = vector.load %arg9[%c0_1022, %c6_1023, %c0_1024, %c0_1025] : memref<2x10x10x64xf32, #tpu.memory_space<vmem>>, vector<1x1x8x64xf32>
    %600 = vector.shape_cast %599 : vector<1x1x8x64xf32> to vector<8x64xf32>
    %c48_1026 = arith.constant 48 : index
    %c0_1027 = arith.constant 0 : index
    %601 = vector.load %arg10[%c48_1026, %c0_1027] : memref<128x576xf32, #tpu.memory_space<vmem>>, vector<8x64xf32>
    tpu.vector_store %arg10[%c48_1026, %c0_1027], %600 {strides = array<i32>} : memref<128x576xf32, #tpu.memory_space<vmem>>, vector<8x64xf32>,
    %c0_1028 = arith.constant 0 : index
    %c7_1029 = arith.constant 7 : index
    %c0_1030 = arith.constant 0 : index
    %c0_1031 = arith.constant 0 : index
    %602 = vector.load %arg9[%c0_1028, %c7_1029, %c0_1030, %c0_1031] : memref<2x10x10x64xf32, #tpu.memory_space<vmem>>, vector<1x1x8x64xf32>
    %603 = vector.shape_cast %602 : vector<1x1x8x64xf32> to vector<8x64xf32>
    %c56_1032 = arith.constant 56 : index
    %c0_1033 = arith.constant 0 : index
    %604 = vector.load %arg10[%c56_1032, %c0_1033] : memref<128x576xf32, #tpu.memory_space<vmem>>, vector<8x64xf32>
    tpu.vector_store %arg10[%c56_1032, %c0_1033], %603 {strides = array<i32>} : memref<128x576xf32, #tpu.memory_space<vmem>>, vector<8x64xf32>,
    %c1_1034 = arith.constant 1 : index
    %c0_1035 = arith.constant 0 : index
    %c0_1036 = arith.constant 0 : index
    %c0_1037 = arith.constant 0 : index
    %605 = vector.load %arg9[%c1_1034, %c0_1035, %c0_1036, %c0_1037] : memref<2x10x10x64xf32, #tpu.memory_space<vmem>>, vector<1x1x8x64xf32>
    %606 = vector.shape_cast %605 : vector<1x1x8x64xf32> to vector<8x64xf32>
    %c64_1038 = arith.constant 64 : index
    %c0_1039 = arith.constant 0 : index
    %607 = vector.load %arg10[%c64_1038, %c0_1039] : memref<128x576xf32, #tpu.memory_space<vmem>>, vector<8x64xf32>
    tpu.vector_store %arg10[%c64_1038, %c0_1039], %606 {strides = array<i32>} : memref<128x576xf32, #tpu.memory_space<vmem>>, vector<8x64xf32>,
    %c1_1040 = arith.constant 1 : index
    %c1_1041 = arith.constant 1 : index
    %c0_1042 = arith.constant 0 : index
    %c0_1043 = arith.constant 0 : index
    %608 = vector.load %arg9[%c1_1040, %c1_1041, %c0_1042, %c0_1043] : memref<2x10x10x64xf32, #tpu.memory_space<vmem>>, vector<1x1x8x64xf32>
    %609 = vector.shape_cast %608 : vector<1x1x8x64xf32> to vector<8x64xf32>
    %c72_1044 = arith.constant 72 : index
    %c0_1045 = arith.constant 0 : index
    %610 = vector.load %arg10[%c72_1044, %c0_1045] : memref<128x576xf32, #tpu.memory_space<vmem>>, vector<8x64xf32>
    tpu.vector_store %arg10[%c72_1044, %c0_1045], %609 {strides = array<i32>} : memref<128x576xf32, #tpu.memory_space<vmem>>, vector<8x64xf32>,
    %c1_1046 = arith.constant 1 : index
    %c2_1047 = arith.constant 2 : index
    %c0_1048 = arith.constant 0 : index
    %c0_1049 = arith.constant 0 : index
    %611 = vector.load %arg9[%c1_1046, %c2_1047, %c0_1048, %c0_1049] : memref<2x10x10x64xf32, #tpu.memory_space<vmem>>, vector<1x1x8x64xf32>
    %612 = vector.shape_cast %611 : vector<1x1x8x64xf32> to vector<8x64xf32>
    %c80_1050 = arith.constant 80 : index
    %c0_1051 = arith.constant 0 : index
    %613 = vector.load %arg10[%c80_1050, %c0_1051] : memref<128x576xf32, #tpu.memory_space<vmem>>, vector<8x64xf32>
    tpu.vector_store %arg10[%c80_1050, %c0_1051], %612 {strides = array<i32>} : memref<128x576xf32, #tpu.memory_space<vmem>>, vector<8x64xf32>,
    %c1_1052 = arith.constant 1 : index
    %c3_1053 = arith.constant 3 : index
    %c0_1054 = arith.constant 0 : index
    %c0_1055 = arith.constant 0 : index
    %614 = vector.load %arg9[%c1_1052, %c3_1053, %c0_1054, %c0_1055] : memref<2x10x10x64xf32, #tpu.memory_space<vmem>>, vector<1x1x8x64xf32>
    %615 = vector.shape_cast %614 : vector<1x1x8x64xf32> to vector<8x64xf32>
    %c88_1056 = arith.constant 88 : index
    %c0_1057 = arith.constant 0 : index
    %616 = vector.load %arg10[%c88_1056, %c0_1057] : memref<128x576xf32, #tpu.memory_space<vmem>>, vector<8x64xf32>
    tpu.vector_store %arg10[%c88_1056, %c0_1057], %615 {strides = array<i32>} : memref<128x576xf32, #tpu.memory_space<vmem>>, vector<8x64xf32>,
    %c1_1058 = arith.constant 1 : index
    %c4_1059 = arith.constant 4 : index
    %c0_1060 = arith.constant 0 : index
    %c0_1061 = arith.constant 0 : index
    %617 = vector.load %arg9[%c1_1058, %c4_1059, %c0_1060, %c0_1061] : memref<2x10x10x64xf32, #tpu.memory_space<vmem>>, vector<1x1x8x64xf32>
    %618 = vector.shape_cast %617 : vector<1x1x8x64xf32> to vector<8x64xf32>
    %c96_1062 = arith.constant 96 : index
    %c0_1063 = arith.constant 0 : index
    %619 = vector.load %arg10[%c96_1062, %c0_1063] : memref<128x576xf32, #tpu.memory_space<vmem>>, vector<8x64xf32>
    tpu.vector_store %arg10[%c96_1062, %c0_1063], %618 {strides = array<i32>} : memref<128x576xf32, #tpu.memory_space<vmem>>, vector<8x64xf32>,
    %c1_1064 = arith.constant 1 : index
    %c5_1065 = arith.constant 5 : index
    %c0_1066 = arith.constant 0 : index
    %c0_1067 = arith.constant 0 : index
    %620 = vector.load %arg9[%c1_1064, %c5_1065, %c0_1066, %c0_1067] : memref<2x10x10x64xf32, #tpu.memory_space<vmem>>, vector<1x1x8x64xf32>
    %621 = vector.shape_cast %620 : vector<1x1x8x64xf32> to vector<8x64xf32>
    %c104_1068 = arith.constant 104 : index
    %c0_1069 = arith.constant 0 : index
    %622 = vector.load %arg10[%c104_1068, %c0_1069] : memref<128x576xf32, #tpu.memory_space<vmem>>, vector<8x64xf32>
    tpu.vector_store %arg10[%c104_1068, %c0_1069], %621 {strides = array<i32>} : memref<128x576xf32, #tpu.memory_space<vmem>>, vector<8x64xf32>,
    %c1_1070 = arith.constant 1 : index
    %c6_1071 = arith.constant 6 : index
    %c0_1072 = arith.constant 0 : index
    %c0_1073 = arith.constant 0 : index
    %623 = vector.load %arg9[%c1_1070, %c6_1071, %c0_1072, %c0_1073] : memref<2x10x10x64xf32, #tpu.memory_space<vmem>>, vector<1x1x8x64xf32>
    %624 = vector.shape_cast %623 : vector<1x1x8x64xf32> to vector<8x64xf32>
    %c112_1074 = arith.constant 112 : index
    %c0_1075 = arith.constant 0 : index
    %625 = vector.load %arg10[%c112_1074, %c0_1075] : memref<128x576xf32, #tpu.memory_space<vmem>>, vector<8x64xf32>
    tpu.vector_store %arg10[%c112_1074, %c0_1075], %624 {strides = array<i32>} : memref<128x576xf32, #tpu.memory_space<vmem>>, vector<8x64xf32>,
    %c1_1076 = arith.constant 1 : index
    %c7_1077 = arith.constant 7 : index
    %c0_1078 = arith.constant 0 : index
    %c0_1079 = arith.constant 0 : index
    %626 = vector.load %arg9[%c1_1076, %c7_1077, %c0_1078, %c0_1079] : memref<2x10x10x64xf32, #tpu.memory_space<vmem>>, vector<1x1x8x64xf32>
    %627 = vector.shape_cast %626 : vector<1x1x8x64xf32> to vector<8x64xf32>
    %c120_1080 = arith.constant 120 : index
    %c0_1081 = arith.constant 0 : index
    %628 = vector.load %arg10[%c120_1080, %c0_1081] : memref<128x576xf32, #tpu.memory_space<vmem>>, vector<8x64xf32>
    tpu.vector_store %arg10[%c120_1080, %c0_1081], %627 {strides = array<i32>} : memref<128x576xf32, #tpu.memory_space<vmem>>, vector<8x64xf32>,
    %c0_1082 = arith.constant 0 : index
    %c0_1083 = arith.constant 0 : index
    %c1_1084 = arith.constant 1 : index
    %c0_1085 = arith.constant 0 : index
    %629 = vector.load %arg9[%c0_1082, %c0_1083, %c1_1084, %c0_1085] : memref<2x10x10x64xf32, #tpu.memory_space<vmem>>, vector<1x1x8x64xf32>
    %630 = vector.shape_cast %629 : vector<1x1x8x64xf32> to vector<8x64xf32>
    %c0_1086 = arith.constant 0 : index
    %c64_1087 = arith.constant 64 : index
    %631 = vector.load %arg10[%c0_1086, %c64_1087] : memref<128x576xf32, #tpu.memory_space<vmem>>, vector<8x64xf32>
    tpu.vector_store %arg10[%c0_1086, %c64_1087], %630 {strides = array<i32>} : memref<128x576xf32, #tpu.memory_space<vmem>>, vector<8x64xf32>,
    %c0_1088 = arith.constant 0 : index
    %c1_1089 = arith.constant 1 : index
    %c1_1090 = arith.constant 1 : index
    %c0_1091 = arith.constant 0 : index
    %632 = vector.load %arg9[%c0_1088, %c1_1089, %c1_1090, %c0_1091] : memref<2x10x10x64xf32, #tpu.memory_space<vmem>>, vector<1x1x8x64xf32>
    %633 = vector.shape_cast %632 : vector<1x1x8x64xf32> to vector<8x64xf32>
    %c8_1092 = arith.constant 8 : index
    %c64_1093 = arith.constant 64 : index
    %634 = vector.load %arg10[%c8_1092, %c64_1093] : memref<128x576xf32, #tpu.memory_space<vmem>>, vector<8x64xf32>
    tpu.vector_store %arg10[%c8_1092, %c64_1093], %633 {strides = array<i32>} : memref<128x576xf32, #tpu.memory_space<vmem>>, vector<8x64xf32>,
    %c0_1094 = arith.constant 0 : index
    %c2_1095 = arith.constant 2 : index
    %c1_1096 = arith.constant 1 : index
    %c0_1097 = arith.constant 0 : index
    %635 = vector.load %arg9[%c0_1094, %c2_1095, %c1_1096, %c0_1097] : memref<2x10x10x64xf32, #tpu.memory_space<vmem>>, vector<1x1x8x64xf32>
    %636 = vector.shape_cast %635 : vector<1x1x8x64xf32> to vector<8x64xf32>
    %c16_1098 = arith.constant 16 : index
    %c64_1099 = arith.constant 64 : index
    %637 = vector.load %arg10[%c16_1098, %c64_1099] : memref<128x576xf32, #tpu.memory_space<vmem>>, vector<8x64xf32>
    tpu.vector_store %arg10[%c16_1098, %c64_1099], %636 {strides = array<i32>} : memref<128x576xf32, #tpu.memory_space<vmem>>, vector<8x64xf32>,
    %c0_1100 = arith.constant 0 : index
    %c3_1101 = arith.constant 3 : index
    %c1_1102 = arith.constant 1 : index
    %c0_1103 = arith.constant 0 : index
    %638 = vector.load %arg9[%c0_1100, %c3_1101, %c1_1102, %c0_1103] : memref<2x10x10x64xf32, #tpu.memory_space<vmem>>, vector<1x1x8x64xf32>
    %639 = vector.shape_cast %638 : vector<1x1x8x64xf32> to vector<8x64xf32>
    %c24_1104 = arith.constant 24 : index
    %c64_1105 = arith.constant 64 : index
    %640 = vector.load %arg10[%c24_1104, %c64_1105] : memref<128x576xf32, #tpu.memory_space<vmem>>, vector<8x64xf32>
    tpu.vector_store %arg10[%c24_1104, %c64_1105], %639 {strides = array<i32>} : memref<128x576xf32, #tpu.memory_space<vmem>>, vector<8x64xf32>,
    %c0_1106 = arith.constant 0 : index
    %c4_1107 = arith.constant 4 : index
    %c1_1108 = arith.constant 1 : index
    %c0_1109 = arith.constant 0 : index
    %641 = vector.load %arg9[%c0_1106, %c4_1107, %c1_1108, %c0_1109] : memref<2x10x10x64xf32, #tpu.memory_space<vmem>>, vector<1x1x8x64xf32>
    %642 = vector.shape_cast %641 : vector<1x1x8x64xf32> to vector<8x64xf32>
    %c32_1110 = arith.constant 32 : index
    %c64_1111 = arith.constant 64 : index
    %643 = vector.load %arg10[%c32_1110, %c64_1111] : memref<128x576xf32, #tpu.memory_space<vmem>>, vector<8x64xf32>
    tpu.vector_store %arg10[%c32_1110, %c64_1111], %642 {strides = array<i32>} : memref<128x576xf32, #tpu.memory_space<vmem>>, vector<8x64xf32>,
    %c0_1112 = arith.constant 0 : index
    %c5_1113 = arith.constant 5 : index
    %c1_1114 = arith.constant 1 : index
    %c0_1115 = arith.constant 0 : index
    %644 = vector.load %arg9[%c0_1112, %c5_1113, %c1_1114, %c0_1115] : memref<2x10x10x64xf32, #tpu.memory_space<vmem>>, vector<1x1x8x64xf32>
    %645 = vector.shape_cast %644 : vector<1x1x8x64xf32> to vector<8x64xf32>
    %c40_1116 = arith.constant 40 : index
    %c64_1117 = arith.constant 64 : index
    %646 = vector.load %arg10[%c40_1116, %c64_1117] : memref<128x576xf32, #tpu.memory_space<vmem>>, vector<8x64xf32>
    tpu.vector_store %arg10[%c40_1116, %c64_1117], %645 {strides = array<i32>} : memref<128x576xf32, #tpu.memory_space<vmem>>, vector<8x64xf32>,
    %c0_1118 = arith.constant 0 : index
    %c6_1119 = arith.constant 6 : index
    %c1_1120 = arith.constant 1 : index
    %c0_1121 = arith.constant 0 : index
    %647 = vector.load %arg9[%c0_1118, %c6_1119, %c1_1120, %c0_1121] : memref<2x10x10x64xf32, #tpu.memory_space<vmem>>, vector<1x1x8x64xf32>
    %648 = vector.shape_cast %647 : vector<1x1x8x64xf32> to vector<8x64xf32>
    %c48_1122 = arith.constant 48 : index
    %c64_1123 = arith.constant 64 : index
    %649 = vector.load %arg10[%c48_1122, %c64_1123] : memref<128x576xf32, #tpu.memory_space<vmem>>, vector<8x64xf32>
    tpu.vector_store %arg10[%c48_1122, %c64_1123], %648 {strides = array<i32>} : memref<128x576xf32, #tpu.memory_space<vmem>>, vector<8x64xf32>,
    %c0_1124 = arith.constant 0 : index
    %c7_1125 = arith.constant 7 : index
    %c1_1126 = arith.constant 1 : index
    %c0_1127 = arith.constant 0 : index
    %650 = vector.load %arg9[%c0_1124, %c7_1125, %c1_1126, %c0_1127] : memref<2x10x10x64xf32, #tpu.memory_space<vmem>>, vector<1x1x8x64xf32>
    %651 = vector.shape_cast %650 : vector<1x1x8x64xf32> to vector<8x64xf32>
    %c56_1128 = arith.constant 56 : index
    %c64_1129 = arith.constant 64 : index
    %652 = vector.load %arg10[%c56_1128, %c64_1129] : memref<128x576xf32, #tpu.memory_space<vmem>>, vector<8x64xf32>
    tpu.vector_store %arg10[%c56_1128, %c64_1129], %651 {strides = array<i32>} : memref<128x576xf32, #tpu.memory_space<vmem>>, vector<8x64xf32>,
    %c1_1130 = arith.constant 1 : index
    %c0_1131 = arith.constant 0 : index
    %c1_1132 = arith.constant 1 : index
    %c0_1133 = arith.constant 0 : index
    %653 = vector.load %arg9[%c1_1130, %c0_1131, %c1_1132, %c0_1133] : memref<2x10x10x64xf32, #tpu.memory_space<vmem>>, vector<1x1x8x64xf32>
    %654 = vector.shape_cast %653 : vector<1x1x8x64xf32> to vector<8x64xf32>
    %c64_1134 = arith.constant 64 : index
    %c64_1135 = arith.constant 64 : index
    %655 = vector.load %arg10[%c64_1134, %c64_1135] : memref<128x576xf32, #tpu.memory_space<vmem>>, vector<8x64xf32>
    tpu.vector_store %arg10[%c64_1134, %c64_1135], %654 {strides = array<i32>} : memref<128x576xf32, #tpu.memory_space<vmem>>, vector<8x64xf32>,
    %c1_1136 = arith.constant 1 : index
    %c1_1137 = arith.constant 1 : index
    %c1_1138 = arith.constant 1 : index
    %c0_1139 = arith.constant 0 : index
    %656 = vector.load %arg9[%c1_1136, %c1_1137, %c1_1138, %c0_1139] : memref<2x10x10x64xf32, #tpu.memory_space<vmem>>, vector<1x1x8x64xf32>
    %657 = vector.shape_cast %656 : vector<1x1x8x64xf32> to vector<8x64xf32>
    %c72_1140 = arith.constant 72 : index
    %c64_1141 = arith.constant 64 : index
    %658 = vector.load %arg10[%c72_1140, %c64_1141] : memref<128x576xf32, #tpu.memory_space<vmem>>, vector<8x64xf32>
    tpu.vector_store %arg10[%c72_1140, %c64_1141], %657 {strides = array<i32>} : memref<128x576xf32, #tpu.memory_space<vmem>>, vector<8x64xf32>,
    %c1_1142 = arith.constant 1 : index
    %c2_1143 = arith.constant 2 : index
    %c1_1144 = arith.constant 1 : index
    %c0_1145 = arith.constant 0 : index
    %659 = vector.load %arg9[%c1_1142, %c2_1143, %c1_1144, %c0_1145] : memref<2x10x10x64xf32, #tpu.memory_space<vmem>>, vector<1x1x8x64xf32>
    %660 = vector.shape_cast %659 : vector<1x1x8x64xf32> to vector<8x64xf32>
    %c80_1146 = arith.constant 80 : index
    %c64_1147 = arith.constant 64 : index
    %661 = vector.load %arg10[%c80_1146, %c64_1147] : memref<128x576xf32, #tpu.memory_space<vmem>>, vector<8x64xf32>
    tpu.vector_store %arg10[%c80_1146, %c64_1147], %660 {strides = array<i32>} : memref<128x576xf32, #tpu.memory_space<vmem>>, vector<8x64xf32>,
    %c1_1148 = arith.constant 1 : index
    %c3_1149 = arith.constant 3 : index
    %c1_1150 = arith.constant 1 : index
    %c0_1151 = arith.constant 0 : index
    %662 = vector.load %arg9[%c1_1148, %c3_1149, %c1_1150, %c0_1151] : memref<2x10x10x64xf32, #tpu.memory_space<vmem>>, vector<1x1x8x64xf32>
    %663 = vector.shape_cast %662 : vector<1x1x8x64xf32> to vector<8x64xf32>
    %c88_1152 = arith.constant 88 : index
    %c64_1153 = arith.constant 64 : index
    %664 = vector.load %arg10[%c88_1152, %c64_1153] : memref<128x576xf32, #tpu.memory_space<vmem>>, vector<8x64xf32>
    tpu.vector_store %arg10[%c88_1152, %c64_1153], %663 {strides = array<i32>} : memref<128x576xf32, #tpu.memory_space<vmem>>, vector<8x64xf32>,
    %c1_1154 = arith.constant 1 : index
    %c4_1155 = arith.constant 4 : index
    %c1_1156 = arith.constant 1 : index
    %c0_1157 = arith.constant 0 : index
    %665 = vector.load %arg9[%c1_1154, %c4_1155, %c1_1156, %c0_1157] : memref<2x10x10x64xf32, #tpu.memory_space<vmem>>, vector<1x1x8x64xf32>
    %666 = vector.shape_cast %665 : vector<1x1x8x64xf32> to vector<8x64xf32>
    %c96_1158 = arith.constant 96 : index
    %c64_1159 = arith.constant 64 : index
    %667 = vector.load %arg10[%c96_1158, %c64_1159] : memref<128x576xf32, #tpu.memory_space<vmem>>, vector<8x64xf32>
    tpu.vector_store %arg10[%c96_1158, %c64_1159], %666 {strides = array<i32>} : memref<128x576xf32, #tpu.memory_space<vmem>>, vector<8x64xf32>,
    %c1_1160 = arith.constant 1 : index
    %c5_1161 = arith.constant 5 : index
    %c1_1162 = arith.constant 1 : index
    %c0_1163 = arith.constant 0 : index
    %668 = vector.load %arg9[%c1_1160, %c5_1161, %c1_1162, %c0_1163] : memref<2x10x10x64xf32, #tpu.memory_space<vmem>>, vector<1x1x8x64xf32>
    %669 = vector.shape_cast %668 : vector<1x1x8x64xf32> to vector<8x64xf32>
    %c104_1164 = arith.constant 104 : index
    %c64_1165 = arith.constant 64 : index
    %670 = vector.load %arg10[%c104_1164, %c64_1165] : memref<128x576xf32, #tpu.memory_space<vmem>>, vector<8x64xf32>
    tpu.vector_store %arg10[%c104_1164, %c64_1165], %669 {strides = array<i32>} : memref<128x576xf32, #tpu.memory_space<vmem>>, vector<8x64xf32>,
    %c1_1166 = arith.constant 1 : index
    %c6_1167 = arith.constant 6 : index
    %c1_1168 = arith.constant 1 : index
    %c0_1169 = arith.constant 0 : index
    %671 = vector.load %arg9[%c1_1166, %c6_1167, %c1_1168, %c0_1169] : memref<2x10x10x64xf32, #tpu.memory_space<vmem>>, vector<1x1x8x64xf32>
    %672 = vector.shape_cast %671 : vector<1x1x8x64xf32> to vector<8x64xf32>
    %c112_1170 = arith.constant 112 : index
    %c64_1171 = arith.constant 64 : index
    %673 = vector.load %arg10[%c112_1170, %c64_1171] : memref<128x576xf32, #tpu.memory_space<vmem>>, vector<8x64xf32>
    tpu.vector_store %arg10[%c112_1170, %c64_1171], %672 {strides = array<i32>} : memref<128x576xf32, #tpu.memory_space<vmem>>, vector<8x64xf32>,
    %c1_1172 = arith.constant 1 : index
    %c7_1173 = arith.constant 7 : index
    %c1_1174 = arith.constant 1 : index
    %c0_1175 = arith.constant 0 : index
    %674 = vector.load %arg9[%c1_1172, %c7_1173, %c1_1174, %c0_1175] : memref<2x10x10x64xf32, #tpu.memory_space<vmem>>, vector<1x1x8x64xf32>
    %675 = vector.shape_cast %674 : vector<1x1x8x64xf32> to vector<8x64xf32>
    %c120_1176 = arith.constant 120 : index
    %c64_1177 = arith.constant 64 : index
    %676 = vector.load %arg10[%c120_1176, %c64_1177] : memref<128x576xf32, #tpu.memory_space<vmem>>, vector<8x64xf32>
    tpu.vector_store %arg10[%c120_1176, %c64_1177], %675 {strides = array<i32>} : memref<128x576xf32, #tpu.memory_space<vmem>>, vector<8x64xf32>,
    %c0_1178 = arith.constant 0 : index
    %c0_1179 = arith.constant 0 : index
    %c2_1180 = arith.constant 2 : index
    %c0_1181 = arith.constant 0 : index
    %677 = vector.load %arg9[%c0_1178, %c0_1179, %c2_1180, %c0_1181] : memref<2x10x10x64xf32, #tpu.memory_space<vmem>>, vector<1x1x8x64xf32>
    %678 = vector.shape_cast %677 : vector<1x1x8x64xf32> to vector<8x64xf32>
    %c0_1182 = arith.constant 0 : index
    %c128_1183 = arith.constant 128 : index
    %679 = vector.load %arg10[%c0_1182, %c128_1183] : memref<128x576xf32, #tpu.memory_space<vmem>>, vector<8x64xf32>
    tpu.vector_store %arg10[%c0_1182, %c128_1183], %678 {strides = array<i32>} : memref<128x576xf32, #tpu.memory_space<vmem>>, vector<8x64xf32>,
    %c0_1184 = arith.constant 0 : index
    %c1_1185 = arith.constant 1 : index
    %c2_1186 = arith.constant 2 : index
    %c0_1187 = arith.constant 0 : index
    %680 = vector.load %arg9[%c0_1184, %c1_1185, %c2_1186, %c0_1187] : memref<2x10x10x64xf32, #tpu.memory_space<vmem>>, vector<1x1x8x64xf32>
    %681 = vector.shape_cast %680 : vector<1x1x8x64xf32> to vector<8x64xf32>
    %c8_1188 = arith.constant 8 : index
    %c128_1189 = arith.constant 128 : index
    %682 = vector.load %arg10[%c8_1188, %c128_1189] : memref<128x576xf32, #tpu.memory_space<vmem>>, vector<8x64xf32>
    tpu.vector_store %arg10[%c8_1188, %c128_1189], %681 {strides = array<i32>} : memref<128x576xf32, #tpu.memory_space<vmem>>, vector<8x64xf32>,
    %c0_1190 = arith.constant 0 : index
    %c2_1191 = arith.constant 2 : index
    %c2_1192 = arith.constant 2 : index
    %c0_1193 = arith.constant 0 : index
    %683 = vector.load %arg9[%c0_1190, %c2_1191, %c2_1192, %c0_1193] : memref<2x10x10x64xf32, #tpu.memory_space<vmem>>, vector<1x1x8x64xf32>
    %684 = vector.shape_cast %683 : vector<1x1x8x64xf32> to vector<8x64xf32>
    %c16_1194 = arith.constant 16 : index
    %c128_1195 = arith.constant 128 : index
    %685 = vector.load %arg10[%c16_1194, %c128_1195] : memref<128x576xf32, #tpu.memory_space<vmem>>, vector<8x64xf32>
    tpu.vector_store %arg10[%c16_1194, %c128_1195], %684 {strides = array<i32>} : memref<128x576xf32, #tpu.memory_space<vmem>>, vector<8x64xf32>,
    %c0_1196 = arith.constant 0 : index
    %c3_1197 = arith.constant 3 : index
    %c2_1198 = arith.constant 2 : index
    %c0_1199 = arith.constant 0 : index
    %686 = vector.load %arg9[%c0_1196, %c3_1197, %c2_1198, %c0_1199] : memref<2x10x10x64xf32, #tpu.memory_space<vmem>>, vector<1x1x8x64xf32>
    %687 = vector.shape_cast %686 : vector<1x1x8x64xf32> to vector<8x64xf32>
    %c24_1200 = arith.constant 24 : index
    %c128_1201 = arith.constant 128 : index
    %688 = vector.load %arg10[%c24_1200, %c128_1201] : memref<128x576xf32, #tpu.memory_space<vmem>>, vector<8x64xf32>
    tpu.vector_store %arg10[%c24_1200, %c128_1201], %687 {strides = array<i32>} : memref<128x576xf32, #tpu.memory_space<vmem>>, vector<8x64xf32>,
    %c0_1202 = arith.constant 0 : index
    %c4_1203 = arith.constant 4 : index
    %c2_1204 = arith.constant 2 : index
    %c0_1205 = arith.constant 0 : index
    %689 = vector.load %arg9[%c0_1202, %c4_1203, %c2_1204, %c0_1205] : memref<2x10x10x64xf32, #tpu.memory_space<vmem>>, vector<1x1x8x64xf32>
    %690 = vector.shape_cast %689 : vector<1x1x8x64xf32> to vector<8x64xf32>
    %c32_1206 = arith.constant 32 : index
    %c128_1207 = arith.constant 128 : index
    %691 = vector.load %arg10[%c32_1206, %c128_1207] : memref<128x576xf32, #tpu.memory_space<vmem>>, vector<8x64xf32>
    tpu.vector_store %arg10[%c32_1206, %c128_1207], %690 {strides = array<i32>} : memref<128x576xf32, #tpu.memory_space<vmem>>, vector<8x64xf32>,
    %c0_1208 = arith.constant 0 : index
    %c5_1209 = arith.constant 5 : index
    %c2_1210 = arith.constant 2 : index
    %c0_1211 = arith.constant 0 : index
    %692 = vector.load %arg9[%c0_1208, %c5_1209, %c2_1210, %c0_1211] : memref<2x10x10x64xf32, #tpu.memory_space<vmem>>, vector<1x1x8x64xf32>
    %693 = vector.shape_cast %692 : vector<1x1x8x64xf32> to vector<8x64xf32>
    %c40_1212 = arith.constant 40 : index
    %c128_1213 = arith.constant 128 : index
    %694 = vector.load %arg10[%c40_1212, %c128_1213] : memref<128x576xf32, #tpu.memory_space<vmem>>, vector<8x64xf32>
    tpu.vector_store %arg10[%c40_1212, %c128_1213], %693 {strides = array<i32>} : memref<128x576xf32, #tpu.memory_space<vmem>>, vector<8x64xf32>,
    %c0_1214 = arith.constant 0 : index
    %c6_1215 = arith.constant 6 : index
    %c2_1216 = arith.constant 2 : index
    %c0_1217 = arith.constant 0 : index
    %695 = vector.load %arg9[%c0_1214, %c6_1215, %c2_1216, %c0_1217] : memref<2x10x10x64xf32, #tpu.memory_space<vmem>>, vector<1x1x8x64xf32>
    %696 = vector.shape_cast %695 : vector<1x1x8x64xf32> to vector<8x64xf32>
    %c48_1218 = arith.constant 48 : index
    %c128_1219 = arith.constant 128 : index
    %697 = vector.load %arg10[%c48_1218, %c128_1219] : memref<128x576xf32, #tpu.memory_space<vmem>>, vector<8x64xf32>
    tpu.vector_store %arg10[%c48_1218, %c128_1219], %696 {strides = array<i32>} : memref<128x576xf32, #tpu.memory_space<vmem>>, vector<8x64xf32>,
    %c0_1220 = arith.constant 0 : index
    %c7_1221 = arith.constant 7 : index
    %c2_1222 = arith.constant 2 : index
    %c0_1223 = arith.constant 0 : index
    %698 = vector.load %arg9[%c0_1220, %c7_1221, %c2_1222, %c0_1223] : memref<2x10x10x64xf32, #tpu.memory_space<vmem>>, vector<1x1x8x64xf32>
    %699 = vector.shape_cast %698 : vector<1x1x8x64xf32> to vector<8x64xf32>
    %c56_1224 = arith.constant 56 : index
    %c128_1225 = arith.constant 128 : index
    %700 = vector.load %arg10[%c56_1224, %c128_1225] : memref<128x576xf32, #tpu.memory_space<vmem>>, vector<8x64xf32>
    tpu.vector_store %arg10[%c56_1224, %c128_1225], %699 {strides = array<i32>} : memref<128x576xf32, #tpu.memory_space<vmem>>, vector<8x64xf32>,
    %c1_1226 = arith.constant 1 : index
    %c0_1227 = arith.constant 0 : index
    %c2_1228 = arith.constant 2 : index
    %c0_1229 = arith.constant 0 : index
    %701 = vector.load %arg9[%c1_1226, %c0_1227, %c2_1228, %c0_1229] : memref<2x10x10x64xf32, #tpu.memory_space<vmem>>, vector<1x1x8x64xf32>
    %702 = vector.shape_cast %701 : vector<1x1x8x64xf32> to vector<8x64xf32>
    %c64_1230 = arith.constant 64 : index
    %c128_1231 = arith.constant 128 : index
    %703 = vector.load %arg10[%c64_1230, %c128_1231] : memref<128x576xf32, #tpu.memory_space<vmem>>, vector<8x64xf32>
    tpu.vector_store %arg10[%c64_1230, %c128_1231], %702 {strides = array<i32>} : memref<128x576xf32, #tpu.memory_space<vmem>>, vector<8x64xf32>,
    %c1_1232 = arith.constant 1 : index
    %c1_1233 = arith.constant 1 : index
    %c2_1234 = arith.constant 2 : index
    %c0_1235 = arith.constant 0 : index
    %704 = vector.load %arg9[%c1_1232, %c1_1233, %c2_1234, %c0_1235] : memref<2x10x10x64xf32, #tpu.memory_space<vmem>>, vector<1x1x8x64xf32>
    %705 = vector.shape_cast %704 : vector<1x1x8x64xf32> to vector<8x64xf32>
    %c72_1236 = arith.constant 72 : index
    %c128_1237 = arith.constant 128 : index
    %706 = vector.load %arg10[%c72_1236, %c128_1237] : memref<128x576xf32, #tpu.memory_space<vmem>>, vector<8x64xf32>
    tpu.vector_store %arg10[%c72_1236, %c128_1237], %705 {strides = array<i32>} : memref<128x576xf32, #tpu.memory_space<vmem>>, vector<8x64xf32>,
    %c1_1238 = arith.constant 1 : index
    %c2_1239 = arith.constant 2 : index
    %c2_1240 = arith.constant 2 : index
    %c0_1241 = arith.constant 0 : index
    %707 = vector.load %arg9[%c1_1238, %c2_1239, %c2_1240, %c0_1241] : memref<2x10x10x64xf32, #tpu.memory_space<vmem>>, vector<1x1x8x64xf32>
    %708 = vector.shape_cast %707 : vector<1x1x8x64xf32> to vector<8x64xf32>
    %c80_1242 = arith.constant 80 : index
    %c128_1243 = arith.constant 128 : index
    %709 = vector.load %arg10[%c80_1242, %c128_1243] : memref<128x576xf32, #tpu.memory_space<vmem>>, vector<8x64xf32>
    tpu.vector_store %arg10[%c80_1242, %c128_1243], %708 {strides = array<i32>} : memref<128x576xf32, #tpu.memory_space<vmem>>, vector<8x64xf32>,
    %c1_1244 = arith.constant 1 : index
    %c3_1245 = arith.constant 3 : index
    %c2_1246 = arith.constant 2 : index
    %c0_1247 = arith.constant 0 : index
    %710 = vector.load %arg9[%c1_1244, %c3_1245, %c2_1246, %c0_1247] : memref<2x10x10x64xf32, #tpu.memory_space<vmem>>, vector<1x1x8x64xf32>
    %711 = vector.shape_cast %710 : vector<1x1x8x64xf32> to vector<8x64xf32>
    %c88_1248 = arith.constant 88 : index
    %c128_1249 = arith.constant 128 : index
    %712 = vector.load %arg10[%c88_1248, %c128_1249] : memref<128x576xf32, #tpu.memory_space<vmem>>, vector<8x64xf32>
    tpu.vector_store %arg10[%c88_1248, %c128_1249], %711 {strides = array<i32>} : memref<128x576xf32, #tpu.memory_space<vmem>>, vector<8x64xf32>,
    %c1_1250 = arith.constant 1 : index
    %c4_1251 = arith.constant 4 : index
    %c2_1252 = arith.constant 2 : index
    %c0_1253 = arith.constant 0 : index
    %713 = vector.load %arg9[%c1_1250, %c4_1251, %c2_1252, %c0_1253] : memref<2x10x10x64xf32, #tpu.memory_space<vmem>>, vector<1x1x8x64xf32>
    %714 = vector.shape_cast %713 : vector<1x1x8x64xf32> to vector<8x64xf32>
    %c96_1254 = arith.constant 96 : index
    %c128_1255 = arith.constant 128 : index
    %715 = vector.load %arg10[%c96_1254, %c128_1255] : memref<128x576xf32, #tpu.memory_space<vmem>>, vector<8x64xf32>
    tpu.vector_store %arg10[%c96_1254, %c128_1255], %714 {strides = array<i32>} : memref<128x576xf32, #tpu.memory_space<vmem>>, vector<8x64xf32>,
    %c1_1256 = arith.constant 1 : index
    %c5_1257 = arith.constant 5 : index
    %c2_1258 = arith.constant 2 : index
    %c0_1259 = arith.constant 0 : index
    %716 = vector.load %arg9[%c1_1256, %c5_1257, %c2_1258, %c0_1259] : memref<2x10x10x64xf32, #tpu.memory_space<vmem>>, vector<1x1x8x64xf32>
    %717 = vector.shape_cast %716 : vector<1x1x8x64xf32> to vector<8x64xf32>
    %c104_1260 = arith.constant 104 : index
    %c128_1261 = arith.constant 128 : index
    %718 = vector.load %arg10[%c104_1260, %c128_1261] : memref<128x576xf32, #tpu.memory_space<vmem>>, vector<8x64xf32>
    tpu.vector_store %arg10[%c104_1260, %c128_1261], %717 {strides = array<i32>} : memref<128x576xf32, #tpu.memory_space<vmem>>, vector<8x64xf32>,
    %c1_1262 = arith.constant 1 : index
    %c6_1263 = arith.constant 6 : index
    %c2_1264 = arith.constant 2 : index
    %c0_1265 = arith.constant 0 : index
    %719 = vector.load %arg9[%c1_1262, %c6_1263, %c2_1264, %c0_1265] : memref<2x10x10x64xf32, #tpu.memory_space<vmem>>, vector<1x1x8x64xf32>
    %720 = vector.shape_cast %719 : vector<1x1x8x64xf32> to vector<8x64xf32>
    %c112_1266 = arith.constant 112 : index
    %c128_1267 = arith.constant 128 : index
    %721 = vector.load %arg10[%c112_1266, %c128_1267] : memref<128x576xf32, #tpu.memory_space<vmem>>, vector<8x64xf32>
    tpu.vector_store %arg10[%c112_1266, %c128_1267], %720 {strides = array<i32>} : memref<128x576xf32, #tpu.memory_space<vmem>>, vector<8x64xf32>,
    %c1_1268 = arith.constant 1 : index
    %c7_1269 = arith.constant 7 : index
    %c2_1270 = arith.constant 2 : index
    %c0_1271 = arith.constant 0 : index
    %722 = vector.load %arg9[%c1_1268, %c7_1269, %c2_1270, %c0_1271] : memref<2x10x10x64xf32, #tpu.memory_space<vmem>>, vector<1x1x8x64xf32>
    %723 = vector.shape_cast %722 : vector<1x1x8x64xf32> to vector<8x64xf32>
    %c120_1272 = arith.constant 120 : index
    %c128_1273 = arith.constant 128 : index
    %724 = vector.load %arg10[%c120_1272, %c128_1273] : memref<128x576xf32, #tpu.memory_space<vmem>>, vector<8x64xf32>
    tpu.vector_store %arg10[%c120_1272, %c128_1273], %723 {strides = array<i32>} : memref<128x576xf32, #tpu.memory_space<vmem>>, vector<8x64xf32>,
    %c0_1274 = arith.constant 0 : index
    %c1_1275 = arith.constant 1 : index
    %c0_1276 = arith.constant 0 : index
    %c0_1277 = arith.constant 0 : index
    %725 = vector.load %arg9[%c0_1274, %c1_1275, %c0_1276, %c0_1277] : memref<2x10x10x64xf32, #tpu.memory_space<vmem>>, vector<1x1x8x64xf32>
    %726 = vector.shape_cast %725 : vector<1x1x8x64xf32> to vector<8x64xf32>
    %c0_1278 = arith.constant 0 : index
    %c192_1279 = arith.constant 192 : index
    %727 = vector.load %arg10[%c0_1278, %c192_1279] : memref<128x576xf32, #tpu.memory_space<vmem>>, vector<8x64xf32>
    tpu.vector_store %arg10[%c0_1278, %c192_1279], %726 {strides = array<i32>} : memref<128x576xf32, #tpu.memory_space<vmem>>, vector<8x64xf32>,
    %c0_1280 = arith.constant 0 : index
    %c2_1281 = arith.constant 2 : index
    %c0_1282 = arith.constant 0 : index
    %c0_1283 = arith.constant 0 : index
    %728 = vector.load %arg9[%c0_1280, %c2_1281, %c0_1282, %c0_1283] : memref<2x10x10x64xf32, #tpu.memory_space<vmem>>, vector<1x1x8x64xf32>
    %729 = vector.shape_cast %728 : vector<1x1x8x64xf32> to vector<8x64xf32>
    %c8_1284 = arith.constant 8 : index
    %c192_1285 = arith.constant 192 : index
    %730 = vector.load %arg10[%c8_1284, %c192_1285] : memref<128x576xf32, #tpu.memory_space<vmem>>, vector<8x64xf32>
    tpu.vector_store %arg10[%c8_1284, %c192_1285], %729 {strides = array<i32>} : memref<128x576xf32, #tpu.memory_space<vmem>>, vector<8x64xf32>,
    %c0_1286 = arith.constant 0 : index
    %c3_1287 = arith.constant 3 : index
    %c0_1288 = arith.constant 0 : index
    %c0_1289 = arith.constant 0 : index
    %731 = vector.load %arg9[%c0_1286, %c3_1287, %c0_1288, %c0_1289] : memref<2x10x10x64xf32, #tpu.memory_space<vmem>>, vector<1x1x8x64xf32>
    %732 = vector.shape_cast %731 : vector<1x1x8x64xf32> to vector<8x64xf32>
    %c16_1290 = arith.constant 16 : index
    %c192_1291 = arith.constant 192 : index
    %733 = vector.load %arg10[%c16_1290, %c192_1291] : memref<128x576xf32, #tpu.memory_space<vmem>>, vector<8x64xf32>
    tpu.vector_store %arg10[%c16_1290, %c192_1291], %732 {strides = array<i32>} : memref<128x576xf32, #tpu.memory_space<vmem>>, vector<8x64xf32>,
    %c0_1292 = arith.constant 0 : index
    %c4_1293 = arith.constant 4 : index
    %c0_1294 = arith.constant 0 : index
    %c0_1295 = arith.constant 0 : index
    %734 = vector.load %arg9[%c0_1292, %c4_1293, %c0_1294, %c0_1295] : memref<2x10x10x64xf32, #tpu.memory_space<vmem>>, vector<1x1x8x64xf32>
    %735 = vector.shape_cast %734 : vector<1x1x8x64xf32> to vector<8x64xf32>
    %c24_1296 = arith.constant 24 : index
    %c192_1297 = arith.constant 192 : index
    %736 = vector.load %arg10[%c24_1296, %c192_1297] : memref<128x576xf32, #tpu.memory_space<vmem>>, vector<8x64xf32>
    tpu.vector_store %arg10[%c24_1296, %c192_1297], %735 {strides = array<i32>} : memref<128x576xf32, #tpu.memory_space<vmem>>, vector<8x64xf32>,
    %c0_1298 = arith.constant 0 : index
    %c5_1299 = arith.constant 5 : index
    %c0_1300 = arith.constant 0 : index
    %c0_1301 = arith.constant 0 : index
    %737 = vector.load %arg9[%c0_1298, %c5_1299, %c0_1300, %c0_1301] : memref<2x10x10x64xf32, #tpu.memory_space<vmem>>, vector<1x1x8x64xf32>
    %738 = vector.shape_cast %737 : vector<1x1x8x64xf32> to vector<8x64xf32>
    %c32_1302 = arith.constant 32 : index
    %c192_1303 = arith.constant 192 : index
    %739 = vector.load %arg10[%c32_1302, %c192_1303] : memref<128x576xf32, #tpu.memory_space<vmem>>, vector<8x64xf32>
    tpu.vector_store %arg10[%c32_1302, %c192_1303], %738 {strides = array<i32>} : memref<128x576xf32, #tpu.memory_space<vmem>>, vector<8x64xf32>,
    %c0_1304 = arith.constant 0 : index
    %c6_1305 = arith.constant 6 : index
    %c0_1306 = arith.constant 0 : index
    %c0_1307 = arith.constant 0 : index
    %740 = vector.load %arg9[%c0_1304, %c6_1305, %c0_1306, %c0_1307] : memref<2x10x10x64xf32, #tpu.memory_space<vmem>>, vector<1x1x8x64xf32>
    %741 = vector.shape_cast %740 : vector<1x1x8x64xf32> to vector<8x64xf32>
    %c40_1308 = arith.constant 40 : index
    %c192_1309 = arith.constant 192 : index
    %742 = vector.load %arg10[%c40_1308, %c192_1309] : memref<128x576xf32, #tpu.memory_space<vmem>>, vector<8x64xf32>
    tpu.vector_store %arg10[%c40_1308, %c192_1309], %741 {strides = array<i32>} : memref<128x576xf32, #tpu.memory_space<vmem>>, vector<8x64xf32>,
    %c0_1310 = arith.constant 0 : index
    %c7_1311 = arith.constant 7 : index
    %c0_1312 = arith.constant 0 : index
    %c0_1313 = arith.constant 0 : index
    %743 = vector.load %arg9[%c0_1310, %c7_1311, %c0_1312, %c0_1313] : memref<2x10x10x64xf32, #tpu.memory_space<vmem>>, vector<1x1x8x64xf32>
    %744 = vector.shape_cast %743 : vector<1x1x8x64xf32> to vector<8x64xf32>
    %c48_1314 = arith.constant 48 : index
    %c192_1315 = arith.constant 192 : index
    %745 = vector.load %arg10[%c48_1314, %c192_1315] : memref<128x576xf32, #tpu.memory_space<vmem>>, vector<8x64xf32>
    tpu.vector_store %arg10[%c48_1314, %c192_1315], %744 {strides = array<i32>} : memref<128x576xf32, #tpu.memory_space<vmem>>, vector<8x64xf32>,
    %c0_1316 = arith.constant 0 : index
    %c8_1317 = arith.constant 8 : index
    %c0_1318 = arith.constant 0 : index
    %c0_1319 = arith.constant 0 : index
    %746 = vector.load %arg9[%c0_1316, %c8_1317, %c0_1318, %c0_1319] : memref<2x10x10x64xf32, #tpu.memory_space<vmem>>, vector<1x1x8x64xf32>
    %747 = vector.shape_cast %746 : vector<1x1x8x64xf32> to vector<8x64xf32>
    %c56_1320 = arith.constant 56 : index
    %c192_1321 = arith.constant 192 : index
    %748 = vector.load %arg10[%c56_1320, %c192_1321] : memref<128x576xf32, #tpu.memory_space<vmem>>, vector<8x64xf32>
    tpu.vector_store %arg10[%c56_1320, %c192_1321], %747 {strides = array<i32>} : memref<128x576xf32, #tpu.memory_space<vmem>>, vector<8x64xf32>,
    %c1_1322 = arith.constant 1 : index
    %c1_1323 = arith.constant 1 : index
    %c0_1324 = arith.constant 0 : index
    %c0_1325 = arith.constant 0 : index
    %749 = vector.load %arg9[%c1_1322, %c1_1323, %c0_1324, %c0_1325] : memref<2x10x10x64xf32, #tpu.memory_space<vmem>>, vector<1x1x8x64xf32>
    %750 = vector.shape_cast %749 : vector<1x1x8x64xf32> to vector<8x64xf32>
    %c64_1326 = arith.constant 64 : index
    %c192_1327 = arith.constant 192 : index
    %751 = vector.load %arg10[%c64_1326, %c192_1327] : memref<128x576xf32, #tpu.memory_space<vmem>>, vector<8x64xf32>
    tpu.vector_store %arg10[%c64_1326, %c192_1327], %750 {strides = array<i32>} : memref<128x576xf32, #tpu.memory_space<vmem>>, vector<8x64xf32>,
    %c1_1328 = arith.constant 1 : index
    %c2_1329 = arith.constant 2 : index
    %c0_1330 = arith.constant 0 : index
    %c0_1331 = arith.constant 0 : index
    %752 = vector.load %arg9[%c1_1328, %c2_1329, %c0_1330, %c0_1331] : memref<2x10x10x64xf32, #tpu.memory_space<vmem>>, vector<1x1x8x64xf32>
    %753 = vector.shape_cast %752 : vector<1x1x8x64xf32> to vector<8x64xf32>
    %c72_1332 = arith.constant 72 : index
    %c192_1333 = arith.constant 192 : index
    %754 = vector.load %arg10[%c72_1332, %c192_1333] : memref<128x576xf32, #tpu.memory_space<vmem>>, vector<8x64xf32>
    tpu.vector_store %arg10[%c72_1332, %c192_1333], %753 {strides = array<i32>} : memref<128x576xf32, #tpu.memory_space<vmem>>, vector<8x64xf32>,
    %c1_1334 = arith.constant 1 : index
    %c3_1335 = arith.constant 3 : index
    %c0_1336 = arith.constant 0 : index
    %c0_1337 = arith.constant 0 : index
    %755 = vector.load %arg9[%c1_1334, %c3_1335, %c0_1336, %c0_1337] : memref<2x10x10x64xf32, #tpu.memory_space<vmem>>, vector<1x1x8x64xf32>
    %756 = vector.shape_cast %755 : vector<1x1x8x64xf32> to vector<8x64xf32>
    %c80_1338 = arith.constant 80 : index
    %c192_1339 = arith.constant 192 : index
    %757 = vector.load %arg10[%c80_1338, %c192_1339] : memref<128x576xf32, #tpu.memory_space<vmem>>, vector<8x64xf32>
    tpu.vector_store %arg10[%c80_1338, %c192_1339], %756 {strides = array<i32>} : memref<128x576xf32, #tpu.memory_space<vmem>>, vector<8x64xf32>,
    %c1_1340 = arith.constant 1 : index
    %c4_1341 = arith.constant 4 : index
    %c0_1342 = arith.constant 0 : index
    %c0_1343 = arith.constant 0 : index
    %758 = vector.load %arg9[%c1_1340, %c4_1341, %c0_1342, %c0_1343] : memref<2x10x10x64xf32, #tpu.memory_space<vmem>>, vector<1x1x8x64xf32>
    %759 = vector.shape_cast %758 : vector<1x1x8x64xf32> to vector<8x64xf32>
    %c88_1344 = arith.constant 88 : index
    %c192_1345 = arith.constant 192 : index
    %760 = vector.load %arg10[%c88_1344, %c192_1345] : memref<128x576xf32, #tpu.memory_space<vmem>>, vector<8x64xf32>
    tpu.vector_store %arg10[%c88_1344, %c192_1345], %759 {strides = array<i32>} : memref<128x576xf32, #tpu.memory_space<vmem>>, vector<8x64xf32>,
    %c1_1346 = arith.constant 1 : index
    %c5_1347 = arith.constant 5 : index
    %c0_1348 = arith.constant 0 : index
    %c0_1349 = arith.constant 0 : index
    %761 = vector.load %arg9[%c1_1346, %c5_1347, %c0_1348, %c0_1349] : memref<2x10x10x64xf32, #tpu.memory_space<vmem>>, vector<1x1x8x64xf32>
    %762 = vector.shape_cast %761 : vector<1x1x8x64xf32> to vector<8x64xf32>
    %c96_1350 = arith.constant 96 : index
    %c192_1351 = arith.constant 192 : index
    %763 = vector.load %arg10[%c96_1350, %c192_1351] : memref<128x576xf32, #tpu.memory_space<vmem>>, vector<8x64xf32>
    tpu.vector_store %arg10[%c96_1350, %c192_1351], %762 {strides = array<i32>} : memref<128x576xf32, #tpu.memory_space<vmem>>, vector<8x64xf32>,
    %c1_1352 = arith.constant 1 : index
    %c6_1353 = arith.constant 6 : index
    %c0_1354 = arith.constant 0 : index
    %c0_1355 = arith.constant 0 : index
    %764 = vector.load %arg9[%c1_1352, %c6_1353, %c0_1354, %c0_1355] : memref<2x10x10x64xf32, #tpu.memory_space<vmem>>, vector<1x1x8x64xf32>
    %765 = vector.shape_cast %764 : vector<1x1x8x64xf32> to vector<8x64xf32>
    %c104_1356 = arith.constant 104 : index
    %c192_1357 = arith.constant 192 : index
    %766 = vector.load %arg10[%c104_1356, %c192_1357] : memref<128x576xf32, #tpu.memory_space<vmem>>, vector<8x64xf32>
    tpu.vector_store %arg10[%c104_1356, %c192_1357], %765 {strides = array<i32>} : memref<128x576xf32, #tpu.memory_space<vmem>>, vector<8x64xf32>,
    %c1_1358 = arith.constant 1 : index
    %c7_1359 = arith.constant 7 : index
    %c0_1360 = arith.constant 0 : index
    %c0_1361 = arith.constant 0 : index
    %767 = vector.load %arg9[%c1_1358, %c7_1359, %c0_1360, %c0_1361] : memref<2x10x10x64xf32, #tpu.memory_space<vmem>>, vector<1x1x8x64xf32>
    %768 = vector.shape_cast %767 : vector<1x1x8x64xf32> to vector<8x64xf32>
    %c112_1362 = arith.constant 112 : index
    %c192_1363 = arith.constant 192 : index
    %769 = vector.load %arg10[%c112_1362, %c192_1363] : memref<128x576xf32, #tpu.memory_space<vmem>>, vector<8x64xf32>
    tpu.vector_store %arg10[%c112_1362, %c192_1363], %768 {strides = array<i32>} : memref<128x576xf32, #tpu.memory_space<vmem>>, vector<8x64xf32>,
    %c1_1364 = arith.constant 1 : index
    %c8_1365 = arith.constant 8 : index
    %c0_1366 = arith.constant 0 : index
    %c0_1367 = arith.constant 0 : index
    %770 = vector.load %arg9[%c1_1364, %c8_1365, %c0_1366, %c0_1367] : memref<2x10x10x64xf32, #tpu.memory_space<vmem>>, vector<1x1x8x64xf32>
    %771 = vector.shape_cast %770 : vector<1x1x8x64xf32> to vector<8x64xf32>
    %c120_1368 = arith.constant 120 : index
    %c192_1369 = arith.constant 192 : index
    %772 = vector.load %arg10[%c120_1368, %c192_1369] : memref<128x576xf32, #tpu.memory_space<vmem>>, vector<8x64xf32>
    tpu.vector_store %arg10[%c120_1368, %c192_1369], %771 {strides = array<i32>} : memref<128x576xf32, #tpu.memory_space<vmem>>, vector<8x64xf32>,
    %c0_1370 = arith.constant 0 : index
    %c1_1371 = arith.constant 1 : index
    %c1_1372 = arith.constant 1 : index
    %c0_1373 = arith.constant 0 : index
    %773 = vector.load %arg9[%c0_1370, %c1_1371, %c1_1372, %c0_1373] : memref<2x10x10x64xf32, #tpu.memory_space<vmem>>, vector<1x1x8x64xf32>
    %774 = vector.shape_cast %773 : vector<1x1x8x64xf32> to vector<8x64xf32>
    %c0_1374 = arith.constant 0 : index
    %c256_1375 = arith.constant 256 : index
    %775 = vector.load %arg10[%c0_1374, %c256_1375] : memref<128x576xf32, #tpu.memory_space<vmem>>, vector<8x64xf32>
    tpu.vector_store %arg10[%c0_1374, %c256_1375], %774 {strides = array<i32>} : memref<128x576xf32, #tpu.memory_space<vmem>>, vector<8x64xf32>,
    %c0_1376 = arith.constant 0 : index
    %c2_1377 = arith.constant 2 : index
    %c1_1378 = arith.constant 1 : index
    %c0_1379 = arith.constant 0 : index
    %776 = vector.load %arg9[%c0_1376, %c2_1377, %c1_1378, %c0_1379] : memref<2x10x10x64xf32, #tpu.memory_space<vmem>>, vector<1x1x8x64xf32>
    %777 = vector.shape_cast %776 : vector<1x1x8x64xf32> to vector<8x64xf32>
    %c8_1380 = arith.constant 8 : index
    %c256_1381 = arith.constant 256 : index
    %778 = vector.load %arg10[%c8_1380, %c256_1381] : memref<128x576xf32, #tpu.memory_space<vmem>>, vector<8x64xf32>
    tpu.vector_store %arg10[%c8_1380, %c256_1381], %777 {strides = array<i32>} : memref<128x576xf32, #tpu.memory_space<vmem>>, vector<8x64xf32>,
    %c0_1382 = arith.constant 0 : index
    %c3_1383 = arith.constant 3 : index
    %c1_1384 = arith.constant 1 : index
    %c0_1385 = arith.constant 0 : index
    %779 = vector.load %arg9[%c0_1382, %c3_1383, %c1_1384, %c0_1385] : memref<2x10x10x64xf32, #tpu.memory_space<vmem>>, vector<1x1x8x64xf32>
    %780 = vector.shape_cast %779 : vector<1x1x8x64xf32> to vector<8x64xf32>
    %c16_1386 = arith.constant 16 : index
    %c256_1387 = arith.constant 256 : index
    %781 = vector.load %arg10[%c16_1386, %c256_1387] : memref<128x576xf32, #tpu.memory_space<vmem>>, vector<8x64xf32>
    tpu.vector_store %arg10[%c16_1386, %c256_1387], %780 {strides = array<i32>} : memref<128x576xf32, #tpu.memory_space<vmem>>, vector<8x64xf32>,
    %c0_1388 = arith.constant 0 : index
    %c4_1389 = arith.constant 4 : index
    %c1_1390 = arith.constant 1 : index
    %c0_1391 = arith.constant 0 : index
    %782 = vector.load %arg9[%c0_1388, %c4_1389, %c1_1390, %c0_1391] : memref<2x10x10x64xf32, #tpu.memory_space<vmem>>, vector<1x1x8x64xf32>
    %783 = vector.shape_cast %782 : vector<1x1x8x64xf32> to vector<8x64xf32>
    %c24_1392 = arith.constant 24 : index
    %c256_1393 = arith.constant 256 : index
    %784 = vector.load %arg10[%c24_1392, %c256_1393] : memref<128x576xf32, #tpu.memory_space<vmem>>, vector<8x64xf32>
    tpu.vector_store %arg10[%c24_1392, %c256_1393], %783 {strides = array<i32>} : memref<128x576xf32, #tpu.memory_space<vmem>>, vector<8x64xf32>,
    %c0_1394 = arith.constant 0 : index
    %c5_1395 = arith.constant 5 : index
    %c1_1396 = arith.constant 1 : index
    %c0_1397 = arith.constant 0 : index
    %785 = vector.load %arg9[%c0_1394, %c5_1395, %c1_1396, %c0_1397] : memref<2x10x10x64xf32, #tpu.memory_space<vmem>>, vector<1x1x8x64xf32>
    %786 = vector.shape_cast %785 : vector<1x1x8x64xf32> to vector<8x64xf32>
    %c32_1398 = arith.constant 32 : index
    %c256_1399 = arith.constant 256 : index
    %787 = vector.load %arg10[%c32_1398, %c256_1399] : memref<128x576xf32, #tpu.memory_space<vmem>>, vector<8x64xf32>
    tpu.vector_store %arg10[%c32_1398, %c256_1399], %786 {strides = array<i32>} : memref<128x576xf32, #tpu.memory_space<vmem>>, vector<8x64xf32>,
    %c0_1400 = arith.constant 0 : index
    %c6_1401 = arith.constant 6 : index
    %c1_1402 = arith.constant 1 : index
    %c0_1403 = arith.constant 0 : index
    %788 = vector.load %arg9[%c0_1400, %c6_1401, %c1_1402, %c0_1403] : memref<2x10x10x64xf32, #tpu.memory_space<vmem>>, vector<1x1x8x64xf32>
    %789 = vector.shape_cast %788 : vector<1x1x8x64xf32> to vector<8x64xf32>
    %c40_1404 = arith.constant 40 : index
    %c256_1405 = arith.constant 256 : index
    %790 = vector.load %arg10[%c40_1404, %c256_1405] : memref<128x576xf32, #tpu.memory_space<vmem>>, vector<8x64xf32>
    tpu.vector_store %arg10[%c40_1404, %c256_1405], %789 {strides = array<i32>} : memref<128x576xf32, #tpu.memory_space<vmem>>, vector<8x64xf32>,
    %c0_1406 = arith.constant 0 : index
    %c7_1407 = arith.constant 7 : index
    %c1_1408 = arith.constant 1 : index
    %c0_1409 = arith.constant 0 : index
    %791 = vector.load %arg9[%c0_1406, %c7_1407, %c1_1408, %c0_1409] : memref<2x10x10x64xf32, #tpu.memory_space<vmem>>, vector<1x1x8x64xf32>
    %792 = vector.shape_cast %791 : vector<1x1x8x64xf32> to vector<8x64xf32>
    %c48_1410 = arith.constant 48 : index
    %c256_1411 = arith.constant 256 : index
    %793 = vector.load %arg10[%c48_1410, %c256_1411] : memref<128x576xf32, #tpu.memory_space<vmem>>, vector<8x64xf32>
    tpu.vector_store %arg10[%c48_1410, %c256_1411], %792 {strides = array<i32>} : memref<128x576xf32, #tpu.memory_space<vmem>>, vector<8x64xf32>,
    %c0_1412 = arith.constant 0 : index
    %c8_1413 = arith.constant 8 : index
    %c1_1414 = arith.constant 1 : index
    %c0_1415 = arith.constant 0 : index
    %794 = vector.load %arg9[%c0_1412, %c8_1413, %c1_1414, %c0_1415] : memref<2x10x10x64xf32, #tpu.memory_space<vmem>>, vector<1x1x8x64xf32>
    %795 = vector.shape_cast %794 : vector<1x1x8x64xf32> to vector<8x64xf32>
    %c56_1416 = arith.constant 56 : index
    %c256_1417 = arith.constant 256 : index
    %796 = vector.load %arg10[%c56_1416, %c256_1417] : memref<128x576xf32, #tpu.memory_space<vmem>>, vector<8x64xf32>
    tpu.vector_store %arg10[%c56_1416, %c256_1417], %795 {strides = array<i32>} : memref<128x576xf32, #tpu.memory_space<vmem>>, vector<8x64xf32>,
    %c1_1418 = arith.constant 1 : index
    %c1_1419 = arith.constant 1 : index
    %c1_1420 = arith.constant 1 : index
    %c0_1421 = arith.constant 0 : index
    %797 = vector.load %arg9[%c1_1418, %c1_1419, %c1_1420, %c0_1421] : memref<2x10x10x64xf32, #tpu.memory_space<vmem>>, vector<1x1x8x64xf32>
    %798 = vector.shape_cast %797 : vector<1x1x8x64xf32> to vector<8x64xf32>
    %c64_1422 = arith.constant 64 : index
    %c256_1423 = arith.constant 256 : index
    %799 = vector.load %arg10[%c64_1422, %c256_1423] : memref<128x576xf32, #tpu.memory_space<vmem>>, vector<8x64xf32>
    tpu.vector_store %arg10[%c64_1422, %c256_1423], %798 {strides = array<i32>} : memref<128x576xf32, #tpu.memory_space<vmem>>, vector<8x64xf32>,
    %c1_1424 = arith.constant 1 : index
    %c2_1425 = arith.constant 2 : index
    %c1_1426 = arith.constant 1 : index
    %c0_1427 = arith.constant 0 : index
    %800 = vector.load %arg9[%c1_1424, %c2_1425, %c1_1426, %c0_1427] : memref<2x10x10x64xf32, #tpu.memory_space<vmem>>, vector<1x1x8x64xf32>
    %801 = vector.shape_cast %800 : vector<1x1x8x64xf32> to vector<8x64xf32>
    %c72_1428 = arith.constant 72 : index
    %c256_1429 = arith.constant 256 : index
    %802 = vector.load %arg10[%c72_1428, %c256_1429] : memref<128x576xf32, #tpu.memory_space<vmem>>, vector<8x64xf32>
    tpu.vector_store %arg10[%c72_1428, %c256_1429], %801 {strides = array<i32>} : memref<128x576xf32, #tpu.memory_space<vmem>>, vector<8x64xf32>,
    %c1_1430 = arith.constant 1 : index
    %c3_1431 = arith.constant 3 : index
    %c1_1432 = arith.constant 1 : index
    %c0_1433 = arith.constant 0 : index
    %803 = vector.load %arg9[%c1_1430, %c3_1431, %c1_1432, %c0_1433] : memref<2x10x10x64xf32, #tpu.memory_space<vmem>>, vector<1x1x8x64xf32>
    %804 = vector.shape_cast %803 : vector<1x1x8x64xf32> to vector<8x64xf32>
    %c80_1434 = arith.constant 80 : index
    %c256_1435 = arith.constant 256 : index
    %805 = vector.load %arg10[%c80_1434, %c256_1435] : memref<128x576xf32, #tpu.memory_space<vmem>>, vector<8x64xf32>
    tpu.vector_store %arg10[%c80_1434, %c256_1435], %804 {strides = array<i32>} : memref<128x576xf32, #tpu.memory_space<vmem>>, vector<8x64xf32>,
    %c1_1436 = arith.constant 1 : index
    %c4_1437 = arith.constant 4 : index
    %c1_1438 = arith.constant 1 : index
    %c0_1439 = arith.constant 0 : index
    %806 = vector.load %arg9[%c1_1436, %c4_1437, %c1_1438, %c0_1439] : memref<2x10x10x64xf32, #tpu.memory_space<vmem>>, vector<1x1x8x64xf32>
    %807 = vector.shape_cast %806 : vector<1x1x8x64xf32> to vector<8x64xf32>
    %c88_1440 = arith.constant 88 : index
    %c256_1441 = arith.constant 256 : index
    %808 = vector.load %arg10[%c88_1440, %c256_1441] : memref<128x576xf32, #tpu.memory_space<vmem>>, vector<8x64xf32>
    tpu.vector_store %arg10[%c88_1440, %c256_1441], %807 {strides = array<i32>} : memref<128x576xf32, #tpu.memory_space<vmem>>, vector<8x64xf32>,
    %c1_1442 = arith.constant 1 : index
    %c5_1443 = arith.constant 5 : index
    %c1_1444 = arith.constant 1 : index
    %c0_1445 = arith.constant 0 : index
    %809 = vector.load %arg9[%c1_1442, %c5_1443, %c1_1444, %c0_1445] : memref<2x10x10x64xf32, #tpu.memory_space<vmem>>, vector<1x1x8x64xf32>
    %810 = vector.shape_cast %809 : vector<1x1x8x64xf32> to vector<8x64xf32>
    %c96_1446 = arith.constant 96 : index
    %c256_1447 = arith.constant 256 : index
    %811 = vector.load %arg10[%c96_1446, %c256_1447] : memref<128x576xf32, #tpu.memory_space<vmem>>, vector<8x64xf32>
    tpu.vector_store %arg10[%c96_1446, %c256_1447], %810 {strides = array<i32>} : memref<128x576xf32, #tpu.memory_space<vmem>>, vector<8x64xf32>,
    %c1_1448 = arith.constant 1 : index
    %c6_1449 = arith.constant 6 : index
    %c1_1450 = arith.constant 1 : index
    %c0_1451 = arith.constant 0 : index
    %812 = vector.load %arg9[%c1_1448, %c6_1449, %c1_1450, %c0_1451] : memref<2x10x10x64xf32, #tpu.memory_space<vmem>>, vector<1x1x8x64xf32>
    %813 = vector.shape_cast %812 : vector<1x1x8x64xf32> to vector<8x64xf32>
    %c104_1452 = arith.constant 104 : index
    %c256_1453 = arith.constant 256 : index
    %814 = vector.load %arg10[%c104_1452, %c256_1453] : memref<128x576xf32, #tpu.memory_space<vmem>>, vector<8x64xf32>
    tpu.vector_store %arg10[%c104_1452, %c256_1453], %813 {strides = array<i32>} : memref<128x576xf32, #tpu.memory_space<vmem>>, vector<8x64xf32>,
    %c1_1454 = arith.constant 1 : index
    %c7_1455 = arith.constant 7 : index
    %c1_1456 = arith.constant 1 : index
    %c0_1457 = arith.constant 0 : index
    %815 = vector.load %arg9[%c1_1454, %c7_1455, %c1_1456, %c0_1457] : memref<2x10x10x64xf32, #tpu.memory_space<vmem>>, vector<1x1x8x64xf32>
    %816 = vector.shape_cast %815 : vector<1x1x8x64xf32> to vector<8x64xf32>
    %c112_1458 = arith.constant 112 : index
    %c256_1459 = arith.constant 256 : index
    %817 = vector.load %arg10[%c112_1458, %c256_1459] : memref<128x576xf32, #tpu.memory_space<vmem>>, vector<8x64xf32>
    tpu.vector_store %arg10[%c112_1458, %c256_1459], %816 {strides = array<i32>} : memref<128x576xf32, #tpu.memory_space<vmem>>, vector<8x64xf32>,
    %c1_1460 = arith.constant 1 : index
    %c8_1461 = arith.constant 8 : index
    %c1_1462 = arith.constant 1 : index
    %c0_1463 = arith.constant 0 : index
    %818 = vector.load %arg9[%c1_1460, %c8_1461, %c1_1462, %c0_1463] : memref<2x10x10x64xf32, #tpu.memory_space<vmem>>, vector<1x1x8x64xf32>
    %819 = vector.shape_cast %818 : vector<1x1x8x64xf32> to vector<8x64xf32>
    %c120_1464 = arith.constant 120 : index
    %c256_1465 = arith.constant 256 : index
    %820 = vector.load %arg10[%c120_1464, %c256_1465] : memref<128x576xf32, #tpu.memory_space<vmem>>, vector<8x64xf32>
    tpu.vector_store %arg10[%c120_1464, %c256_1465], %819 {strides = array<i32>} : memref<128x576xf32, #tpu.memory_space<vmem>>, vector<8x64xf32>,
    %c0_1466 = arith.constant 0 : index
    %c1_1467 = arith.constant 1 : index
    %c2_1468 = arith.constant 2 : index
    %c0_1469 = arith.constant 0 : index
    %821 = vector.load %arg9[%c0_1466, %c1_1467, %c2_1468, %c0_1469] : memref<2x10x10x64xf32, #tpu.memory_space<vmem>>, vector<1x1x8x64xf32>
    %822 = vector.shape_cast %821 : vector<1x1x8x64xf32> to vector<8x64xf32>
    %c0_1470 = arith.constant 0 : index
    %c320_1471 = arith.constant 320 : index
    %823 = vector.load %arg10[%c0_1470, %c320_1471] : memref<128x576xf32, #tpu.memory_space<vmem>>, vector<8x64xf32>
    tpu.vector_store %arg10[%c0_1470, %c320_1471], %822 {strides = array<i32>} : memref<128x576xf32, #tpu.memory_space<vmem>>, vector<8x64xf32>,
    %c0_1472 = arith.constant 0 : index
    %c2_1473 = arith.constant 2 : index
    %c2_1474 = arith.constant 2 : index
    %c0_1475 = arith.constant 0 : index
    %824 = vector.load %arg9[%c0_1472, %c2_1473, %c2_1474, %c0_1475] : memref<2x10x10x64xf32, #tpu.memory_space<vmem>>, vector<1x1x8x64xf32>
    %825 = vector.shape_cast %824 : vector<1x1x8x64xf32> to vector<8x64xf32>
    %c8_1476 = arith.constant 8 : index
    %c320_1477 = arith.constant 320 : index
    %826 = vector.load %arg10[%c8_1476, %c320_1477] : memref<128x576xf32, #tpu.memory_space<vmem>>, vector<8x64xf32>
    tpu.vector_store %arg10[%c8_1476, %c320_1477], %825 {strides = array<i32>} : memref<128x576xf32, #tpu.memory_space<vmem>>, vector<8x64xf32>,
    %c0_1478 = arith.constant 0 : index
    %c3_1479 = arith.constant 3 : index
    %c2_1480 = arith.constant 2 : index
    %c0_1481 = arith.constant 0 : index
    %827 = vector.load %arg9[%c0_1478, %c3_1479, %c2_1480, %c0_1481] : memref<2x10x10x64xf32, #tpu.memory_space<vmem>>, vector<1x1x8x64xf32>
    %828 = vector.shape_cast %827 : vector<1x1x8x64xf32> to vector<8x64xf32>
    %c16_1482 = arith.constant 16 : index
    %c320_1483 = arith.constant 320 : index
    %829 = vector.load %arg10[%c16_1482, %c320_1483] : memref<128x576xf32, #tpu.memory_space<vmem>>, vector<8x64xf32>
    tpu.vector_store %arg10[%c16_1482, %c320_1483], %828 {strides = array<i32>} : memref<128x576xf32, #tpu.memory_space<vmem>>, vector<8x64xf32>,
    %c0_1484 = arith.constant 0 : index
    %c4_1485 = arith.constant 4 : index
    %c2_1486 = arith.constant 2 : index
    %c0_1487 = arith.constant 0 : index
    %830 = vector.load %arg9[%c0_1484, %c4_1485, %c2_1486, %c0_1487] : memref<2x10x10x64xf32, #tpu.memory_space<vmem>>, vector<1x1x8x64xf32>
    %831 = vector.shape_cast %830 : vector<1x1x8x64xf32> to vector<8x64xf32>
    %c24_1488 = arith.constant 24 : index
    %c320_1489 = arith.constant 320 : index
    %832 = vector.load %arg10[%c24_1488, %c320_1489] : memref<128x576xf32, #tpu.memory_space<vmem>>, vector<8x64xf32>
    tpu.vector_store %arg10[%c24_1488, %c320_1489], %831 {strides = array<i32>} : memref<128x576xf32, #tpu.memory_space<vmem>>, vector<8x64xf32>,
    %c0_1490 = arith.constant 0 : index
    %c5_1491 = arith.constant 5 : index
    %c2_1492 = arith.constant 2 : index
    %c0_1493 = arith.constant 0 : index
    %833 = vector.load %arg9[%c0_1490, %c5_1491, %c2_1492, %c0_1493] : memref<2x10x10x64xf32, #tpu.memory_space<vmem>>, vector<1x1x8x64xf32>
    %834 = vector.shape_cast %833 : vector<1x1x8x64xf32> to vector<8x64xf32>
    %c32_1494 = arith.constant 32 : index
    %c320_1495 = arith.constant 320 : index
    %835 = vector.load %arg10[%c32_1494, %c320_1495] : memref<128x576xf32, #tpu.memory_space<vmem>>, vector<8x64xf32>
    tpu.vector_store %arg10[%c32_1494, %c320_1495], %834 {strides = array<i32>} : memref<128x576xf32, #tpu.memory_space<vmem>>, vector<8x64xf32>,
    %c0_1496 = arith.constant 0 : index
    %c6_1497 = arith.constant 6 : index
    %c2_1498 = arith.constant 2 : index
    %c0_1499 = arith.constant 0 : index
    %836 = vector.load %arg9[%c0_1496, %c6_1497, %c2_1498, %c0_1499] : memref<2x10x10x64xf32, #tpu.memory_space<vmem>>, vector<1x1x8x64xf32>
    %837 = vector.shape_cast %836 : vector<1x1x8x64xf32> to vector<8x64xf32>
    %c40_1500 = arith.constant 40 : index
    %c320_1501 = arith.constant 320 : index
    %838 = vector.load %arg10[%c40_1500, %c320_1501] : memref<128x576xf32, #tpu.memory_space<vmem>>, vector<8x64xf32>
    tpu.vector_store %arg10[%c40_1500, %c320_1501], %837 {strides = array<i32>} : memref<128x576xf32, #tpu.memory_space<vmem>>, vector<8x64xf32>,
    %c0_1502 = arith.constant 0 : index
    %c7_1503 = arith.constant 7 : index
    %c2_1504 = arith.constant 2 : index
    %c0_1505 = arith.constant 0 : index
    %839 = vector.load %arg9[%c0_1502, %c7_1503, %c2_1504, %c0_1505] : memref<2x10x10x64xf32, #tpu.memory_space<vmem>>, vector<1x1x8x64xf32>
    %840 = vector.shape_cast %839 : vector<1x1x8x64xf32> to vector<8x64xf32>
    %c48_1506 = arith.constant 48 : index
    %c320_1507 = arith.constant 320 : index
    %841 = vector.load %arg10[%c48_1506, %c320_1507] : memref<128x576xf32, #tpu.memory_space<vmem>>, vector<8x64xf32>
    tpu.vector_store %arg10[%c48_1506, %c320_1507], %840 {strides = array<i32>} : memref<128x576xf32, #tpu.memory_space<vmem>>, vector<8x64xf32>,
    %c0_1508 = arith.constant 0 : index
    %c8_1509 = arith.constant 8 : index
    %c2_1510 = arith.constant 2 : index
    %c0_1511 = arith.constant 0 : index
    %842 = vector.load %arg9[%c0_1508, %c8_1509, %c2_1510, %c0_1511] : memref<2x10x10x64xf32, #tpu.memory_space<vmem>>, vector<1x1x8x64xf32>
    %843 = vector.shape_cast %842 : vector<1x1x8x64xf32> to vector<8x64xf32>
    %c56_1512 = arith.constant 56 : index
    %c320_1513 = arith.constant 320 : index
    %844 = vector.load %arg10[%c56_1512, %c320_1513] : memref<128x576xf32, #tpu.memory_space<vmem>>, vector<8x64xf32>
    tpu.vector_store %arg10[%c56_1512, %c320_1513], %843 {strides = array<i32>} : memref<128x576xf32, #tpu.memory_space<vmem>>, vector<8x64xf32>,
    %c1_1514 = arith.constant 1 : index
    %c1_1515 = arith.constant 1 : index
    %c2_1516 = arith.constant 2 : index
    %c0_1517 = arith.constant 0 : index
    %845 = vector.load %arg9[%c1_1514, %c1_1515, %c2_1516, %c0_1517] : memref<2x10x10x64xf32, #tpu.memory_space<vmem>>, vector<1x1x8x64xf32>
    %846 = vector.shape_cast %845 : vector<1x1x8x64xf32> to vector<8x64xf32>
    %c64_1518 = arith.constant 64 : index
    %c320_1519 = arith.constant 320 : index
    %847 = vector.load %arg10[%c64_1518, %c320_1519] : memref<128x576xf32, #tpu.memory_space<vmem>>, vector<8x64xf32>
    tpu.vector_store %arg10[%c64_1518, %c320_1519], %846 {strides = array<i32>} : memref<128x576xf32, #tpu.memory_space<vmem>>, vector<8x64xf32>,
    %c1_1520 = arith.constant 1 : index
    %c2_1521 = arith.constant 2 : index
    %c2_1522 = arith.constant 2 : index
    %c0_1523 = arith.constant 0 : index
    %848 = vector.load %arg9[%c1_1520, %c2_1521, %c2_1522, %c0_1523] : memref<2x10x10x64xf32, #tpu.memory_space<vmem>>, vector<1x1x8x64xf32>
    %849 = vector.shape_cast %848 : vector<1x1x8x64xf32> to vector<8x64xf32>
    %c72_1524 = arith.constant 72 : index
    %c320_1525 = arith.constant 320 : index
    %850 = vector.load %arg10[%c72_1524, %c320_1525] : memref<128x576xf32, #tpu.memory_space<vmem>>, vector<8x64xf32>
    tpu.vector_store %arg10[%c72_1524, %c320_1525], %849 {strides = array<i32>} : memref<128x576xf32, #tpu.memory_space<vmem>>, vector<8x64xf32>,
    %c1_1526 = arith.constant 1 : index
    %c3_1527 = arith.constant 3 : index
    %c2_1528 = arith.constant 2 : index
    %c0_1529 = arith.constant 0 : index
    %851 = vector.load %arg9[%c1_1526, %c3_1527, %c2_1528, %c0_1529] : memref<2x10x10x64xf32, #tpu.memory_space<vmem>>, vector<1x1x8x64xf32>
    %852 = vector.shape_cast %851 : vector<1x1x8x64xf32> to vector<8x64xf32>
    %c80_1530 = arith.constant 80 : index
    %c320_1531 = arith.constant 320 : index
    %853 = vector.load %arg10[%c80_1530, %c320_1531] : memref<128x576xf32, #tpu.memory_space<vmem>>, vector<8x64xf32>
    tpu.vector_store %arg10[%c80_1530, %c320_1531], %852 {strides = array<i32>} : memref<128x576xf32, #tpu.memory_space<vmem>>, vector<8x64xf32>,
    %c1_1532 = arith.constant 1 : index
    %c4_1533 = arith.constant 4 : index
    %c2_1534 = arith.constant 2 : index
    %c0_1535 = arith.constant 0 : index
    %854 = vector.load %arg9[%c1_1532, %c4_1533, %c2_1534, %c0_1535] : memref<2x10x10x64xf32, #tpu.memory_space<vmem>>, vector<1x1x8x64xf32>
    %855 = vector.shape_cast %854 : vector<1x1x8x64xf32> to vector<8x64xf32>
    %c88_1536 = arith.constant 88 : index
    %c320_1537 = arith.constant 320 : index
    %856 = vector.load %arg10[%c88_1536, %c320_1537] : memref<128x576xf32, #tpu.memory_space<vmem>>, vector<8x64xf32>
    tpu.vector_store %arg10[%c88_1536, %c320_1537], %855 {strides = array<i32>} : memref<128x576xf32, #tpu.memory_space<vmem>>, vector<8x64xf32>,
    %c1_1538 = arith.constant 1 : index
    %c5_1539 = arith.constant 5 : index
    %c2_1540 = arith.constant 2 : index
    %c0_1541 = arith.constant 0 : index
    %857 = vector.load %arg9[%c1_1538, %c5_1539, %c2_1540, %c0_1541] : memref<2x10x10x64xf32, #tpu.memory_space<vmem>>, vector<1x1x8x64xf32>
    %858 = vector.shape_cast %857 : vector<1x1x8x64xf32> to vector<8x64xf32>
    %c96_1542 = arith.constant 96 : index
    %c320_1543 = arith.constant 320 : index
    %859 = vector.load %arg10[%c96_1542, %c320_1543] : memref<128x576xf32, #tpu.memory_space<vmem>>, vector<8x64xf32>
    tpu.vector_store %arg10[%c96_1542, %c320_1543], %858 {strides = array<i32>} : memref<128x576xf32, #tpu.memory_space<vmem>>, vector<8x64xf32>,
    %c1_1544 = arith.constant 1 : index
    %c6_1545 = arith.constant 6 : index
    %c2_1546 = arith.constant 2 : index
    %c0_1547 = arith.constant 0 : index
    %860 = vector.load %arg9[%c1_1544, %c6_1545, %c2_1546, %c0_1547] : memref<2x10x10x64xf32, #tpu.memory_space<vmem>>, vector<1x1x8x64xf32>
    %861 = vector.shape_cast %860 : vector<1x1x8x64xf32> to vector<8x64xf32>
    %c104_1548 = arith.constant 104 : index
    %c320_1549 = arith.constant 320 : index
    %862 = vector.load %arg10[%c104_1548, %c320_1549] : memref<128x576xf32, #tpu.memory_space<vmem>>, vector<8x64xf32>
    tpu.vector_store %arg10[%c104_1548, %c320_1549], %861 {strides = array<i32>} : memref<128x576xf32, #tpu.memory_space<vmem>>, vector<8x64xf32>,
    %c1_1550 = arith.constant 1 : index
    %c7_1551 = arith.constant 7 : index
    %c2_1552 = arith.constant 2 : index
    %c0_1553 = arith.constant 0 : index
    %863 = vector.load %arg9[%c1_1550, %c7_1551, %c2_1552, %c0_1553] : memref<2x10x10x64xf32, #tpu.memory_space<vmem>>, vector<1x1x8x64xf32>
    %864 = vector.shape_cast %863 : vector<1x1x8x64xf32> to vector<8x64xf32>
    %c112_1554 = arith.constant 112 : index
    %c320_1555 = arith.constant 320 : index
    %865 = vector.load %arg10[%c112_1554, %c320_1555] : memref<128x576xf32, #tpu.memory_space<vmem>>, vector<8x64xf32>
    tpu.vector_store %arg10[%c112_1554, %c320_1555], %864 {strides = array<i32>} : memref<128x576xf32, #tpu.memory_space<vmem>>, vector<8x64xf32>,
    %c1_1556 = arith.constant 1 : index
    %c8_1557 = arith.constant 8 : index
    %c2_1558 = arith.constant 2 : index
    %c0_1559 = arith.constant 0 : index
    %866 = vector.load %arg9[%c1_1556, %c8_1557, %c2_1558, %c0_1559] : memref<2x10x10x64xf32, #tpu.memory_space<vmem>>, vector<1x1x8x64xf32>
    %867 = vector.shape_cast %866 : vector<1x1x8x64xf32> to vector<8x64xf32>
    %c120_1560 = arith.constant 120 : index
    %c320_1561 = arith.constant 320 : index
    %868 = vector.load %arg10[%c120_1560, %c320_1561] : memref<128x576xf32, #tpu.memory_space<vmem>>, vector<8x64xf32>
    tpu.vector_store %arg10[%c120_1560, %c320_1561], %867 {strides = array<i32>} : memref<128x576xf32, #tpu.memory_space<vmem>>, vector<8x64xf32>,
    %c0_1562 = arith.constant 0 : index
    %c2_1563 = arith.constant 2 : index
    %c0_1564 = arith.constant 0 : index
    %c0_1565 = arith.constant 0 : index
    %869 = vector.load %arg9[%c0_1562, %c2_1563, %c0_1564, %c0_1565] : memref<2x10x10x64xf32, #tpu.memory_space<vmem>>, vector<1x1x8x64xf32>
    %870 = vector.shape_cast %869 : vector<1x1x8x64xf32> to vector<8x64xf32>
    %c0_1566 = arith.constant 0 : index
    %c384_1567 = arith.constant 384 : index
    %871 = vector.load %arg10[%c0_1566, %c384_1567] : memref<128x576xf32, #tpu.memory_space<vmem>>, vector<8x64xf32>
    tpu.vector_store %arg10[%c0_1566, %c384_1567], %870 {strides = array<i32>} : memref<128x576xf32, #tpu.memory_space<vmem>>, vector<8x64xf32>,
    %c0_1568 = arith.constant 0 : index
    %c3_1569 = arith.constant 3 : index
    %c0_1570 = arith.constant 0 : index
    %c0_1571 = arith.constant 0 : index
    %872 = vector.load %arg9[%c0_1568, %c3_1569, %c0_1570, %c0_1571] : memref<2x10x10x64xf32, #tpu.memory_space<vmem>>, vector<1x1x8x64xf32>
    %873 = vector.shape_cast %872 : vector<1x1x8x64xf32> to vector<8x64xf32>
    %c8_1572 = arith.constant 8 : index
    %c384_1573 = arith.constant 384 : index
    %874 = vector.load %arg10[%c8_1572, %c384_1573] : memref<128x576xf32, #tpu.memory_space<vmem>>, vector<8x64xf32>
    tpu.vector_store %arg10[%c8_1572, %c384_1573], %873 {strides = array<i32>} : memref<128x576xf32, #tpu.memory_space<vmem>>, vector<8x64xf32>,
    %c0_1574 = arith.constant 0 : index
    %c4_1575 = arith.constant 4 : index
    %c0_1576 = arith.constant 0 : index
    %c0_1577 = arith.constant 0 : index
    %875 = vector.load %arg9[%c0_1574, %c4_1575, %c0_1576, %c0_1577] : memref<2x10x10x64xf32, #tpu.memory_space<vmem>>, vector<1x1x8x64xf32>
    %876 = vector.shape_cast %875 : vector<1x1x8x64xf32> to vector<8x64xf32>
    %c16_1578 = arith.constant 16 : index
    %c384_1579 = arith.constant 384 : index
    %877 = vector.load %arg10[%c16_1578, %c384_1579] : memref<128x576xf32, #tpu.memory_space<vmem>>, vector<8x64xf32>
    tpu.vector_store %arg10[%c16_1578, %c384_1579], %876 {strides = array<i32>} : memref<128x576xf32, #tpu.memory_space<vmem>>, vector<8x64xf32>,
    %c0_1580 = arith.constant 0 : index
    %c5_1581 = arith.constant 5 : index
    %c0_1582 = arith.constant 0 : index
    %c0_1583 = arith.constant 0 : index
    %878 = vector.load %arg9[%c0_1580, %c5_1581, %c0_1582, %c0_1583] : memref<2x10x10x64xf32, #tpu.memory_space<vmem>>, vector<1x1x8x64xf32>
    %879 = vector.shape_cast %878 : vector<1x1x8x64xf32> to vector<8x64xf32>
    %c24_1584 = arith.constant 24 : index
    %c384_1585 = arith.constant 384 : index
    %880 = vector.load %arg10[%c24_1584, %c384_1585] : memref<128x576xf32, #tpu.memory_space<vmem>>, vector<8x64xf32>
    tpu.vector_store %arg10[%c24_1584, %c384_1585], %879 {strides = array<i32>} : memref<128x576xf32, #tpu.memory_space<vmem>>, vector<8x64xf32>,
    %c0_1586 = arith.constant 0 : index
    %c6_1587 = arith.constant 6 : index
    %c0_1588 = arith.constant 0 : index
    %c0_1589 = arith.constant 0 : index
    %881 = vector.load %arg9[%c0_1586, %c6_1587, %c0_1588, %c0_1589] : memref<2x10x10x64xf32, #tpu.memory_space<vmem>>, vector<1x1x8x64xf32>
    %882 = vector.shape_cast %881 : vector<1x1x8x64xf32> to vector<8x64xf32>
    %c32_1590 = arith.constant 32 : index
    %c384_1591 = arith.constant 384 : index
    %883 = vector.load %arg10[%c32_1590, %c384_1591] : memref<128x576xf32, #tpu.memory_space<vmem>>, vector<8x64xf32>
    tpu.vector_store %arg10[%c32_1590, %c384_1591], %882 {strides = array<i32>} : memref<128x576xf32, #tpu.memory_space<vmem>>, vector<8x64xf32>,
    %c0_1592 = arith.constant 0 : index
    %c7_1593 = arith.constant 7 : index
    %c0_1594 = arith.constant 0 : index
    %c0_1595 = arith.constant 0 : index
    %884 = vector.load %arg9[%c0_1592, %c7_1593, %c0_1594, %c0_1595] : memref<2x10x10x64xf32, #tpu.memory_space<vmem>>, vector<1x1x8x64xf32>
    %885 = vector.shape_cast %884 : vector<1x1x8x64xf32> to vector<8x64xf32>
    %c40_1596 = arith.constant 40 : index
    %c384_1597 = arith.constant 384 : index
    %886 = vector.load %arg10[%c40_1596, %c384_1597] : memref<128x576xf32, #tpu.memory_space<vmem>>, vector<8x64xf32>
    tpu.vector_store %arg10[%c40_1596, %c384_1597], %885 {strides = array<i32>} : memref<128x576xf32, #tpu.memory_space<vmem>>, vector<8x64xf32>,
    %c0_1598 = arith.constant 0 : index
    %c8_1599 = arith.constant 8 : index
    %c0_1600 = arith.constant 0 : index
    %c0_1601 = arith.constant 0 : index
    %887 = vector.load %arg9[%c0_1598, %c8_1599, %c0_1600, %c0_1601] : memref<2x10x10x64xf32, #tpu.memory_space<vmem>>, vector<1x1x8x64xf32>
    %888 = vector.shape_cast %887 : vector<1x1x8x64xf32> to vector<8x64xf32>
    %c48_1602 = arith.constant 48 : index
    %c384_1603 = arith.constant 384 : index
    %889 = vector.load %arg10[%c48_1602, %c384_1603] : memref<128x576xf32, #tpu.memory_space<vmem>>, vector<8x64xf32>
    tpu.vector_store %arg10[%c48_1602, %c384_1603], %888 {strides = array<i32>} : memref<128x576xf32, #tpu.memory_space<vmem>>, vector<8x64xf32>,
    %c0_1604 = arith.constant 0 : index
    %c9_1605 = arith.constant 9 : index
    %c0_1606 = arith.constant 0 : index
    %c0_1607 = arith.constant 0 : index
    %890 = vector.load %arg9[%c0_1604, %c9_1605, %c0_1606, %c0_1607] : memref<2x10x10x64xf32, #tpu.memory_space<vmem>>, vector<1x1x8x64xf32>
    %891 = vector.shape_cast %890 : vector<1x1x8x64xf32> to vector<8x64xf32>
    %c56_1608 = arith.constant 56 : index
    %c384_1609 = arith.constant 384 : index
    %892 = vector.load %arg10[%c56_1608, %c384_1609] : memref<128x576xf32, #tpu.memory_space<vmem>>, vector<8x64xf32>
    tpu.vector_store %arg10[%c56_1608, %c384_1609], %891 {strides = array<i32>} : memref<128x576xf32, #tpu.memory_space<vmem>>, vector<8x64xf32>,
    %c1_1610 = arith.constant 1 : index
    %c2_1611 = arith.constant 2 : index
    %c0_1612 = arith.constant 0 : index
    %c0_1613 = arith.constant 0 : index
    %893 = vector.load %arg9[%c1_1610, %c2_1611, %c0_1612, %c0_1613] : memref<2x10x10x64xf32, #tpu.memory_space<vmem>>, vector<1x1x8x64xf32>
    %894 = vector.shape_cast %893 : vector<1x1x8x64xf32> to vector<8x64xf32>
    %c64_1614 = arith.constant 64 : index
    %c384_1615 = arith.constant 384 : index
    %895 = vector.load %arg10[%c64_1614, %c384_1615] : memref<128x576xf32, #tpu.memory_space<vmem>>, vector<8x64xf32>
    tpu.vector_store %arg10[%c64_1614, %c384_1615], %894 {strides = array<i32>} : memref<128x576xf32, #tpu.memory_space<vmem>>, vector<8x64xf32>,
    %c1_1616 = arith.constant 1 : index
    %c3_1617 = arith.constant 3 : index
    %c0_1618 = arith.constant 0 : index
    %c0_1619 = arith.constant 0 : index
    %896 = vector.load %arg9[%c1_1616, %c3_1617, %c0_1618, %c0_1619] : memref<2x10x10x64xf32, #tpu.memory_space<vmem>>, vector<1x1x8x64xf32>
    %897 = vector.shape_cast %896 : vector<1x1x8x64xf32> to vector<8x64xf32>
    %c72_1620 = arith.constant 72 : index
    %c384_1621 = arith.constant 384 : index
    %898 = vector.load %arg10[%c72_1620, %c384_1621] : memref<128x576xf32, #tpu.memory_space<vmem>>, vector<8x64xf32>
    tpu.vector_store %arg10[%c72_1620, %c384_1621], %897 {strides = array<i32>} : memref<128x576xf32, #tpu.memory_space<vmem>>, vector<8x64xf32>,
    %c1_1622 = arith.constant 1 : index
    %c4_1623 = arith.constant 4 : index
    %c0_1624 = arith.constant 0 : index
    %c0_1625 = arith.constant 0 : index
    %899 = vector.load %arg9[%c1_1622, %c4_1623, %c0_1624, %c0_1625] : memref<2x10x10x64xf32, #tpu.memory_space<vmem>>, vector<1x1x8x64xf32>
    %900 = vector.shape_cast %899 : vector<1x1x8x64xf32> to vector<8x64xf32>
    %c80_1626 = arith.constant 80 : index
    %c384_1627 = arith.constant 384 : index
    %901 = vector.load %arg10[%c80_1626, %c384_1627] : memref<128x576xf32, #tpu.memory_space<vmem>>, vector<8x64xf32>
    tpu.vector_store %arg10[%c80_1626, %c384_1627], %900 {strides = array<i32>} : memref<128x576xf32, #tpu.memory_space<vmem>>, vector<8x64xf32>,
    %c1_1628 = arith.constant 1 : index
    %c5_1629 = arith.constant 5 : index
    %c0_1630 = arith.constant 0 : index
    %c0_1631 = arith.constant 0 : index
    %902 = vector.load %arg9[%c1_1628, %c5_1629, %c0_1630, %c0_1631] : memref<2x10x10x64xf32, #tpu.memory_space<vmem>>, vector<1x1x8x64xf32>
    %903 = vector.shape_cast %902 : vector<1x1x8x64xf32> to vector<8x64xf32>
    %c88_1632 = arith.constant 88 : index
    %c384_1633 = arith.constant 384 : index
    %904 = vector.load %arg10[%c88_1632, %c384_1633] : memref<128x576xf32, #tpu.memory_space<vmem>>, vector<8x64xf32>
    tpu.vector_store %arg10[%c88_1632, %c384_1633], %903 {strides = array<i32>} : memref<128x576xf32, #tpu.memory_space<vmem>>, vector<8x64xf32>,
    %c1_1634 = arith.constant 1 : index
    %c6_1635 = arith.constant 6 : index
    %c0_1636 = arith.constant 0 : index
    %c0_1637 = arith.constant 0 : index
    %905 = vector.load %arg9[%c1_1634, %c6_1635, %c0_1636, %c0_1637] : memref<2x10x10x64xf32, #tpu.memory_space<vmem>>, vector<1x1x8x64xf32>
    %906 = vector.shape_cast %905 : vector<1x1x8x64xf32> to vector<8x64xf32>
    %c96_1638 = arith.constant 96 : index
    %c384_1639 = arith.constant 384 : index
    %907 = vector.load %arg10[%c96_1638, %c384_1639] : memref<128x576xf32, #tpu.memory_space<vmem>>, vector<8x64xf32>
    tpu.vector_store %arg10[%c96_1638, %c384_1639], %906 {strides = array<i32>} : memref<128x576xf32, #tpu.memory_space<vmem>>, vector<8x64xf32>,
    %c1_1640 = arith.constant 1 : index
    %c7_1641 = arith.constant 7 : index
    %c0_1642 = arith.constant 0 : index
    %c0_1643 = arith.constant 0 : index
    %908 = vector.load %arg9[%c1_1640, %c7_1641, %c0_1642, %c0_1643] : memref<2x10x10x64xf32, #tpu.memory_space<vmem>>, vector<1x1x8x64xf32>
    %909 = vector.shape_cast %908 : vector<1x1x8x64xf32> to vector<8x64xf32>
    %c104_1644 = arith.constant 104 : index
    %c384_1645 = arith.constant 384 : index
    %910 = vector.load %arg10[%c104_1644, %c384_1645] : memref<128x576xf32, #tpu.memory_space<vmem>>, vector<8x64xf32>
    tpu.vector_store %arg10[%c104_1644, %c384_1645], %909 {strides = array<i32>} : memref<128x576xf32, #tpu.memory_space<vmem>>, vector<8x64xf32>,
    %c1_1646 = arith.constant 1 : index
    %c8_1647 = arith.constant 8 : index
    %c0_1648 = arith.constant 0 : index
    %c0_1649 = arith.constant 0 : index
    %911 = vector.load %arg9[%c1_1646, %c8_1647, %c0_1648, %c0_1649] : memref<2x10x10x64xf32, #tpu.memory_space<vmem>>, vector<1x1x8x64xf32>
    %912 = vector.shape_cast %911 : vector<1x1x8x64xf32> to vector<8x64xf32>
    %c112_1650 = arith.constant 112 : index
    %c384_1651 = arith.constant 384 : index
    %913 = vector.load %arg10[%c112_1650, %c384_1651] : memref<128x576xf32, #tpu.memory_space<vmem>>, vector<8x64xf32>
    tpu.vector_store %arg10[%c112_1650, %c384_1651], %912 {strides = array<i32>} : memref<128x576xf32, #tpu.memory_space<vmem>>, vector<8x64xf32>,
    %c1_1652 = arith.constant 1 : index
    %c9_1653 = arith.constant 9 : index
    %c0_1654 = arith.constant 0 : index
    %c0_1655 = arith.constant 0 : index
    %914 = vector.load %arg9[%c1_1652, %c9_1653, %c0_1654, %c0_1655] : memref<2x10x10x64xf32, #tpu.memory_space<vmem>>, vector<1x1x8x64xf32>
    %915 = vector.shape_cast %914 : vector<1x1x8x64xf32> to vector<8x64xf32>
    %c120_1656 = arith.constant 120 : index
    %c384_1657 = arith.constant 384 : index
    %916 = vector.load %arg10[%c120_1656, %c384_1657] : memref<128x576xf32, #tpu.memory_space<vmem>>, vector<8x64xf32>
    tpu.vector_store %arg10[%c120_1656, %c384_1657], %915 {strides = array<i32>} : memref<128x576xf32, #tpu.memory_space<vmem>>, vector<8x64xf32>,
    %c0_1658 = arith.constant 0 : index
    %c2_1659 = arith.constant 2 : index
    %c1_1660 = arith.constant 1 : index
    %c0_1661 = arith.constant 0 : index
    %917 = vector.load %arg9[%c0_1658, %c2_1659, %c1_1660, %c0_1661] : memref<2x10x10x64xf32, #tpu.memory_space<vmem>>, vector<1x1x8x64xf32>
    %918 = vector.shape_cast %917 : vector<1x1x8x64xf32> to vector<8x64xf32>
    %c0_1662 = arith.constant 0 : index
    %c448_1663 = arith.constant 448 : index
    %919 = vector.load %arg10[%c0_1662, %c448_1663] : memref<128x576xf32, #tpu.memory_space<vmem>>, vector<8x64xf32>
    tpu.vector_store %arg10[%c0_1662, %c448_1663], %918 {strides = array<i32>} : memref<128x576xf32, #tpu.memory_space<vmem>>, vector<8x64xf32>,
    %c0_1664 = arith.constant 0 : index
    %c3_1665 = arith.constant 3 : index
    %c1_1666 = arith.constant 1 : index
    %c0_1667 = arith.constant 0 : index
    %920 = vector.load %arg9[%c0_1664, %c3_1665, %c1_1666, %c0_1667] : memref<2x10x10x64xf32, #tpu.memory_space<vmem>>, vector<1x1x8x64xf32>
    %921 = vector.shape_cast %920 : vector<1x1x8x64xf32> to vector<8x64xf32>
    %c8_1668 = arith.constant 8 : index
    %c448_1669 = arith.constant 448 : index
    %922 = vector.load %arg10[%c8_1668, %c448_1669] : memref<128x576xf32, #tpu.memory_space<vmem>>, vector<8x64xf32>
    tpu.vector_store %arg10[%c8_1668, %c448_1669], %921 {strides = array<i32>} : memref<128x576xf32, #tpu.memory_space<vmem>>, vector<8x64xf32>,
    %c0_1670 = arith.constant 0 : index
    %c4_1671 = arith.constant 4 : index
    %c1_1672 = arith.constant 1 : index
    %c0_1673 = arith.constant 0 : index
    %923 = vector.load %arg9[%c0_1670, %c4_1671, %c1_1672, %c0_1673] : memref<2x10x10x64xf32, #tpu.memory_space<vmem>>, vector<1x1x8x64xf32>
    %924 = vector.shape_cast %923 : vector<1x1x8x64xf32> to vector<8x64xf32>
    %c16_1674 = arith.constant 16 : index
    %c448_1675 = arith.constant 448 : index
    %925 = vector.load %arg10[%c16_1674, %c448_1675] : memref<128x576xf32, #tpu.memory_space<vmem>>, vector<8x64xf32>
    tpu.vector_store %arg10[%c16_1674, %c448_1675], %924 {strides = array<i32>} : memref<128x576xf32, #tpu.memory_space<vmem>>, vector<8x64xf32>,
    %c0_1676 = arith.constant 0 : index
    %c5_1677 = arith.constant 5 : index
    %c1_1678 = arith.constant 1 : index
    %c0_1679 = arith.constant 0 : index
    %926 = vector.load %arg9[%c0_1676, %c5_1677, %c1_1678, %c0_1679] : memref<2x10x10x64xf32, #tpu.memory_space<vmem>>, vector<1x1x8x64xf32>
    %927 = vector.shape_cast %926 : vector<1x1x8x64xf32> to vector<8x64xf32>
    %c24_1680 = arith.constant 24 : index
    %c448_1681 = arith.constant 448 : index
    %928 = vector.load %arg10[%c24_1680, %c448_1681] : memref<128x576xf32, #tpu.memory_space<vmem>>, vector<8x64xf32>
    tpu.vector_store %arg10[%c24_1680, %c448_1681], %927 {strides = array<i32>} : memref<128x576xf32, #tpu.memory_space<vmem>>, vector<8x64xf32>,
    %c0_1682 = arith.constant 0 : index
    %c6_1683 = arith.constant 6 : index
    %c1_1684 = arith.constant 1 : index
    %c0_1685 = arith.constant 0 : index
    %929 = vector.load %arg9[%c0_1682, %c6_1683, %c1_1684, %c0_1685] : memref<2x10x10x64xf32, #tpu.memory_space<vmem>>, vector<1x1x8x64xf32>
    %930 = vector.shape_cast %929 : vector<1x1x8x64xf32> to vector<8x64xf32>
    %c32_1686 = arith.constant 32 : index
    %c448_1687 = arith.constant 448 : index
    %931 = vector.load %arg10[%c32_1686, %c448_1687] : memref<128x576xf32, #tpu.memory_space<vmem>>, vector<8x64xf32>
    tpu.vector_store %arg10[%c32_1686, %c448_1687], %930 {strides = array<i32>} : memref<128x576xf32, #tpu.memory_space<vmem>>, vector<8x64xf32>,
    %c0_1688 = arith.constant 0 : index
    %c7_1689 = arith.constant 7 : index
    %c1_1690 = arith.constant 1 : index
    %c0_1691 = arith.constant 0 : index
    %932 = vector.load %arg9[%c0_1688, %c7_1689, %c1_1690, %c0_1691] : memref<2x10x10x64xf32, #tpu.memory_space<vmem>>, vector<1x1x8x64xf32>
    %933 = vector.shape_cast %932 : vector<1x1x8x64xf32> to vector<8x64xf32>
    %c40_1692 = arith.constant 40 : index
    %c448_1693 = arith.constant 448 : index
    %934 = vector.load %arg10[%c40_1692, %c448_1693] : memref<128x576xf32, #tpu.memory_space<vmem>>, vector<8x64xf32>
    tpu.vector_store %arg10[%c40_1692, %c448_1693], %933 {strides = array<i32>} : memref<128x576xf32, #tpu.memory_space<vmem>>, vector<8x64xf32>,
    %c0_1694 = arith.constant 0 : index
    %c8_1695 = arith.constant 8 : index
    %c1_1696 = arith.constant 1 : index
    %c0_1697 = arith.constant 0 : index
    %935 = vector.load %arg9[%c0_1694, %c8_1695, %c1_1696, %c0_1697] : memref<2x10x10x64xf32, #tpu.memory_space<vmem>>, vector<1x1x8x64xf32>
    %936 = vector.shape_cast %935 : vector<1x1x8x64xf32> to vector<8x64xf32>
    %c48_1698 = arith.constant 48 : index
    %c448_1699 = arith.constant 448 : index
    %937 = vector.load %arg10[%c48_1698, %c448_1699] : memref<128x576xf32, #tpu.memory_space<vmem>>, vector<8x64xf32>
    tpu.vector_store %arg10[%c48_1698, %c448_1699], %936 {strides = array<i32>} : memref<128x576xf32, #tpu.memory_space<vmem>>, vector<8x64xf32>,
    %c0_1700 = arith.constant 0 : index
    %c9_1701 = arith.constant 9 : index
    %c1_1702 = arith.constant 1 : index
    %c0_1703 = arith.constant 0 : index
    %938 = vector.load %arg9[%c0_1700, %c9_1701, %c1_1702, %c0_1703] : memref<2x10x10x64xf32, #tpu.memory_space<vmem>>, vector<1x1x8x64xf32>
    %939 = vector.shape_cast %938 : vector<1x1x8x64xf32> to vector<8x64xf32>
    %c56_1704 = arith.constant 56 : index
    %c448_1705 = arith.constant 448 : index
    %940 = vector.load %arg10[%c56_1704, %c448_1705] : memref<128x576xf32, #tpu.memory_space<vmem>>, vector<8x64xf32>
    tpu.vector_store %arg10[%c56_1704, %c448_1705], %939 {strides = array<i32>} : memref<128x576xf32, #tpu.memory_space<vmem>>, vector<8x64xf32>,
    %c1_1706 = arith.constant 1 : index
    %c2_1707 = arith.constant 2 : index
    %c1_1708 = arith.constant 1 : index
    %c0_1709 = arith.constant 0 : index
    %941 = vector.load %arg9[%c1_1706, %c2_1707, %c1_1708, %c0_1709] : memref<2x10x10x64xf32, #tpu.memory_space<vmem>>, vector<1x1x8x64xf32>
    %942 = vector.shape_cast %941 : vector<1x1x8x64xf32> to vector<8x64xf32>
    %c64_1710 = arith.constant 64 : index
    %c448_1711 = arith.constant 448 : index
    %943 = vector.load %arg10[%c64_1710, %c448_1711] : memref<128x576xf32, #tpu.memory_space<vmem>>, vector<8x64xf32>
    tpu.vector_store %arg10[%c64_1710, %c448_1711], %942 {strides = array<i32>} : memref<128x576xf32, #tpu.memory_space<vmem>>, vector<8x64xf32>,
    %c1_1712 = arith.constant 1 : index
    %c3_1713 = arith.constant 3 : index
    %c1_1714 = arith.constant 1 : index
    %c0_1715 = arith.constant 0 : index
    %944 = vector.load %arg9[%c1_1712, %c3_1713, %c1_1714, %c0_1715] : memref<2x10x10x64xf32, #tpu.memory_space<vmem>>, vector<1x1x8x64xf32>
    %945 = vector.shape_cast %944 : vector<1x1x8x64xf32> to vector<8x64xf32>
    %c72_1716 = arith.constant 72 : index
    %c448_1717 = arith.constant 448 : index
    %946 = vector.load %arg10[%c72_1716, %c448_1717] : memref<128x576xf32, #tpu.memory_space<vmem>>, vector<8x64xf32>
    tpu.vector_store %arg10[%c72_1716, %c448_1717], %945 {strides = array<i32>} : memref<128x576xf32, #tpu.memory_space<vmem>>, vector<8x64xf32>,
    %c1_1718 = arith.constant 1 : index
    %c4_1719 = arith.constant 4 : index
    %c1_1720 = arith.constant 1 : index
    %c0_1721 = arith.constant 0 : index
    %947 = vector.load %arg9[%c1_1718, %c4_1719, %c1_1720, %c0_1721] : memref<2x10x10x64xf32, #tpu.memory_space<vmem>>, vector<1x1x8x64xf32>
    %948 = vector.shape_cast %947 : vector<1x1x8x64xf32> to vector<8x64xf32>
    %c80_1722 = arith.constant 80 : index
    %c448_1723 = arith.constant 448 : index
    %949 = vector.load %arg10[%c80_1722, %c448_1723] : memref<128x576xf32, #tpu.memory_space<vmem>>, vector<8x64xf32>
    tpu.vector_store %arg10[%c80_1722, %c448_1723], %948 {strides = array<i32>} : memref<128x576xf32, #tpu.memory_space<vmem>>, vector<8x64xf32>,
    %c1_1724 = arith.constant 1 : index
    %c5_1725 = arith.constant 5 : index
    %c1_1726 = arith.constant 1 : index
    %c0_1727 = arith.constant 0 : index
    %950 = vector.load %arg9[%c1_1724, %c5_1725, %c1_1726, %c0_1727] : memref<2x10x10x64xf32, #tpu.memory_space<vmem>>, vector<1x1x8x64xf32>
    %951 = vector.shape_cast %950 : vector<1x1x8x64xf32> to vector<8x64xf32>
    %c88_1728 = arith.constant 88 : index
    %c448_1729 = arith.constant 448 : index
    %952 = vector.load %arg10[%c88_1728, %c448_1729] : memref<128x576xf32, #tpu.memory_space<vmem>>, vector<8x64xf32>
    tpu.vector_store %arg10[%c88_1728, %c448_1729], %951 {strides = array<i32>} : memref<128x576xf32, #tpu.memory_space<vmem>>, vector<8x64xf32>,
    %c1_1730 = arith.constant 1 : index
    %c6_1731 = arith.constant 6 : index
    %c1_1732 = arith.constant 1 : index
    %c0_1733 = arith.constant 0 : index
    %953 = vector.load %arg9[%c1_1730, %c6_1731, %c1_1732, %c0_1733] : memref<2x10x10x64xf32, #tpu.memory_space<vmem>>, vector<1x1x8x64xf32>
    %954 = vector.shape_cast %953 : vector<1x1x8x64xf32> to vector<8x64xf32>
    %c96_1734 = arith.constant 96 : index
    %c448_1735 = arith.constant 448 : index
    %955 = vector.load %arg10[%c96_1734, %c448_1735] : memref<128x576xf32, #tpu.memory_space<vmem>>, vector<8x64xf32>
    tpu.vector_store %arg10[%c96_1734, %c448_1735], %954 {strides = array<i32>} : memref<128x576xf32, #tpu.memory_space<vmem>>, vector<8x64xf32>,
    %c1_1736 = arith.constant 1 : index
    %c7_1737 = arith.constant 7 : index
    %c1_1738 = arith.constant 1 : index
    %c0_1739 = arith.constant 0 : index
    %956 = vector.load %arg9[%c1_1736, %c7_1737, %c1_1738, %c0_1739] : memref<2x10x10x64xf32, #tpu.memory_space<vmem>>, vector<1x1x8x64xf32>
    %957 = vector.shape_cast %956 : vector<1x1x8x64xf32> to vector<8x64xf32>
    %c104_1740 = arith.constant 104 : index
    %c448_1741 = arith.constant 448 : index
    %958 = vector.load %arg10[%c104_1740, %c448_1741] : memref<128x576xf32, #tpu.memory_space<vmem>>, vector<8x64xf32>
    tpu.vector_store %arg10[%c104_1740, %c448_1741], %957 {strides = array<i32>} : memref<128x576xf32, #tpu.memory_space<vmem>>, vector<8x64xf32>,
    %c1_1742 = arith.constant 1 : index
    %c8_1743 = arith.constant 8 : index
    %c1_1744 = arith.constant 1 : index
    %c0_1745 = arith.constant 0 : index
    %959 = vector.load %arg9[%c1_1742, %c8_1743, %c1_1744, %c0_1745] : memref<2x10x10x64xf32, #tpu.memory_space<vmem>>, vector<1x1x8x64xf32>
    %960 = vector.shape_cast %959 : vector<1x1x8x64xf32> to vector<8x64xf32>
    %c112_1746 = arith.constant 112 : index
    %c448_1747 = arith.constant 448 : index
    %961 = vector.load %arg10[%c112_1746, %c448_1747] : memref<128x576xf32, #tpu.memory_space<vmem>>, vector<8x64xf32>
    tpu.vector_store %arg10[%c112_1746, %c448_1747], %960 {strides = array<i32>} : memref<128x576xf32, #tpu.memory_space<vmem>>, vector<8x64xf32>,
    %c1_1748 = arith.constant 1 : index
    %c9_1749 = arith.constant 9 : index
    %c1_1750 = arith.constant 1 : index
    %c0_1751 = arith.constant 0 : index
    %962 = vector.load %arg9[%c1_1748, %c9_1749, %c1_1750, %c0_1751] : memref<2x10x10x64xf32, #tpu.memory_space<vmem>>, vector<1x1x8x64xf32>
    %963 = vector.shape_cast %962 : vector<1x1x8x64xf32> to vector<8x64xf32>
    %c120_1752 = arith.constant 120 : index
    %c448_1753 = arith.constant 448 : index
    %964 = vector.load %arg10[%c120_1752, %c448_1753] : memref<128x576xf32, #tpu.memory_space<vmem>>, vector<8x64xf32>
    tpu.vector_store %arg10[%c120_1752, %c448_1753], %963 {strides = array<i32>} : memref<128x576xf32, #tpu.memory_space<vmem>>, vector<8x64xf32>,
    %c0_1754 = arith.constant 0 : index
    %c2_1755 = arith.constant 2 : index
    %c2_1756 = arith.constant 2 : index
    %c0_1757 = arith.constant 0 : index
    %965 = vector.load %arg9[%c0_1754, %c2_1755, %c2_1756, %c0_1757] : memref<2x10x10x64xf32, #tpu.memory_space<vmem>>, vector<1x1x8x64xf32>
    %966 = vector.shape_cast %965 : vector<1x1x8x64xf32> to vector<8x64xf32>
    %c0_1758 = arith.constant 0 : index
    %c512_1759 = arith.constant 512 : index
    %967 = vector.load %arg10[%c0_1758, %c512_1759] : memref<128x576xf32, #tpu.memory_space<vmem>>, vector<8x64xf32>
    tpu.vector_store %arg10[%c0_1758, %c512_1759], %966 {strides = array<i32>} : memref<128x576xf32, #tpu.memory_space<vmem>>, vector<8x64xf32>,
    %c0_1760 = arith.constant 0 : index
    %c3_1761 = arith.constant 3 : index
    %c2_1762 = arith.constant 2 : index
    %c0_1763 = arith.constant 0 : index
    %968 = vector.load %arg9[%c0_1760, %c3_1761, %c2_1762, %c0_1763] : memref<2x10x10x64xf32, #tpu.memory_space<vmem>>, vector<1x1x8x64xf32>
    %969 = vector.shape_cast %968 : vector<1x1x8x64xf32> to vector<8x64xf32>
    %c8_1764 = arith.constant 8 : index
    %c512_1765 = arith.constant 512 : index
    %970 = vector.load %arg10[%c8_1764, %c512_1765] : memref<128x576xf32, #tpu.memory_space<vmem>>, vector<8x64xf32>
    tpu.vector_store %arg10[%c8_1764, %c512_1765], %969 {strides = array<i32>} : memref<128x576xf32, #tpu.memory_space<vmem>>, vector<8x64xf32>,
    %c0_1766 = arith.constant 0 : index
    %c4_1767 = arith.constant 4 : index
    %c2_1768 = arith.constant 2 : index
    %c0_1769 = arith.constant 0 : index
    %971 = vector.load %arg9[%c0_1766, %c4_1767, %c2_1768, %c0_1769] : memref<2x10x10x64xf32, #tpu.memory_space<vmem>>, vector<1x1x8x64xf32>
    %972 = vector.shape_cast %971 : vector<1x1x8x64xf32> to vector<8x64xf32>
    %c16_1770 = arith.constant 16 : index
    %c512_1771 = arith.constant 512 : index
    %973 = vector.load %arg10[%c16_1770, %c512_1771] : memref<128x576xf32, #tpu.memory_space<vmem>>, vector<8x64xf32>
    tpu.vector_store %arg10[%c16_1770, %c512_1771], %972 {strides = array<i32>} : memref<128x576xf32, #tpu.memory_space<vmem>>, vector<8x64xf32>,
    %c0_1772 = arith.constant 0 : index
    %c5_1773 = arith.constant 5 : index
    %c2_1774 = arith.constant 2 : index
    %c0_1775 = arith.constant 0 : index
    %974 = vector.load %arg9[%c0_1772, %c5_1773, %c2_1774, %c0_1775] : memref<2x10x10x64xf32, #tpu.memory_space<vmem>>, vector<1x1x8x64xf32>
    %975 = vector.shape_cast %974 : vector<1x1x8x64xf32> to vector<8x64xf32>
    %c24_1776 = arith.constant 24 : index
    %c512_1777 = arith.constant 512 : index
    %976 = vector.load %arg10[%c24_1776, %c512_1777] : memref<128x576xf32, #tpu.memory_space<vmem>>, vector<8x64xf32>
    tpu.vector_store %arg10[%c24_1776, %c512_1777], %975 {strides = array<i32>} : memref<128x576xf32, #tpu.memory_space<vmem>>, vector<8x64xf32>,
    %c0_1778 = arith.constant 0 : index
    %c6_1779 = arith.constant 6 : index
    %c2_1780 = arith.constant 2 : index
    %c0_1781 = arith.constant 0 : index
    %977 = vector.load %arg9[%c0_1778, %c6_1779, %c2_1780, %c0_1781] : memref<2x10x10x64xf32, #tpu.memory_space<vmem>>, vector<1x1x8x64xf32>
    %978 = vector.shape_cast %977 : vector<1x1x8x64xf32> to vector<8x64xf32>
    %c32_1782 = arith.constant 32 : index
    %c512_1783 = arith.constant 512 : index
    %979 = vector.load %arg10[%c32_1782, %c512_1783] : memref<128x576xf32, #tpu.memory_space<vmem>>, vector<8x64xf32>
    tpu.vector_store %arg10[%c32_1782, %c512_1783], %978 {strides = array<i32>} : memref<128x576xf32, #tpu.memory_space<vmem>>, vector<8x64xf32>,
    %c0_1784 = arith.constant 0 : index
    %c7_1785 = arith.constant 7 : index
    %c2_1786 = arith.constant 2 : index
    %c0_1787 = arith.constant 0 : index
    %980 = vector.load %arg9[%c0_1784, %c7_1785, %c2_1786, %c0_1787] : memref<2x10x10x64xf32, #tpu.memory_space<vmem>>, vector<1x1x8x64xf32>
    %981 = vector.shape_cast %980 : vector<1x1x8x64xf32> to vector<8x64xf32>
    %c40_1788 = arith.constant 40 : index
    %c512_1789 = arith.constant 512 : index
    %982 = vector.load %arg10[%c40_1788, %c512_1789] : memref<128x576xf32, #tpu.memory_space<vmem>>, vector<8x64xf32>
    tpu.vector_store %arg10[%c40_1788, %c512_1789], %981 {strides = array<i32>} : memref<128x576xf32, #tpu.memory_space<vmem>>, vector<8x64xf32>,
    %c0_1790 = arith.constant 0 : index
    %c8_1791 = arith.constant 8 : index
    %c2_1792 = arith.constant 2 : index
    %c0_1793 = arith.constant 0 : index
    %983 = vector.load %arg9[%c0_1790, %c8_1791, %c2_1792, %c0_1793] : memref<2x10x10x64xf32, #tpu.memory_space<vmem>>, vector<1x1x8x64xf32>
    %984 = vector.shape_cast %983 : vector<1x1x8x64xf32> to vector<8x64xf32>
    %c48_1794 = arith.constant 48 : index
    %c512_1795 = arith.constant 512 : index
    %985 = vector.load %arg10[%c48_1794, %c512_1795] : memref<128x576xf32, #tpu.memory_space<vmem>>, vector<8x64xf32>
    tpu.vector_store %arg10[%c48_1794, %c512_1795], %984 {strides = array<i32>} : memref<128x576xf32, #tpu.memory_space<vmem>>, vector<8x64xf32>,
    %c0_1796 = arith.constant 0 : index
    %c9_1797 = arith.constant 9 : index
    %c2_1798 = arith.constant 2 : index
    %c0_1799 = arith.constant 0 : index
    %986 = vector.load %arg9[%c0_1796, %c9_1797, %c2_1798, %c0_1799] : memref<2x10x10x64xf32, #tpu.memory_space<vmem>>, vector<1x1x8x64xf32>
    %987 = vector.shape_cast %986 : vector<1x1x8x64xf32> to vector<8x64xf32>
    %c56_1800 = arith.constant 56 : index
    %c512_1801 = arith.constant 512 : index
    %988 = vector.load %arg10[%c56_1800, %c512_1801] : memref<128x576xf32, #tpu.memory_space<vmem>>, vector<8x64xf32>
    tpu.vector_store %arg10[%c56_1800, %c512_1801], %987 {strides = array<i32>} : memref<128x576xf32, #tpu.memory_space<vmem>>, vector<8x64xf32>,
    %c1_1802 = arith.constant 1 : index
    %c2_1803 = arith.constant 2 : index
    %c2_1804 = arith.constant 2 : index
    %c0_1805 = arith.constant 0 : index
    %989 = vector.load %arg9[%c1_1802, %c2_1803, %c2_1804, %c0_1805] : memref<2x10x10x64xf32, #tpu.memory_space<vmem>>, vector<1x1x8x64xf32>
    %990 = vector.shape_cast %989 : vector<1x1x8x64xf32> to vector<8x64xf32>
    %c64_1806 = arith.constant 64 : index
    %c512_1807 = arith.constant 512 : index
    %991 = vector.load %arg10[%c64_1806, %c512_1807] : memref<128x576xf32, #tpu.memory_space<vmem>>, vector<8x64xf32>
    tpu.vector_store %arg10[%c64_1806, %c512_1807], %990 {strides = array<i32>} : memref<128x576xf32, #tpu.memory_space<vmem>>, vector<8x64xf32>,
    %c1_1808 = arith.constant 1 : index
    %c3_1809 = arith.constant 3 : index
    %c2_1810 = arith.constant 2 : index
    %c0_1811 = arith.constant 0 : index
    %992 = vector.load %arg9[%c1_1808, %c3_1809, %c2_1810, %c0_1811] : memref<2x10x10x64xf32, #tpu.memory_space<vmem>>, vector<1x1x8x64xf32>
    %993 = vector.shape_cast %992 : vector<1x1x8x64xf32> to vector<8x64xf32>
    %c72_1812 = arith.constant 72 : index
    %c512_1813 = arith.constant 512 : index
    %994 = vector.load %arg10[%c72_1812, %c512_1813] : memref<128x576xf32, #tpu.memory_space<vmem>>, vector<8x64xf32>
    tpu.vector_store %arg10[%c72_1812, %c512_1813], %993 {strides = array<i32>} : memref<128x576xf32, #tpu.memory_space<vmem>>, vector<8x64xf32>,
    %c1_1814 = arith.constant 1 : index
    %c4_1815 = arith.constant 4 : index
    %c2_1816 = arith.constant 2 : index
    %c0_1817 = arith.constant 0 : index
    %995 = vector.load %arg9[%c1_1814, %c4_1815, %c2_1816, %c0_1817] : memref<2x10x10x64xf32, #tpu.memory_space<vmem>>, vector<1x1x8x64xf32>
    %996 = vector.shape_cast %995 : vector<1x1x8x64xf32> to vector<8x64xf32>
    %c80_1818 = arith.constant 80 : index
    %c512_1819 = arith.constant 512 : index
    %997 = vector.load %arg10[%c80_1818, %c512_1819] : memref<128x576xf32, #tpu.memory_space<vmem>>, vector<8x64xf32>
    tpu.vector_store %arg10[%c80_1818, %c512_1819], %996 {strides = array<i32>} : memref<128x576xf32, #tpu.memory_space<vmem>>, vector<8x64xf32>,
    %c1_1820 = arith.constant 1 : index
    %c5_1821 = arith.constant 5 : index
    %c2_1822 = arith.constant 2 : index
    %c0_1823 = arith.constant 0 : index
    %998 = vector.load %arg9[%c1_1820, %c5_1821, %c2_1822, %c0_1823] : memref<2x10x10x64xf32, #tpu.memory_space<vmem>>, vector<1x1x8x64xf32>
    %999 = vector.shape_cast %998 : vector<1x1x8x64xf32> to vector<8x64xf32>
    %c88_1824 = arith.constant 88 : index
    %c512_1825 = arith.constant 512 : index
    %1000 = vector.load %arg10[%c88_1824, %c512_1825] : memref<128x576xf32, #tpu.memory_space<vmem>>, vector<8x64xf32>
    tpu.vector_store %arg10[%c88_1824, %c512_1825], %999 {strides = array<i32>} : memref<128x576xf32, #tpu.memory_space<vmem>>, vector<8x64xf32>,
    %c1_1826 = arith.constant 1 : index
    %c6_1827 = arith.constant 6 : index
    %c2_1828 = arith.constant 2 : index
    %c0_1829 = arith.constant 0 : index
    %1001 = vector.load %arg9[%c1_1826, %c6_1827, %c2_1828, %c0_1829] : memref<2x10x10x64xf32, #tpu.memory_space<vmem>>, vector<1x1x8x64xf32>
    %1002 = vector.shape_cast %1001 : vector<1x1x8x64xf32> to vector<8x64xf32>
    %c96_1830 = arith.constant 96 : index
    %c512_1831 = arith.constant 512 : index
    %1003 = vector.load %arg10[%c96_1830, %c512_1831] : memref<128x576xf32, #tpu.memory_space<vmem>>, vector<8x64xf32>
    tpu.vector_store %arg10[%c96_1830, %c512_1831], %1002 {strides = array<i32>} : memref<128x576xf32, #tpu.memory_space<vmem>>, vector<8x64xf32>,
    %c1_1832 = arith.constant 1 : index
    %c7_1833 = arith.constant 7 : index
    %c2_1834 = arith.constant 2 : index
    %c0_1835 = arith.constant 0 : index
    %1004 = vector.load %arg9[%c1_1832, %c7_1833, %c2_1834, %c0_1835] : memref<2x10x10x64xf32, #tpu.memory_space<vmem>>, vector<1x1x8x64xf32>
    %1005 = vector.shape_cast %1004 : vector<1x1x8x64xf32> to vector<8x64xf32>
    %c104_1836 = arith.constant 104 : index
    %c512_1837 = arith.constant 512 : index
    %1006 = vector.load %arg10[%c104_1836, %c512_1837] : memref<128x576xf32, #tpu.memory_space<vmem>>, vector<8x64xf32>
    tpu.vector_store %arg10[%c104_1836, %c512_1837], %1005 {strides = array<i32>} : memref<128x576xf32, #tpu.memory_space<vmem>>, vector<8x64xf32>,
    %c1_1838 = arith.constant 1 : index
    %c8_1839 = arith.constant 8 : index
    %c2_1840 = arith.constant 2 : index
    %c0_1841 = arith.constant 0 : index
    %1007 = vector.load %arg9[%c1_1838, %c8_1839, %c2_1840, %c0_1841] : memref<2x10x10x64xf32, #tpu.memory_space<vmem>>, vector<1x1x8x64xf32>
    %1008 = vector.shape_cast %1007 : vector<1x1x8x64xf32> to vector<8x64xf32>
    %c112_1842 = arith.constant 112 : index
    %c512_1843 = arith.constant 512 : index
    %1009 = vector.load %arg10[%c112_1842, %c512_1843] : memref<128x576xf32, #tpu.memory_space<vmem>>, vector<8x64xf32>
    tpu.vector_store %arg10[%c112_1842, %c512_1843], %1008 {strides = array<i32>} : memref<128x576xf32, #tpu.memory_space<vmem>>, vector<8x64xf32>,
    %c1_1844 = arith.constant 1 : index
    %c9_1845 = arith.constant 9 : index
    %c2_1846 = arith.constant 2 : index
    %c0_1847 = arith.constant 0 : index
    %1010 = vector.load %arg9[%c1_1844, %c9_1845, %c2_1846, %c0_1847] : memref<2x10x10x64xf32, #tpu.memory_space<vmem>>, vector<1x1x8x64xf32>
    %1011 = vector.shape_cast %1010 : vector<1x1x8x64xf32> to vector<8x64xf32>
    %c120_1848 = arith.constant 120 : index
    %c512_1849 = arith.constant 512 : index
    %1012 = vector.load %arg10[%c120_1848, %c512_1849] : memref<128x576xf32, #tpu.memory_space<vmem>>, vector<8x64xf32>
    tpu.vector_store %arg10[%c120_1848, %c512_1849], %1011 {strides = array<i32>} : memref<128x576xf32, #tpu.memory_space<vmem>>, vector<8x64xf32>,
    %c0_1850 = arith.constant 0 : index
    %c0_1851 = arith.constant 0 : index
    %1013 = vector.load %arg10[%c0_1850, %c0_1851] : memref<128x576xf32, #tpu.memory_space<vmem>>, vector<128x576xf32>
    %1014 = arith.truncf %1013 : vector<128x576xf32> to vector<128x576xbf16>
    %c0_1852 = arith.constant 0 : index
    %c0_1853 = arith.constant 0 : index
    %1015 = vector.load %arg6[%c0_1852, %c0_1853] : memref<576x128xbf16, #tpu.memory_space<vmem>>, vector<576x128xbf16>
    %cst_1854 = arith.constant dense<0.000000e+00> : vector<128x128xf32>
    %1016 = tpu.matmul %1014, %1015, %cst_1854 {dimension_numbers = #tpu.dot_dimension_numbers<[1], [0], [0], [1], [0, 0, 1, 1], [], []>} : vector<128x576xbf16>, vector<576x128xbf16>, vector<128x128xf32> -> vector<128x128xf32>
    %c0_1855 = arith.constant 0 : index
    %c0_1856 = arith.constant 0 : index
    %1017 = vector.load %arg7[%c0_1855, %c0_1856] : memref<1x128xf32, #tpu.memory_space<vmem>>, vector<1x128xf32>
    %1018 = vector.broadcast %1017 : vector<1x128xf32> to vector<128x128xf32>
    %1019 = arith.addf %1016, %1018 : vector<128x128xf32>
    %cst_1857 = arith.constant 0.000000e+00 : f32
    %1020 = vector.broadcast %cst_1857 : f32 to vector<128x128xf32>
    %1021 = arith.maximumf %1019, %1020 : vector<128x128xf32>
    %1022 = vector.extract_strided_slice %1021 {offsets = [0, 0], sizes = [8, 128], strides = [1, 1]} : vector<128x128xf32> to vector<8x128xf32>
    %c0_1858 = arith.constant 0 : index
    %c0_1859 = arith.constant 0 : index
    %c0_1860 = arith.constant 0 : index
    %c0_1861 = arith.constant 0 : index
    %1023 = vector.load %arg11[%c0_1858, %c0_1859, %c0_1860, %c0_1861] : memref<2x8x8x128xf32, #tpu.memory_space<vmem>>, vector<1x1x8x128xf32>
    %1024 = vector.shape_cast %1023 : vector<1x1x8x128xf32> to vector<8x128xf32>
    %1025 = vector.shape_cast %1022 : vector<8x128xf32> to vector<1x1x8x128xf32>
    tpu.vector_store %arg11[%c0_1858, %c0_1859, %c0_1860, %c0_1861], %1025 {strides = array<i32>} : memref<2x8x8x128xf32, #tpu.memory_space<vmem>>, vector<1x1x8x128xf32>,
    %1026 = vector.extract_strided_slice %1021 {offsets = [8, 0], sizes = [8, 128], strides = [1, 1]} : vector<128x128xf32> to vector<8x128xf32>
    %c0_1862 = arith.constant 0 : index
    %c1_1863 = arith.constant 1 : index
    %c0_1864 = arith.constant 0 : index
    %c0_1865 = arith.constant 0 : index
    %1027 = vector.load %arg11[%c0_1862, %c1_1863, %c0_1864, %c0_1865] : memref<2x8x8x128xf32, #tpu.memory_space<vmem>>, vector<1x1x8x128xf32>
    %1028 = vector.shape_cast %1027 : vector<1x1x8x128xf32> to vector<8x128xf32>
    %1029 = vector.shape_cast %1026 : vector<8x128xf32> to vector<1x1x8x128xf32>
    tpu.vector_store %arg11[%c0_1862, %c1_1863, %c0_1864, %c0_1865], %1029 {strides = array<i32>} : memref<2x8x8x128xf32, #tpu.memory_space<vmem>>, vector<1x1x8x128xf32>,
    %1030 = vector.extract_strided_slice %1021 {offsets = [16, 0], sizes = [8, 128], strides = [1, 1]} : vector<128x128xf32> to vector<8x128xf32>
    %c0_1866 = arith.constant 0 : index
    %c2_1867 = arith.constant 2 : index
    %c0_1868 = arith.constant 0 : index
    %c0_1869 = arith.constant 0 : index
    %1031 = vector.load %arg11[%c0_1866, %c2_1867, %c0_1868, %c0_1869] : memref<2x8x8x128xf32, #tpu.memory_space<vmem>>, vector<1x1x8x128xf32>
    %1032 = vector.shape_cast %1031 : vector<1x1x8x128xf32> to vector<8x128xf32>
    %1033 = vector.shape_cast %1030 : vector<8x128xf32> to vector<1x1x8x128xf32>
    tpu.vector_store %arg11[%c0_1866, %c2_1867, %c0_1868, %c0_1869], %1033 {strides = array<i32>} : memref<2x8x8x128xf32, #tpu.memory_space<vmem>>, vector<1x1x8x128xf32>,
    %1034 = vector.extract_strided_slice %1021 {offsets = [24, 0], sizes = [8, 128], strides = [1, 1]} : vector<128x128xf32> to vector<8x128xf32>
    %c0_1870 = arith.constant 0 : index
    %c3_1871 = arith.constant 3 : index
    %c0_1872 = arith.constant 0 : index
    %c0_1873 = arith.constant 0 : index
    %1035 = vector.load %arg11[%c0_1870, %c3_1871, %c0_1872, %c0_1873] : memref<2x8x8x128xf32, #tpu.memory_space<vmem>>, vector<1x1x8x128xf32>
    %1036 = vector.shape_cast %1035 : vector<1x1x8x128xf32> to vector<8x128xf32>
    %1037 = vector.shape_cast %1034 : vector<8x128xf32> to vector<1x1x8x128xf32>
    tpu.vector_store %arg11[%c0_1870, %c3_1871, %c0_1872, %c0_1873], %1037 {strides = array<i32>} : memref<2x8x8x128xf32, #tpu.memory_space<vmem>>, vector<1x1x8x128xf32>,
    %1038 = vector.extract_strided_slice %1021 {offsets = [32, 0], sizes = [8, 128], strides = [1, 1]} : vector<128x128xf32> to vector<8x128xf32>
    %c0_1874 = arith.constant 0 : index
    %c4_1875 = arith.constant 4 : index
    %c0_1876 = arith.constant 0 : index
    %c0_1877 = arith.constant 0 : index
    %1039 = vector.load %arg11[%c0_1874, %c4_1875, %c0_1876, %c0_1877] : memref<2x8x8x128xf32, #tpu.memory_space<vmem>>, vector<1x1x8x128xf32>
    %1040 = vector.shape_cast %1039 : vector<1x1x8x128xf32> to vector<8x128xf32>
    %1041 = vector.shape_cast %1038 : vector<8x128xf32> to vector<1x1x8x128xf32>
    tpu.vector_store %arg11[%c0_1874, %c4_1875, %c0_1876, %c0_1877], %1041 {strides = array<i32>} : memref<2x8x8x128xf32, #tpu.memory_space<vmem>>, vector<1x1x8x128xf32>,
    %1042 = vector.extract_strided_slice %1021 {offsets = [40, 0], sizes = [8, 128], strides = [1, 1]} : vector<128x128xf32> to vector<8x128xf32>
    %c0_1878 = arith.constant 0 : index
    %c5_1879 = arith.constant 5 : index
    %c0_1880 = arith.constant 0 : index
    %c0_1881 = arith.constant 0 : index
    %1043 = vector.load %arg11[%c0_1878, %c5_1879, %c0_1880, %c0_1881] : memref<2x8x8x128xf32, #tpu.memory_space<vmem>>, vector<1x1x8x128xf32>
    %1044 = vector.shape_cast %1043 : vector<1x1x8x128xf32> to vector<8x128xf32>
    %1045 = vector.shape_cast %1042 : vector<8x128xf32> to vector<1x1x8x128xf32>
    tpu.vector_store %arg11[%c0_1878, %c5_1879, %c0_1880, %c0_1881], %1045 {strides = array<i32>} : memref<2x8x8x128xf32, #tpu.memory_space<vmem>>, vector<1x1x8x128xf32>,
    %1046 = vector.extract_strided_slice %1021 {offsets = [48, 0], sizes = [8, 128], strides = [1, 1]} : vector<128x128xf32> to vector<8x128xf32>
    %c0_1882 = arith.constant 0 : index
    %c6_1883 = arith.constant 6 : index
    %c0_1884 = arith.constant 0 : index
    %c0_1885 = arith.constant 0 : index
    %1047 = vector.load %arg11[%c0_1882, %c6_1883, %c0_1884, %c0_1885] : memref<2x8x8x128xf32, #tpu.memory_space<vmem>>, vector<1x1x8x128xf32>
    %1048 = vector.shape_cast %1047 : vector<1x1x8x128xf32> to vector<8x128xf32>
    %1049 = vector.shape_cast %1046 : vector<8x128xf32> to vector<1x1x8x128xf32>
    tpu.vector_store %arg11[%c0_1882, %c6_1883, %c0_1884, %c0_1885], %1049 {strides = array<i32>} : memref<2x8x8x128xf32, #tpu.memory_space<vmem>>, vector<1x1x8x128xf32>,
    %1050 = vector.extract_strided_slice %1021 {offsets = [56, 0], sizes = [8, 128], strides = [1, 1]} : vector<128x128xf32> to vector<8x128xf32>
    %c0_1886 = arith.constant 0 : index
    %c7_1887 = arith.constant 7 : index
    %c0_1888 = arith.constant 0 : index
    %c0_1889 = arith.constant 0 : index
    %1051 = vector.load %arg11[%c0_1886, %c7_1887, %c0_1888, %c0_1889] : memref<2x8x8x128xf32, #tpu.memory_space<vmem>>, vector<1x1x8x128xf32>
    %1052 = vector.shape_cast %1051 : vector<1x1x8x128xf32> to vector<8x128xf32>
    %1053 = vector.shape_cast %1050 : vector<8x128xf32> to vector<1x1x8x128xf32>
    tpu.vector_store %arg11[%c0_1886, %c7_1887, %c0_1888, %c0_1889], %1053 {strides = array<i32>} : memref<2x8x8x128xf32, #tpu.memory_space<vmem>>, vector<1x1x8x128xf32>,
    %1054 = vector.extract_strided_slice %1021 {offsets = [64, 0], sizes = [8, 128], strides = [1, 1]} : vector<128x128xf32> to vector<8x128xf32>
    %c1_1890 = arith.constant 1 : index
    %c0_1891 = arith.constant 0 : index
    %c0_1892 = arith.constant 0 : index
    %c0_1893 = arith.constant 0 : index
    %1055 = vector.load %arg11[%c1_1890, %c0_1891, %c0_1892, %c0_1893] : memref<2x8x8x128xf32, #tpu.memory_space<vmem>>, vector<1x1x8x128xf32>
    %1056 = vector.shape_cast %1055 : vector<1x1x8x128xf32> to vector<8x128xf32>
    %1057 = vector.shape_cast %1054 : vector<8x128xf32> to vector<1x1x8x128xf32>
    tpu.vector_store %arg11[%c1_1890, %c0_1891, %c0_1892, %c0_1893], %1057 {strides = array<i32>} : memref<2x8x8x128xf32, #tpu.memory_space<vmem>>, vector<1x1x8x128xf32>,
    %1058 = vector.extract_strided_slice %1021 {offsets = [72, 0], sizes = [8, 128], strides = [1, 1]} : vector<128x128xf32> to vector<8x128xf32>
    %c1_1894 = arith.constant 1 : index
    %c1_1895 = arith.constant 1 : index
    %c0_1896 = arith.constant 0 : index
    %c0_1897 = arith.constant 0 : index
    %1059 = vector.load %arg11[%c1_1894, %c1_1895, %c0_1896, %c0_1897] : memref<2x8x8x128xf32, #tpu.memory_space<vmem>>, vector<1x1x8x128xf32>
    %1060 = vector.shape_cast %1059 : vector<1x1x8x128xf32> to vector<8x128xf32>
    %1061 = vector.shape_cast %1058 : vector<8x128xf32> to vector<1x1x8x128xf32>
    tpu.vector_store %arg11[%c1_1894, %c1_1895, %c0_1896, %c0_1897], %1061 {strides = array<i32>} : memref<2x8x8x128xf32, #tpu.memory_space<vmem>>, vector<1x1x8x128xf32>,
    %1062 = vector.extract_strided_slice %1021 {offsets = [80, 0], sizes = [8, 128], strides = [1, 1]} : vector<128x128xf32> to vector<8x128xf32>
    %c1_1898 = arith.constant 1 : index
    %c2_1899 = arith.constant 2 : index
    %c0_1900 = arith.constant 0 : index
    %c0_1901 = arith.constant 0 : index
    %1063 = vector.load %arg11[%c1_1898, %c2_1899, %c0_1900, %c0_1901] : memref<2x8x8x128xf32, #tpu.memory_space<vmem>>, vector<1x1x8x128xf32>
    %1064 = vector.shape_cast %1063 : vector<1x1x8x128xf32> to vector<8x128xf32>
    %1065 = vector.shape_cast %1062 : vector<8x128xf32> to vector<1x1x8x128xf32>
    tpu.vector_store %arg11[%c1_1898, %c2_1899, %c0_1900, %c0_1901], %1065 {strides = array<i32>} : memref<2x8x8x128xf32, #tpu.memory_space<vmem>>, vector<1x1x8x128xf32>,
    %1066 = vector.extract_strided_slice %1021 {offsets = [88, 0], sizes = [8, 128], strides = [1, 1]} : vector<128x128xf32> to vector<8x128xf32>
    %c1_1902 = arith.constant 1 : index
    %c3_1903 = arith.constant 3 : index
    %c0_1904 = arith.constant 0 : index
    %c0_1905 = arith.constant 0 : index
    %1067 = vector.load %arg11[%c1_1902, %c3_1903, %c0_1904, %c0_1905] : memref<2x8x8x128xf32, #tpu.memory_space<vmem>>, vector<1x1x8x128xf32>
    %1068 = vector.shape_cast %1067 : vector<1x1x8x128xf32> to vector<8x128xf32>
    %1069 = vector.shape_cast %1066 : vector<8x128xf32> to vector<1x1x8x128xf32>
    tpu.vector_store %arg11[%c1_1902, %c3_1903, %c0_1904, %c0_1905], %1069 {strides = array<i32>} : memref<2x8x8x128xf32, #tpu.memory_space<vmem>>, vector<1x1x8x128xf32>,
    %1070 = vector.extract_strided_slice %1021 {offsets = [96, 0], sizes = [8, 128], strides = [1, 1]} : vector<128x128xf32> to vector<8x128xf32>
    %c1_1906 = arith.constant 1 : index
    %c4_1907 = arith.constant 4 : index
    %c0_1908 = arith.constant 0 : index
    %c0_1909 = arith.constant 0 : index
    %1071 = vector.load %arg11[%c1_1906, %c4_1907, %c0_1908, %c0_1909] : memref<2x8x8x128xf32, #tpu.memory_space<vmem>>, vector<1x1x8x128xf32>
    %1072 = vector.shape_cast %1071 : vector<1x1x8x128xf32> to vector<8x128xf32>
    %1073 = vector.shape_cast %1070 : vector<8x128xf32> to vector<1x1x8x128xf32>
    tpu.vector_store %arg11[%c1_1906, %c4_1907, %c0_1908, %c0_1909], %1073 {strides = array<i32>} : memref<2x8x8x128xf32, #tpu.memory_space<vmem>>, vector<1x1x8x128xf32>,
    %1074 = vector.extract_strided_slice %1021 {offsets = [104, 0], sizes = [8, 128], strides = [1, 1]} : vector<128x128xf32> to vector<8x128xf32>
    %c1_1910 = arith.constant 1 : index
    %c5_1911 = arith.constant 5 : index
    %c0_1912 = arith.constant 0 : index
    %c0_1913 = arith.constant 0 : index
    %1075 = vector.load %arg11[%c1_1910, %c5_1911, %c0_1912, %c0_1913] : memref<2x8x8x128xf32, #tpu.memory_space<vmem>>, vector<1x1x8x128xf32>
    %1076 = vector.shape_cast %1075 : vector<1x1x8x128xf32> to vector<8x128xf32>
    %1077 = vector.shape_cast %1074 : vector<8x128xf32> to vector<1x1x8x128xf32>
    tpu.vector_store %arg11[%c1_1910, %c5_1911, %c0_1912, %c0_1913], %1077 {strides = array<i32>} : memref<2x8x8x128xf32, #tpu.memory_space<vmem>>, vector<1x1x8x128xf32>,
    %1078 = vector.extract_strided_slice %1021 {offsets = [112, 0], sizes = [8, 128], strides = [1, 1]} : vector<128x128xf32> to vector<8x128xf32>
    %c1_1914 = arith.constant 1 : index
    %c6_1915 = arith.constant 6 : index
    %c0_1916 = arith.constant 0 : index
    %c0_1917 = arith.constant 0 : index
    %1079 = vector.load %arg11[%c1_1914, %c6_1915, %c0_1916, %c0_1917] : memref<2x8x8x128xf32, #tpu.memory_space<vmem>>, vector<1x1x8x128xf32>
    %1080 = vector.shape_cast %1079 : vector<1x1x8x128xf32> to vector<8x128xf32>
    %1081 = vector.shape_cast %1078 : vector<8x128xf32> to vector<1x1x8x128xf32>
    tpu.vector_store %arg11[%c1_1914, %c6_1915, %c0_1916, %c0_1917], %1081 {strides = array<i32>} : memref<2x8x8x128xf32, #tpu.memory_space<vmem>>, vector<1x1x8x128xf32>,
    %1082 = vector.extract_strided_slice %1021 {offsets = [120, 0], sizes = [8, 128], strides = [1, 1]} : vector<128x128xf32> to vector<8x128xf32>
    %c1_1918 = arith.constant 1 : index
    %c7_1919 = arith.constant 7 : index
    %c0_1920 = arith.constant 0 : index
    %c0_1921 = arith.constant 0 : index
    %1083 = vector.load %arg11[%c1_1918, %c7_1919, %c0_1920, %c0_1921] : memref<2x8x8x128xf32, #tpu.memory_space<vmem>>, vector<1x1x8x128xf32>
    %1084 = vector.shape_cast %1083 : vector<1x1x8x128xf32> to vector<8x128xf32>
    %1085 = vector.shape_cast %1082 : vector<8x128xf32> to vector<1x1x8x128xf32>
    tpu.vector_store %arg11[%c1_1918, %c7_1919, %c0_1920, %c0_1921], %1085 {strides = array<i32>} : memref<2x8x8x128xf32, #tpu.memory_space<vmem>>, vector<1x1x8x128xf32>,
    %c0_1922 = arith.constant 0 : index
    %c0_1923 = arith.constant 0 : index
    %c0_1924 = arith.constant 0 : index
    %c0_1925 = arith.constant 0 : index
    %1086 = vector.load %arg11[%c0_1922, %c0_1923, %c0_1924, %c0_1925] : memref<2x8x8x128xf32, #tpu.memory_space<vmem>>, vector<2x2x2x128xf32>
    %1087 = vector.extract_strided_slice %1086 {offsets = [0, 0, 0, 0], sizes = [2, 1, 1, 128], strides = [1, 1, 1, 1]} : vector<2x2x2x128xf32> to vector<2x1x1x128xf32>
    %1088 = vector.extract_strided_slice %1086 {offsets = [0, 0, 0, 0], sizes = [2, 1, 1, 128], strides = [1, 1, 1, 1]} : vector<2x2x2x128xf32> to vector<2x1x1x128xf32>
    %1089 = arith.maximumf %1087, %1088 : vector<2x1x1x128xf32>
    %1090 = vector.extract_strided_slice %1086 {offsets = [0, 0, 1, 0], sizes = [2, 1, 1, 128], strides = [1, 1, 1, 1]} : vector<2x2x2x128xf32> to vector<2x1x1x128xf32>
    %1091 = arith.maximumf %1089, %1090 : vector<2x1x1x128xf32>
    %1092 = vector.extract_strided_slice %1086 {offsets = [0, 1, 0, 0], sizes = [2, 1, 1, 128], strides = [1, 1, 1, 1]} : vector<2x2x2x128xf32> to vector<2x1x1x128xf32>
    %1093 = arith.maximumf %1091, %1092 : vector<2x1x1x128xf32>
    %1094 = vector.extract_strided_slice %1086 {offsets = [0, 1, 1, 0], sizes = [2, 1, 1, 128], strides = [1, 1, 1, 1]} : vector<2x2x2x128xf32> to vector<2x1x1x128xf32>
    %1095 = arith.maximumf %1093, %1094 : vector<2x1x1x128xf32>
    %c0_1926 = arith.constant 0 : index
    %c0_1927 = arith.constant 0 : index
    %c0_1928 = arith.constant 0 : index
    %c0_1929 = arith.constant 0 : index
    %1096 = vector.load %arg8[%c0_1926, %c0_1927, %c0_1928, %c0_1929] : memref<2x4x4x128xf32, #tpu.memory_space<vmem>>, vector<2x1x1x128xf32>
    tpu.vector_store %arg8[%c0_1926, %c0_1927, %c0_1928, %c0_1929], %1095 {strides = array<i32>} : memref<2x4x4x128xf32, #tpu.memory_space<vmem>>, vector<2x1x1x128xf32>,
    %c0_1930 = arith.constant 0 : index
    %c0_1931 = arith.constant 0 : index
    %c1_1932 = arith.constant 1 : index
    %c0_1933 = arith.constant 0 : index
    %1097 = vector.load %arg11[%c0_1930, %c0_1931, %c1_1932, %c0_1933] : memref<2x8x8x128xf32, #tpu.memory_space<vmem>>, vector<2x2x3x128xf32>
    %1098 = vector.extract_strided_slice %1097 {offsets = [0, 0, 0, 0], sizes = [2, 1, 1, 128], strides = [1, 1, 1, 1]} : vector<2x2x3x128xf32> to vector<2x1x1x128xf32>
    %1099 = vector.extract_strided_slice %1097 {offsets = [0, 0, 0, 0], sizes = [2, 1, 1, 128], strides = [1, 1, 1, 1]} : vector<2x2x3x128xf32> to vector<2x1x1x128xf32>
    %1100 = arith.maximumf %1098, %1099 : vector<2x1x1x128xf32>
    %1101 = vector.extract_strided_slice %1097 {offsets = [0, 0, 1, 0], sizes = [2, 1, 1, 128], strides = [1, 1, 1, 1]} : vector<2x2x3x128xf32> to vector<2x1x1x128xf32>
    %1102 = arith.maximumf %1100, %1101 : vector<2x1x1x128xf32>
    %1103 = vector.extract_strided_slice %1097 {offsets = [0, 0, 2, 0], sizes = [2, 1, 1, 128], strides = [1, 1, 1, 1]} : vector<2x2x3x128xf32> to vector<2x1x1x128xf32>
    %1104 = arith.maximumf %1102, %1103 : vector<2x1x1x128xf32>
    %1105 = vector.extract_strided_slice %1097 {offsets = [0, 1, 0, 0], sizes = [2, 1, 1, 128], strides = [1, 1, 1, 1]} : vector<2x2x3x128xf32> to vector<2x1x1x128xf32>
    %1106 = arith.maximumf %1104, %1105 : vector<2x1x1x128xf32>
    %1107 = vector.extract_strided_slice %1097 {offsets = [0, 1, 1, 0], sizes = [2, 1, 1, 128], strides = [1, 1, 1, 1]} : vector<2x2x3x128xf32> to vector<2x1x1x128xf32>
    %1108 = arith.maximumf %1106, %1107 : vector<2x1x1x128xf32>
    %1109 = vector.extract_strided_slice %1097 {offsets = [0, 1, 2, 0], sizes = [2, 1, 1, 128], strides = [1, 1, 1, 1]} : vector<2x2x3x128xf32> to vector<2x1x1x128xf32>
    %1110 = arith.maximumf %1108, %1109 : vector<2x1x1x128xf32>
    %c0_1934 = arith.constant 0 : index
    %c0_1935 = arith.constant 0 : index
    %c1_1936 = arith.constant 1 : index
    %c0_1937 = arith.constant 0 : index
    %1111 = vector.load %arg8[%c0_1934, %c0_1935, %c1_1936, %c0_1937] : memref<2x4x4x128xf32, #tpu.memory_space<vmem>>, vector<2x1x1x128xf32>
    tpu.vector_store %arg8[%c0_1934, %c0_1935, %c1_1936, %c0_1937], %1110 {strides = array<i32>} : memref<2x4x4x128xf32, #tpu.memory_space<vmem>>, vector<2x1x1x128xf32>,
    %c0_1938 = arith.constant 0 : index
    %c0_1939 = arith.constant 0 : index
    %c3_1940 = arith.constant 3 : index
    %c0_1941 = arith.constant 0 : index
    %1112 = vector.load %arg11[%c0_1938, %c0_1939, %c3_1940, %c0_1941] : memref<2x8x8x128xf32, #tpu.memory_space<vmem>>, vector<2x2x3x128xf32>
    %1113 = vector.extract_strided_slice %1112 {offsets = [0, 0, 0, 0], sizes = [2, 1, 1, 128], strides = [1, 1, 1, 1]} : vector<2x2x3x128xf32> to vector<2x1x1x128xf32>
    %1114 = vector.extract_strided_slice %1112 {offsets = [0, 0, 0, 0], sizes = [2, 1, 1, 128], strides = [1, 1, 1, 1]} : vector<2x2x3x128xf32> to vector<2x1x1x128xf32>
    %1115 = arith.maximumf %1113, %1114 : vector<2x1x1x128xf32>
    %1116 = vector.extract_strided_slice %1112 {offsets = [0, 0, 1, 0], sizes = [2, 1, 1, 128], strides = [1, 1, 1, 1]} : vector<2x2x3x128xf32> to vector<2x1x1x128xf32>
    %1117 = arith.maximumf %1115, %1116 : vector<2x1x1x128xf32>
    %1118 = vector.extract_strided_slice %1112 {offsets = [0, 0, 2, 0], sizes = [2, 1, 1, 128], strides = [1, 1, 1, 1]} : vector<2x2x3x128xf32> to vector<2x1x1x128xf32>
    %1119 = arith.maximumf %1117, %1118 : vector<2x1x1x128xf32>
    %1120 = vector.extract_strided_slice %1112 {offsets = [0, 1, 0, 0], sizes = [2, 1, 1, 128], strides = [1, 1, 1, 1]} : vector<2x2x3x128xf32> to vector<2x1x1x128xf32>
    %1121 = arith.maximumf %1119, %1120 : vector<2x1x1x128xf32>
    %1122 = vector.extract_strided_slice %1112 {offsets = [0, 1, 1, 0], sizes = [2, 1, 1, 128], strides = [1, 1, 1, 1]} : vector<2x2x3x128xf32> to vector<2x1x1x128xf32>
    %1123 = arith.maximumf %1121, %1122 : vector<2x1x1x128xf32>
    %1124 = vector.extract_strided_slice %1112 {offsets = [0, 1, 2, 0], sizes = [2, 1, 1, 128], strides = [1, 1, 1, 1]} : vector<2x2x3x128xf32> to vector<2x1x1x128xf32>
    %1125 = arith.maximumf %1123, %1124 : vector<2x1x1x128xf32>
    %c0_1942 = arith.constant 0 : index
    %c0_1943 = arith.constant 0 : index
    %c2_1944 = arith.constant 2 : index
    %c0_1945 = arith.constant 0 : index
    %1126 = vector.load %arg8[%c0_1942, %c0_1943, %c2_1944, %c0_1945] : memref<2x4x4x128xf32, #tpu.memory_space<vmem>>, vector<2x1x1x128xf32>
    tpu.vector_store %arg8[%c0_1942, %c0_1943, %c2_1944, %c0_1945], %1125 {strides = array<i32>} : memref<2x4x4x128xf32, #tpu.memory_space<vmem>>, vector<2x1x1x128xf32>,
    %c0_1946 = arith.constant 0 : index
    %c0_1947 = arith.constant 0 : index
    %c5_1948 = arith.constant 5 : index
    %c0_1949 = arith.constant 0 : index
    %1127 = vector.load %arg11[%c0_1946, %c0_1947, %c5_1948, %c0_1949] : memref<2x8x8x128xf32, #tpu.memory_space<vmem>>, vector<2x2x3x128xf32>
    %1128 = vector.extract_strided_slice %1127 {offsets = [0, 0, 0, 0], sizes = [2, 1, 1, 128], strides = [1, 1, 1, 1]} : vector<2x2x3x128xf32> to vector<2x1x1x128xf32>
    %1129 = vector.extract_strided_slice %1127 {offsets = [0, 0, 0, 0], sizes = [2, 1, 1, 128], strides = [1, 1, 1, 1]} : vector<2x2x3x128xf32> to vector<2x1x1x128xf32>
    %1130 = arith.maximumf %1128, %1129 : vector<2x1x1x128xf32>
    %1131 = vector.extract_strided_slice %1127 {offsets = [0, 0, 1, 0], sizes = [2, 1, 1, 128], strides = [1, 1, 1, 1]} : vector<2x2x3x128xf32> to vector<2x1x1x128xf32>
    %1132 = arith.maximumf %1130, %1131 : vector<2x1x1x128xf32>
    %1133 = vector.extract_strided_slice %1127 {offsets = [0, 0, 2, 0], sizes = [2, 1, 1, 128], strides = [1, 1, 1, 1]} : vector<2x2x3x128xf32> to vector<2x1x1x128xf32>
    %1134 = arith.maximumf %1132, %1133 : vector<2x1x1x128xf32>
    %1135 = vector.extract_strided_slice %1127 {offsets = [0, 1, 0, 0], sizes = [2, 1, 1, 128], strides = [1, 1, 1, 1]} : vector<2x2x3x128xf32> to vector<2x1x1x128xf32>
    %1136 = arith.maximumf %1134, %1135 : vector<2x1x1x128xf32>
    %1137 = vector.extract_strided_slice %1127 {offsets = [0, 1, 1, 0], sizes = [2, 1, 1, 128], strides = [1, 1, 1, 1]} : vector<2x2x3x128xf32> to vector<2x1x1x128xf32>
    %1138 = arith.maximumf %1136, %1137 : vector<2x1x1x128xf32>
    %1139 = vector.extract_strided_slice %1127 {offsets = [0, 1, 2, 0], sizes = [2, 1, 1, 128], strides = [1, 1, 1, 1]} : vector<2x2x3x128xf32> to vector<2x1x1x128xf32>
    %1140 = arith.maximumf %1138, %1139 : vector<2x1x1x128xf32>
    %c0_1950 = arith.constant 0 : index
    %c0_1951 = arith.constant 0 : index
    %c3_1952 = arith.constant 3 : index
    %c0_1953 = arith.constant 0 : index
    %1141 = vector.load %arg8[%c0_1950, %c0_1951, %c3_1952, %c0_1953] : memref<2x4x4x128xf32, #tpu.memory_space<vmem>>, vector<2x1x1x128xf32>
    tpu.vector_store %arg8[%c0_1950, %c0_1951, %c3_1952, %c0_1953], %1140 {strides = array<i32>} : memref<2x4x4x128xf32, #tpu.memory_space<vmem>>, vector<2x1x1x128xf32>,
    %c0_1954 = arith.constant 0 : index
    %c1_1955 = arith.constant 1 : index
    %c0_1956 = arith.constant 0 : index
    %c0_1957 = arith.constant 0 : index
    %1142 = vector.load %arg11[%c0_1954, %c1_1955, %c0_1956, %c0_1957] : memref<2x8x8x128xf32, #tpu.memory_space<vmem>>, vector<2x3x2x128xf32>
    %1143 = vector.extract_strided_slice %1142 {offsets = [0, 0, 0, 0], sizes = [2, 1, 1, 128], strides = [1, 1, 1, 1]} : vector<2x3x2x128xf32> to vector<2x1x1x128xf32>
    %1144 = vector.extract_strided_slice %1142 {offsets = [0, 0, 0, 0], sizes = [2, 1, 1, 128], strides = [1, 1, 1, 1]} : vector<2x3x2x128xf32> to vector<2x1x1x128xf32>
    %1145 = arith.maximumf %1143, %1144 : vector<2x1x1x128xf32>
    %1146 = vector.extract_strided_slice %1142 {offsets = [0, 0, 1, 0], sizes = [2, 1, 1, 128], strides = [1, 1, 1, 1]} : vector<2x3x2x128xf32> to vector<2x1x1x128xf32>
    %1147 = arith.maximumf %1145, %1146 : vector<2x1x1x128xf32>
    %1148 = vector.extract_strided_slice %1142 {offsets = [0, 1, 0, 0], sizes = [2, 1, 1, 128], strides = [1, 1, 1, 1]} : vector<2x3x2x128xf32> to vector<2x1x1x128xf32>
    %1149 = arith.maximumf %1147, %1148 : vector<2x1x1x128xf32>
    %1150 = vector.extract_strided_slice %1142 {offsets = [0, 1, 1, 0], sizes = [2, 1, 1, 128], strides = [1, 1, 1, 1]} : vector<2x3x2x128xf32> to vector<2x1x1x128xf32>
    %1151 = arith.maximumf %1149, %1150 : vector<2x1x1x128xf32>
    %1152 = vector.extract_strided_slice %1142 {offsets = [0, 2, 0, 0], sizes = [2, 1, 1, 128], strides = [1, 1, 1, 1]} : vector<2x3x2x128xf32> to vector<2x1x1x128xf32>
    %1153 = arith.maximumf %1151, %1152 : vector<2x1x1x128xf32>
    %1154 = vector.extract_strided_slice %1142 {offsets = [0, 2, 1, 0], sizes = [2, 1, 1, 128], strides = [1, 1, 1, 1]} : vector<2x3x2x128xf32> to vector<2x1x1x128xf32>
    %1155 = arith.maximumf %1153, %1154 : vector<2x1x1x128xf32>
    %c0_1958 = arith.constant 0 : index
    %c1_1959 = arith.constant 1 : index
    %c0_1960 = arith.constant 0 : index
    %c0_1961 = arith.constant 0 : index
    %1156 = vector.load %arg8[%c0_1958, %c1_1959, %c0_1960, %c0_1961] : memref<2x4x4x128xf32, #tpu.memory_space<vmem>>, vector<2x1x1x128xf32>
    tpu.vector_store %arg8[%c0_1958, %c1_1959, %c0_1960, %c0_1961], %1155 {strides = array<i32>} : memref<2x4x4x128xf32, #tpu.memory_space<vmem>>, vector<2x1x1x128xf32>,
    %c0_1962 = arith.constant 0 : index
    %c1_1963 = arith.constant 1 : index
    %c1_1964 = arith.constant 1 : index
    %c0_1965 = arith.constant 0 : index
    %1157 = vector.load %arg11[%c0_1962, %c1_1963, %c1_1964, %c0_1965] : memref<2x8x8x128xf32, #tpu.memory_space<vmem>>, vector<2x3x3x128xf32>
    %1158 = vector.extract_strided_slice %1157 {offsets = [0, 0, 0, 0], sizes = [2, 1, 1, 128], strides = [1, 1, 1, 1]} : vector<2x3x3x128xf32> to vector<2x1x1x128xf32>
    %1159 = vector.extract_strided_slice %1157 {offsets = [0, 0, 0, 0], sizes = [2, 1, 1, 128], strides = [1, 1, 1, 1]} : vector<2x3x3x128xf32> to vector<2x1x1x128xf32>
    %1160 = arith.maximumf %1158, %1159 : vector<2x1x1x128xf32>
    %1161 = vector.extract_strided_slice %1157 {offsets = [0, 0, 1, 0], sizes = [2, 1, 1, 128], strides = [1, 1, 1, 1]} : vector<2x3x3x128xf32> to vector<2x1x1x128xf32>
    %1162 = arith.maximumf %1160, %1161 : vector<2x1x1x128xf32>
    %1163 = vector.extract_strided_slice %1157 {offsets = [0, 0, 2, 0], sizes = [2, 1, 1, 128], strides = [1, 1, 1, 1]} : vector<2x3x3x128xf32> to vector<2x1x1x128xf32>
    %1164 = arith.maximumf %1162, %1163 : vector<2x1x1x128xf32>
    %1165 = vector.extract_strided_slice %1157 {offsets = [0, 1, 0, 0], sizes = [2, 1, 1, 128], strides = [1, 1, 1, 1]} : vector<2x3x3x128xf32> to vector<2x1x1x128xf32>
    %1166 = arith.maximumf %1164, %1165 : vector<2x1x1x128xf32>
    %1167 = vector.extract_strided_slice %1157 {offsets = [0, 1, 1, 0], sizes = [2, 1, 1, 128], strides = [1, 1, 1, 1]} : vector<2x3x3x128xf32> to vector<2x1x1x128xf32>
    %1168 = arith.maximumf %1166, %1167 : vector<2x1x1x128xf32>
    %1169 = vector.extract_strided_slice %1157 {offsets = [0, 1, 2, 0], sizes = [2, 1, 1, 128], strides = [1, 1, 1, 1]} : vector<2x3x3x128xf32> to vector<2x1x1x128xf32>
    %1170 = arith.maximumf %1168, %1169 : vector<2x1x1x128xf32>
    %1171 = vector.extract_strided_slice %1157 {offsets = [0, 2, 0, 0], sizes = [2, 1, 1, 128], strides = [1, 1, 1, 1]} : vector<2x3x3x128xf32> to vector<2x1x1x128xf32>
    %1172 = arith.maximumf %1170, %1171 : vector<2x1x1x128xf32>
    %1173 = vector.extract_strided_slice %1157 {offsets = [0, 2, 1, 0], sizes = [2, 1, 1, 128], strides = [1, 1, 1, 1]} : vector<2x3x3x128xf32> to vector<2x1x1x128xf32>
    %1174 = arith.maximumf %1172, %1173 : vector<2x1x1x128xf32>
    %1175 = vector.extract_strided_slice %1157 {offsets = [0, 2, 2, 0], sizes = [2, 1, 1, 128], strides = [1, 1, 1, 1]} : vector<2x3x3x128xf32> to vector<2x1x1x128xf32>
    %1176 = arith.maximumf %1174, %1175 : vector<2x1x1x128xf32>
    %c0_1966 = arith.constant 0 : index
    %c1_1967 = arith.constant 1 : index
    %c1_1968 = arith.constant 1 : index
    %c0_1969 = arith.constant 0 : index
    %1177 = vector.load %arg8[%c0_1966, %c1_1967, %c1_1968, %c0_1969] : memref<2x4x4x128xf32, #tpu.memory_space<vmem>>, vector<2x1x1x128xf32>
    tpu.vector_store %arg8[%c0_1966, %c1_1967, %c1_1968, %c0_1969], %1176 {strides = array<i32>} : memref<2x4x4x128xf32, #tpu.memory_space<vmem>>, vector<2x1x1x128xf32>,
    %c0_1970 = arith.constant 0 : index
    %c1_1971 = arith.constant 1 : index
    %c3_1972 = arith.constant 3 : index
    %c0_1973 = arith.constant 0 : index
    %1178 = vector.load %arg11[%c0_1970, %c1_1971, %c3_1972, %c0_1973] : memref<2x8x8x128xf32, #tpu.memory_space<vmem>>, vector<2x3x3x128xf32>
    %1179 = vector.extract_strided_slice %1178 {offsets = [0, 0, 0, 0], sizes = [2, 1, 1, 128], strides = [1, 1, 1, 1]} : vector<2x3x3x128xf32> to vector<2x1x1x128xf32>
    %1180 = vector.extract_strided_slice %1178 {offsets = [0, 0, 0, 0], sizes = [2, 1, 1, 128], strides = [1, 1, 1, 1]} : vector<2x3x3x128xf32> to vector<2x1x1x128xf32>
    %1181 = arith.maximumf %1179, %1180 : vector<2x1x1x128xf32>
    %1182 = vector.extract_strided_slice %1178 {offsets = [0, 0, 1, 0], sizes = [2, 1, 1, 128], strides = [1, 1, 1, 1]} : vector<2x3x3x128xf32> to vector<2x1x1x128xf32>
    %1183 = arith.maximumf %1181, %1182 : vector<2x1x1x128xf32>
    %1184 = vector.extract_strided_slice %1178 {offsets = [0, 0, 2, 0], sizes = [2, 1, 1, 128], strides = [1, 1, 1, 1]} : vector<2x3x3x128xf32> to vector<2x1x1x128xf32>
    %1185 = arith.maximumf %1183, %1184 : vector<2x1x1x128xf32>
    %1186 = vector.extract_strided_slice %1178 {offsets = [0, 1, 0, 0], sizes = [2, 1, 1, 128], strides = [1, 1, 1, 1]} : vector<2x3x3x128xf32> to vector<2x1x1x128xf32>
    %1187 = arith.maximumf %1185, %1186 : vector<2x1x1x128xf32>
    %1188 = vector.extract_strided_slice %1178 {offsets = [0, 1, 1, 0], sizes = [2, 1, 1, 128], strides = [1, 1, 1, 1]} : vector<2x3x3x128xf32> to vector<2x1x1x128xf32>
    %1189 = arith.maximumf %1187, %1188 : vector<2x1x1x128xf32>
    %1190 = vector.extract_strided_slice %1178 {offsets = [0, 1, 2, 0], sizes = [2, 1, 1, 128], strides = [1, 1, 1, 1]} : vector<2x3x3x128xf32> to vector<2x1x1x128xf32>
    %1191 = arith.maximumf %1189, %1190 : vector<2x1x1x128xf32>
    %1192 = vector.extract_strided_slice %1178 {offsets = [0, 2, 0, 0], sizes = [2, 1, 1, 128], strides = [1, 1, 1, 1]} : vector<2x3x3x128xf32> to vector<2x1x1x128xf32>
    %1193 = arith.maximumf %1191, %1192 : vector<2x1x1x128xf32>
    %1194 = vector.extract_strided_slice %1178 {offsets = [0, 2, 1, 0], sizes = [2, 1, 1, 128], strides = [1, 1, 1, 1]} : vector<2x3x3x128xf32> to vector<2x1x1x128xf32>
    %1195 = arith.maximumf %1193, %1194 : vector<2x1x1x128xf32>
    %1196 = vector.extract_strided_slice %1178 {offsets = [0, 2, 2, 0], sizes = [2, 1, 1, 128], strides = [1, 1, 1, 1]} : vector<2x3x3x128xf32> to vector<2x1x1x128xf32>
    %1197 = arith.maximumf %1195, %1196 : vector<2x1x1x128xf32>
    %c0_1974 = arith.constant 0 : index
    %c1_1975 = arith.constant 1 : index
    %c2_1976 = arith.constant 2 : index
    %c0_1977 = arith.constant 0 : index
    %1198 = vector.load %arg8[%c0_1974, %c1_1975, %c2_1976, %c0_1977] : memref<2x4x4x128xf32, #tpu.memory_space<vmem>>, vector<2x1x1x128xf32>
    tpu.vector_store %arg8[%c0_1974, %c1_1975, %c2_1976, %c0_1977], %1197 {strides = array<i32>} : memref<2x4x4x128xf32, #tpu.memory_space<vmem>>, vector<2x1x1x128xf32>,
    %c0_1978 = arith.constant 0 : index
    %c1_1979 = arith.constant 1 : index
    %c5_1980 = arith.constant 5 : index
    %c0_1981 = arith.constant 0 : index
    %1199 = vector.load %arg11[%c0_1978, %c1_1979, %c5_1980, %c0_1981] : memref<2x8x8x128xf32, #tpu.memory_space<vmem>>, vector<2x3x3x128xf32>
    %1200 = vector.extract_strided_slice %1199 {offsets = [0, 0, 0, 0], sizes = [2, 1, 1, 128], strides = [1, 1, 1, 1]} : vector<2x3x3x128xf32> to vector<2x1x1x128xf32>
    %1201 = vector.extract_strided_slice %1199 {offsets = [0, 0, 0, 0], sizes = [2, 1, 1, 128], strides = [1, 1, 1, 1]} : vector<2x3x3x128xf32> to vector<2x1x1x128xf32>
    %1202 = arith.maximumf %1200, %1201 : vector<2x1x1x128xf32>
    %1203 = vector.extract_strided_slice %1199 {offsets = [0, 0, 1, 0], sizes = [2, 1, 1, 128], strides = [1, 1, 1, 1]} : vector<2x3x3x128xf32> to vector<2x1x1x128xf32>
    %1204 = arith.maximumf %1202, %1203 : vector<2x1x1x128xf32>
    %1205 = vector.extract_strided_slice %1199 {offsets = [0, 0, 2, 0], sizes = [2, 1, 1, 128], strides = [1, 1, 1, 1]} : vector<2x3x3x128xf32> to vector<2x1x1x128xf32>
    %1206 = arith.maximumf %1204, %1205 : vector<2x1x1x128xf32>
    %1207 = vector.extract_strided_slice %1199 {offsets = [0, 1, 0, 0], sizes = [2, 1, 1, 128], strides = [1, 1, 1, 1]} : vector<2x3x3x128xf32> to vector<2x1x1x128xf32>
    %1208 = arith.maximumf %1206, %1207 : vector<2x1x1x128xf32>
    %1209 = vector.extract_strided_slice %1199 {offsets = [0, 1, 1, 0], sizes = [2, 1, 1, 128], strides = [1, 1, 1, 1]} : vector<2x3x3x128xf32> to vector<2x1x1x128xf32>
    %1210 = arith.maximumf %1208, %1209 : vector<2x1x1x128xf32>
    %1211 = vector.extract_strided_slice %1199 {offsets = [0, 1, 2, 0], sizes = [2, 1, 1, 128], strides = [1, 1, 1, 1]} : vector<2x3x3x128xf32> to vector<2x1x1x128xf32>
    %1212 = arith.maximumf %1210, %1211 : vector<2x1x1x128xf32>
    %1213 = vector.extract_strided_slice %1199 {offsets = [0, 2, 0, 0], sizes = [2, 1, 1, 128], strides = [1, 1, 1, 1]} : vector<2x3x3x128xf32> to vector<2x1x1x128xf32>
    %1214 = arith.maximumf %1212, %1213 : vector<2x1x1x128xf32>
    %1215 = vector.extract_strided_slice %1199 {offsets = [0, 2, 1, 0], sizes = [2, 1, 1, 128], strides = [1, 1, 1, 1]} : vector<2x3x3x128xf32> to vector<2x1x1x128xf32>
    %1216 = arith.maximumf %1214, %1215 : vector<2x1x1x128xf32>
    %1217 = vector.extract_strided_slice %1199 {offsets = [0, 2, 2, 0], sizes = [2, 1, 1, 128], strides = [1, 1, 1, 1]} : vector<2x3x3x128xf32> to vector<2x1x1x128xf32>
    %1218 = arith.maximumf %1216, %1217 : vector<2x1x1x128xf32>
    %c0_1982 = arith.constant 0 : index
    %c1_1983 = arith.constant 1 : index
    %c3_1984 = arith.constant 3 : index
    %c0_1985 = arith.constant 0 : index
    %1219 = vector.load %arg8[%c0_1982, %c1_1983, %c3_1984, %c0_1985] : memref<2x4x4x128xf32, #tpu.memory_space<vmem>>, vector<2x1x1x128xf32>
    tpu.vector_store %arg8[%c0_1982, %c1_1983, %c3_1984, %c0_1985], %1218 {strides = array<i32>} : memref<2x4x4x128xf32, #tpu.memory_space<vmem>>, vector<2x1x1x128xf32>,
    %c0_1986 = arith.constant 0 : index
    %c3_1987 = arith.constant 3 : index
    %c0_1988 = arith.constant 0 : index
    %c0_1989 = arith.constant 0 : index
    %1220 = vector.load %arg11[%c0_1986, %c3_1987, %c0_1988, %c0_1989] : memref<2x8x8x128xf32, #tpu.memory_space<vmem>>, vector<2x3x2x128xf32>
    %1221 = vector.extract_strided_slice %1220 {offsets = [0, 0, 0, 0], sizes = [2, 1, 1, 128], strides = [1, 1, 1, 1]} : vector<2x3x2x128xf32> to vector<2x1x1x128xf32>
    %1222 = vector.extract_strided_slice %1220 {offsets = [0, 0, 0, 0], sizes = [2, 1, 1, 128], strides = [1, 1, 1, 1]} : vector<2x3x2x128xf32> to vector<2x1x1x128xf32>
    %1223 = arith.maximumf %1221, %1222 : vector<2x1x1x128xf32>
    %1224 = vector.extract_strided_slice %1220 {offsets = [0, 0, 1, 0], sizes = [2, 1, 1, 128], strides = [1, 1, 1, 1]} : vector<2x3x2x128xf32> to vector<2x1x1x128xf32>
    %1225 = arith.maximumf %1223, %1224 : vector<2x1x1x128xf32>
    %1226 = vector.extract_strided_slice %1220 {offsets = [0, 1, 0, 0], sizes = [2, 1, 1, 128], strides = [1, 1, 1, 1]} : vector<2x3x2x128xf32> to vector<2x1x1x128xf32>
    %1227 = arith.maximumf %1225, %1226 : vector<2x1x1x128xf32>
    %1228 = vector.extract_strided_slice %1220 {offsets = [0, 1, 1, 0], sizes = [2, 1, 1, 128], strides = [1, 1, 1, 1]} : vector<2x3x2x128xf32> to vector<2x1x1x128xf32>
    %1229 = arith.maximumf %1227, %1228 : vector<2x1x1x128xf32>
    %1230 = vector.extract_strided_slice %1220 {offsets = [0, 2, 0, 0], sizes = [2, 1, 1, 128], strides = [1, 1, 1, 1]} : vector<2x3x2x128xf32> to vector<2x1x1x128xf32>
    %1231 = arith.maximumf %1229, %1230 : vector<2x1x1x128xf32>
    %1232 = vector.extract_strided_slice %1220 {offsets = [0, 2, 1, 0], sizes = [2, 1, 1, 128], strides = [1, 1, 1, 1]} : vector<2x3x2x128xf32> to vector<2x1x1x128xf32>
    %1233 = arith.maximumf %1231, %1232 : vector<2x1x1x128xf32>
    %c0_1990 = arith.constant 0 : index
    %c2_1991 = arith.constant 2 : index
    %c0_1992 = arith.constant 0 : index
    %c0_1993 = arith.constant 0 : index
    %1234 = vector.load %arg8[%c0_1990, %c2_1991, %c0_1992, %c0_1993] : memref<2x4x4x128xf32, #tpu.memory_space<vmem>>, vector<2x1x1x128xf32>
    tpu.vector_store %arg8[%c0_1990, %c2_1991, %c0_1992, %c0_1993], %1233 {strides = array<i32>} : memref<2x4x4x128xf32, #tpu.memory_space<vmem>>, vector<2x1x1x128xf32>,
    %c0_1994 = arith.constant 0 : index
    %c3_1995 = arith.constant 3 : index
    %c1_1996 = arith.constant 1 : index
    %c0_1997 = arith.constant 0 : index
    %1235 = vector.load %arg11[%c0_1994, %c3_1995, %c1_1996, %c0_1997] : memref<2x8x8x128xf32, #tpu.memory_space<vmem>>, vector<2x3x3x128xf32>
    %1236 = vector.extract_strided_slice %1235 {offsets = [0, 0, 0, 0], sizes = [2, 1, 1, 128], strides = [1, 1, 1, 1]} : vector<2x3x3x128xf32> to vector<2x1x1x128xf32>
    %1237 = vector.extract_strided_slice %1235 {offsets = [0, 0, 0, 0], sizes = [2, 1, 1, 128], strides = [1, 1, 1, 1]} : vector<2x3x3x128xf32> to vector<2x1x1x128xf32>
    %1238 = arith.maximumf %1236, %1237 : vector<2x1x1x128xf32>
    %1239 = vector.extract_strided_slice %1235 {offsets = [0, 0, 1, 0], sizes = [2, 1, 1, 128], strides = [1, 1, 1, 1]} : vector<2x3x3x128xf32> to vector<2x1x1x128xf32>
    %1240 = arith.maximumf %1238, %1239 : vector<2x1x1x128xf32>
    %1241 = vector.extract_strided_slice %1235 {offsets = [0, 0, 2, 0], sizes = [2, 1, 1, 128], strides = [1, 1, 1, 1]} : vector<2x3x3x128xf32> to vector<2x1x1x128xf32>
    %1242 = arith.maximumf %1240, %1241 : vector<2x1x1x128xf32>
    %1243 = vector.extract_strided_slice %1235 {offsets = [0, 1, 0, 0], sizes = [2, 1, 1, 128], strides = [1, 1, 1, 1]} : vector<2x3x3x128xf32> to vector<2x1x1x128xf32>
    %1244 = arith.maximumf %1242, %1243 : vector<2x1x1x128xf32>
    %1245 = vector.extract_strided_slice %1235 {offsets = [0, 1, 1, 0], sizes = [2, 1, 1, 128], strides = [1, 1, 1, 1]} : vector<2x3x3x128xf32> to vector<2x1x1x128xf32>
    %1246 = arith.maximumf %1244, %1245 : vector<2x1x1x128xf32>
    %1247 = vector.extract_strided_slice %1235 {offsets = [0, 1, 2, 0], sizes = [2, 1, 1, 128], strides = [1, 1, 1, 1]} : vector<2x3x3x128xf32> to vector<2x1x1x128xf32>
    %1248 = arith.maximumf %1246, %1247 : vector<2x1x1x128xf32>
    %1249 = vector.extract_strided_slice %1235 {offsets = [0, 2, 0, 0], sizes = [2, 1, 1, 128], strides = [1, 1, 1, 1]} : vector<2x3x3x128xf32> to vector<2x1x1x128xf32>
    %1250 = arith.maximumf %1248, %1249 : vector<2x1x1x128xf32>
    %1251 = vector.extract_strided_slice %1235 {offsets = [0, 2, 1, 0], sizes = [2, 1, 1, 128], strides = [1, 1, 1, 1]} : vector<2x3x3x128xf32> to vector<2x1x1x128xf32>
    %1252 = arith.maximumf %1250, %1251 : vector<2x1x1x128xf32>
    %1253 = vector.extract_strided_slice %1235 {offsets = [0, 2, 2, 0], sizes = [2, 1, 1, 128], strides = [1, 1, 1, 1]} : vector<2x3x3x128xf32> to vector<2x1x1x128xf32>
    %1254 = arith.maximumf %1252, %1253 : vector<2x1x1x128xf32>
    %c0_1998 = arith.constant 0 : index
    %c2_1999 = arith.constant 2 : index
    %c1_2000 = arith.constant 1 : index
    %c0_2001 = arith.constant 0 : index
    %1255 = vector.load %arg8[%c0_1998, %c2_1999, %c1_2000, %c0_2001] : memref<2x4x4x128xf32, #tpu.memory_space<vmem>>, vector<2x1x1x128xf32>
    tpu.vector_store %arg8[%c0_1998, %c2_1999, %c1_2000, %c0_2001], %1254 {strides = array<i32>} : memref<2x4x4x128xf32, #tpu.memory_space<vmem>>, vector<2x1x1x128xf32>,
    %c0_2002 = arith.constant 0 : index
    %c3_2003 = arith.constant 3 : index
    %c3_2004 = arith.constant 3 : index
    %c0_2005 = arith.constant 0 : index
    %1256 = vector.load %arg11[%c0_2002, %c3_2003, %c3_2004, %c0_2005] : memref<2x8x8x128xf32, #tpu.memory_space<vmem>>, vector<2x3x3x128xf32>
    %1257 = vector.extract_strided_slice %1256 {offsets = [0, 0, 0, 0], sizes = [2, 1, 1, 128], strides = [1, 1, 1, 1]} : vector<2x3x3x128xf32> to vector<2x1x1x128xf32>
    %1258 = vector.extract_strided_slice %1256 {offsets = [0, 0, 0, 0], sizes = [2, 1, 1, 128], strides = [1, 1, 1, 1]} : vector<2x3x3x128xf32> to vector<2x1x1x128xf32>
    %1259 = arith.maximumf %1257, %1258 : vector<2x1x1x128xf32>
    %1260 = vector.extract_strided_slice %1256 {offsets = [0, 0, 1, 0], sizes = [2, 1, 1, 128], strides = [1, 1, 1, 1]} : vector<2x3x3x128xf32> to vector<2x1x1x128xf32>
    %1261 = arith.maximumf %1259, %1260 : vector<2x1x1x128xf32>
    %1262 = vector.extract_strided_slice %1256 {offsets = [0, 0, 2, 0], sizes = [2, 1, 1, 128], strides = [1, 1, 1, 1]} : vector<2x3x3x128xf32> to vector<2x1x1x128xf32>
    %1263 = arith.maximumf %1261, %1262 : vector<2x1x1x128xf32>
    %1264 = vector.extract_strided_slice %1256 {offsets = [0, 1, 0, 0], sizes = [2, 1, 1, 128], strides = [1, 1, 1, 1]} : vector<2x3x3x128xf32> to vector<2x1x1x128xf32>
    %1265 = arith.maximumf %1263, %1264 : vector<2x1x1x128xf32>
    %1266 = vector.extract_strided_slice %1256 {offsets = [0, 1, 1, 0], sizes = [2, 1, 1, 128], strides = [1, 1, 1, 1]} : vector<2x3x3x128xf32> to vector<2x1x1x128xf32>
    %1267 = arith.maximumf %1265, %1266 : vector<2x1x1x128xf32>
    %1268 = vector.extract_strided_slice %1256 {offsets = [0, 1, 2, 0], sizes = [2, 1, 1, 128], strides = [1, 1, 1, 1]} : vector<2x3x3x128xf32> to vector<2x1x1x128xf32>
    %1269 = arith.maximumf %1267, %1268 : vector<2x1x1x128xf32>
    %1270 = vector.extract_strided_slice %1256 {offsets = [0, 2, 0, 0], sizes = [2, 1, 1, 128], strides = [1, 1, 1, 1]} : vector<2x3x3x128xf32> to vector<2x1x1x128xf32>
    %1271 = arith.maximumf %1269, %1270 : vector<2x1x1x128xf32>
    %1272 = vector.extract_strided_slice %1256 {offsets = [0, 2, 1, 0], sizes = [2, 1, 1, 128], strides = [1, 1, 1, 1]} : vector<2x3x3x128xf32> to vector<2x1x1x128xf32>
    %1273 = arith.maximumf %1271, %1272 : vector<2x1x1x128xf32>
    %1274 = vector.extract_strided_slice %1256 {offsets = [0, 2, 2, 0], sizes = [2, 1, 1, 128], strides = [1, 1, 1, 1]} : vector<2x3x3x128xf32> to vector<2x1x1x128xf32>
    %1275 = arith.maximumf %1273, %1274 : vector<2x1x1x128xf32>
    %c0_2006 = arith.constant 0 : index
    %c2_2007 = arith.constant 2 : index
    %c2_2008 = arith.constant 2 : index
    %c0_2009 = arith.constant 0 : index
    %1276 = vector.load %arg8[%c0_2006, %c2_2007, %c2_2008, %c0_2009] : memref<2x4x4x128xf32, #tpu.memory_space<vmem>>, vector<2x1x1x128xf32>
    tpu.vector_store %arg8[%c0_2006, %c2_2007, %c2_2008, %c0_2009], %1275 {strides = array<i32>} : memref<2x4x4x128xf32, #tpu.memory_space<vmem>>, vector<2x1x1x128xf32>,
    %c0_2010 = arith.constant 0 : index
    %c3_2011 = arith.constant 3 : index
    %c5_2012 = arith.constant 5 : index
    %c0_2013 = arith.constant 0 : index
    %1277 = vector.load %arg11[%c0_2010, %c3_2011, %c5_2012, %c0_2013] : memref<2x8x8x128xf32, #tpu.memory_space<vmem>>, vector<2x3x3x128xf32>
    %1278 = vector.extract_strided_slice %1277 {offsets = [0, 0, 0, 0], sizes = [2, 1, 1, 128], strides = [1, 1, 1, 1]} : vector<2x3x3x128xf32> to vector<2x1x1x128xf32>
    %1279 = vector.extract_strided_slice %1277 {offsets = [0, 0, 0, 0], sizes = [2, 1, 1, 128], strides = [1, 1, 1, 1]} : vector<2x3x3x128xf32> to vector<2x1x1x128xf32>
    %1280 = arith.maximumf %1278, %1279 : vector<2x1x1x128xf32>
    %1281 = vector.extract_strided_slice %1277 {offsets = [0, 0, 1, 0], sizes = [2, 1, 1, 128], strides = [1, 1, 1, 1]} : vector<2x3x3x128xf32> to vector<2x1x1x128xf32>
    %1282 = arith.maximumf %1280, %1281 : vector<2x1x1x128xf32>
    %1283 = vector.extract_strided_slice %1277 {offsets = [0, 0, 2, 0], sizes = [2, 1, 1, 128], strides = [1, 1, 1, 1]} : vector<2x3x3x128xf32> to vector<2x1x1x128xf32>
    %1284 = arith.maximumf %1282, %1283 : vector<2x1x1x128xf32>
    %1285 = vector.extract_strided_slice %1277 {offsets = [0, 1, 0, 0], sizes = [2, 1, 1, 128], strides = [1, 1, 1, 1]} : vector<2x3x3x128xf32> to vector<2x1x1x128xf32>
    %1286 = arith.maximumf %1284, %1285 : vector<2x1x1x128xf32>
    %1287 = vector.extract_strided_slice %1277 {offsets = [0, 1, 1, 0], sizes = [2, 1, 1, 128], strides = [1, 1, 1, 1]} : vector<2x3x3x128xf32> to vector<2x1x1x128xf32>
    %1288 = arith.maximumf %1286, %1287 : vector<2x1x1x128xf32>
    %1289 = vector.extract_strided_slice %1277 {offsets = [0, 1, 2, 0], sizes = [2, 1, 1, 128], strides = [1, 1, 1, 1]} : vector<2x3x3x128xf32> to vector<2x1x1x128xf32>
    %1290 = arith.maximumf %1288, %1289 : vector<2x1x1x128xf32>
    %1291 = vector.extract_strided_slice %1277 {offsets = [0, 2, 0, 0], sizes = [2, 1, 1, 128], strides = [1, 1, 1, 1]} : vector<2x3x3x128xf32> to vector<2x1x1x128xf32>
    %1292 = arith.maximumf %1290, %1291 : vector<2x1x1x128xf32>
    %1293 = vector.extract_strided_slice %1277 {offsets = [0, 2, 1, 0], sizes = [2, 1, 1, 128], strides = [1, 1, 1, 1]} : vector<2x3x3x128xf32> to vector<2x1x1x128xf32>
    %1294 = arith.maximumf %1292, %1293 : vector<2x1x1x128xf32>
    %1295 = vector.extract_strided_slice %1277 {offsets = [0, 2, 2, 0], sizes = [2, 1, 1, 128], strides = [1, 1, 1, 1]} : vector<2x3x3x128xf32> to vector<2x1x1x128xf32>
    %1296 = arith.maximumf %1294, %1295 : vector<2x1x1x128xf32>
    %c0_2014 = arith.constant 0 : index
    %c2_2015 = arith.constant 2 : index
    %c3_2016 = arith.constant 3 : index
    %c0_2017 = arith.constant 0 : index
    %1297 = vector.load %arg8[%c0_2014, %c2_2015, %c3_2016, %c0_2017] : memref<2x4x4x128xf32, #tpu.memory_space<vmem>>, vector<2x1x1x128xf32>
    tpu.vector_store %arg8[%c0_2014, %c2_2015, %c3_2016, %c0_2017], %1296 {strides = array<i32>} : memref<2x4x4x128xf32, #tpu.memory_space<vmem>>, vector<2x1x1x128xf32>,
    %c0_2018 = arith.constant 0 : index
    %c5_2019 = arith.constant 5 : index
    %c0_2020 = arith.constant 0 : index
    %c0_2021 = arith.constant 0 : index
    %1298 = vector.load %arg11[%c0_2018, %c5_2019, %c0_2020, %c0_2021] : memref<2x8x8x128xf32, #tpu.memory_space<vmem>>, vector<2x3x2x128xf32>
    %1299 = vector.extract_strided_slice %1298 {offsets = [0, 0, 0, 0], sizes = [2, 1, 1, 128], strides = [1, 1, 1, 1]} : vector<2x3x2x128xf32> to vector<2x1x1x128xf32>
    %1300 = vector.extract_strided_slice %1298 {offsets = [0, 0, 0, 0], sizes = [2, 1, 1, 128], strides = [1, 1, 1, 1]} : vector<2x3x2x128xf32> to vector<2x1x1x128xf32>
    %1301 = arith.maximumf %1299, %1300 : vector<2x1x1x128xf32>
    %1302 = vector.extract_strided_slice %1298 {offsets = [0, 0, 1, 0], sizes = [2, 1, 1, 128], strides = [1, 1, 1, 1]} : vector<2x3x2x128xf32> to vector<2x1x1x128xf32>
    %1303 = arith.maximumf %1301, %1302 : vector<2x1x1x128xf32>
    %1304 = vector.extract_strided_slice %1298 {offsets = [0, 1, 0, 0], sizes = [2, 1, 1, 128], strides = [1, 1, 1, 1]} : vector<2x3x2x128xf32> to vector<2x1x1x128xf32>
    %1305 = arith.maximumf %1303, %1304 : vector<2x1x1x128xf32>
    %1306 = vector.extract_strided_slice %1298 {offsets = [0, 1, 1, 0], sizes = [2, 1, 1, 128], strides = [1, 1, 1, 1]} : vector<2x3x2x128xf32> to vector<2x1x1x128xf32>
    %1307 = arith.maximumf %1305, %1306 : vector<2x1x1x128xf32>
    %1308 = vector.extract_strided_slice %1298 {offsets = [0, 2, 0, 0], sizes = [2, 1, 1, 128], strides = [1, 1, 1, 1]} : vector<2x3x2x128xf32> to vector<2x1x1x128xf32>
    %1309 = arith.maximumf %1307, %1308 : vector<2x1x1x128xf32>
    %1310 = vector.extract_strided_slice %1298 {offsets = [0, 2, 1, 0], sizes = [2, 1, 1, 128], strides = [1, 1, 1, 1]} : vector<2x3x2x128xf32> to vector<2x1x1x128xf32>
    %1311 = arith.maximumf %1309, %1310 : vector<2x1x1x128xf32>
    %c0_2022 = arith.constant 0 : index
    %c3_2023 = arith.constant 3 : index
    %c0_2024 = arith.constant 0 : index
    %c0_2025 = arith.constant 0 : index
    %1312 = vector.load %arg8[%c0_2022, %c3_2023, %c0_2024, %c0_2025] : memref<2x4x4x128xf32, #tpu.memory_space<vmem>>, vector<2x1x1x128xf32>
    tpu.vector_store %arg8[%c0_2022, %c3_2023, %c0_2024, %c0_2025], %1311 {strides = array<i32>} : memref<2x4x4x128xf32, #tpu.memory_space<vmem>>, vector<2x1x1x128xf32>,
    %c0_2026 = arith.constant 0 : index
    %c5_2027 = arith.constant 5 : index
    %c1_2028 = arith.constant 1 : index
    %c0_2029 = arith.constant 0 : index
    %1313 = vector.load %arg11[%c0_2026, %c5_2027, %c1_2028, %c0_2029] : memref<2x8x8x128xf32, #tpu.memory_space<vmem>>, vector<2x3x3x128xf32>
    %1314 = vector.extract_strided_slice %1313 {offsets = [0, 0, 0, 0], sizes = [2, 1, 1, 128], strides = [1, 1, 1, 1]} : vector<2x3x3x128xf32> to vector<2x1x1x128xf32>
    %1315 = vector.extract_strided_slice %1313 {offsets = [0, 0, 0, 0], sizes = [2, 1, 1, 128], strides = [1, 1, 1, 1]} : vector<2x3x3x128xf32> to vector<2x1x1x128xf32>
    %1316 = arith.maximumf %1314, %1315 : vector<2x1x1x128xf32>
    %1317 = vector.extract_strided_slice %1313 {offsets = [0, 0, 1, 0], sizes = [2, 1, 1, 128], strides = [1, 1, 1, 1]} : vector<2x3x3x128xf32> to vector<2x1x1x128xf32>
    %1318 = arith.maximumf %1316, %1317 : vector<2x1x1x128xf32>
    %1319 = vector.extract_strided_slice %1313 {offsets = [0, 0, 2, 0], sizes = [2, 1, 1, 128], strides = [1, 1, 1, 1]} : vector<2x3x3x128xf32> to vector<2x1x1x128xf32>
    %1320 = arith.maximumf %1318, %1319 : vector<2x1x1x128xf32>
    %1321 = vector.extract_strided_slice %1313 {offsets = [0, 1, 0, 0], sizes = [2, 1, 1, 128], strides = [1, 1, 1, 1]} : vector<2x3x3x128xf32> to vector<2x1x1x128xf32>
    %1322 = arith.maximumf %1320, %1321 : vector<2x1x1x128xf32>
    %1323 = vector.extract_strided_slice %1313 {offsets = [0, 1, 1, 0], sizes = [2, 1, 1, 128], strides = [1, 1, 1, 1]} : vector<2x3x3x128xf32> to vector<2x1x1x128xf32>
    %1324 = arith.maximumf %1322, %1323 : vector<2x1x1x128xf32>
    %1325 = vector.extract_strided_slice %1313 {offsets = [0, 1, 2, 0], sizes = [2, 1, 1, 128], strides = [1, 1, 1, 1]} : vector<2x3x3x128xf32> to vector<2x1x1x128xf32>
    %1326 = arith.maximumf %1324, %1325 : vector<2x1x1x128xf32>
    %1327 = vector.extract_strided_slice %1313 {offsets = [0, 2, 0, 0], sizes = [2, 1, 1, 128], strides = [1, 1, 1, 1]} : vector<2x3x3x128xf32> to vector<2x1x1x128xf32>
    %1328 = arith.maximumf %1326, %1327 : vector<2x1x1x128xf32>
    %1329 = vector.extract_strided_slice %1313 {offsets = [0, 2, 1, 0], sizes = [2, 1, 1, 128], strides = [1, 1, 1, 1]} : vector<2x3x3x128xf32> to vector<2x1x1x128xf32>
    %1330 = arith.maximumf %1328, %1329 : vector<2x1x1x128xf32>
    %1331 = vector.extract_strided_slice %1313 {offsets = [0, 2, 2, 0], sizes = [2, 1, 1, 128], strides = [1, 1, 1, 1]} : vector<2x3x3x128xf32> to vector<2x1x1x128xf32>
    %1332 = arith.maximumf %1330, %1331 : vector<2x1x1x128xf32>
    %c0_2030 = arith.constant 0 : index
    %c3_2031 = arith.constant 3 : index
    %c1_2032 = arith.constant 1 : index
    %c0_2033 = arith.constant 0 : index
    %1333 = vector.load %arg8[%c0_2030, %c3_2031, %c1_2032, %c0_2033] : memref<2x4x4x128xf32, #tpu.memory_space<vmem>>, vector<2x1x1x128xf32>
    tpu.vector_store %arg8[%c0_2030, %c3_2031, %c1_2032, %c0_2033], %1332 {strides = array<i32>} : memref<2x4x4x128xf32, #tpu.memory_space<vmem>>, vector<2x1x1x128xf32>,
    %c0_2034 = arith.constant 0 : index
    %c5_2035 = arith.constant 5 : index
    %c3_2036 = arith.constant 3 : index
    %c0_2037 = arith.constant 0 : index
    %1334 = vector.load %arg11[%c0_2034, %c5_2035, %c3_2036, %c0_2037] : memref<2x8x8x128xf32, #tpu.memory_space<vmem>>, vector<2x3x3x128xf32>
    %1335 = vector.extract_strided_slice %1334 {offsets = [0, 0, 0, 0], sizes = [2, 1, 1, 128], strides = [1, 1, 1, 1]} : vector<2x3x3x128xf32> to vector<2x1x1x128xf32>
    %1336 = vector.extract_strided_slice %1334 {offsets = [0, 0, 0, 0], sizes = [2, 1, 1, 128], strides = [1, 1, 1, 1]} : vector<2x3x3x128xf32> to vector<2x1x1x128xf32>
    %1337 = arith.maximumf %1335, %1336 : vector<2x1x1x128xf32>
    %1338 = vector.extract_strided_slice %1334 {offsets = [0, 0, 1, 0], sizes = [2, 1, 1, 128], strides = [1, 1, 1, 1]} : vector<2x3x3x128xf32> to vector<2x1x1x128xf32>
    %1339 = arith.maximumf %1337, %1338 : vector<2x1x1x128xf32>
    %1340 = vector.extract_strided_slice %1334 {offsets = [0, 0, 2, 0], sizes = [2, 1, 1, 128], strides = [1, 1, 1, 1]} : vector<2x3x3x128xf32> to vector<2x1x1x128xf32>
    %1341 = arith.maximumf %1339, %1340 : vector<2x1x1x128xf32>
    %1342 = vector.extract_strided_slice %1334 {offsets = [0, 1, 0, 0], sizes = [2, 1, 1, 128], strides = [1, 1, 1, 1]} : vector<2x3x3x128xf32> to vector<2x1x1x128xf32>
    %1343 = arith.maximumf %1341, %1342 : vector<2x1x1x128xf32>
    %1344 = vector.extract_strided_slice %1334 {offsets = [0, 1, 1, 0], sizes = [2, 1, 1, 128], strides = [1, 1, 1, 1]} : vector<2x3x3x128xf32> to vector<2x1x1x128xf32>
    %1345 = arith.maximumf %1343, %1344 : vector<2x1x1x128xf32>
    %1346 = vector.extract_strided_slice %1334 {offsets = [0, 1, 2, 0], sizes = [2, 1, 1, 128], strides = [1, 1, 1, 1]} : vector<2x3x3x128xf32> to vector<2x1x1x128xf32>
    %1347 = arith.maximumf %1345, %1346 : vector<2x1x1x128xf32>
    %1348 = vector.extract_strided_slice %1334 {offsets = [0, 2, 0, 0], sizes = [2, 1, 1, 128], strides = [1, 1, 1, 1]} : vector<2x3x3x128xf32> to vector<2x1x1x128xf32>
    %1349 = arith.maximumf %1347, %1348 : vector<2x1x1x128xf32>
    %1350 = vector.extract_strided_slice %1334 {offsets = [0, 2, 1, 0], sizes = [2, 1, 1, 128], strides = [1, 1, 1, 1]} : vector<2x3x3x128xf32> to vector<2x1x1x128xf32>
    %1351 = arith.maximumf %1349, %1350 : vector<2x1x1x128xf32>
    %1352 = vector.extract_strided_slice %1334 {offsets = [0, 2, 2, 0], sizes = [2, 1, 1, 128], strides = [1, 1, 1, 1]} : vector<2x3x3x128xf32> to vector<2x1x1x128xf32>
    %1353 = arith.maximumf %1351, %1352 : vector<2x1x1x128xf32>
    %c0_2038 = arith.constant 0 : index
    %c3_2039 = arith.constant 3 : index
    %c2_2040 = arith.constant 2 : index
    %c0_2041 = arith.constant 0 : index
    %1354 = vector.load %arg8[%c0_2038, %c3_2039, %c2_2040, %c0_2041] : memref<2x4x4x128xf32, #tpu.memory_space<vmem>>, vector<2x1x1x128xf32>
    tpu.vector_store %arg8[%c0_2038, %c3_2039, %c2_2040, %c0_2041], %1353 {strides = array<i32>} : memref<2x4x4x128xf32, #tpu.memory_space<vmem>>, vector<2x1x1x128xf32>,
    %c0_2042 = arith.constant 0 : index
    %c5_2043 = arith.constant 5 : index
    %c5_2044 = arith.constant 5 : index
    %c0_2045 = arith.constant 0 : index
    %1355 = vector.load %arg11[%c0_2042, %c5_2043, %c5_2044, %c0_2045] : memref<2x8x8x128xf32, #tpu.memory_space<vmem>>, vector<2x3x3x128xf32>
    %1356 = vector.extract_strided_slice %1355 {offsets = [0, 0, 0, 0], sizes = [2, 1, 1, 128], strides = [1, 1, 1, 1]} : vector<2x3x3x128xf32> to vector<2x1x1x128xf32>
    %1357 = vector.extract_strided_slice %1355 {offsets = [0, 0, 0, 0], sizes = [2, 1, 1, 128], strides = [1, 1, 1, 1]} : vector<2x3x3x128xf32> to vector<2x1x1x128xf32>
    %1358 = arith.maximumf %1356, %1357 : vector<2x1x1x128xf32>
    %1359 = vector.extract_strided_slice %1355 {offsets = [0, 0, 1, 0], sizes = [2, 1, 1, 128], strides = [1, 1, 1, 1]} : vector<2x3x3x128xf32> to vector<2x1x1x128xf32>
    %1360 = arith.maximumf %1358, %1359 : vector<2x1x1x128xf32>
    %1361 = vector.extract_strided_slice %1355 {offsets = [0, 0, 2, 0], sizes = [2, 1, 1, 128], strides = [1, 1, 1, 1]} : vector<2x3x3x128xf32> to vector<2x1x1x128xf32>
    %1362 = arith.maximumf %1360, %1361 : vector<2x1x1x128xf32>
    %1363 = vector.extract_strided_slice %1355 {offsets = [0, 1, 0, 0], sizes = [2, 1, 1, 128], strides = [1, 1, 1, 1]} : vector<2x3x3x128xf32> to vector<2x1x1x128xf32>
    %1364 = arith.maximumf %1362, %1363 : vector<2x1x1x128xf32>
    %1365 = vector.extract_strided_slice %1355 {offsets = [0, 1, 1, 0], sizes = [2, 1, 1, 128], strides = [1, 1, 1, 1]} : vector<2x3x3x128xf32> to vector<2x1x1x128xf32>
    %1366 = arith.maximumf %1364, %1365 : vector<2x1x1x128xf32>
    %1367 = vector.extract_strided_slice %1355 {offsets = [0, 1, 2, 0], sizes = [2, 1, 1, 128], strides = [1, 1, 1, 1]} : vector<2x3x3x128xf32> to vector<2x1x1x128xf32>
    %1368 = arith.maximumf %1366, %1367 : vector<2x1x1x128xf32>
    %1369 = vector.extract_strided_slice %1355 {offsets = [0, 2, 0, 0], sizes = [2, 1, 1, 128], strides = [1, 1, 1, 1]} : vector<2x3x3x128xf32> to vector<2x1x1x128xf32>
    %1370 = arith.maximumf %1368, %1369 : vector<2x1x1x128xf32>
    %1371 = vector.extract_strided_slice %1355 {offsets = [0, 2, 1, 0], sizes = [2, 1, 1, 128], strides = [1, 1, 1, 1]} : vector<2x3x3x128xf32> to vector<2x1x1x128xf32>
    %1372 = arith.maximumf %1370, %1371 : vector<2x1x1x128xf32>
    %1373 = vector.extract_strided_slice %1355 {offsets = [0, 2, 2, 0], sizes = [2, 1, 1, 128], strides = [1, 1, 1, 1]} : vector<2x3x3x128xf32> to vector<2x1x1x128xf32>
    %1374 = arith.maximumf %1372, %1373 : vector<2x1x1x128xf32>
    %c0_2046 = arith.constant 0 : index
    %c3_2047 = arith.constant 3 : index
    %c3_2048 = arith.constant 3 : index
    %c0_2049 = arith.constant 0 : index
    %1375 = vector.load %arg8[%c0_2046, %c3_2047, %c3_2048, %c0_2049] : memref<2x4x4x128xf32, #tpu.memory_space<vmem>>, vector<2x1x1x128xf32>
    tpu.vector_store %arg8[%c0_2046, %c3_2047, %c3_2048, %c0_2049], %1374 {strides = array<i32>} : memref<2x4x4x128xf32, #tpu.memory_space<vmem>>, vector<2x1x1x128xf32>,
    return
  }
  func.func @transform_0(%arg0: i32) -> (i32, i32) {
    %c0_i32 = arith.constant 0 : i32
    %c0_i32_0 = arith.constant 0 : i32
    %c0_i32_1 = arith.constant 0 : i32
    return %c0_i32, %c0_i32_0 : i32, i32
  }
  func.func @transform_1(%arg0: i32) -> (i32, i32) {
    %c0_i32 = arith.constant 0 : i32
    %c0_i32_0 = arith.constant 0 : i32
    %c0_i32_1 = arith.constant 0 : i32
    return %c0_i32, %c0_i32_0 : i32, i32
  }
  func.func @transform_2(%arg0: i32) -> (i32, i32) {
    %c0_i32 = arith.constant 0 : i32
    %c0_i32_0 = arith.constant 0 : i32
    %c0_i32_1 = arith.constant 0 : i32
    return %c0_i32, %c0_i32_0 : i32, i32
  }
  func.func @transform_3(%arg0: i32) -> (i32, i32) {
    %c0_i32 = arith.constant 0 : i32
    %c0_i32_0 = arith.constant 0 : i32
    %c0_i32_1 = arith.constant 0 : i32
    return %c0_i32, %c0_i32_0 : i32, i32
  }
  func.func @transform_4(%arg0: i32) -> (i32, i32) {
    %c0_i32 = arith.constant 0 : i32
    %c0_i32_0 = arith.constant 0 : i32
    %c0_i32_1 = arith.constant 0 : i32
    return %c0_i32, %c0_i32_0 : i32, i32
  }
  func.func @transform_5(%arg0: i32) -> (i32, i32) {
    %c0_i32 = arith.constant 0 : i32
    %c0_i32_0 = arith.constant 0 : i32
    %c0_i32_1 = arith.constant 0 : i32
    return %c0_i32, %c0_i32_0 : i32, i32
  }
  func.func @transform_6(%arg0: i32) -> (i32, i32) {
    %c0_i32 = arith.constant 0 : i32
    %c0_i32_0 = arith.constant 0 : i32
    %c0_i32_1 = arith.constant 0 : i32
    return %c0_i32, %c0_i32_0 : i32, i32
  }
  func.func @transform_7(%arg0: i32) -> (i32, i32, i32, i32) {
    %c0_i32 = arith.constant 0 : i32
    %c0_i32_0 = arith.constant 0 : i32
    %c0_i32_1 = arith.constant 0 : i32
    %c0_i32_2 = arith.constant 0 : i32
    %c0_i32_3 = arith.constant 0 : i32
    return %c0_i32, %c0_i32_0, %c0_i32_1, %c0_i32_2 : i32, i32, i32, i32
  }
}

</mosaic_0001>

<llo_original>
// kernel: feature_map_convolution.1
$region0: #{feature_map_convolution.1}
  #allocation0 [shape = 'u32[]', space=smem, size = 0x4, offset = 0x4, fixed_abs, tag = 'smem constant byte address 0x4 - core index']
  #allocation1 [shape = 'u32[144,128]{1,0:T(1,128)}', space=vmem, size = 0x12000, scoped, tag = 'internal scratch']
  #allocation2 [shape = 'f32[2,10,10,64]{3,2,1,0:T(8,128)}', space=vmem, size = 0x28000, scoped, tag = 'scratch operand']
  #allocation3 [shape = 'f32[128,576]{1,0:T(8,128)}', space=vmem, size = 0x50000, scoped, tag = 'scratch operand']
  #allocation4 [shape = 'f32[2,8,8,128]{3,2,1,0:T(8,128)}', space=vmem, size = 0x10000, scoped, tag = 'scratch operand']
  %s0 = inlined_call_operand.vmem [shape: bf16[128,32], index: 0, kind: input, shape index: {}]
  %s1 = inlined_call_operand.vmem [shape: bf16[32,64], index: 1, kind: input, shape index: {}]
  %s2 = inlined_call_operand.vmem [shape: f32[1,64], index: 2, kind: input, shape index: {}]
  %s3 = inlined_call_operand.vmem [shape: bf16[576,64], index: 3, kind: input, shape index: {}]
  %s4 = inlined_call_operand.vmem [shape: f32[1,64], index: 4, kind: input, shape index: {}]
  %s5 = inlined_call_operand.vmem [shape: bf16[576,128], index: 5, kind: input, shape index: {}]
  %s6 = inlined_call_operand.vmem [shape: f32[1,128], index: 6, kind: input, shape index: {}]
  %s7 = inlined_call_operand.hbm [shape: f32[2,4,4,128], index: 7, kind: output, shape index: {}]
  %s8 = sld [smem:[#allocation0]]
  $region38: #{feature_map_convolution.1} parent=0
    _
  %s10 = ssub.s32 1, %s8
  %s11 = scalar_select 0, %s10, %s8
  $region1: #{feature_map_convolution.1} parent=0
    #allocation5 [shape = 'u8[16384]{0}', space=vmem, size = 0x4000, scoped, tag = 'output window, operand 0, single buffered']
    #allocation6 [shape = 's32[1]{0}', space=sflag, size = 0x4, scoped, tag = 'scoped memory for feature_map_convolution.1']
    %12 = vsyncpa [#allocation6], 0
    // Predicated region
    $region2: #{feature_map_convolution.1} parent=1 // pred_check
      _
    $region3: #{feature_map_convolution.1} parent=1 // pred_check_branch
      %14 = sbr.rel (0) target = $region5
    $region4: #{feature_map_convolution.1} parent=1 // pred_region
      _
    $region5: #{feature_map_convolution.1} parent=1 // pred_fallthru
      _
    // Predicated region
    $region6: #{feature_map_convolution.1} parent=1 // pred_check
      _
    $region7: #{feature_map_convolution.1} parent=1 // pred_check_branch
      %16 = sbr.rel (0) target = $region9
    $region8: #{feature_map_convolution.1} parent=1 // pred_region
      _
    $region9: #{feature_map_convolution.1} parent=1 // pred_fallthru
      _
    // Predicated region
    $region10: #{feature_map_convolution.1} parent=1 // pred_check
      _
    $region11: #{feature_map_convolution.1} parent=1 // pred_check_branch
      %18 = sbr.rel (0) target = $region13
    $region12: #{feature_map_convolution.1} parent=1 // pred_region
      _
    $region13: #{feature_map_convolution.1} parent=1 // pred_fallthru
      _
    // Predicated region
    $region14: #{feature_map_convolution.1} parent=1 // pred_check
      _
    $region15: #{feature_map_convolution.1} parent=1 // pred_check_branch
      %20 = sbr.rel (0) target = $region17
    $region16: #{feature_map_convolution.1} parent=1 // pred_region
      _
    $region17: #{feature_map_convolution.1} parent=1 // pred_fallthru
      _
    // Predicated region
    $region18: #{feature_map_convolution.1} parent=1 // pred_check
      _
    $region19: #{feature_map_convolution.1} parent=1 // pred_check_branch
      %22 = sbr.rel (0) target = $region21
    $region20: #{feature_map_convolution.1} parent=1 // pred_region
      _
    $region21: #{feature_map_convolution.1} parent=1 // pred_fallthru
      _
    // Predicated region
    $region22: #{feature_map_convolution.1} parent=1 // pred_check
      _
    $region23: #{feature_map_convolution.1} parent=1 // pred_check_branch
      %24 = sbr.rel (0) target = $region25
    $region24: #{feature_map_convolution.1} parent=1 // pred_region
      _
    $region25: #{feature_map_convolution.1} parent=1 // pred_fallthru
      _
    // Predicated region
    $region26: #{feature_map_convolution.1} parent=1 // pred_check
      _
    $region27: #{feature_map_convolution.1} parent=1 // pred_check_branch
      %26 = sbr.rel (0) target = $region29
    $region28: #{feature_map_convolution.1} parent=1 // pred_region
      _
    $region29: #{feature_map_convolution.1} parent=1 // pred_fallthru
      _
    %v28 = vld [vmem:[%s0] sm:$0xf]
    %v29 = vld [vmem:[%s0 + $0x4] sm:$0xf]
    %v30 = vld [vmem:[%s0 + $0x8] sm:$0xf]
    %v31 = vld [vmem:[%s0 + $0xc] sm:$0xf]
    %v32 = vld [vmem:[%s0 + $0x10] sm:$0xf]
    %v33 = vld [vmem:[%s0 + $0x14] sm:$0xf]
    %v34 = vld [vmem:[%s0 + $0x18] sm:$0xf]
    %v35 = vld [vmem:[%s0 + $0x1c] sm:$0xf]
    %v36 = vld [vmem:[%s0 + $0x20] sm:$0xf]
    %v37 = vld [vmem:[%s0 + $0x24] sm:$0xf]
    %v38 = vld [vmem:[%s0 + $0x28] sm:$0xf]
    %v39 = vld [vmem:[%s0 + $0x2c] sm:$0xf]
    %v40 = vld [vmem:[%s0 + $0x30] sm:$0xf]
    %v41 = vld [vmem:[%s0 + $0x34] sm:$0xf]
    %v42 = vld [vmem:[%s0 + $0x38] sm:$0xf]
    %v43 = vld [vmem:[%s0 + $0x3c] sm:$0xf]
    %v44 = vld [vmem:[%s1] sm:$0xf]
    %v45 = vld [vmem:[%s1 + $0x4] sm:$0xf]
    %v46 = vld [vmem:[%s1 + $0x8] sm:$0xf]
    %v47 = vld [vmem:[%s1 + $0xc] sm:$0xf]
    %v48 = vld [vmem:[%s2] sm:$0x1]
    %v50 = vlaneseq
    %v51 = vshrl.u32 %v50, 7
    %v52 = vsub.s32 0, %v51
    %v53 = vrot.slane %v48, %v52
    %v71 = vunpack.c.l.b16 %v28
    %v72 = vunpack.c.l.b16 %v29
    %v73 = vunpack.c.l.b16 %v30
    %v74 = vunpack.c.l.b16 %v31
    %v75 = vunpack.c.l.b16 %v32
    %v76 = vunpack.c.l.b16 %v33
    %v77 = vunpack.c.l.b16 %v34
    %v78 = vunpack.c.l.b16 %v35
    %v79 = vunpack.c.l.b16 %v36
    %v80 = vunpack.c.l.b16 %v37
    %v81 = vunpack.c.l.b16 %v38
    %v82 = vunpack.c.l.b16 %v39
    %v83 = vunpack.c.l.b16 %v40
    %v84 = vunpack.c.l.b16 %v41
    %v85 = vunpack.c.l.b16 %v42
    %v86 = vunpack.c.l.b16 %v43
    %v87 = vpack.c.b16 %v72, %v71
    %v88 = vpack.c.b16 %v74, %v73
    %v89 = vpack.c.b16 %v76, %v75
    %v90 = vpack.c.b16 %v78, %v77
    %v91 = vpack.c.b16 %v80, %v79
    %v92 = vpack.c.b16 %v82, %v81
    %v93 = vpack.c.b16 %v84, %v83
    %v94 = vpack.c.b16 %v86, %v85
    %v99 = vunpack.c.l.b16 %v44
    %v100 = vunpack.c.l.b16 %v45
    %v101 = vunpack.c.l.b16 %v46
    %v102 = vunpack.c.l.b16 %v47
    %v103 = vpack.c.b16 %v100, %v99
    %v104 = vpack.c.b16 %v102, %v101
    %vm107 = vcmask 261120
    %v109 = vsel %vm107, %v87, 0
    %v112 = vsel %vm107, %v88, 0
    %v115 = vsel %vm107, %v89, 0
    %v118 = vsel %vm107, %v90, 0
    %v121 = vsel %vm107, %v91, 0
    %v124 = vsel %vm107, %v92, 0
    %v127 = vsel %vm107, %v93, 0
    %v130 = vsel %vm107, %v94, 0
    %132 = vmatprep.subr.bf16.mxu0 0
    %133 = vmatpush1.bf16.msra.mxu0 %v103
    %134 = vmatprep.subr.bf16.mxu0 0
    %135 = vmatpush1.bf16.msra.mxu0 %v104
    %136 = vmatprep.subr.bf16.mxu0 0
    %137 = vmatpush1.bf16.msra.mxu0 0
    %138 = vmatprep.subr.bf16.mxu0 0
    %139 = vmatpush1.bf16.msra.mxu0 0
    %140 = vmatprep.subr.bf16.mxu0 0
    %141 = vmatpush1.bf16.msra.mxu0 0
    %142 = vmatprep.subr.bf16.mxu0 0
    %143 = vmatpush1.bf16.msra.mxu0 0
    %144 = vmatprep.subr.bf16.mxu0 0
    %145 = vmatpush1.bf16.msra.mxu0 0
    %146 = vmatprep.subr.bf16.mxu0 0
    %147 = vmatpush1.bf16.msra.mxu0 0
    %148 = vmatprep.subr.bf16.mxu0 0
    %149 = vmatpush1.bf16.msra.mxu0 0
    %150 = vmatprep.subr.bf16.mxu0 0
    %151 = vmatpush1.bf16.msra.mxu0 0
    %152 = vmatprep.subr.bf16.mxu0 0
    %153 = vmatpush1.bf16.msra.mxu0 0
    %154 = vmatprep.subr.bf16.mxu0 0
    %155 = vmatpush1.bf16.msra.mxu0 0
    %156 = vmatprep.subr.bf16.mxu0 0
    %157 = vmatpush1.bf16.msra.mxu0 0
    %158 = vmatprep.subr.bf16.mxu0 0
    %159 = vmatpush1.bf16.msra.mxu0 0
    %160 = vmatprep.subr.bf16.mxu0 0
    %161 = vmatpush1.bf16.msra.mxu0 0
    %162 = vmatprep.subr.bf16.mxu0 0
    %163 = vmatpush1.bf16.msra.mxu0 0
    %164 = vmatprep.mubr.bf16.mxu0 0
    %165 = vmatmul.mubr.bf16.gmra.mrb[0].mxu0 %v109
    %v166 = vpop.f32.mrb[0].mxu0
    %v167 = vadd.f32 %v53, %v166
    %v168 = vpop.f32.mrb[0].mxu0
    %v169 = vpop.f32.mrb[0].mxu0
    %v170 = vadd.f32 %v53, %v169
    %v171 = vpop.f32.mrb[0].mxu0
    %172 = vmatprep.mubr.bf16.mxu0 0
    %173 = vmatmul.mubr.bf16.gmra.mrb[0].mxu0 %v112
    %v174 = vpop.f32.mrb[0].mxu0
    %v175 = vadd.f32 %v53, %v174
    %v176 = vpop.f32.mrb[0].mxu0
    %v177 = vpop.f32.mrb[0].mxu0
    %v178 = vadd.f32 %v53, %v177
    %v179 = vpop.f32.mrb[0].mxu0
    %180 = vmatprep.mubr.bf16.mxu0 0
    %181 = vmatmul.mubr.bf16.gmra.mrb[0].mxu0 %v115
    %v182 = vpop.f32.mrb[0].mxu0
    %v183 = vadd.f32 %v53, %v182
    %v184 = vpop.f32.mrb[0].mxu0
    %v185 = vpop.f32.mrb[0].mxu0
    %v186 = vadd.f32 %v53, %v185
    %v187 = vpop.f32.mrb[0].mxu0
    %188 = vmatprep.mubr.bf16.mxu0 0
    %189 = vmatmul.mubr.bf16.gmra.mrb[0].mxu0 %v118
    %v190 = vpop.f32.mrb[0].mxu0
    %v191 = vadd.f32 %v53, %v190
    %v192 = vpop.f32.mrb[0].mxu0
    %v193 = vpop.f32.mrb[0].mxu0
    %v194 = vadd.f32 %v53, %v193
    %v195 = vpop.f32.mrb[0].mxu0
    %196 = vmatprep.mubr.bf16.mxu0 0
    %197 = vmatmul.mubr.bf16.gmra.mrb[0].mxu0 %v121
    %v198 = vpop.f32.mrb[0].mxu0
    %v199 = vadd.f32 %v53, %v198
    %v200 = vpop.f32.mrb[0].mxu0
    %v201 = vpop.f32.mrb[0].mxu0
    %v202 = vadd.f32 %v53, %v201
    %v203 = vpop.f32.mrb[0].mxu0
    %204 = vmatprep.mubr.bf16.mxu0 0
    %205 = vmatmul.mubr.bf16.gmra.mrb[0].mxu0 %v124
    %v206 = vpop.f32.mrb[0].mxu0
    %v207 = vadd.f32 %v53, %v206
    %v208 = vpop.f32.mrb[0].mxu0
    %v209 = vpop.f32.mrb[0].mxu0
    %v210 = vadd.f32 %v53, %v209
    %v211 = vpop.f32.mrb[0].mxu0
    %212 = vmatprep.mubr.bf16.mxu0 0
    %213 = vmatmul.mubr.bf16.gmra.mrb[0].mxu0 %v127
    %v214 = vpop.f32.mrb[0].mxu0
    %v215 = vadd.f32 %v53, %v214
    %v216 = vpop.f32.mrb[0].mxu0
    %v217 = vpop.f32.mrb[0].mxu0
    %v218 = vadd.f32 %v53, %v217
    %v219 = vpop.f32.mrb[0].mxu0
    %220 = vmatprep.mubr.bf16.mxu0 0
    %221 = vmatmul.mubr.bf16.gmra.mrb[0].mxu0 %v130
    %v222 = vpop.f32.mrb[0].mxu0
    %v223 = vadd.f32 %v53, %v222
    %v224 = vpop.f32.mrb[0].mxu0
    %v225 = vpop.f32.mrb[0].mxu0
    %v226 = vadd.f32 %v53, %v225
    %v227 = vpop.f32.mrb[0].mxu0
    %228 = vdwg.mxu0
    %v229 = vmax.f32 %v167, 0.0
    %v230 = vmax.f32 %v170, 0.0
    %v231 = vmax.f32 %v175, 0.0
    %v232 = vmax.f32 %v178, 0.0
    %v233 = vmax.f32 %v183, 0.0
    %v234 = vmax.f32 %v186, 0.0
    %v235 = vmax.f32 %v191, 0.0
    %v236 = vmax.f32 %v194, 0.0
    %v237 = vmax.f32 %v199, 0.0
    %v238 = vmax.f32 %v202, 0.0
    %v239 = vmax.f32 %v207, 0.0
    %v240 = vmax.f32 %v210, 0.0
    %v241 = vmax.f32 %v215, 0.0
    %v242 = vmax.f32 %v218, 0.0
    %v243 = vmax.f32 %v223, 0.0
    %v244 = vmax.f32 %v226, 0.0
    %vm245 = vcmask 523264
    %246 = vst.msk [vmem:[#allocation2] sm:$0xff] %vm245, 0.0
    %vm247 = vcmask 517120
    %248 = vst.msk [vmem:[#allocation2 + $0x8] sm:$0x3] %vm247, 0.0
    %249 = vst.msk [vmem:[#allocation2 + $0x10] sm:$0xff] %vm245, 0.0
    %250 = vst.msk [vmem:[#allocation2 + $0x18] sm:$0x3] %vm247, 0.0
    %251 = vst.msk [vmem:[#allocation2 + $0x20] sm:$0xff] %vm245, 0.0
    %252 = vst.msk [vmem:[#allocation2 + $0x28] sm:$0x3] %vm247, 0.0
    %253 = vst.msk [vmem:[#allocation2 + $0x30] sm:$0xff] %vm245, 0.0
    %254 = vst.msk [vmem:[#allocation2 + $0x38] sm:$0x3] %vm247, 0.0
    %255 = vst.msk [vmem:[#allocation2 + $0x40] sm:$0xff] %vm245, 0.0
    %256 = vst.msk [vmem:[#allocation2 + $0x48] sm:$0x3] %vm247, 0.0
    %257 = vst.msk [vmem:[#allocation2 + $0x50] sm:$0xff] %vm245, 0.0
    %258 = vst.msk [vmem:[#allocation2 + $0x58] sm:$0x3] %vm247, 0.0
    %259 = vst.msk [vmem:[#allocation2 + $0x60] sm:$0xff] %vm245, 0.0
    %260 = vst.msk [vmem:[#allocation2 + $0x68] sm:$0x3] %vm247, 0.0
    %261 = vst.msk [vmem:[#allocation2 + $0x70] sm:$0xff] %vm245, 0.0
    %262 = vst.msk [vmem:[#allocation2 + $0x78] sm:$0x3] %vm247, 0.0
    %263 = vst.msk [vmem:[#allocation2 + $0x80] sm:$0xff] %vm245, 0.0
    %264 = vst.msk [vmem:[#allocation2 + $0x88] sm:$0x3] %vm247, 0.0
    %265 = vst.msk [vmem:[#allocation2 + $0x90] sm:$0xff] %vm245, 0.0
    %266 = vst.msk [vmem:[#allocation2 + $0x98] sm:$0x3] %vm247, 0.0
    %267 = vst.msk [vmem:[#allocation2 + $0xa0] sm:$0xff] %vm245, 0.0
    %268 = vst.msk [vmem:[#allocation2 + $0xa8] sm:$0x3] %vm247, 0.0
    %269 = vst.msk [vmem:[#allocation2 + $0xb0] sm:$0xff] %vm245, 0.0
    %270 = vst.msk [vmem:[#allocation2 + $0xb8] sm:$0x3] %vm247, 0.0
    %271 = vst.msk [vmem:[#allocation2 + $0xc0] sm:$0xff] %vm245, 0.0
    %272 = vst.msk [vmem:[#allocation2 + $0xc8] sm:$0x3] %vm247, 0.0
    %273 = vst.msk [vmem:[#allocation2 + $0xd0] sm:$0xff] %vm245, 0.0
    %274 = vst.msk [vmem:[#allocation2 + $0xd8] sm:$0x3] %vm247, 0.0
    %275 = vst.msk [vmem:[#allocation2 + $0xe0] sm:$0xff] %vm245, 0.0
    %276 = vst.msk [vmem:[#allocation2 + $0xe8] sm:$0x3] %vm247, 0.0
    %277 = vst.msk [vmem:[#allocation2 + $0xf0] sm:$0xff] %vm245, 0.0
    %278 = vst.msk [vmem:[#allocation2 + $0xf8] sm:$0x3] %vm247, 0.0
    %279 = vst.msk [vmem:[#allocation2 + $0x100] sm:$0xff] %vm245, 0.0
    %280 = vst.msk [vmem:[#allocation2 + $0x108] sm:$0x3] %vm247, 0.0
    %281 = vst.msk [vmem:[#allocation2 + $0x110] sm:$0xff] %vm245, 0.0
    %282 = vst.msk [vmem:[#allocation2 + $0x118] sm:$0x3] %vm247, 0.0
    %283 = vst.msk [vmem:[#allocation2 + $0x120] sm:$0xff] %vm245, 0.0
    %284 = vst.msk [vmem:[#allocation2 + $0x128] sm:$0x3] %vm247, 0.0
    %285 = vst.msk [vmem:[#allocation2 + $0x130] sm:$0xff] %vm245, 0.0
    %286 = vst.msk [vmem:[#allocation2 + $0x138] sm:$0x3] %vm247, 0.0
    %s287 = scalar_lea.vmem [#allocation2], 16
    %288 = vst.msk [vmem:[%s287 + $0x1] sm:$0xff] %vm245, %v229
    %s289 = scalar_lea.vmem [#allocation2], 32
    %290 = vst.msk [vmem:[%s289 + $0x1] sm:$0xff] %vm245, %v230
    %s291 = scalar_lea.vmem [#allocation2], 48
    %292 = vst.msk [vmem:[%s291 + $0x1] sm:$0xff] %vm245, %v231
    %s293 = scalar_lea.vmem [#allocation2], 64
    %294 = vst.msk [vmem:[%s293 + $0x1] sm:$0xff] %vm245, %v232
    %s295 = scalar_lea.vmem [#allocation2], 80
    %296 = vst.msk [vmem:[%s295 + $0x1] sm:$0xff] %vm245, %v233
    %s297 = scalar_lea.vmem [#allocation2], 96
    %298 = vst.msk [vmem:[%s297 + $0x1] sm:$0xff] %vm245, %v234
    %s299 = scalar_lea.vmem [#allocation2], 112
    %300 = vst.msk [vmem:[%s299 + $0x1] sm:$0xff] %vm245, %v235
    %s301 = scalar_lea.vmem [#allocation2], 128
    %302 = vst.msk [vmem:[%s301 + $0x1] sm:$0xff] %vm245, %v236
    %s303 = scalar_lea.vmem [#allocation2], 176
    %304 = vst.msk [vmem:[%s303 + $0x1] sm:$0xff] %vm245, %v237
    %s305 = scalar_lea.vmem [#allocation2], 192
    %306 = vst.msk [vmem:[%s305 + $0x1] sm:$0xff] %vm245, %v238
    %s307 = scalar_lea.vmem [#allocation2], 208
    %308 = vst.msk [vmem:[%s307 + $0x1] sm:$0xff] %vm245, %v239
    %s309 = scalar_lea.vmem [#allocation2], 224
    %310 = vst.msk [vmem:[%s309 + $0x1] sm:$0xff] %vm245, %v240
    %s311 = scalar_lea.vmem [#allocation2], 240
    %312 = vst.msk [vmem:[%s311 + $0x1] sm:$0xff] %vm245, %v241
    %s313 = scalar_lea.vmem [#allocation2], 256
    %314 = vst.msk [vmem:[%s313 + $0x1] sm:$0xff] %vm245, %v242
    %s315 = scalar_lea.vmem [#allocation2], 272
    %316 = vst.msk [vmem:[%s315 + $0x1] sm:$0xff] %vm245, %v243
    %s317 = scalar_lea.vmem [#allocation2], 288
    %318 = vst.msk [vmem:[%s317 + $0x1] sm:$0xff] %vm245, %v244
    %v319 = vld [vmem:[#allocation2] sm:$0xff]
    %320 = vst.msk [vmem:[#allocation3] sm:$0xff] %vm245, %v319
    %v321 = vld [vmem:[%s287] sm:$0xff]
    %322 = vst.msk [vmem:[#allocation3 + $0x28] sm:$0xff] %vm245, %v321
    %v323 = vld [vmem:[%s289] sm:$0xff]
    %324 = vst.msk [vmem:[#allocation3 + $0x50] sm:$0xff] %vm245, %v323
    %v325 = vld [vmem:[%s291] sm:$0xff]
    %326 = vst.msk [vmem:[#allocation3 + $0x78] sm:$0xff] %vm245, %v325
    %v327 = vld [vmem:[%s293] sm:$0xff]
    %328 = vst.msk [vmem:[#allocation3 + $0xa0] sm:$0xff] %vm245, %v327
    %v329 = vld [vmem:[%s295] sm:$0xff]
    %330 = vst.msk [vmem:[#allocation3 + $0xc8] sm:$0xff] %vm245, %v329
    %v331 = vld [vmem:[%s297] sm:$0xff]
    %332 = vst.msk [vmem:[#allocation3 + $0xf0] sm:$0xff] %vm245, %v331
    %v333 = vld [vmem:[%s299] sm:$0xff]
    %334 = vst.msk [vmem:[#allocation3 + $0x118] sm:$0xff] %vm245, %v333
    %s335 = scalar_lea.vmem [#allocation2], 160
    %v336 = vld [vmem:[%s335] sm:$0xff]
    %337 = vst.msk [vmem:[#allocation3 + $0x140] sm:$0xff] %vm245, %v336
    %v338 = vld [vmem:[%s303] sm:$0xff]
    %339 = vst.msk [vmem:[#allocation3 + $0x168] sm:$0xff] %vm245, %v338
    %v340 = vld [vmem:[%s305] sm:$0xff]
    %341 = vst.msk [vmem:[#allocation3 + $0x190] sm:$0xff] %vm245, %v340
    %v342 = vld [vmem:[%s307] sm:$0xff]
    %343 = vst.msk [vmem:[#allocation3 + $0x1b8] sm:$0xff] %vm245, %v342
    %v344 = vld [vmem:[%s309] sm:$0xff]
    %345 = vst.msk [vmem:[#allocation3 + $0x1e0] sm:$0xff] %vm245, %v344
    %v346 = vld [vmem:[%s311] sm:$0xff]
    %347 = vst.msk [vmem:[#allocation3 + $0x208] sm:$0xff] %vm245, %v346
    %v348 = vld [vmem:[%s313] sm:$0xff]
    %349 = vst.msk [vmem:[#allocation3 + $0x230] sm:$0xff] %vm245, %v348
    %v350 = vld [vmem:[%s315] sm:$0xff]
    %351 = vst.msk [vmem:[#allocation3 + $0x258] sm:$0xff] %vm245, %v350
    %v352 = vld [vmem:[#allocation2 + $0x1] sm:$0xff]
    %354 = vrot.lane.b32.xlu0 %v352, 64
    %v355 = vpop.permute.xlu0 %354
    %vm357 = vcmask 1048064
    %358 = vst.msk [vmem:[#allocation3] sm:$0xff] %vm357, %v355
    %v359 = vld [vmem:[%s287 + $0x1] sm:$0xff]
    %361 = vrot.lane.b32.xlu0 %v359, 64
    %v362 = vpop.permute.xlu0 %361
    %364 = vst.msk [vmem:[#allocation3 + $0x28] sm:$0xff] %vm357, %v362
    %v365 = vld [vmem:[%s289 + $0x1] sm:$0xff]
    %367 = vrot.lane.b32.xlu0 %v365, 64
    %v368 = vpop.permute.xlu0 %367
    %370 = vst.msk [vmem:[#allocation3 + $0x50] sm:$0xff] %vm357, %v368
    %v371 = vld [vmem:[%s291 + $0x1] sm:$0xff]
    %373 = vrot.lane.b32.xlu0 %v371, 64
    %v374 = vpop.permute.xlu0 %373
    %376 = vst.msk [vmem:[#allocation3 + $0x78] sm:$0xff] %vm357, %v374
    %v377 = vld [vmem:[%s293 + $0x1] sm:$0xff]
    %379 = vrot.lane.b32.xlu0 %v377, 64
    %v380 = vpop.permute.xlu0 %379
    %382 = vst.msk [vmem:[#allocation3 + $0xa0] sm:$0xff] %vm357, %v380
    %v383 = vld [vmem:[%s295 + $0x1] sm:$0xff]
    %385 = vrot.lane.b32.xlu0 %v383, 64
    %v386 = vpop.permute.xlu0 %385
    %388 = vst.msk [vmem:[#allocation3 + $0xc8] sm:$0xff] %vm357, %v386
    %v389 = vld [vmem:[%s297 + $0x1] sm:$0xff]
    %391 = vrot.lane.b32.xlu0 %v389, 64
    %v392 = vpop.permute.xlu0 %391
    %394 = vst.msk [vmem:[#allocation3 + $0xf0] sm:$0xff] %vm357, %v392
    %v395 = vld [vmem:[%s299 + $0x1] sm:$0xff]
    %397 = vrot.lane.b32.xlu0 %v395, 64
    %v398 = vpop.permute.xlu0 %397
    %400 = vst.msk [vmem:[#allocation3 + $0x118] sm:$0xff] %vm357, %v398
    %v401 = vld [vmem:[%s335 + $0x1] sm:$0xff]
    %403 = vrot.lane.b32.xlu0 %v401, 64
    %v404 = vpop.permute.xlu0 %403
    %406 = vst.msk [vmem:[#allocation3 + $0x140] sm:$0xff] %vm357, %v404
    %v407 = vld [vmem:[%s303 + $0x1] sm:$0xff]
    %409 = vrot.lane.b32.xlu0 %v407, 64
    %v410 = vpop.permute.xlu0 %409
    %412 = vst.msk [vmem:[#allocation3 + $0x168] sm:$0xff] %vm357, %v410
    %v413 = vld [vmem:[%s305 + $0x1] sm:$0xff]
    %415 = vrot.lane.b32.xlu0 %v413, 64
    %v416 = vpop.permute.xlu0 %415
    %418 = vst.msk [vmem:[#allocation3 + $0x190] sm:$0xff] %vm357, %v416
    %v419 = vld [vmem:[%s307 + $0x1] sm:$0xff]
    %421 = vrot.lane.b32.xlu0 %v419, 64
    %v422 = vpop.permute.xlu0 %421
    %424 = vst.msk [vmem:[#allocation3 + $0x1b8] sm:$0xff] %vm357, %v422
    %v425 = vld [vmem:[%s309 + $0x1] sm:$0xff]
    %427 = vrot.lane.b32.xlu0 %v425, 64
    %v428 = vpop.permute.xlu0 %427
    %430 = vst.msk [vmem:[#allocation3 + $0x1e0] sm:$0xff] %vm357, %v428
    %v431 = vld [vmem:[%s311 + $0x1] sm:$0xff]
    %433 = vrot.lane.b32.xlu0 %v431, 64
    %v434 = vpop.permute.xlu0 %433
    %436 = vst.msk [vmem:[#allocation3 + $0x208] sm:$0xff] %vm357, %v434
    %v437 = vld [vmem:[%s313 + $0x1] sm:$0xff]
    %439 = vrot.lane.b32.xlu0 %v437, 64
    %v440 = vpop.permute.xlu0 %439
    %442 = vst.msk [vmem:[#allocation3 + $0x230] sm:$0xff] %vm357, %v440
    %v443 = vld [vmem:[%s315 + $0x1] sm:$0xff]
    %445 = vrot.lane.b32.xlu0 %v443, 64
    %v446 = vpop.permute.xlu0 %445
    %448 = vst.msk [vmem:[#allocation3 + $0x258] sm:$0xff] %vm357, %v446
    %v449 = vld [vmem:[#allocation2 + $0x2] sm:$0xff]
    %450 = vst.msk [vmem:[#allocation3 + $0x8] sm:$0xff] %vm245, %v449
    %v451 = vld [vmem:[%s287 + $0x2] sm:$0xff]
    %452 = vst.msk [vmem:[#allocation3 + $0x30] sm:$0xff] %vm245, %v451
    %v453 = vld [vmem:[%s289 + $0x2] sm:$0xff]
    %454 = vst.msk [vmem:[#allocation3 + $0x58] sm:$0xff] %vm245, %v453
    %v455 = vld [vmem:[%s291 + $0x2] sm:$0xff]
    %456 = vst.msk [vmem:[#allocation3 + $0x80] sm:$0xff] %vm245, %v455
    %v457 = vld [vmem:[%s293 + $0x2] sm:$0xff]
    %458 = vst.msk [vmem:[#allocation3 + $0xa8] sm:$0xff] %vm245, %v457
    %v459 = vld [vmem:[%s295 + $0x2] sm:$0xff]
    %460 = vst.msk [vmem:[#allocation3 + $0xd0] sm:$0xff] %vm245, %v459
    %v461 = vld [vmem:[%s297 + $0x2] sm:$0xff]
    %462 = vst.msk [vmem:[#allocation3 + $0xf8] sm:$0xff] %vm245, %v461
    %v463 = vld [vmem:[%s299 + $0x2] sm:$0xff]
    %464 = vst.msk [vmem:[#allocation3 + $0x120] sm:$0xff] %vm245, %v463
    %v465 = vld [vmem:[%s335 + $0x2] sm:$0xff]
    %466 = vst.msk [vmem:[#allocation3 + $0x148] sm:$0xff] %vm245, %v465
    %v467 = vld [vmem:[%s303 + $0x2] sm:$0xff]
    %468 = vst.msk [vmem:[#allocation3 + $0x170] sm:$0xff] %vm245, %v467
    %v469 = vld [vmem:[%s305 + $0x2] sm:$0xff]
    %470 = vst.msk [vmem:[#allocation3 + $0x198] sm:$0xff] %vm245, %v469
    %v471 = vld [vmem:[%s307 + $0x2] sm:$0xff]
    %472 = vst.msk [vmem:[#allocation3 + $0x1c0] sm:$0xff] %vm245, %v471
    %v473 = vld [vmem:[%s309 + $0x2] sm:$0xff]
    %474 = vst.msk [vmem:[#allocation3 + $0x1e8] sm:$0xff] %vm245, %v473
    %v475 = vld [vmem:[%s311 + $0x2] sm:$0xff]
    %476 = vst.msk [vmem:[#allocation3 + $0x210] sm:$0xff] %vm245, %v475
    %v477 = vld [vmem:[%s313 + $0x2] sm:$0xff]
    %478 = vst.msk [vmem:[#allocation3 + $0x238] sm:$0xff] %vm245, %v477
    %v479 = vld [vmem:[%s315 + $0x2] sm:$0xff]
    %480 = vst.msk [vmem:[#allocation3 + $0x260] sm:$0xff] %vm245, %v479
    %v481 = vld [vmem:[%s287] sm:$0xff]
    %483 = vrot.lane.b32.xlu0 %v481, 64
    %v484 = vpop.permute.xlu0 %483
    %486 = vst.msk [vmem:[#allocation3 + $0x8] sm:$0xff] %vm357, %v484
    %v487 = vld [vmem:[%s289] sm:$0xff]
    %489 = vrot.lane.b32.xlu0 %v487, 64
    %v490 = vpop.permute.xlu0 %489
    %492 = vst.msk [vmem:[#allocation3 + $0x30] sm:$0xff] %vm357, %v490
    %v493 = vld [vmem:[%s291] sm:$0xff]
    %495 = vrot.lane.b32.xlu0 %v493, 64
    %v496 = vpop.permute.xlu0 %495
    %498 = vst.msk [vmem:[#allocation3 + $0x58] sm:$0xff] %vm357, %v496
    %v499 = vld [vmem:[%s293] sm:$0xff]
    %501 = vrot.lane.b32.xlu0 %v499, 64
    %v502 = vpop.permute.xlu0 %501
    %504 = vst.msk [vmem:[#allocation3 + $0x80] sm:$0xff] %vm357, %v502
    %v505 = vld [vmem:[%s295] sm:$0xff]
    %507 = vrot.lane.b32.xlu0 %v505, 64
    %v508 = vpop.permute.xlu0 %507
    %510 = vst.msk [vmem:[#allocation3 + $0xa8] sm:$0xff] %vm357, %v508
    %v511 = vld [vmem:[%s297] sm:$0xff]
    %513 = vrot.lane.b32.xlu0 %v511, 64
    %v514 = vpop.permute.xlu0 %513
    %516 = vst.msk [vmem:[#allocation3 + $0xd0] sm:$0xff] %vm357, %v514
    %v517 = vld [vmem:[%s299] sm:$0xff]
    %519 = vrot.lane.b32.xlu0 %v517, 64
    %v520 = vpop.permute.xlu0 %519
    %522 = vst.msk [vmem:[#allocation3 + $0xf8] sm:$0xff] %vm357, %v520
    %v523 = vld [vmem:[%s301] sm:$0xff]
    %525 = vrot.lane.b32.xlu0 %v523, 64
    %v526 = vpop.permute.xlu0 %525
    %528 = vst.msk [vmem:[#allocation3 + $0x120] sm:$0xff] %vm357, %v526
    %v529 = vld [vmem:[%s303] sm:$0xff]
    %531 = vrot.lane.b32.xlu0 %v529, 64
    %v532 = vpop.permute.xlu0 %531
    %534 = vst.msk [vmem:[#allocation3 + $0x148] sm:$0xff] %vm357, %v532
    %v535 = vld [vmem:[%s305] sm:$0xff]
    %537 = vrot.lane.b32.xlu0 %v535, 64
    %v538 = vpop.permute.xlu0 %537
    %540 = vst.msk [vmem:[#allocation3 + $0x170] sm:$0xff] %vm357, %v538
    %v541 = vld [vmem:[%s307] sm:$0xff]
    %543 = vrot.lane.b32.xlu0 %v541, 64
    %v544 = vpop.permute.xlu0 %543
    %546 = vst.msk [vmem:[#allocation3 + $0x198] sm:$0xff] %vm357, %v544
    %v547 = vld [vmem:[%s309] sm:$0xff]
    %549 = vrot.lane.b32.xlu0 %v547, 64
    %v550 = vpop.permute.xlu0 %549
    %552 = vst.msk [vmem:[#allocation3 + $0x1c0] sm:$0xff] %vm357, %v550
    %v553 = vld [vmem:[%s311] sm:$0xff]
    %555 = vrot.lane.b32.xlu0 %v553, 64
    %v556 = vpop.permute.xlu0 %555
    %558 = vst.msk [vmem:[#allocation3 + $0x1e8] sm:$0xff] %vm357, %v556
    %v559 = vld [vmem:[%s313] sm:$0xff]
    %561 = vrot.lane.b32.xlu0 %v559, 64
    %v562 = vpop.permute.xlu0 %561
    %564 = vst.msk [vmem:[#allocation3 + $0x210] sm:$0xff] %vm357, %v562
    %v565 = vld [vmem:[%s315] sm:$0xff]
    %567 = vrot.lane.b32.xlu0 %v565, 64
    %v568 = vpop.permute.xlu0 %567
    %570 = vst.msk [vmem:[#allocation3 + $0x238] sm:$0xff] %vm357, %v568
    %v571 = vld [vmem:[%s317] sm:$0xff]
    %573 = vrot.lane.b32.xlu0 %v571, 64
    %v574 = vpop.permute.xlu0 %573
    %576 = vst.msk [vmem:[#allocation3 + $0x260] sm:$0xff] %vm357, %v574
    %v577 = vld [vmem:[%s287 + $0x1] sm:$0xff]
    %578 = vst.msk [vmem:[#allocation3 + $0x10] sm:$0xff] %vm245, %v577
    %v579 = vld [vmem:[%s289 + $0x1] sm:$0xff]
    %580 = vst.msk [vmem:[#allocation3 + $0x38] sm:$0xff] %vm245, %v579
    %v581 = vld [vmem:[%s291 + $0x1] sm:$0xff]
    %582 = vst.msk [vmem:[#allocation3 + $0x60] sm:$0xff] %vm245, %v581
    %v583 = vld [vmem:[%s293 + $0x1] sm:$0xff]
    %584 = vst.msk [vmem:[#allocation3 + $0x88] sm:$0xff] %vm245, %v583
    %v585 = vld [vmem:[%s295 + $0x1] sm:$0xff]
    %586 = vst.msk [vmem:[#allocation3 + $0xb0] sm:$0xff] %vm245, %v585
    %v587 = vld [vmem:[%s297 + $0x1] sm:$0xff]
    %588 = vst.msk [vmem:[#allocation3 + $0xd8] sm:$0xff] %vm245, %v587
    %v589 = vld [vmem:[%s299 + $0x1] sm:$0xff]
    %590 = vst.msk [vmem:[#allocation3 + $0x100] sm:$0xff] %vm245, %v589
    %v591 = vld [vmem:[%s301 + $0x1] sm:$0xff]
    %592 = vst.msk [vmem:[#allocation3 + $0x128] sm:$0xff] %vm245, %v591
    %v593 = vld [vmem:[%s303 + $0x1] sm:$0xff]
    %594 = vst.msk [vmem:[#allocation3 + $0x150] sm:$0xff] %vm245, %v593
    %v595 = vld [vmem:[%s305 + $0x1] sm:$0xff]
    %596 = vst.msk [vmem:[#allocation3 + $0x178] sm:$0xff] %vm245, %v595
    %v597 = vld [vmem:[%s307 + $0x1] sm:$0xff]
    %598 = vst.msk [vmem:[#allocation3 + $0x1a0] sm:$0xff] %vm245, %v597
    %v599 = vld [vmem:[%s309 + $0x1] sm:$0xff]
    %600 = vst.msk [vmem:[#allocation3 + $0x1c8] sm:$0xff] %vm245, %v599
    %v601 = vld [vmem:[%s311 + $0x1] sm:$0xff]
    %602 = vst.msk [vmem:[#allocation3 + $0x1f0] sm:$0xff] %vm245, %v601
    %v603 = vld [vmem:[%s313 + $0x1] sm:$0xff]
    %604 = vst.msk [vmem:[#allocation3 + $0x218] sm:$0xff] %vm245, %v603
    %v605 = vld [vmem:[%s315 + $0x1] sm:$0xff]
    %606 = vst.msk [vmem:[#allocation3 + $0x240] sm:$0xff] %vm245, %v605
    %v607 = vld [vmem:[%s317 + $0x1] sm:$0xff]
    %608 = vst.msk [vmem:[#allocation3 + $0x268] sm:$0xff] %vm245, %v607
    %v609 = vld [vmem:[%s287 + $0x2] sm:$0xff]
    %611 = vrot.lane.b32.xlu0 %v609, 64
    %v612 = vpop.permute.xlu0 %611
    %614 = vst.msk [vmem:[#allocation3 + $0x10] sm:$0xff] %vm357, %v612
    %v615 = vld [vmem:[%s289 + $0x2] sm:$0xff]
    %617 = vrot.lane.b32.xlu0 %v615, 64
    %v618 = vpop.permute.xlu0 %617
    %620 = vst.msk [vmem:[#allocation3 + $0x38] sm:$0xff] %vm357, %v618
    %v621 = vld [vmem:[%s291 + $0x2] sm:$0xff]
    %623 = vrot.lane.b32.xlu0 %v621, 64
    %v624 = vpop.permute.xlu0 %623
    %626 = vst.msk [vmem:[#allocation3 + $0x60] sm:$0xff] %vm357, %v624
    %v627 = vld [vmem:[%s293 + $0x2] sm:$0xff]
    %629 = vrot.lane.b32.xlu0 %v627, 64
    %v630 = vpop.permute.xlu0 %629
    %632 = vst.msk [vmem:[#allocation3 + $0x88] sm:$0xff] %vm357, %v630
    %v633 = vld [vmem:[%s295 + $0x2] sm:$0xff]
    %635 = vrot.lane.b32.xlu0 %v633, 64
    %v636 = vpop.permute.xlu0 %635
    %638 = vst.msk [vmem:[#allocation3 + $0xb0] sm:$0xff] %vm357, %v636
    %v639 = vld [vmem:[%s297 + $0x2] sm:$0xff]
    %641 = vrot.lane.b32.xlu0 %v639, 64
    %v642 = vpop.permute.xlu0 %641
    %644 = vst.msk [vmem:[#allocation3 + $0xd8] sm:$0xff] %vm357, %v642
    %v645 = vld [vmem:[%s299 + $0x2] sm:$0xff]
    %647 = vrot.lane.b32.xlu0 %v645, 64
    %v648 = vpop.permute.xlu0 %647
    %650 = vst.msk [vmem:[#allocation3 + $0x100] sm:$0xff] %vm357, %v648
    %v651 = vld [vmem:[%s301 + $0x2] sm:$0xff]
    %653 = vrot.lane.b32.xlu0 %v651, 64
    %v654 = vpop.permute.xlu0 %653
    %656 = vst.msk [vmem:[#allocation3 + $0x128] sm:$0xff] %vm357, %v654
    %v657 = vld [vmem:[%s303 + $0x2] sm:$0xff]
    %659 = vrot.lane.b32.xlu0 %v657, 64
    %v660 = vpop.permute.xlu0 %659
    %662 = vst.msk [vmem:[#allocation3 + $0x150] sm:$0xff] %vm357, %v660
    %v663 = vld [vmem:[%s305 + $0x2] sm:$0xff]
    %665 = vrot.lane.b32.xlu0 %v663, 64
    %v666 = vpop.permute.xlu0 %665
    %668 = vst.msk [vmem:[#allocation3 + $0x178] sm:$0xff] %vm357, %v666
    %v669 = vld [vmem:[%s307 + $0x2] sm:$0xff]
    %671 = vrot.lane.b32.xlu0 %v669, 64
    %v672 = vpop.permute.xlu0 %671
    %674 = vst.msk [vmem:[#allocation3 + $0x1a0] sm:$0xff] %vm357, %v672
    %v675 = vld [vmem:[%s309 + $0x2] sm:$0xff]
    %677 = vrot.lane.b32.xlu0 %v675, 64
    %v678 = vpop.permute.xlu0 %677
    %680 = vst.msk [vmem:[#allocation3 + $0x1c8] sm:$0xff] %vm357, %v678
    %v681 = vld [vmem:[%s311 + $0x2] sm:$0xff]
    %683 = vrot.lane.b32.xlu0 %v681, 64
    %v684 = vpop.permute.xlu0 %683
    %686 = vst.msk [vmem:[#allocation3 + $0x1f0] sm:$0xff] %vm357, %v684
    %v687 = vld [vmem:[%s313 + $0x2] sm:$0xff]
    %689 = vrot.lane.b32.xlu0 %v687, 64
    %v690 = vpop.permute.xlu0 %689
    %692 = vst.msk [vmem:[#allocation3 + $0x218] sm:$0xff] %vm357, %v690
    %v693 = vld [vmem:[%s315 + $0x2] sm:$0xff]
    %695 = vrot.lane.b32.xlu0 %v693, 64
    %v696 = vpop.permute.xlu0 %695
    %698 = vst.msk [vmem:[#allocation3 + $0x240] sm:$0xff] %vm357, %v696
    %v699 = vld [vmem:[%s317 + $0x2] sm:$0xff]
    %701 = vrot.lane.b32.xlu0 %v699, 64
    %v702 = vpop.permute.xlu0 %701
    %704 = vst.msk [vmem:[#allocation3 + $0x268] sm:$0xff] %vm357, %v702
    %v705 = vld [vmem:[%s289] sm:$0xff]
    %706 = vst.msk [vmem:[#allocation3 + $0x18] sm:$0xff] %vm245, %v705
    %v707 = vld [vmem:[%s291] sm:$0xff]
    %708 = vst.msk [vmem:[#allocation3 + $0x40] sm:$0xff] %vm245, %v707
    %v709 = vld [vmem:[%s293] sm:$0xff]
    %710 = vst.msk [vmem:[#allocation3 + $0x68] sm:$0xff] %vm245, %v709
    %v711 = vld [vmem:[%s295] sm:$0xff]
    %712 = vst.msk [vmem:[#allocation3 + $0x90] sm:$0xff] %vm245, %v711
    %v713 = vld [vmem:[%s297] sm:$0xff]
    %714 = vst.msk [vmem:[#allocation3 + $0xb8] sm:$0xff] %vm245, %v713
    %v715 = vld [vmem:[%s299] sm:$0xff]
    %716 = vst.msk [vmem:[#allocation3 + $0xe0] sm:$0xff] %vm245, %v715
    %v717 = vld [vmem:[%s301] sm:$0xff]
    %718 = vst.msk [vmem:[#allocation3 + $0x108] sm:$0xff] %vm245, %v717
    %s719 = scalar_lea.vmem [#allocation2], 144
    %v720 = vld [vmem:[%s719] sm:$0xff]
    %721 = vst.msk [vmem:[#allocation3 + $0x130] sm:$0xff] %vm245, %v720
    %v722 = vld [vmem:[%s305] sm:$0xff]
    %723 = vst.msk [vmem:[#allocation3 + $0x158] sm:$0xff] %vm245, %v722
    %v724 = vld [vmem:[%s307] sm:$0xff]
    %725 = vst.msk [vmem:[#allocation3 + $0x180] sm:$0xff] %vm245, %v724
    %v726 = vld [vmem:[%s309] sm:$0xff]
    %727 = vst.msk [vmem:[#allocation3 + $0x1a8] sm:$0xff] %vm245, %v726
    %v728 = vld [vmem:[%s311] sm:$0xff]
    %729 = vst.msk [vmem:[#allocation3 + $0x1d0] sm:$0xff] %vm245, %v728
    %v730 = vld [vmem:[%s313] sm:$0xff]
    %731 = vst.msk [vmem:[#allocation3 + $0x1f8] sm:$0xff] %vm245, %v730
    %v732 = vld [vmem:[%s315] sm:$0xff]
    %733 = vst.msk [vmem:[#allocation3 + $0x220] sm:$0xff] %vm245, %v732
    %v734 = vld [vmem:[%s317] sm:$0xff]
    %735 = vst.msk [vmem:[#allocation3 + $0x248] sm:$0xff] %vm245, %v734
    %s736 = scalar_lea.vmem [#allocation2], 304
    %v737 = vld [vmem:[%s736] sm:$0xff]
    %738 = vst.msk [vmem:[#allocation3 + $0x270] sm:$0xff] %vm245, %v737
    %v739 = vld [vmem:[%s289 + $0x1] sm:$0xff]
    %741 = vrot.lane.b32.xlu0 %v739, 64
    %v742 = vpop.permute.xlu0 %741
    %744 = vst.msk [vmem:[#allocation3 + $0x18] sm:$0xff] %vm357, %v742
    %v745 = vld [vmem:[%s291 + $0x1] sm:$0xff]
    %747 = vrot.lane.b32.xlu0 %v745, 64
    %v748 = vpop.permute.xlu0 %747
    %750 = vst.msk [vmem:[#allocation3 + $0x40] sm:$0xff] %vm357, %v748
    %v751 = vld [vmem:[%s293 + $0x1] sm:$0xff]
    %753 = vrot.lane.b32.xlu0 %v751, 64
    %v754 = vpop.permute.xlu0 %753
    %756 = vst.msk [vmem:[#allocation3 + $0x68] sm:$0xff] %vm357, %v754
    %v757 = vld [vmem:[%s295 + $0x1] sm:$0xff]
    %759 = vrot.lane.b32.xlu0 %v757, 64
    %v760 = vpop.permute.xlu0 %759
    %762 = vst.msk [vmem:[#allocation3 + $0x90] sm:$0xff] %vm357, %v760
    %v763 = vld [vmem:[%s297 + $0x1] sm:$0xff]
    %765 = vrot.lane.b32.xlu0 %v763, 64
    %v766 = vpop.permute.xlu0 %765
    %768 = vst.msk [vmem:[#allocation3 + $0xb8] sm:$0xff] %vm357, %v766
    %v769 = vld [vmem:[%s299 + $0x1] sm:$0xff]
    %771 = vrot.lane.b32.xlu0 %v769, 64
    %v772 = vpop.permute.xlu0 %771
    %774 = vst.msk [vmem:[#allocation3 + $0xe0] sm:$0xff] %vm357, %v772
    %v775 = vld [vmem:[%s301 + $0x1] sm:$0xff]
    %777 = vrot.lane.b32.xlu0 %v775, 64
    %v778 = vpop.permute.xlu0 %777
    %780 = vst.msk [vmem:[#allocation3 + $0x108] sm:$0xff] %vm357, %v778
    %v781 = vld [vmem:[%s719 + $0x1] sm:$0xff]
    %783 = vrot.lane.b32.xlu0 %v781, 64
    %v784 = vpop.permute.xlu0 %783
    %786 = vst.msk [vmem:[#allocation3 + $0x130] sm:$0xff] %vm357, %v784
    %v787 = vld [vmem:[%s305 + $0x1] sm:$0xff]
    %789 = vrot.lane.b32.xlu0 %v787, 64
    %v790 = vpop.permute.xlu0 %789
    %792 = vst.msk [vmem:[#allocation3 + $0x158] sm:$0xff] %vm357, %v790
    %v793 = vld [vmem:[%s307 + $0x1] sm:$0xff]
    %795 = vrot.lane.b32.xlu0 %v793, 64
    %v796 = vpop.permute.xlu0 %795
    %798 = vst.msk [vmem:[#allocation3 + $0x180] sm:$0xff] %vm357, %v796
    %v799 = vld [vmem:[%s309 + $0x1] sm:$0xff]
    %801 = vrot.lane.b32.xlu0 %v799, 64
    %v802 = vpop.permute.xlu0 %801
    %804 = vst.msk [vmem:[#allocation3 + $0x1a8] sm:$0xff] %vm357, %v802
    %v805 = vld [vmem:[%s311 + $0x1] sm:$0xff]
    %807 = vrot.lane.b32.xlu0 %v805, 64
    %v808 = vpop.permute.xlu0 %807
    %810 = vst.msk [vmem:[#allocation3 + $0x1d0] sm:$0xff] %vm357, %v808
    %v811 = vld [vmem:[%s313 + $0x1] sm:$0xff]
    %813 = vrot.lane.b32.xlu0 %v811, 64
    %v814 = vpop.permute.xlu0 %813
    %816 = vst.msk [vmem:[#allocation3 + $0x1f8] sm:$0xff] %vm357, %v814
    %v817 = vld [vmem:[%s315 + $0x1] sm:$0xff]
    %819 = vrot.lane.b32.xlu0 %v817, 64
    %v820 = vpop.permute.xlu0 %819
    %822 = vst.msk [vmem:[#allocation3 + $0x220] sm:$0xff] %vm357, %v820
    %v823 = vld [vmem:[%s317 + $0x1] sm:$0xff]
    %825 = vrot.lane.b32.xlu0 %v823, 64
    %v826 = vpop.permute.xlu0 %825
    %828 = vst.msk [vmem:[#allocation3 + $0x248] sm:$0xff] %vm357, %v826
    %v829 = vld [vmem:[%s736 + $0x1] sm:$0xff]
    %831 = vrot.lane.b32.xlu0 %v829, 64
    %v832 = vpop.permute.xlu0 %831
    %834 = vst.msk [vmem:[#allocation3 + $0x270] sm:$0xff] %vm357, %v832
    %v835 = vld [vmem:[%s289 + $0x2] sm:$0xff]
    %836 = vst.msk [vmem:[#allocation3 + $0x20] sm:$0xff] %vm245, %v835
    %v837 = vld [vmem:[%s291 + $0x2] sm:$0xff]
    %838 = vst.msk [vmem:[#allocation3 + $0x48] sm:$0xff] %vm245, %v837
    %v839 = vld [vmem:[%s293 + $0x2] sm:$0xff]
    %840 = vst.msk [vmem:[#allocation3 + $0x70] sm:$0xff] %vm245, %v839
    %v841 = vld [vmem:[%s295 + $0x2] sm:$0xff]
    %842 = vst.msk [vmem:[#allocation3 + $0x98] sm:$0xff] %vm245, %v841
    %v843 = vld [vmem:[%s297 + $0x2] sm:$0xff]
    %844 = vst.msk [vmem:[#allocation3 + $0xc0] sm:$0xff] %vm245, %v843
    %v845 = vld [vmem:[%s299 + $0x2] sm:$0xff]
    %846 = vst.msk [vmem:[#allocation3 + $0xe8] sm:$0xff] %vm245, %v845
    %v847 = vld [vmem:[%s301 + $0x2] sm:$0xff]
    %848 = vst.msk [vmem:[#allocation3 + $0x110] sm:$0xff] %vm245, %v847
    %v849 = vld [vmem:[%s719 + $0x2] sm:$0xff]
    %850 = vst.msk [vmem:[#allocation3 + $0x138] sm:$0xff] %vm245, %v849
    %v851 = vld [vmem:[%s305 + $0x2] sm:$0xff]
    %852 = vst.msk [vmem:[#allocation3 + $0x160] sm:$0xff] %vm245, %v851
    %v853 = vld [vmem:[%s307 + $0x2] sm:$0xff]
    %854 = vst.msk [vmem:[#allocation3 + $0x188] sm:$0xff] %vm245, %v853
    %v855 = vld [vmem:[%s309 + $0x2] sm:$0xff]
    %856 = vst.msk [vmem:[#allocation3 + $0x1b0] sm:$0xff] %vm245, %v855
    %v857 = vld [vmem:[%s311 + $0x2] sm:$0xff]
    %858 = vst.msk [vmem:[#allocation3 + $0x1d8] sm:$0xff] %vm245, %v857
    %v859 = vld [vmem:[%s313 + $0x2] sm:$0xff]
    %860 = vst.msk [vmem:[#allocation3 + $0x200] sm:$0xff] %vm245, %v859
    %v861 = vld [vmem:[%s315 + $0x2] sm:$0xff]
    %862 = vst.msk [vmem:[#allocation3 + $0x228] sm:$0xff] %vm245, %v861
    %v863 = vld [vmem:[%s317 + $0x2] sm:$0xff]
    %864 = vst.msk [vmem:[#allocation3 + $0x250] sm:$0xff] %vm245, %v863
    %v865 = vld [vmem:[%s736 + $0x2] sm:$0xff]
    %866 = vst.msk [vmem:[#allocation3 + $0x278] sm:$0xff] %vm245, %v865
    %v867 = vld [vmem:[#allocation3] sm:$0xff]
    %v868 = vld [vmem:[#allocation3 + $0x8] sm:$0xff]
    %v869 = vld [vmem:[#allocation3 + $0x10] sm:$0xff]
    %v870 = vld [vmem:[#allocation3 + $0x18] sm:$0xff]
    %v871 = vld [vmem:[#allocation3 + $0x20] sm:$0xff]
    %v872 = vld [vmem:[#allocation3 + $0x28] sm:$0xff]
    %v873 = vld [vmem:[#allocation3 + $0x30] sm:$0xff]
    %v874 = vld [vmem:[#allocation3 + $0x38] sm:$0xff]
    %v875 = vld [vmem:[#allocation3 + $0x40] sm:$0xff]
    %v876 = vld [vmem:[#allocation3 + $0x48] sm:$0xff]
    %v877 = vld [vmem:[#allocation3 + $0x50] sm:$0xff]
    %v878 = vld [vmem:[#allocation3 + $0x58] sm:$0xff]
    %v879 = vld [vmem:[#allocation3 + $0x60] sm:$0xff]
    %v880 = vld [vmem:[#allocation3 + $0x68] sm:$0xff]
    %v881 = vld [vmem:[#allocation3 + $0x70] sm:$0xff]
    %v882 = vld [vmem:[#allocation3 + $0x78] sm:$0xff]
    %v883 = vld [vmem:[#allocation3 + $0x80] sm:$0xff]
    %v884 = vld [vmem:[#allocation3 + $0x88] sm:$0xff]
    %v885 = vld [vmem:[#allocation3 + $0x90] sm:$0xff]
    %v886 = vld [vmem:[#allocation3 + $0x98] sm:$0xff]
    %v887 = vld [vmem:[#allocation3 + $0xa0] sm:$0xff]
    %v888 = vld [vmem:[#allocation3 + $0xa8] sm:$0xff]
    %v889 = vld [vmem:[#allocation3 + $0xb0] sm:$0xff]
    %v890 = vld [vmem:[#allocation3 + $0xb8] sm:$0xff]
    %v891 = vld [vmem:[#allocation3 + $0xc0] sm:$0xff]
    %v892 = vld [vmem:[#allocation3 + $0xc8] sm:$0xff]
    %v893 = vld [vmem:[#allocation3 + $0xd0] sm:$0xff]
    %v894 = vld [vmem:[#allocation3 + $0xd8] sm:$0xff]
    %v895 = vld [vmem:[#allocation3 + $0xe0] sm:$0xff]
    %v896 = vld [vmem:[#allocation3 + $0xe8] sm:$0xff]
    %v897 = vld [vmem:[#allocation3 + $0xf0] sm:$0xff]
    %v898 = vld [vmem:[#allocation3 + $0xf8] sm:$0xff]
    %v899 = vld [vmem:[#allocation3 + $0x100] sm:$0xff]
    %v900 = vld [vmem:[#allocation3 + $0x108] sm:$0xff]
    %v901 = vld [vmem:[#allocation3 + $0x110] sm:$0xff]
    %v902 = vld [vmem:[#allocation3 + $0x118] sm:$0xff]
    %v903 = vld [vmem:[#allocation3 + $0x120] sm:$0xff]
    %v904 = vld [vmem:[#allocation3 + $0x128] sm:$0xff]
    %v905 = vld [vmem:[#allocation3 + $0x130] sm:$0xff]
    %v906 = vld [vmem:[#allocation3 + $0x138] sm:$0xff]
    %v907 = vld [vmem:[#allocation3 + $0x140] sm:$0xff]
    %v908 = vld [vmem:[#allocation3 + $0x148] sm:$0xff]
    %v909 = vld [vmem:[#allocation3 + $0x150] sm:$0xff]
    %v910 = vld [vmem:[#allocation3 + $0x158] sm:$0xff]
    %v911 = vld [vmem:[#allocation3 + $0x160] sm:$0xff]
    %v912 = vld [vmem:[#allocation3 + $0x168] sm:$0xff]
    %v913 = vld [vmem:[#allocation3 + $0x170] sm:$0xff]
    %v914 = vld [vmem:[#allocation3 + $0x178] sm:$0xff]
    %v915 = vld [vmem:[#allocation3 + $0x180] sm:$0xff]
    %v916 = vld [vmem:[#allocation3 + $0x188] sm:$0xff]
    %v917 = vld [vmem:[#allocation3 + $0x190] sm:$0xff]
    %v918 = vld [vmem:[#allocation3 + $0x198] sm:$0xff]
    %v919 = vld [vmem:[#allocation3 + $0x1a0] sm:$0xff]
    %v920 = vld [vmem:[#allocation3 + $0x1a8] sm:$0xff]
    %v921 = vld [vmem:[#allocation3 + $0x1b0] sm:$0xff]
    %v922 = vld [vmem:[#allocation3 + $0x1b8] sm:$0xff]
    %v923 = vld [vmem:[#allocation3 + $0x1c0] sm:$0xff]
    %v924 = vld [vmem:[#allocation3 + $0x1c8] sm:$0xff]
    %v925 = vld [vmem:[#allocation3 + $0x1d0] sm:$0xff]
    %v926 = vld [vmem:[#allocation3 + $0x1d8] sm:$0xff]
    %v927 = vld [vmem:[#allocation3 + $0x1e0] sm:$0xff]
    %v928 = vld [vmem:[#allocation3 + $0x1e8] sm:$0xff]
    %v929 = vld [vmem:[#allocation3 + $0x1f0] sm:$0xff]
    %v930 = vld [vmem:[#allocation3 + $0x1f8] sm:$0xff]
    %v931 = vld [vmem:[#allocation3 + $0x200] sm:$0xff]
    %v932 = vld [vmem:[#allocation3 + $0x208] sm:$0xff]
    %v933 = vld [vmem:[#allocation3 + $0x210] sm:$0xff]
    %v934 = vld [vmem:[#allocation3 + $0x218] sm:$0xff]
    %v935 = vld [vmem:[#allocation3 + $0x220] sm:$0xff]
    %v936 = vld [vmem:[#allocation3 + $0x228] sm:$0xff]
    %v937 = vld [vmem:[#allocation3 + $0x230] sm:$0xff]
    %v938 = vld [vmem:[#allocation3 + $0x238] sm:$0xff]
    %v939 = vld [vmem:[#allocation3 + $0x240] sm:$0xff]
    %v940 = vld [vmem:[#allocation3 + $0x248] sm:$0xff]
    %v941 = vld [vmem:[#allocation3 + $0x250] sm:$0xff]
    %v942 = vld [vmem:[#allocation3 + $0x258] sm:$0xff]
    %v943 = vld [vmem:[#allocation3 + $0x260] sm:$0xff]
    %v944 = vld [vmem:[#allocation3 + $0x268] sm:$0xff]
    %v945 = vld [vmem:[#allocation3 + $0x270] sm:$0xff]
    %v946 = vld [vmem:[#allocation3 + $0x278] sm:$0xff]
    %v947 = vpack.c.bf16 %v872, %v867
    %v948 = vpack.c.bf16 %v873, %v868
    %v949 = vpack.c.bf16 %v874, %v869
    %v950 = vpack.c.bf16 %v875, %v870
    %v951 = vpack.c.bf16 %v876, %v871
    %v952 = vpack.c.bf16 %v882, %v877
    %v953 = vpack.c.bf16 %v883, %v878
    %v954 = vpack.c.bf16 %v884, %v879
    %v955 = vpack.c.bf16 %v885, %v880
    %v956 = vpack.c.bf16 %v886, %v881
    %v957 = vpack.c.bf16 %v892, %v887
    %v958 = vpack.c.bf16 %v893, %v888
    %v959 = vpack.c.bf16 %v894, %v889
    %v960 = vpack.c.bf16 %v895, %v890
    %v961 = vpack.c.bf16 %v896, %v891
    %v962 = vpack.c.bf16 %v902, %v897
    %v963 = vpack.c.bf16 %v903, %v898
    %v964 = vpack.c.bf16 %v904, %v899
    %v965 = vpack.c.bf16 %v905, %v900
    %v966 = vpack.c.bf16 %v906, %v901
    %v967 = vpack.c.bf16 %v912, %v907
    %v968 = vpack.c.bf16 %v913, %v908
    %v969 = vpack.c.bf16 %v914, %v909
    %v970 = vpack.c.bf16 %v915, %v910
    %v971 = vpack.c.bf16 %v916, %v911
    %v972 = vpack.c.bf16 %v922, %v917
    %v973 = vpack.c.bf16 %v923, %v918
    %v974 = vpack.c.bf16 %v924, %v919
    %v975 = vpack.c.bf16 %v925, %v920
    %v976 = vpack.c.bf16 %v926, %v921
    %v977 = vpack.c.bf16 %v932, %v927
    %v978 = vpack.c.bf16 %v933, %v928
    %v979 = vpack.c.bf16 %v934, %v929
    %v980 = vpack.c.bf16 %v935, %v930
    %v981 = vpack.c.bf16 %v936, %v931
    %v982 = vpack.c.bf16 %v942, %v937
    %v983 = vpack.c.bf16 %v943, %v938
    %v984 = vpack.c.bf16 %v944, %v939
    %v985 = vpack.c.bf16 %v945, %v940
    %v986 = vpack.c.bf16 %v946, %v941
    %v987 = vld [vmem:[%s3] sm:$0xf]
    %v988 = vld [vmem:[%s3 + $0x4] sm:$0xf]
    %v989 = vld [vmem:[%s3 + $0x8] sm:$0xf]
    %v990 = vld [vmem:[%s3 + $0xc] sm:$0xf]
    %v991 = vld [vmem:[%s3 + $0x10] sm:$0xf]
    %v992 = vld [vmem:[%s3 + $0x14] sm:$0xf]
    %v993 = vld [vmem:[%s3 + $0x18] sm:$0xf]
    %v994 = vld [vmem:[%s3 + $0x1c] sm:$0xf]
    %v995 = vld [vmem:[%s3 + $0x20] sm:$0xf]
    %v996 = vld [vmem:[%s3 + $0x24] sm:$0xf]
    %v997 = vld [vmem:[%s3 + $0x28] sm:$0xf]
    %v998 = vld [vmem:[%s3 + $0x2c] sm:$0xf]
    %v999 = vld [vmem:[%s3 + $0x30] sm:$0xf]
    %v1000 = vld [vmem:[%s3 + $0x34] sm:$0xf]
    %v1001 = vld [vmem:[%s3 + $0x38] sm:$0xf]
    %v1002 = vld [vmem:[%s3 + $0x3c] sm:$0xf]
    %v1003 = vld [vmem:[%s3 + $0x40] sm:$0xf]
    %v1004 = vld [vmem:[%s3 + $0x44] sm:$0xf]
    %v1005 = vld [vmem:[%s3 + $0x48] sm:$0xf]
    %v1006 = vld [vmem:[%s3 + $0x4c] sm:$0xf]
    %v1007 = vld [vmem:[%s3 + $0x50] sm:$0xf]
    %v1008 = vld [vmem:[%s3 + $0x54] sm:$0xf]
    %v1009 = vld [vmem:[%s3 + $0x58] sm:$0xf]
    %v1010 = vld [vmem:[%s3 + $0x5c] sm:$0xf]
    %v1011 = vld [vmem:[%s3 + $0x60] sm:$0xf]
    %v1012 = vld [vmem:[%s3 + $0x64] sm:$0xf]
    %v1013 = vld [vmem:[%s3 + $0x68] sm:$0xf]
    %v1014 = vld [vmem:[%s3 + $0x6c] sm:$0xf]
    %v1015 = vld [vmem:[%s3 + $0x70] sm:$0xf]
    %v1016 = vld [vmem:[%s3 + $0x74] sm:$0xf]
    %v1017 = vld [vmem:[%s3 + $0x78] sm:$0xf]
    %v1018 = vld [vmem:[%s3 + $0x7c] sm:$0xf]
    %v1019 = vld [vmem:[%s3 + $0x80] sm:$0xf]
    %v1020 = vld [vmem:[%s3 + $0x84] sm:$0xf]
    %v1021 = vld [vmem:[%s3 + $0x88] sm:$0xf]
    %v1022 = vld [vmem:[%s3 + $0x8c] sm:$0xf]
    %v1023 = vld [vmem:[%s3 + $0x90] sm:$0xf]
    %v1024 = vld [vmem:[%s3 + $0x94] sm:$0xf]
    %v1025 = vld [vmem:[%s3 + $0x98] sm:$0xf]
    %v1026 = vld [vmem:[%s3 + $0x9c] sm:$0xf]
    %v1027 = vld [vmem:[%s3 + $0xa0] sm:$0xf]
    %v1028 = vld [vmem:[%s3 + $0xa4] sm:$0xf]
    %v1029 = vld [vmem:[%s3 + $0xa8] sm:$0xf]
    %v1030 = vld [vmem:[%s3 + $0xac] sm:$0xf]
    %v1031 = vld [vmem:[%s3 + $0xb0] sm:$0xf]
    %v1032 = vld [vmem:[%s3 + $0xb4] sm:$0xf]
    %v1033 = vld [vmem:[%s3 + $0xb8] sm:$0xf]
    %v1034 = vld [vmem:[%s3 + $0xbc] sm:$0xf]
    %v1035 = vld [vmem:[%s3 + $0xc0] sm:$0xf]
    %v1036 = vld [vmem:[%s3 + $0xc4] sm:$0xf]
    %v1037 = vld [vmem:[%s3 + $0xc8] sm:$0xf]
    %v1038 = vld [vmem:[%s3 + $0xcc] sm:$0xf]
    %v1039 = vld [vmem:[%s3 + $0xd0] sm:$0xf]
    %v1040 = vld [vmem:[%s3 + $0xd4] sm:$0xf]
    %v1041 = vld [vmem:[%s3 + $0xd8] sm:$0xf]
    %v1042 = vld [vmem:[%s3 + $0xdc] sm:$0xf]
    %v1043 = vld [vmem:[%s3 + $0xe0] sm:$0xf]
    %v1044 = vld [vmem:[%s3 + $0xe4] sm:$0xf]
    %v1045 = vld [vmem:[%s3 + $0xe8] sm:$0xf]
    %v1046 = vld [vmem:[%s3 + $0xec] sm:$0xf]
    %v1047 = vld [vmem:[%s3 + $0xf0] sm:$0xf]
    %v1048 = vld [vmem:[%s3 + $0xf4] sm:$0xf]
    %v1049 = vld [vmem:[%s3 + $0xf8] sm:$0xf]
    %v1050 = vld [vmem:[%s3 + $0xfc] sm:$0xf]
    %v1051 = vld [vmem:[%s3 + $0x100] sm:$0xf]
    %v1052 = vld [vmem:[%s3 + $0x104] sm:$0xf]
    %v1053 = vld [vmem:[%s3 + $0x108] sm:$0xf]
    %v1054 = vld [vmem:[%s3 + $0x10c] sm:$0xf]
    %v1055 = vld [vmem:[%s3 + $0x110] sm:$0xf]
    %v1056 = vld [vmem:[%s3 + $0x114] sm:$0xf]
    %v1057 = vld [vmem:[%s3 + $0x118] sm:$0xf]
    %v1058 = vld [vmem:[%s3 + $0x11c] sm:$0xf]
    %v1059 = vld [vmem:[%s4] sm:$0x1]
    %v1061 = vlaneseq
    %v1062 = vshrl.u32 %v1061, 7
    %v1063 = vsub.s32 0, %v1062
    %v1064 = vrot.slane %v1059, %v1063
    %v1138 = vunpack.c.l.b16 %v987
    %v1139 = vunpack.c.l.b16 %v988
    %v1140 = vunpack.c.l.b16 %v989
    %v1141 = vunpack.c.l.b16 %v990
    %v1142 = vunpack.c.l.b16 %v991
    %v1143 = vunpack.c.l.b16 %v992
    %v1144 = vunpack.c.l.b16 %v993
    %v1145 = vunpack.c.l.b16 %v994
    %v1146 = vunpack.c.l.b16 %v995
    %v1147 = vunpack.c.l.b16 %v996
    %v1148 = vunpack.c.l.b16 %v997
    %v1149 = vunpack.c.l.b16 %v998
    %v1150 = vunpack.c.l.b16 %v999
    %v1151 = vunpack.c.l.b16 %v1000
    %v1152 = vunpack.c.l.b16 %v1001
    %v1153 = vunpack.c.l.b16 %v1002
    %v1154 = vunpack.c.l.b16 %v1003
    %v1155 = vunpack.c.l.b16 %v1004
    %v1156 = vunpack.c.l.b16 %v1005
    %v1157 = vunpack.c.l.b16 %v1006
    %v1158 = vunpack.c.l.b16 %v1007
    %v1159 = vunpack.c.l.b16 %v1008
    %v1160 = vunpack.c.l.b16 %v1009
    %v1161 = vunpack.c.l.b16 %v1010
    %v1162 = vunpack.c.l.b16 %v1011
    %v1163 = vunpack.c.l.b16 %v1012
    %v1164 = vunpack.c.l.b16 %v1013
    %v1165 = vunpack.c.l.b16 %v1014
    %v1166 = vunpack.c.l.b16 %v1015
    %v1167 = vunpack.c.l.b16 %v1016
    %v1168 = vunpack.c.l.b16 %v1017
    %v1169 = vunpack.c.l.b16 %v1018
    %v1170 = vunpack.c.l.b16 %v1019
    %v1171 = vunpack.c.l.b16 %v1020
    %v1172 = vunpack.c.l.b16 %v1021
    %v1173 = vunpack.c.l.b16 %v1022
    %v1174 = vunpack.c.l.b16 %v1023
    %v1175 = vunpack.c.l.b16 %v1024
    %v1176 = vunpack.c.l.b16 %v1025
    %v1177 = vunpack.c.l.b16 %v1026
    %v1178 = vunpack.c.l.b16 %v1027
    %v1179 = vunpack.c.l.b16 %v1028
    %v1180 = vunpack.c.l.b16 %v1029
    %v1181 = vunpack.c.l.b16 %v1030
    %v1182 = vunpack.c.l.b16 %v1031
    %v1183 = vunpack.c.l.b16 %v1032
    %v1184 = vunpack.c.l.b16 %v1033
    %v1185 = vunpack.c.l.b16 %v1034
    %v1186 = vunpack.c.l.b16 %v1035
    %v1187 = vunpack.c.l.b16 %v1036
    %v1188 = vunpack.c.l.b16 %v1037
    %v1189 = vunpack.c.l.b16 %v1038
    %v1190 = vunpack.c.l.b16 %v1039
    %v1191 = vunpack.c.l.b16 %v1040
    %v1192 = vunpack.c.l.b16 %v1041
    %v1193 = vunpack.c.l.b16 %v1042
    %v1194 = vunpack.c.l.b16 %v1043
    %v1195 = vunpack.c.l.b16 %v1044
    %v1196 = vunpack.c.l.b16 %v1045
    %v1197 = vunpack.c.l.b16 %v1046
    %v1198 = vunpack.c.l.b16 %v1047
    %v1199 = vunpack.c.l.b16 %v1048
    %v1200 = vunpack.c.l.b16 %v1049
    %v1201 = vunpack.c.l.b16 %v1050
    %v1202 = vunpack.c.l.b16 %v1051
    %v1203 = vunpack.c.l.b16 %v1052
    %v1204 = vunpack.c.l.b16 %v1053
    %v1205 = vunpack.c.l.b16 %v1054
    %v1206 = vunpack.c.l.b16 %v1055
    %v1207 = vunpack.c.l.b16 %v1056
    %v1208 = vunpack.c.l.b16 %v1057
    %v1209 = vunpack.c.l.b16 %v1058
    %v1210 = vpack.c.b16 %v1139, %v1138
    %v1211 = vpack.c.b16 %v1141, %v1140
    %v1212 = vpack.c.b16 %v1143, %v1142
    %v1213 = vpack.c.b16 %v1145, %v1144
    %v1214 = vpack.c.b16 %v1147, %v1146
    %v1215 = vpack.c.b16 %v1149, %v1148
    %v1216 = vpack.c.b16 %v1151, %v1150
    %v1217 = vpack.c.b16 %v1153, %v1152
    %v1218 = vpack.c.b16 %v1155, %v1154
    %v1219 = vpack.c.b16 %v1157, %v1156
    %v1220 = vpack.c.b16 %v1159, %v1158
    %v1221 = vpack.c.b16 %v1161, %v1160
    %v1222 = vpack.c.b16 %v1163, %v1162
    %v1223 = vpack.c.b16 %v1165, %v1164
    %v1224 = vpack.c.b16 %v1167, %v1166
    %v1225 = vpack.c.b16 %v1169, %v1168
    %v1226 = vpack.c.b16 %v1171, %v1170
    %v1227 = vpack.c.b16 %v1173, %v1172
    %v1228 = vpack.c.b16 %v1175, %v1174
    %v1229 = vpack.c.b16 %v1177, %v1176
    %v1230 = vpack.c.b16 %v1179, %v1178
    %v1231 = vpack.c.b16 %v1181, %v1180
    %v1232 = vpack.c.b16 %v1183, %v1182
    %v1233 = vpack.c.b16 %v1185, %v1184
    %v1234 = vpack.c.b16 %v1187, %v1186
    %v1235 = vpack.c.b16 %v1189, %v1188
    %v1236 = vpack.c.b16 %v1191, %v1190
    %v1237 = vpack.c.b16 %v1193, %v1192
    %v1238 = vpack.c.b16 %v1195, %v1194
    %v1239 = vpack.c.b16 %v1197, %v1196
    %v1240 = vpack.c.b16 %v1199, %v1198
    %v1241 = vpack.c.b16 %v1201, %v1200
    %v1242 = vpack.c.b16 %v1203, %v1202
    %v1243 = vpack.c.b16 %v1205, %v1204
    %v1244 = vpack.c.b16 %v1207, %v1206
    %v1245 = vpack.c.b16 %v1209, %v1208
    %v1283 = vsel %vm245, %v951, 0
    %v1286 = vsel %vm245, %v956, 0
    %v1289 = vsel %vm245, %v961, 0
    %v1292 = vsel %vm245, %v966, 0
    %v1295 = vsel %vm245, %v971, 0
    %v1298 = vsel %vm245, %v976, 0
    %v1301 = vsel %vm245, %v981, 0
    %v1304 = vsel %vm245, %v986, 0
    %1306 = vmatprep.subr.bf16.mxu0 0
    %1307 = vmatpush1.bf16.msra.mxu0 %v1210
    %1308 = vmatprep.subr.bf16.mxu0 0
    %1309 = vmatpush1.bf16.msra.mxu0 %v1211
    %1310 = vmatprep.subr.bf16.mxu0 0
    %1311 = vmatpush1.bf16.msra.mxu0 %v1212
    %1312 = vmatprep.subr.bf16.mxu0 0
    %1313 = vmatpush1.bf16.msra.mxu0 %v1213
    %1314 = vmatprep.subr.bf16.mxu0 0
    %1315 = vmatpush1.bf16.msra.mxu0 %v1214
    %1316 = vmatprep.subr.bf16.mxu0 0
    %1317 = vmatpush1.bf16.msra.mxu0 %v1215
    %1318 = vmatprep.subr.bf16.mxu0 0
    %1319 = vmatpush1.bf16.msra.mxu0 %v1216
    %1320 = vmatprep.subr.bf16.mxu0 0
    %1321 = vmatpush1.bf16.msra.mxu0 %v1217
    %1322 = vmatprep.subr.bf16.mxu0 0
    %1323 = vmatpush1.bf16.msra.mxu0 %v1218
    %1324 = vmatprep.subr.bf16.mxu0 0
    %1325 = vmatpush1.bf16.msra.mxu0 %v1219
    %1326 = vmatprep.subr.bf16.mxu0 0
    %1327 = vmatpush1.bf16.msra.mxu0 %v1220
    %1328 = vmatprep.subr.bf16.mxu0 0
    %1329 = vmatpush1.bf16.msra.mxu0 %v1221
    %1330 = vmatprep.subr.bf16.mxu0 0
    %1331 = vmatpush1.bf16.msra.mxu0 %v1222
    %1332 = vmatprep.subr.bf16.mxu0 0
    %1333 = vmatpush1.bf16.msra.mxu0 %v1223
    %1334 = vmatprep.subr.bf16.mxu0 0
    %1335 = vmatpush1.bf16.msra.mxu0 %v1224
    %1336 = vmatprep.subr.bf16.mxu0 0
    %1337 = vmatpush1.bf16.msra.mxu0 %v1225
    %1338 = vmatprep.mubr.bf16.mxu0 %v948
    %1339 = vmatmul.mubr.bf16.gmra.mrb[0].mxu0 %v947
    %v1340 = vpop.f32.mrb[0].mxu0
    %v1341 = vadd.f32 %v1064, %v1340
    %v1342 = vpop.f32.mrb[0].mxu0
    %v1343 = vpop.f32.mrb[0].mxu0
    %v1344 = vadd.f32 %v1064, %v1343
    %v1345 = vpop.f32.mrb[0].mxu0
    %1346 = vmatprep.mubr.bf16.mxu0 %v953
    %1347 = vmatmul.mubr.bf16.gmra.mrb[0].mxu0 %v952
    %v1348 = vpop.f32.mrb[0].mxu0
    %v1349 = vadd.f32 %v1064, %v1348
    %v1350 = vpop.f32.mrb[0].mxu0
    %v1351 = vpop.f32.mrb[0].mxu0
    %v1352 = vadd.f32 %v1064, %v1351
    %v1353 = vpop.f32.mrb[0].mxu0
    %1354 = vmatprep.mubr.bf16.mxu0 %v958
    %1355 = vmatmul.mubr.bf16.gmra.mrb[0].mxu0 %v957
    %v1356 = vpop.f32.mrb[0].mxu0
    %v1357 = vadd.f32 %v1064, %v1356
    %v1358 = vpop.f32.mrb[0].mxu0
    %v1359 = vpop.f32.mrb[0].mxu0
    %v1360 = vadd.f32 %v1064, %v1359
    %v1361 = vpop.f32.mrb[0].mxu0
    %1362 = vmatprep.mubr.bf16.mxu0 %v963
    %1363 = vmatmul.mubr.bf16.gmra.mrb[0].mxu0 %v962
    %v1364 = vpop.f32.mrb[0].mxu0
    %v1365 = vadd.f32 %v1064, %v1364
    %v1366 = vpop.f32.mrb[0].mxu0
    %v1367 = vpop.f32.mrb[0].mxu0
    %v1368 = vadd.f32 %v1064, %v1367
    %v1369 = vpop.f32.mrb[0].mxu0
    %1370 = vmatprep.mubr.bf16.mxu0 %v968
    %1371 = vmatmul.mubr.bf16.gmra.mrb[0].mxu0 %v967
    %v1372 = vpop.f32.mrb[0].mxu0
    %v1373 = vadd.f32 %v1064, %v1372
    %v1374 = vpop.f32.mrb[0].mxu0
    %v1375 = vpop.f32.mrb[0].mxu0
    %v1376 = vadd.f32 %v1064, %v1375
    %v1377 = vpop.f32.mrb[0].mxu0
    %1378 = vmatprep.mubr.bf16.mxu0 %v973
    %1379 = vmatmul.mubr.bf16.gmra.mrb[0].mxu0 %v972
    %v1380 = vpop.f32.mrb[0].mxu0
    %v1381 = vadd.f32 %v1064, %v1380
    %v1382 = vpop.f32.mrb[0].mxu0
    %v1383 = vpop.f32.mrb[0].mxu0
    %v1384 = vadd.f32 %v1064, %v1383
    %v1385 = vpop.f32.mrb[0].mxu0
    %1386 = vmatprep.mubr.bf16.mxu0 %v978
    %1387 = vmatmul.mubr.bf16.gmra.mrb[0].mxu0 %v977
    %v1388 = vpop.f32.mrb[0].mxu0
    %v1389 = vadd.f32 %v1064, %v1388
    %v1390 = vpop.f32.mrb[0].mxu0
    %v1391 = vpop.f32.mrb[0].mxu0
    %v1392 = vadd.f32 %v1064, %v1391
    %v1393 = vpop.f32.mrb[0].mxu0
    %1394 = vmatprep.mubr.bf16.mxu0 %v983
    %1395 = vmatmul.mubr.bf16.gmra.mrb[0].mxu0 %v982
    %v1396 = vpop.f32.mrb[0].mxu0
    %v1397 = vadd.f32 %v1064, %v1396
    %v1398 = vpop.f32.mrb[0].mxu0
    %v1399 = vpop.f32.mrb[0].mxu0
    %v1400 = vadd.f32 %v1064, %v1399
    %v1401 = vpop.f32.mrb[0].mxu0
    %1402 = vdwg.mxu0
    %1403 = vmatprep.subr.bf16.mxu0 0
    %1404 = vmatpush1.bf16.msra.mxu0 %v1226
    %1405 = vmatprep.subr.bf16.mxu0 0
    %1406 = vmatpush1.bf16.msra.mxu0 %v1227
    %1407 = vmatprep.subr.bf16.mxu0 0
    %1408 = vmatpush1.bf16.msra.mxu0 %v1228
    %1409 = vmatprep.subr.bf16.mxu0 0
    %1410 = vmatpush1.bf16.msra.mxu0 %v1229
    %1411 = vmatprep.subr.bf16.mxu0 0
    %1412 = vmatpush1.bf16.msra.mxu0 %v1230
    %1413 = vmatprep.subr.bf16.mxu0 0
    %1414 = vmatpush1.bf16.msra.mxu0 %v1231
    %1415 = vmatprep.subr.bf16.mxu0 0
    %1416 = vmatpush1.bf16.msra.mxu0 %v1232
    %1417 = vmatprep.subr.bf16.mxu0 0
    %1418 = vmatpush1.bf16.msra.mxu0 %v1233
    %1419 = vmatprep.subr.bf16.mxu0 0
    %1420 = vmatpush1.bf16.msra.mxu0 %v1234
    %1421 = vmatprep.subr.bf16.mxu0 0
    %1422 = vmatpush1.bf16.msra.mxu0 %v1235
    %1423 = vmatprep.subr.bf16.mxu0 0
    %1424 = vmatpush1.bf16.msra.mxu0 %v1236
    %1425 = vmatprep.subr.bf16.mxu0 0
    %1426 = vmatpush1.bf16.msra.mxu0 %v1237
    %1427 = vmatprep.subr.bf16.mxu0 0
    %1428 = vmatpush1.bf16.msra.mxu0 %v1238
    %1429 = vmatprep.subr.bf16.mxu0 0
    %1430 = vmatpush1.bf16.msra.mxu0 %v1239
    %1431 = vmatprep.subr.bf16.mxu0 0
    %1432 = vmatpush1.bf16.msra.mxu0 %v1240
    %1433 = vmatprep.subr.bf16.mxu0 0
    %1434 = vmatpush1.bf16.msra.mxu0 %v1241
    %1435 = vmatprep.mubr.bf16.mxu0 %v950
    %1436 = vmatmul.mubr.bf16.gmra.mrb[0].mxu0 %v949
    %v1437 = vpop.f32.mrb[0].mxu0
    %v1438 = vadd.f32 %v1341, %v1437
    %v1439 = vpop.f32.mrb[0].mxu0
    %v1440 = vpop.f32.mrb[0].mxu0
    %v1441 = vadd.f32 %v1344, %v1440
    %v1442 = vpop.f32.mrb[0].mxu0
    %1443 = vmatprep.mubr.bf16.mxu0 %v955
    %1444 = vmatmul.mubr.bf16.gmra.mrb[0].mxu0 %v954
    %v1445 = vpop.f32.mrb[0].mxu0
    %v1446 = vadd.f32 %v1349, %v1445
    %v1447 = vpop.f32.mrb[0].mxu0
    %v1448 = vpop.f32.mrb[0].mxu0
    %v1449 = vadd.f32 %v1352, %v1448
    %v1450 = vpop.f32.mrb[0].mxu0
    %1451 = vmatprep.mubr.bf16.mxu0 %v960
    %1452 = vmatmul.mubr.bf16.gmra.mrb[0].mxu0 %v959
    %v1453 = vpop.f32.mrb[0].mxu0
    %v1454 = vadd.f32 %v1357, %v1453
    %v1455 = vpop.f32.mrb[0].mxu0
    %v1456 = vpop.f32.mrb[0].mxu0
    %v1457 = vadd.f32 %v1360, %v1456
    %v1458 = vpop.f32.mrb[0].mxu0
    %1459 = vmatprep.mubr.bf16.mxu0 %v965
    %1460 = vmatmul.mubr.bf16.gmra.mrb[0].mxu0 %v964
    %v1461 = vpop.f32.mrb[0].mxu0
    %v1462 = vadd.f32 %v1365, %v1461
    %v1463 = vpop.f32.mrb[0].mxu0
    %v1464 = vpop.f32.mrb[0].mxu0
    %v1465 = vadd.f32 %v1368, %v1464
    %v1466 = vpop.f32.mrb[0].mxu0
    %1467 = vmatprep.mubr.bf16.mxu0 %v970
    %1468 = vmatmul.mubr.bf16.gmra.mrb[0].mxu0 %v969
    %v1469 = vpop.f32.mrb[0].mxu0
    %v1470 = vadd.f32 %v1373, %v1469
    %v1471 = vpop.f32.mrb[0].mxu0
    %v1472 = vpop.f32.mrb[0].mxu0
    %v1473 = vadd.f32 %v1376, %v1472
    %v1474 = vpop.f32.mrb[0].mxu0
    %1475 = vmatprep.mubr.bf16.mxu0 %v975
    %1476 = vmatmul.mubr.bf16.gmra.mrb[0].mxu0 %v974
    %v1477 = vpop.f32.mrb[0].mxu0
    %v1478 = vadd.f32 %v1381, %v1477
    %v1479 = vpop.f32.mrb[0].mxu0
    %v1480 = vpop.f32.mrb[0].mxu0
    %v1481 = vadd.f32 %v1384, %v1480
    %v1482 = vpop.f32.mrb[0].mxu0
    %1483 = vmatprep.mubr.bf16.mxu0 %v980
    %1484 = vmatmul.mubr.bf16.gmra.mrb[0].mxu0 %v979
    %v1485 = vpop.f32.mrb[0].mxu0
    %v1486 = vadd.f32 %v1389, %v1485
    %v1487 = vpop.f32.mrb[0].mxu0
    %v1488 = vpop.f32.mrb[0].mxu0
    %v1489 = vadd.f32 %v1392, %v1488
    %v1490 = vpop.f32.mrb[0].mxu0
    %1491 = vmatprep.mubr.bf16.mxu0 %v985
    %1492 = vmatmul.mubr.bf16.gmra.mrb[0].mxu0 %v984
    %v1493 = vpop.f32.mrb[0].mxu0
    %v1494 = vadd.f32 %v1397, %v1493
    %v1495 = vpop.f32.mrb[0].mxu0
    %v1496 = vpop.f32.mrb[0].mxu0
    %v1497 = vadd.f32 %v1400, %v1496
    %v1498 = vpop.f32.mrb[0].mxu0
    %1499 = vdwg.mxu0
    %1500 = vmatprep.subr.bf16.mxu0 0
    %1501 = vmatpush1.bf16.msra.mxu0 %v1242
    %1502 = vmatprep.subr.bf16.mxu0 0
    %1503 = vmatpush1.bf16.msra.mxu0 %v1243
    %1504 = vmatprep.subr.bf16.mxu0 0
    %1505 = vmatpush1.bf16.msra.mxu0 %v1244
    %1506 = vmatprep.subr.bf16.mxu0 0
    %1507 = vmatpush1.bf16.msra.mxu0 %v1245
    %1508 = vmatprep.subr.bf16.mxu0 0
    %1509 = vmatpush1.bf16.msra.mxu0 0
    %1510 = vmatprep.subr.bf16.mxu0 0
    %1511 = vmatpush1.bf16.msra.mxu0 0
    %1512 = vmatprep.subr.bf16.mxu0 0
    %1513 = vmatpush1.bf16.msra.mxu0 0
    %1514 = vmatprep.subr.bf16.mxu0 0
    %1515 = vmatpush1.bf16.msra.mxu0 0
    %1516 = vmatprep.subr.bf16.mxu0 0
    %1517 = vmatpush1.bf16.msra.mxu0 0
    %1518 = vmatprep.subr.bf16.mxu0 0
    %1519 = vmatpush1.bf16.msra.mxu0 0
    %1520 = vmatprep.subr.bf16.mxu0 0
    %1521 = vmatpush1.bf16.msra.mxu0 0
    %1522 = vmatprep.subr.bf16.mxu0 0
    %1523 = vmatpush1.bf16.msra.mxu0 0
    %1524 = vmatprep.subr.bf16.mxu0 0
    %1525 = vmatpush1.bf16.msra.mxu0 0
    %1526 = vmatprep.subr.bf16.mxu0 0
    %1527 = vmatpush1.bf16.msra.mxu0 0
    %1528 = vmatprep.subr.bf16.mxu0 0
    %1529 = vmatpush1.bf16.msra.mxu0 0
    %1530 = vmatprep.subr.bf16.mxu0 0
    %1531 = vmatpush1.bf16.msra.mxu0 0
    %1532 = vmatprep.mubr.bf16.mxu0 0
    %1533 = vmatmul.mubr.bf16.gmra.mrb[0].mxu0 %v1283
    %v1534 = vpop.f32.mrb[0].mxu0
    %v1535 = vadd.f32 %v1438, %v1534
    %v1536 = vpop.f32.mrb[0].mxu0
    %v1537 = vpop.f32.mrb[0].mxu0
    %v1538 = vadd.f32 %v1441, %v1537
    %v1539 = vpop.f32.mrb[0].mxu0
    %1540 = vmatprep.mubr.bf16.mxu0 0
    %1541 = vmatmul.mubr.bf16.gmra.mrb[0].mxu0 %v1286
    %v1542 = vpop.f32.mrb[0].mxu0
    %v1543 = vadd.f32 %v1446, %v1542
    %v1544 = vpop.f32.mrb[0].mxu0
    %v1545 = vpop.f32.mrb[0].mxu0
    %v1546 = vadd.f32 %v1449, %v1545
    %v1547 = vpop.f32.mrb[0].mxu0
    %1548 = vmatprep.mubr.bf16.mxu0 0
    %1549 = vmatmul.mubr.bf16.gmra.mrb[0].mxu0 %v1289
    %v1550 = vpop.f32.mrb[0].mxu0
    %v1551 = vadd.f32 %v1454, %v1550
    %v1552 = vpop.f32.mrb[0].mxu0
    %v1553 = vpop.f32.mrb[0].mxu0
    %v1554 = vadd.f32 %v1457, %v1553
    %v1555 = vpop.f32.mrb[0].mxu0
    %1556 = vmatprep.mubr.bf16.mxu0 0
    %1557 = vmatmul.mubr.bf16.gmra.mrb[0].mxu0 %v1292
    %v1558 = vpop.f32.mrb[0].mxu0
    %v1559 = vadd.f32 %v1462, %v1558
    %v1560 = vpop.f32.mrb[0].mxu0
    %v1561 = vpop.f32.mrb[0].mxu0
    %v1562 = vadd.f32 %v1465, %v1561
    %v1563 = vpop.f32.mrb[0].mxu0
    %1564 = vmatprep.mubr.bf16.mxu0 0
    %1565 = vmatmul.mubr.bf16.gmra.mrb[0].mxu0 %v1295
    %v1566 = vpop.f32.mrb[0].mxu0
    %v1567 = vadd.f32 %v1470, %v1566
    %v1568 = vpop.f32.mrb[0].mxu0
    %v1569 = vpop.f32.mrb[0].mxu0
    %v1570 = vadd.f32 %v1473, %v1569
    %v1571 = vpop.f32.mrb[0].mxu0
    %1572 = vmatprep.mubr.bf16.mxu0 0
    %1573 = vmatmul.mubr.bf16.gmra.mrb[0].mxu0 %v1298
    %v1574 = vpop.f32.mrb[0].mxu0
    %v1575 = vadd.f32 %v1478, %v1574
    %v1576 = vpop.f32.mrb[0].mxu0
    %v1577 = vpop.f32.mrb[0].mxu0
    %v1578 = vadd.f32 %v1481, %v1577
    %v1579 = vpop.f32.mrb[0].mxu0
    %1580 = vmatprep.mubr.bf16.mxu0 0
    %1581 = vmatmul.mubr.bf16.gmra.mrb[0].mxu0 %v1301
    %v1582 = vpop.f32.mrb[0].mxu0
    %v1583 = vadd.f32 %v1486, %v1582
    %v1584 = vpop.f32.mrb[0].mxu0
    %v1585 = vpop.f32.mrb[0].mxu0
    %v1586 = vadd.f32 %v1489, %v1585
    %v1587 = vpop.f32.mrb[0].mxu0
    %1588 = vmatprep.mubr.bf16.mxu0 0
    %1589 = vmatmul.mubr.bf16.gmra.mrb[0].mxu0 %v1304
    %v1590 = vpop.f32.mrb[0].mxu0
    %v1591 = vadd.f32 %v1494, %v1590
    %v1592 = vpop.f32.mrb[0].mxu0
    %v1593 = vpop.f32.mrb[0].mxu0
    %v1594 = vadd.f32 %v1497, %v1593
    %v1595 = vpop.f32.mrb[0].mxu0
    %1596 = vdwg.mxu0
    %v1597 = vmax.f32 %v1535, 0.0
    %v1598 = vmax.f32 %v1538, 0.0
    %v1599 = vmax.f32 %v1543, 0.0
    %v1600 = vmax.f32 %v1546, 0.0
    %v1601 = vmax.f32 %v1551, 0.0
    %v1602 = vmax.f32 %v1554, 0.0
    %v1603 = vmax.f32 %v1559, 0.0
    %v1604 = vmax.f32 %v1562, 0.0
    %v1605 = vmax.f32 %v1567, 0.0
    %v1606 = vmax.f32 %v1570, 0.0
    %v1607 = vmax.f32 %v1575, 0.0
    %v1608 = vmax.f32 %v1578, 0.0
    %v1609 = vmax.f32 %v1583, 0.0
    %v1610 = vmax.f32 %v1586, 0.0
    %v1611 = vmax.f32 %v1591, 0.0
    %v1612 = vmax.f32 %v1594, 0.0
    %1613 = vst.msk [vmem:[#allocation2] sm:$0xff] %vm245, 0.0
    %1614 = vst.msk [vmem:[#allocation2 + $0x8] sm:$0x3] %vm247, 0.0
    %1615 = vst.msk [vmem:[#allocation2 + $0x10] sm:$0xff] %vm245, 0.0
    %1616 = vst.msk [vmem:[#allocation2 + $0x18] sm:$0x3] %vm247, 0.0
    %1617 = vst.msk [vmem:[#allocation2 + $0x20] sm:$0xff] %vm245, 0.0
    %1618 = vst.msk [vmem:[#allocation2 + $0x28] sm:$0x3] %vm247, 0.0
    %1619 = vst.msk [vmem:[#allocation2 + $0x30] sm:$0xff] %vm245, 0.0
    %1620 = vst.msk [vmem:[#allocation2 + $0x38] sm:$0x3] %vm247, 0.0
    %1621 = vst.msk [vmem:[#allocation2 + $0x40] sm:$0xff] %vm245, 0.0
    %1622 = vst.msk [vmem:[#allocation2 + $0x48] sm:$0x3] %vm247, 0.0
    %1623 = vst.msk [vmem:[#allocation2 + $0x50] sm:$0xff] %vm245, 0.0
    %1624 = vst.msk [vmem:[#allocation2 + $0x58] sm:$0x3] %vm247, 0.0
    %1625 = vst.msk [vmem:[#allocation2 + $0x60] sm:$0xff] %vm245, 0.0
    %1626 = vst.msk [vmem:[#allocation2 + $0x68] sm:$0x3] %vm247, 0.0
    %1627 = vst.msk [vmem:[#allocation2 + $0x70] sm:$0xff] %vm245, 0.0
    %1628 = vst.msk [vmem:[#allocation2 + $0x78] sm:$0x3] %vm247, 0.0
    %1629 = vst.msk [vmem:[#allocation2 + $0x80] sm:$0xff] %vm245, 0.0
    %1630 = vst.msk [vmem:[#allocation2 + $0x88] sm:$0x3] %vm247, 0.0
    %1631 = vst.msk [vmem:[#allocation2 + $0x90] sm:$0xff] %vm245, 0.0
    %1632 = vst.msk [vmem:[#allocation2 + $0x98] sm:$0x3] %vm247, 0.0
    %1633 = vst.msk [vmem:[#allocation2 + $0xa0] sm:$0xff] %vm245, 0.0
    %1634 = vst.msk [vmem:[#allocation2 + $0xa8] sm:$0x3] %vm247, 0.0
    %1635 = vst.msk [vmem:[#allocation2 + $0xb0] sm:$0xff] %vm245, 0.0
    %1636 = vst.msk [vmem:[#allocation2 + $0xb8] sm:$0x3] %vm247, 0.0
    %1637 = vst.msk [vmem:[#allocation2 + $0xc0] sm:$0xff] %vm245, 0.0
    %1638 = vst.msk [vmem:[#allocation2 + $0xc8] sm:$0x3] %vm247, 0.0
    %1639 = vst.msk [vmem:[#allocation2 + $0xd0] sm:$0xff] %vm245, 0.0
    %1640 = vst.msk [vmem:[#allocation2 + $0xd8] sm:$0x3] %vm247, 0.0
    %1641 = vst.msk [vmem:[#allocation2 + $0xe0] sm:$0xff] %vm245, 0.0
    %1642 = vst.msk [vmem:[#allocation2 + $0xe8] sm:$0x3] %vm247, 0.0
    %1643 = vst.msk [vmem:[#allocation2 + $0xf0] sm:$0xff] %vm245, 0.0
    %1644 = vst.msk [vmem:[#allocation2 + $0xf8] sm:$0x3] %vm247, 0.0
    %1645 = vst.msk [vmem:[#allocation2 + $0x100] sm:$0xff] %vm245, 0.0
    %1646 = vst.msk [vmem:[#allocation2 + $0x108] sm:$0x3] %vm247, 0.0
    %1647 = vst.msk [vmem:[#allocation2 + $0x110] sm:$0xff] %vm245, 0.0
    %1648 = vst.msk [vmem:[#allocation2 + $0x118] sm:$0x3] %vm247, 0.0
    %1649 = vst.msk [vmem:[#allocation2 + $0x120] sm:$0xff] %vm245, 0.0
    %1650 = vst.msk [vmem:[#allocation2 + $0x128] sm:$0x3] %vm247, 0.0
    %1651 = vst.msk [vmem:[#allocation2 + $0x130] sm:$0xff] %vm245, 0.0
    %1652 = vst.msk [vmem:[#allocation2 + $0x138] sm:$0x3] %vm247, 0.0
    %1653 = vst.msk [vmem:[%s287 + $0x1] sm:$0xff] %vm245, %v1597
    %1654 = vst.msk [vmem:[%s289 + $0x1] sm:$0xff] %vm245, %v1598
    %1655 = vst.msk [vmem:[%s291 + $0x1] sm:$0xff] %vm245, %v1599
    %1656 = vst.msk [vmem:[%s293 + $0x1] sm:$0xff] %vm245, %v1600
    %1657 = vst.msk [vmem:[%s295 + $0x1] sm:$0xff] %vm245, %v1601
    %1658 = vst.msk [vmem:[%s297 + $0x1] sm:$0xff] %vm245, %v1602
    %1659 = vst.msk [vmem:[%s299 + $0x1] sm:$0xff] %vm245, %v1603
    %1660 = vst.msk [vmem:[%s301 + $0x1] sm:$0xff] %vm245, %v1604
    %1661 = vst.msk [vmem:[%s303 + $0x1] sm:$0xff] %vm245, %v1605
    %1662 = vst.msk [vmem:[%s305 + $0x1] sm:$0xff] %vm245, %v1606
    %1663 = vst.msk [vmem:[%s307 + $0x1] sm:$0xff] %vm245, %v1607
    %1664 = vst.msk [vmem:[%s309 + $0x1] sm:$0xff] %vm245, %v1608
    %1665 = vst.msk [vmem:[%s311 + $0x1] sm:$0xff] %vm245, %v1609
    %1666 = vst.msk [vmem:[%s313 + $0x1] sm:$0xff] %vm245, %v1610
    %1667 = vst.msk [vmem:[%s315 + $0x1] sm:$0xff] %vm245, %v1611
    %1668 = vst.msk [vmem:[%s317 + $0x1] sm:$0xff] %vm245, %v1612
    %v1669 = vld [vmem:[#allocation2] sm:$0xff]
    %1670 = vst.msk [vmem:[#allocation3] sm:$0xff] %vm245, %v1669
    %v1671 = vld [vmem:[%s287] sm:$0xff]
    %1672 = vst.msk [vmem:[#allocation3 + $0x28] sm:$0xff] %vm245, %v1671
    %v1673 = vld [vmem:[%s289] sm:$0xff]
    %1674 = vst.msk [vmem:[#allocation3 + $0x50] sm:$0xff] %vm245, %v1673
    %v1675 = vld [vmem:[%s291] sm:$0xff]
    %1676 = vst.msk [vmem:[#allocation3 + $0x78] sm:$0xff] %vm245, %v1675
    %v1677 = vld [vmem:[%s293] sm:$0xff]
    %1678 = vst.msk [vmem:[#allocation3 + $0xa0] sm:$0xff] %vm245, %v1677
    %v1679 = vld [vmem:[%s295] sm:$0xff]
    %1680 = vst.msk [vmem:[#allocation3 + $0xc8] sm:$0xff] %vm245, %v1679
    %v1681 = vld [vmem:[%s297] sm:$0xff]
    %1682 = vst.msk [vmem:[#allocation3 + $0xf0] sm:$0xff] %vm245, %v1681
    %v1683 = vld [vmem:[%s299] sm:$0xff]
    %1684 = vst.msk [vmem:[#allocation3 + $0x118] sm:$0xff] %vm245, %v1683
    %v1685 = vld [vmem:[%s335] sm:$0xff]
    %1686 = vst.msk [vmem:[#allocation3 + $0x140] sm:$0xff] %vm245, %v1685
    %v1687 = vld [vmem:[%s303] sm:$0xff]
    %1688 = vst.msk [vmem:[#allocation3 + $0x168] sm:$0xff] %vm245, %v1687
    %v1689 = vld [vmem:[%s305] sm:$0xff]
    %1690 = vst.msk [vmem:[#allocation3 + $0x190] sm:$0xff] %vm245, %v1689
    %v1691 = vld [vmem:[%s307] sm:$0xff]
    %1692 = vst.msk [vmem:[#allocation3 + $0x1b8] sm:$0xff] %vm245, %v1691
    %v1693 = vld [vmem:[%s309] sm:$0xff]
    %1694 = vst.msk [vmem:[#allocation3 + $0x1e0] sm:$0xff] %vm245, %v1693
    %v1695 = vld [vmem:[%s311] sm:$0xff]
    %1696 = vst.msk [vmem:[#allocation3 + $0x208] sm:$0xff] %vm245, %v1695
    %v1697 = vld [vmem:[%s313] sm:$0xff]
    %1698 = vst.msk [vmem:[#allocation3 + $0x230] sm:$0xff] %vm245, %v1697
    %v1699 = vld [vmem:[%s315] sm:$0xff]
    %1700 = vst.msk [vmem:[#allocation3 + $0x258] sm:$0xff] %vm245, %v1699
    %v1701 = vld [vmem:[#allocation2 + $0x1] sm:$0xff]
    %1703 = vrot.lane.b32.xlu0 %v1701, 64
    %v1704 = vpop.permute.xlu0 %1703
    %1706 = vst.msk [vmem:[#allocation3] sm:$0xff] %vm357, %v1704
    %v1707 = vld [vmem:[%s287 + $0x1] sm:$0xff]
    %1709 = vrot.lane.b32.xlu0 %v1707, 64
    %v1710 = vpop.permute.xlu0 %1709
    %1712 = vst.msk [vmem:[#allocation3 + $0x28] sm:$0xff] %vm357, %v1710
    %v1713 = vld [vmem:[%s289 + $0x1] sm:$0xff]
    %1715 = vrot.lane.b32.xlu0 %v1713, 64
    %v1716 = vpop.permute.xlu0 %1715
    %1718 = vst.msk [vmem:[#allocation3 + $0x50] sm:$0xff] %vm357, %v1716
    %v1719 = vld [vmem:[%s291 + $0x1] sm:$0xff]
    %1721 = vrot.lane.b32.xlu0 %v1719, 64
    %v1722 = vpop.permute.xlu0 %1721
    %1724 = vst.msk [vmem:[#allocation3 + $0x78] sm:$0xff] %vm357, %v1722
    %v1725 = vld [vmem:[%s293 + $0x1] sm:$0xff]
    %1727 = vrot.lane.b32.xlu0 %v1725, 64
    %v1728 = vpop.permute.xlu0 %1727
    %1730 = vst.msk [vmem:[#allocation3 + $0xa0] sm:$0xff] %vm357, %v1728
    %v1731 = vld [vmem:[%s295 + $0x1] sm:$0xff]
    %1733 = vrot.lane.b32.xlu0 %v1731, 64
    %v1734 = vpop.permute.xlu0 %1733
    %1736 = vst.msk [vmem:[#allocation3 + $0xc8] sm:$0xff] %vm357, %v1734
    %v1737 = vld [vmem:[%s297 + $0x1] sm:$0xff]
    %1739 = vrot.lane.b32.xlu0 %v1737, 64
    %v1740 = vpop.permute.xlu0 %1739
    %1742 = vst.msk [vmem:[#allocation3 + $0xf0] sm:$0xff] %vm357, %v1740
    %v1743 = vld [vmem:[%s299 + $0x1] sm:$0xff]
    %1745 = vrot.lane.b32.xlu0 %v1743, 64
    %v1746 = vpop.permute.xlu0 %1745
    %1748 = vst.msk [vmem:[#allocation3 + $0x118] sm:$0xff] %vm357, %v1746
    %v1749 = vld [vmem:[%s335 + $0x1] sm:$0xff]
    %1751 = vrot.lane.b32.xlu0 %v1749, 64
    %v1752 = vpop.permute.xlu0 %1751
    %1754 = vst.msk [vmem:[#allocation3 + $0x140] sm:$0xff] %vm357, %v1752
    %v1755 = vld [vmem:[%s303 + $0x1] sm:$0xff]
    %1757 = vrot.lane.b32.xlu0 %v1755, 64
    %v1758 = vpop.permute.xlu0 %1757
    %1760 = vst.msk [vmem:[#allocation3 + $0x168] sm:$0xff] %vm357, %v1758
    %v1761 = vld [vmem:[%s305 + $0x1] sm:$0xff]
    %1763 = vrot.lane.b32.xlu0 %v1761, 64
    %v1764 = vpop.permute.xlu0 %1763
    %1766 = vst.msk [vmem:[#allocation3 + $0x190] sm:$0xff] %vm357, %v1764
    %v1767 = vld [vmem:[%s307 + $0x1] sm:$0xff]
    %1769 = vrot.lane.b32.xlu0 %v1767, 64
    %v1770 = vpop.permute.xlu0 %1769
    %1772 = vst.msk [vmem:[#allocation3 + $0x1b8] sm:$0xff] %vm357, %v1770
    %v1773 = vld [vmem:[%s309 + $0x1] sm:$0xff]
    %1775 = vrot.lane.b32.xlu0 %v1773, 64
    %v1776 = vpop.permute.xlu0 %1775
    %1778 = vst.msk [vmem:[#allocation3 + $0x1e0] sm:$0xff] %vm357, %v1776
    %v1779 = vld [vmem:[%s311 + $0x1] sm:$0xff]
    %1781 = vrot.lane.b32.xlu0 %v1779, 64
    %v1782 = vpop.permute.xlu0 %1781
    %1784 = vst.msk [vmem:[#allocation3 + $0x208] sm:$0xff] %vm357, %v1782
    %v1785 = vld [vmem:[%s313 + $0x1] sm:$0xff]
    %1787 = vrot.lane.b32.xlu0 %v1785, 64
    %v1788 = vpop.permute.xlu0 %1787
    %1790 = vst.msk [vmem:[#allocation3 + $0x230] sm:$0xff] %vm357, %v1788
    %v1791 = vld [vmem:[%s315 + $0x1] sm:$0xff]
    %1793 = vrot.lane.b32.xlu0 %v1791, 64
    %v1794 = vpop.permute.xlu0 %1793
    %1796 = vst.msk [vmem:[#allocation3 + $0x258] sm:$0xff] %vm357, %v1794
    %v1797 = vld [vmem:[#allocation2 + $0x2] sm:$0xff]
    %1798 = vst.msk [vmem:[#allocation3 + $0x8] sm:$0xff] %vm245, %v1797
    %v1799 = vld [vmem:[%s287 + $0x2] sm:$0xff]
    %1800 = vst.msk [vmem:[#allocation3 + $0x30] sm:$0xff] %vm245, %v1799
    %v1801 = vld [vmem:[%s289 + $0x2] sm:$0xff]
    %1802 = vst.msk [vmem:[#allocation3 + $0x58] sm:$0xff] %vm245, %v1801
    %v1803 = vld [vmem:[%s291 + $0x2] sm:$0xff]
    %1804 = vst.msk [vmem:[#allocation3 + $0x80] sm:$0xff] %vm245, %v1803
    %v1805 = vld [vmem:[%s293 + $0x2] sm:$0xff]
    %1806 = vst.msk [vmem:[#allocation3 + $0xa8] sm:$0xff] %vm245, %v1805
    %v1807 = vld [vmem:[%s295 + $0x2] sm:$0xff]
    %1808 = vst.msk [vmem:[#allocation3 + $0xd0] sm:$0xff] %vm245, %v1807
    %v1809 = vld [vmem:[%s297 + $0x2] sm:$0xff]
    %1810 = vst.msk [vmem:[#allocation3 + $0xf8] sm:$0xff] %vm245, %v1809
    %v1811 = vld [vmem:[%s299 + $0x2] sm:$0xff]
    %1812 = vst.msk [vmem:[#allocation3 + $0x120] sm:$0xff] %vm245, %v1811
    %v1813 = vld [vmem:[%s335 + $0x2] sm:$0xff]
    %1814 = vst.msk [vmem:[#allocation3 + $0x148] sm:$0xff] %vm245, %v1813
    %v1815 = vld [vmem:[%s303 + $0x2] sm:$0xff]
    %1816 = vst.msk [vmem:[#allocation3 + $0x170] sm:$0xff] %vm245, %v1815
    %v1817 = vld [vmem:[%s305 + $0x2] sm:$0xff]
    %1818 = vst.msk [vmem:[#allocation3 + $0x198] sm:$0xff] %vm245, %v1817
    %v1819 = vld [vmem:[%s307 + $0x2] sm:$0xff]
    %1820 = vst.msk [vmem:[#allocation3 + $0x1c0] sm:$0xff] %vm245, %v1819
    %v1821 = vld [vmem:[%s309 + $0x2] sm:$0xff]
    %1822 = vst.msk [vmem:[#allocation3 + $0x1e8] sm:$0xff] %vm245, %v1821
    %v1823 = vld [vmem:[%s311 + $0x2] sm:$0xff]
    %1824 = vst.msk [vmem:[#allocation3 + $0x210] sm:$0xff] %vm245, %v1823
    %v1825 = vld [vmem:[%s313 + $0x2] sm:$0xff]
    %1826 = vst.msk [vmem:[#allocation3 + $0x238] sm:$0xff] %vm245, %v1825
    %v1827 = vld [vmem:[%s315 + $0x2] sm:$0xff]
    %1828 = vst.msk [vmem:[#allocation3 + $0x260] sm:$0xff] %vm245, %v1827
    %v1829 = vld [vmem:[%s287] sm:$0xff]
    %1831 = vrot.lane.b32.xlu0 %v1829, 64
    %v1832 = vpop.permute.xlu0 %1831
    %1834 = vst.msk [vmem:[#allocation3 + $0x8] sm:$0xff] %vm357, %v1832
    %v1835 = vld [vmem:[%s289] sm:$0xff]
    %1837 = vrot.lane.b32.xlu0 %v1835, 64
    %v1838 = vpop.permute.xlu0 %1837
    %1840 = vst.msk [vmem:[#allocation3 + $0x30] sm:$0xff] %vm357, %v1838
    %v1841 = vld [vmem:[%s291] sm:$0xff]
    %1843 = vrot.lane.b32.xlu0 %v1841, 64
    %v1844 = vpop.permute.xlu0 %1843
    %1846 = vst.msk [vmem:[#allocation3 + $0x58] sm:$0xff] %vm357, %v1844
    %v1847 = vld [vmem:[%s293] sm:$0xff]
    %1849 = vrot.lane.b32.xlu0 %v1847, 64
    %v1850 = vpop.permute.xlu0 %1849
    %1852 = vst.msk [vmem:[#allocation3 + $0x80] sm:$0xff] %vm357, %v1850
    %v1853 = vld [vmem:[%s295] sm:$0xff]
    %1855 = vrot.lane.b32.xlu0 %v1853, 64
    %v1856 = vpop.permute.xlu0 %1855
    %1858 = vst.msk [vmem:[#allocation3 + $0xa8] sm:$0xff] %vm357, %v1856
    %v1859 = vld [vmem:[%s297] sm:$0xff]
    %1861 = vrot.lane.b32.xlu0 %v1859, 64
    %v1862 = vpop.permute.xlu0 %1861
    %1864 = vst.msk [vmem:[#allocation3 + $0xd0] sm:$0xff] %vm357, %v1862
    %v1865 = vld [vmem:[%s299] sm:$0xff]
    %1867 = vrot.lane.b32.xlu0 %v1865, 64
    %v1868 = vpop.permute.xlu0 %1867
    %1870 = vst.msk [vmem:[#allocation3 + $0xf8] sm:$0xff] %vm357, %v1868
    %v1871 = vld [vmem:[%s301] sm:$0xff]
    %1873 = vrot.lane.b32.xlu0 %v1871, 64
    %v1874 = vpop.permute.xlu0 %1873
    %1876 = vst.msk [vmem:[#allocation3 + $0x120] sm:$0xff] %vm357, %v1874
    %v1877 = vld [vmem:[%s303] sm:$0xff]
    %1879 = vrot.lane.b32.xlu0 %v1877, 64
    %v1880 = vpop.permute.xlu0 %1879
    %1882 = vst.msk [vmem:[#allocation3 + $0x148] sm:$0xff] %vm357, %v1880
    %v1883 = vld [vmem:[%s305] sm:$0xff]
    %1885 = vrot.lane.b32.xlu0 %v1883, 64
    %v1886 = vpop.permute.xlu0 %1885
    %1888 = vst.msk [vmem:[#allocation3 + $0x170] sm:$0xff] %vm357, %v1886
    %v1889 = vld [vmem:[%s307] sm:$0xff]
    %1891 = vrot.lane.b32.xlu0 %v1889, 64
    %v1892 = vpop.permute.xlu0 %1891
    %1894 = vst.msk [vmem:[#allocation3 + $0x198] sm:$0xff] %vm357, %v1892
    %v1895 = vld [vmem:[%s309] sm:$0xff]
    %1897 = vrot.lane.b32.xlu0 %v1895, 64
    %v1898 = vpop.permute.xlu0 %1897
    %1900 = vst.msk [vmem:[#allocation3 + $0x1c0] sm:$0xff] %vm357, %v1898
    %v1901 = vld [vmem:[%s311] sm:$0xff]
    %1903 = vrot.lane.b32.xlu0 %v1901, 64
    %v1904 = vpop.permute.xlu0 %1903
    %1906 = vst.msk [vmem:[#allocation3 + $0x1e8] sm:$0xff] %vm357, %v1904
    %v1907 = vld [vmem:[%s313] sm:$0xff]
    %1909 = vrot.lane.b32.xlu0 %v1907, 64
    %v1910 = vpop.permute.xlu0 %1909
    %1912 = vst.msk [vmem:[#allocation3 + $0x210] sm:$0xff] %vm357, %v1910
    %v1913 = vld [vmem:[%s315] sm:$0xff]
    %1915 = vrot.lane.b32.xlu0 %v1913, 64
    %v1916 = vpop.permute.xlu0 %1915
    %1918 = vst.msk [vmem:[#allocation3 + $0x238] sm:$0xff] %vm357, %v1916
    %v1919 = vld [vmem:[%s317] sm:$0xff]
    %1921 = vrot.lane.b32.xlu0 %v1919, 64
    %v1922 = vpop.permute.xlu0 %1921
    %1924 = vst.msk [vmem:[#allocation3 + $0x260] sm:$0xff] %vm357, %v1922
    %v1925 = vld [vmem:[%s287 + $0x1] sm:$0xff]
    %1926 = vst.msk [vmem:[#allocation3 + $0x10] sm:$0xff] %vm245, %v1925
    %v1927 = vld [vmem:[%s289 + $0x1] sm:$0xff]
    %1928 = vst.msk [vmem:[#allocation3 + $0x38] sm:$0xff] %vm245, %v1927
    %v1929 = vld [vmem:[%s291 + $0x1] sm:$0xff]
    %1930 = vst.msk [vmem:[#allocation3 + $0x60] sm:$0xff] %vm245, %v1929
    %v1931 = vld [vmem:[%s293 + $0x1] sm:$0xff]
    %1932 = vst.msk [vmem:[#allocation3 + $0x88] sm:$0xff] %vm245, %v1931
    %v1933 = vld [vmem:[%s295 + $0x1] sm:$0xff]
    %1934 = vst.msk [vmem:[#allocation3 + $0xb0] sm:$0xff] %vm245, %v1933
    %v1935 = vld [vmem:[%s297 + $0x1] sm:$0xff]
    %1936 = vst.msk [vmem:[#allocation3 + $0xd8] sm:$0xff] %vm245, %v1935
    %v1937 = vld [vmem:[%s299 + $0x1] sm:$0xff]
    %1938 = vst.msk [vmem:[#allocation3 + $0x100] sm:$0xff] %vm245, %v1937
    %v1939 = vld [vmem:[%s301 + $0x1] sm:$0xff]
    %1940 = vst.msk [vmem:[#allocation3 + $0x128] sm:$0xff] %vm245, %v1939
    %v1941 = vld [vmem:[%s303 + $0x1] sm:$0xff]
    %1942 = vst.msk [vmem:[#allocation3 + $0x150] sm:$0xff] %vm245, %v1941
    %v1943 = vld [vmem:[%s305 + $0x1] sm:$0xff]
    %1944 = vst.msk [vmem:[#allocation3 + $0x178] sm:$0xff] %vm245, %v1943
    %v1945 = vld [vmem:[%s307 + $0x1] sm:$0xff]
    %1946 = vst.msk [vmem:[#allocation3 + $0x1a0] sm:$0xff] %vm245, %v1945
    %v1947 = vld [vmem:[%s309 + $0x1] sm:$0xff]
    %1948 = vst.msk [vmem:[#allocation3 + $0x1c8] sm:$0xff] %vm245, %v1947
    %v1949 = vld [vmem:[%s311 + $0x1] sm:$0xff]
    %1950 = vst.msk [vmem:[#allocation3 + $0x1f0] sm:$0xff] %vm245, %v1949
    %v1951 = vld [vmem:[%s313 + $0x1] sm:$0xff]
    %1952 = vst.msk [vmem:[#allocation3 + $0x218] sm:$0xff] %vm245, %v1951
    %v1953 = vld [vmem:[%s315 + $0x1] sm:$0xff]
    %1954 = vst.msk [vmem:[#allocation3 + $0x240] sm:$0xff] %vm245, %v1953
    %v1955 = vld [vmem:[%s317 + $0x1] sm:$0xff]
    %1956 = vst.msk [vmem:[#allocation3 + $0x268] sm:$0xff] %vm245, %v1955
    %v1957 = vld [vmem:[%s287 + $0x2] sm:$0xff]
    %1959 = vrot.lane.b32.xlu0 %v1957, 64
    %v1960 = vpop.permute.xlu0 %1959
    %1962 = vst.msk [vmem:[#allocation3 + $0x10] sm:$0xff] %vm357, %v1960
    %v1963 = vld [vmem:[%s289 + $0x2] sm:$0xff]
    %1965 = vrot.lane.b32.xlu0 %v1963, 64
    %v1966 = vpop.permute.xlu0 %1965
    %1968 = vst.msk [vmem:[#allocation3 + $0x38] sm:$0xff] %vm357, %v1966
    %v1969 = vld [vmem:[%s291 + $0x2] sm:$0xff]
    %1971 = vrot.lane.b32.xlu0 %v1969, 64
    %v1972 = vpop.permute.xlu0 %1971
    %1974 = vst.msk [vmem:[#allocation3 + $0x60] sm:$0xff] %vm357, %v1972
    %v1975 = vld [vmem:[%s293 + $0x2] sm:$0xff]
    %1977 = vrot.lane.b32.xlu0 %v1975, 64
    %v1978 = vpop.permute.xlu0 %1977
    %1980 = vst.msk [vmem:[#allocation3 + $0x88] sm:$0xff] %vm357, %v1978
    %v1981 = vld [vmem:[%s295 + $0x2] sm:$0xff]
    %1983 = vrot.lane.b32.xlu0 %v1981, 64
    %v1984 = vpop.permute.xlu0 %1983
    %1986 = vst.msk [vmem:[#allocation3 + $0xb0] sm:$0xff] %vm357, %v1984
    %v1987 = vld [vmem:[%s297 + $0x2] sm:$0xff]
    %1989 = vrot.lane.b32.xlu0 %v1987, 64
    %v1990 = vpop.permute.xlu0 %1989
    %1992 = vst.msk [vmem:[#allocation3 + $0xd8] sm:$0xff] %vm357, %v1990
    %v1993 = vld [vmem:[%s299 + $0x2] sm:$0xff]
    %1995 = vrot.lane.b32.xlu0 %v1993, 64
    %v1996 = vpop.permute.xlu0 %1995
    %1998 = vst.msk [vmem:[#allocation3 + $0x100] sm:$0xff] %vm357, %v1996
    %v1999 = vld [vmem:[%s301 + $0x2] sm:$0xff]
    %2001 = vrot.lane.b32.xlu0 %v1999, 64
    %v2002 = vpop.permute.xlu0 %2001
    %2004 = vst.msk [vmem:[#allocation3 + $0x128] sm:$0xff] %vm357, %v2002
    %v2005 = vld [vmem:[%s303 + $0x2] sm:$0xff]
    %2007 = vrot.lane.b32.xlu0 %v2005, 64
    %v2008 = vpop.permute.xlu0 %2007
    %2010 = vst.msk [vmem:[#allocation3 + $0x150] sm:$0xff] %vm357, %v2008
    %v2011 = vld [vmem:[%s305 + $0x2] sm:$0xff]
    %2013 = vrot.lane.b32.xlu0 %v2011, 64
    %v2014 = vpop.permute.xlu0 %2013
    %2016 = vst.msk [vmem:[#allocation3 + $0x178] sm:$0xff] %vm357, %v2014
    %v2017 = vld [vmem:[%s307 + $0x2] sm:$0xff]
    %2019 = vrot.lane.b32.xlu0 %v2017, 64
    %v2020 = vpop.permute.xlu0 %2019
    %2022 = vst.msk [vmem:[#allocation3 + $0x1a0] sm:$0xff] %vm357, %v2020
    %v2023 = vld [vmem:[%s309 + $0x2] sm:$0xff]
    %2025 = vrot.lane.b32.xlu0 %v2023, 64
    %v2026 = vpop.permute.xlu0 %2025
    %2028 = vst.msk [vmem:[#allocation3 + $0x1c8] sm:$0xff] %vm357, %v2026
    %v2029 = vld [vmem:[%s311 + $0x2] sm:$0xff]
    %2031 = vrot.lane.b32.xlu0 %v2029, 64
    %v2032 = vpop.permute.xlu0 %2031
    %2034 = vst.msk [vmem:[#allocation3 + $0x1f0] sm:$0xff] %vm357, %v2032
    %v2035 = vld [vmem:[%s313 + $0x2] sm:$0xff]
    %2037 = vrot.lane.b32.xlu0 %v2035, 64
    %v2038 = vpop.permute.xlu0 %2037
    %2040 = vst.msk [vmem:[#allocation3 + $0x218] sm:$0xff] %vm357, %v2038
    %v2041 = vld [vmem:[%s315 + $0x2] sm:$0xff]
    %2043 = vrot.lane.b32.xlu0 %v2041, 64
    %v2044 = vpop.permute.xlu0 %2043
    %2046 = vst.msk [vmem:[#allocation3 + $0x240] sm:$0xff] %vm357, %v2044
    %v2047 = vld [vmem:[%s317 + $0x2] sm:$0xff]
    %2049 = vrot.lane.b32.xlu0 %v2047, 64
    %v2050 = vpop.permute.xlu0 %2049
    %2052 = vst.msk [vmem:[#allocation3 + $0x268] sm:$0xff] %vm357, %v2050
    %v2053 = vld [vmem:[%s289] sm:$0xff]
    %2054 = vst.msk [vmem:[#allocation3 + $0x18] sm:$0xff] %vm245, %v2053
    %v2055 = vld [vmem:[%s291] sm:$0xff]
    %2056 = vst.msk [vmem:[#allocation3 + $0x40] sm:$0xff] %vm245, %v2055
    %v2057 = vld [vmem:[%s293] sm:$0xff]
    %2058 = vst.msk [vmem:[#allocation3 + $0x68] sm:$0xff] %vm245, %v2057
    %v2059 = vld [vmem:[%s295] sm:$0xff]
    %2060 = vst.msk [vmem:[#allocation3 + $0x90] sm:$0xff] %vm245, %v2059
    %v2061 = vld [vmem:[%s297] sm:$0xff]
    %2062 = vst.msk [vmem:[#allocation3 + $0xb8] sm:$0xff] %vm245, %v2061
    %v2063 = vld [vmem:[%s299] sm:$0xff]
    %2064 = vst.msk [vmem:[#allocation3 + $0xe0] sm:$0xff] %vm245, %v2063
    %v2065 = vld [vmem:[%s301] sm:$0xff]
    %2066 = vst.msk [vmem:[#allocation3 + $0x108] sm:$0xff] %vm245, %v2065
    %v2067 = vld [vmem:[%s719] sm:$0xff]
    %2068 = vst.msk [vmem:[#allocation3 + $0x130] sm:$0xff] %vm245, %v2067
    %v2069 = vld [vmem:[%s305] sm:$0xff]
    %2070 = vst.msk [vmem:[#allocation3 + $0x158] sm:$0xff] %vm245, %v2069
    %v2071 = vld [vmem:[%s307] sm:$0xff]
    %2072 = vst.msk [vmem:[#allocation3 + $0x180] sm:$0xff] %vm245, %v2071
    %v2073 = vld [vmem:[%s309] sm:$0xff]
    %2074 = vst.msk [vmem:[#allocation3 + $0x1a8] sm:$0xff] %vm245, %v2073
    %v2075 = vld [vmem:[%s311] sm:$0xff]
    %2076 = vst.msk [vmem:[#allocation3 + $0x1d0] sm:$0xff] %vm245, %v2075
    %v2077 = vld [vmem:[%s313] sm:$0xff]
    %2078 = vst.msk [vmem:[#allocation3 + $0x1f8] sm:$0xff] %vm245, %v2077
    %v2079 = vld [vmem:[%s315] sm:$0xff]
    %2080 = vst.msk [vmem:[#allocation3 + $0x220] sm:$0xff] %vm245, %v2079
    %v2081 = vld [vmem:[%s317] sm:$0xff]
    %2082 = vst.msk [vmem:[#allocation3 + $0x248] sm:$0xff] %vm245, %v2081
    %v2083 = vld [vmem:[%s736] sm:$0xff]
    %2084 = vst.msk [vmem:[#allocation3 + $0x270] sm:$0xff] %vm245, %v2083
    %v2085 = vld [vmem:[%s289 + $0x1] sm:$0xff]
    %2087 = vrot.lane.b32.xlu0 %v2085, 64
    %v2088 = vpop.permute.xlu0 %2087
    %2090 = vst.msk [vmem:[#allocation3 + $0x18] sm:$0xff] %vm357, %v2088
    %v2091 = vld [vmem:[%s291 + $0x1] sm:$0xff]
    %2093 = vrot.lane.b32.xlu0 %v2091, 64
    %v2094 = vpop.permute.xlu0 %2093
    %2096 = vst.msk [vmem:[#allocation3 + $0x40] sm:$0xff] %vm357, %v2094
    %v2097 = vld [vmem:[%s293 + $0x1] sm:$0xff]
    %2099 = vrot.lane.b32.xlu0 %v2097, 64
    %v2100 = vpop.permute.xlu0 %2099
    %2102 = vst.msk [vmem:[#allocation3 + $0x68] sm:$0xff] %vm357, %v2100
    %v2103 = vld [vmem:[%s295 + $0x1] sm:$0xff]
    %2105 = vrot.lane.b32.xlu0 %v2103, 64
    %v2106 = vpop.permute.xlu0 %2105
    %2108 = vst.msk [vmem:[#allocation3 + $0x90] sm:$0xff] %vm357, %v2106
    %v2109 = vld [vmem:[%s297 + $0x1] sm:$0xff]
    %2111 = vrot.lane.b32.xlu0 %v2109, 64
    %v2112 = vpop.permute.xlu0 %2111
    %2114 = vst.msk [vmem:[#allocation3 + $0xb8] sm:$0xff] %vm357, %v2112
    %v2115 = vld [vmem:[%s299 + $0x1] sm:$0xff]
    %2117 = vrot.lane.b32.xlu0 %v2115, 64
    %v2118 = vpop.permute.xlu0 %2117
    %2120 = vst.msk [vmem:[#allocation3 + $0xe0] sm:$0xff] %vm357, %v2118
    %v2121 = vld [vmem:[%s301 + $0x1] sm:$0xff]
    %2123 = vrot.lane.b32.xlu0 %v2121, 64
    %v2124 = vpop.permute.xlu0 %2123
    %2126 = vst.msk [vmem:[#allocation3 + $0x108] sm:$0xff] %vm357, %v2124
    %v2127 = vld [vmem:[%s719 + $0x1] sm:$0xff]
    %2129 = vrot.lane.b32.xlu0 %v2127, 64
    %v2130 = vpop.permute.xlu0 %2129
    %2132 = vst.msk [vmem:[#allocation3 + $0x130] sm:$0xff] %vm357, %v2130
    %v2133 = vld [vmem:[%s305 + $0x1] sm:$0xff]
    %2135 = vrot.lane.b32.xlu0 %v2133, 64
    %v2136 = vpop.permute.xlu0 %2135
    %2138 = vst.msk [vmem:[#allocation3 + $0x158] sm:$0xff] %vm357, %v2136
    %v2139 = vld [vmem:[%s307 + $0x1] sm:$0xff]
    %2141 = vrot.lane.b32.xlu0 %v2139, 64
    %v2142 = vpop.permute.xlu0 %2141
    %2144 = vst.msk [vmem:[#allocation3 + $0x180] sm:$0xff] %vm357, %v2142
    %v2145 = vld [vmem:[%s309 + $0x1] sm:$0xff]
    %2147 = vrot.lane.b32.xlu0 %v2145, 64
    %v2148 = vpop.permute.xlu0 %2147
    %2150 = vst.msk [vmem:[#allocation3 + $0x1a8] sm:$0xff] %vm357, %v2148
    %v2151 = vld [vmem:[%s311 + $0x1] sm:$0xff]
    %2153 = vrot.lane.b32.xlu0 %v2151, 64
    %v2154 = vpop.permute.xlu0 %2153
    %2156 = vst.msk [vmem:[#allocation3 + $0x1d0] sm:$0xff] %vm357, %v2154
    %v2157 = vld [vmem:[%s313 + $0x1] sm:$0xff]
    %2159 = vrot.lane.b32.xlu0 %v2157, 64
    %v2160 = vpop.permute.xlu0 %2159
    %2162 = vst.msk [vmem:[#allocation3 + $0x1f8] sm:$0xff] %vm357, %v2160
    %v2163 = vld [vmem:[%s315 + $0x1] sm:$0xff]
    %2165 = vrot.lane.b32.xlu0 %v2163, 64
    %v2166 = vpop.permute.xlu0 %2165
    %2168 = vst.msk [vmem:[#allocation3 + $0x220] sm:$0xff] %vm357, %v2166
    %v2169 = vld [vmem:[%s317 + $0x1] sm:$0xff]
    %2171 = vrot.lane.b32.xlu0 %v2169, 64
    %v2172 = vpop.permute.xlu0 %2171
    %2174 = vst.msk [vmem:[#allocation3 + $0x248] sm:$0xff] %vm357, %v2172
    %v2175 = vld [vmem:[%s736 + $0x1] sm:$0xff]
    %2177 = vrot.lane.b32.xlu0 %v2175, 64
    %v2178 = vpop.permute.xlu0 %2177
    %2180 = vst.msk [vmem:[#allocation3 + $0x270] sm:$0xff] %vm357, %v2178
    %v2181 = vld [vmem:[%s289 + $0x2] sm:$0xff]
    %2182 = vst.msk [vmem:[#allocation3 + $0x20] sm:$0xff] %vm245, %v2181
    %v2183 = vld [vmem:[%s291 + $0x2] sm:$0xff]
    %2184 = vst.msk [vmem:[#allocation3 + $0x48] sm:$0xff] %vm245, %v2183
    %v2185 = vld [vmem:[%s293 + $0x2] sm:$0xff]
    %2186 = vst.msk [vmem:[#allocation3 + $0x70] sm:$0xff] %vm245, %v2185
    %v2187 = vld [vmem:[%s295 + $0x2] sm:$0xff]
    %2188 = vst.msk [vmem:[#allocation3 + $0x98] sm:$0xff] %vm245, %v2187
    %v2189 = vld [vmem:[%s297 + $0x2] sm:$0xff]
    %2190 = vst.msk [vmem:[#allocation3 + $0xc0] sm:$0xff] %vm245, %v2189
    %v2191 = vld [vmem:[%s299 + $0x2] sm:$0xff]
    %2192 = vst.msk [vmem:[#allocation3 + $0xe8] sm:$0xff] %vm245, %v2191
    %v2193 = vld [vmem:[%s301 + $0x2] sm:$0xff]
    %2194 = vst.msk [vmem:[#allocation3 + $0x110] sm:$0xff] %vm245, %v2193
    %v2195 = vld [vmem:[%s719 + $0x2] sm:$0xff]
    %2196 = vst.msk [vmem:[#allocation3 + $0x138] sm:$0xff] %vm245, %v2195
    %v2197 = vld [vmem:[%s305 + $0x2] sm:$0xff]
    %2198 = vst.msk [vmem:[#allocation3 + $0x160] sm:$0xff] %vm245, %v2197
    %v2199 = vld [vmem:[%s307 + $0x2] sm:$0xff]
    %2200 = vst.msk [vmem:[#allocation3 + $0x188] sm:$0xff] %vm245, %v2199
    %v2201 = vld [vmem:[%s309 + $0x2] sm:$0xff]
    %2202 = vst.msk [vmem:[#allocation3 + $0x1b0] sm:$0xff] %vm245, %v2201
    %v2203 = vld [vmem:[%s311 + $0x2] sm:$0xff]
    %2204 = vst.msk [vmem:[#allocation3 + $0x1d8] sm:$0xff] %vm245, %v2203
    %v2205 = vld [vmem:[%s313 + $0x2] sm:$0xff]
    %2206 = vst.msk [vmem:[#allocation3 + $0x200] sm:$0xff] %vm245, %v2205
    %v2207 = vld [vmem:[%s315 + $0x2] sm:$0xff]
    %2208 = vst.msk [vmem:[#allocation3 + $0x228] sm:$0xff] %vm245, %v2207
    %v2209 = vld [vmem:[%s317 + $0x2] sm:$0xff]
    %2210 = vst.msk [vmem:[#allocation3 + $0x250] sm:$0xff] %vm245, %v2209
    %v2211 = vld [vmem:[%s736 + $0x2] sm:$0xff]
    %2212 = vst.msk [vmem:[#allocation3 + $0x278] sm:$0xff] %vm245, %v2211
    %v2213 = vld [vmem:[#allocation3] sm:$0xff]
    %v2214 = vld [vmem:[#allocation3 + $0x8] sm:$0xff]
    %v2215 = vld [vmem:[#allocation3 + $0x10] sm:$0xff]
    %v2216 = vld [vmem:[#allocation3 + $0x18] sm:$0xff]
    %v2217 = vld [vmem:[#allocation3 + $0x20] sm:$0xff]
    %v2218 = vld [vmem:[#allocation3 + $0x28] sm:$0xff]
    %v2219 = vld [vmem:[#allocation3 + $0x30] sm:$0xff]
    %v2220 = vld [vmem:[#allocation3 + $0x38] sm:$0xff]
    %v2221 = vld [vmem:[#allocation3 + $0x40] sm:$0xff]
    %v2222 = vld [vmem:[#allocation3 + $0x48] sm:$0xff]
    %v2223 = vld [vmem:[#allocation3 + $0x50] sm:$0xff]
    %v2224 = vld [vmem:[#allocation3 + $0x58] sm:$0xff]
    %v2225 = vld [vmem:[#allocation3 + $0x60] sm:$0xff]
    %v2226 = vld [vmem:[#allocation3 + $0x68] sm:$0xff]
    %v2227 = vld [vmem:[#allocation3 + $0x70] sm:$0xff]
    %v2228 = vld [vmem:[#allocation3 + $0x78] sm:$0xff]
    %v2229 = vld [vmem:[#allocation3 + $0x80] sm:$0xff]
    %v2230 = vld [vmem:[#allocation3 + $0x88] sm:$0xff]
    %v2231 = vld [vmem:[#allocation3 + $0x90] sm:$0xff]
    %v2232 = vld [vmem:[#allocation3 + $0x98] sm:$0xff]
    %v2233 = vld [vmem:[#allocation3 + $0xa0] sm:$0xff]
    %v2234 = vld [vmem:[#allocation3 + $0xa8] sm:$0xff]
    %v2235 = vld [vmem:[#allocation3 + $0xb0] sm:$0xff]
    %v2236 = vld [vmem:[#allocation3 + $0xb8] sm:$0xff]
    %v2237 = vld [vmem:[#allocation3 + $0xc0] sm:$0xff]
    %v2238 = vld [vmem:[#allocation3 + $0xc8] sm:$0xff]
    %v2239 = vld [vmem:[#allocation3 + $0xd0] sm:$0xff]
    %v2240 = vld [vmem:[#allocation3 + $0xd8] sm:$0xff]
    %v2241 = vld [vmem:[#allocation3 + $0xe0] sm:$0xff]
    %v2242 = vld [vmem:[#allocation3 + $0xe8] sm:$0xff]
    %v2243 = vld [vmem:[#allocation3 + $0xf0] sm:$0xff]
    %v2244 = vld [vmem:[#allocation3 + $0xf8] sm:$0xff]
    %v2245 = vld [vmem:[#allocation3 + $0x100] sm:$0xff]
    %v2246 = vld [vmem:[#allocation3 + $0x108] sm:$0xff]
    %v2247 = vld [vmem:[#allocation3 + $0x110] sm:$0xff]
    %v2248 = vld [vmem:[#allocation3 + $0x118] sm:$0xff]
    %v2249 = vld [vmem:[#allocation3 + $0x120] sm:$0xff]
    %v2250 = vld [vmem:[#allocation3 + $0x128] sm:$0xff]
    %v2251 = vld [vmem:[#allocation3 + $0x130] sm:$0xff]
    %v2252 = vld [vmem:[#allocation3 + $0x138] sm:$0xff]
    %v2253 = vld [vmem:[#allocation3 + $0x140] sm:$0xff]
    %v2254 = vld [vmem:[#allocation3 + $0x148] sm:$0xff]
    %v2255 = vld [vmem:[#allocation3 + $0x150] sm:$0xff]
    %v2256 = vld [vmem:[#allocation3 + $0x158] sm:$0xff]
    %v2257 = vld [vmem:[#allocation3 + $0x160] sm:$0xff]
    %v2258 = vld [vmem:[#allocation3 + $0x168] sm:$0xff]
    %v2259 = vld [vmem:[#allocation3 + $0x170] sm:$0xff]
    %v2260 = vld [vmem:[#allocation3 + $0x178] sm:$0xff]
    %v2261 = vld [vmem:[#allocation3 + $0x180] sm:$0xff]
    %v2262 = vld [vmem:[#allocation3 + $0x188] sm:$0xff]
    %v2263 = vld [vmem:[#allocation3 + $0x190] sm:$0xff]
    %v2264 = vld [vmem:[#allocation3 + $0x198] sm:$0xff]
    %v2265 = vld [vmem:[#allocation3 + $0x1a0] sm:$0xff]
    %v2266 = vld [vmem:[#allocation3 + $0x1a8] sm:$0xff]
    %v2267 = vld [vmem:[#allocation3 + $0x1b0] sm:$0xff]
    %v2268 = vld [vmem:[#allocation3 + $0x1b8] sm:$0xff]
    %v2269 = vld [vmem:[#allocation3 + $0x1c0] sm:$0xff]
    %v2270 = vld [vmem:[#allocation3 + $0x1c8] sm:$0xff]
    %v2271 = vld [vmem:[#allocation3 + $0x1d0] sm:$0xff]
    %v2272 = vld [vmem:[#allocation3 + $0x1d8] sm:$0xff]
    %v2273 = vld [vmem:[#allocation3 + $0x1e0] sm:$0xff]
    %v2274 = vld [vmem:[#allocation3 + $0x1e8] sm:$0xff]
    %v2275 = vld [vmem:[#allocation3 + $0x1f0] sm:$0xff]
    %v2276 = vld [vmem:[#allocation3 + $0x1f8] sm:$0xff]
    %v2277 = vld [vmem:[#allocation3 + $0x200] sm:$0xff]
    %v2278 = vld [vmem:[#allocation3 + $0x208] sm:$0xff]
    %v2279 = vld [vmem:[#allocation3 + $0x210] sm:$0xff]
    %v2280 = vld [vmem:[#allocation3 + $0x218] sm:$0xff]
    %v2281 = vld [vmem:[#allocation3 + $0x220] sm:$0xff]
    %v2282 = vld [vmem:[#allocation3 + $0x228] sm:$0xff]
    %v2283 = vld [vmem:[#allocation3 + $0x230] sm:$0xff]
    %v2284 = vld [vmem:[#allocation3 + $0x238] sm:$0xff]
    %v2285 = vld [vmem:[#allocation3 + $0x240] sm:$0xff]
    %v2286 = vld [vmem:[#allocation3 + $0x248] sm:$0xff]
    %v2287 = vld [vmem:[#allocation3 + $0x250] sm:$0xff]
    %v2288 = vld [vmem:[#allocation3 + $0x258] sm:$0xff]
    %v2289 = vld [vmem:[#allocation3 + $0x260] sm:$0xff]
    %v2290 = vld [vmem:[#allocation3 + $0x268] sm:$0xff]
    %v2291 = vld [vmem:[#allocation3 + $0x270] sm:$0xff]
    %v2292 = vld [vmem:[#allocation3 + $0x278] sm:$0xff]
    %v2293 = vpack.c.bf16 %v2218, %v2213
    %v2294 = vpack.c.bf16 %v2219, %v2214
    %v2295 = vpack.c.bf16 %v2220, %v2215
    %v2296 = vpack.c.bf16 %v2221, %v2216
    %v2297 = vpack.c.bf16 %v2222, %v2217
    %v2298 = vpack.c.bf16 %v2228, %v2223
    %v2299 = vpack.c.bf16 %v2229, %v2224
    %v2300 = vpack.c.bf16 %v2230, %v2225
    %v2301 = vpack.c.bf16 %v2231, %v2226
    %v2302 = vpack.c.bf16 %v2232, %v2227
    %v2303 = vpack.c.bf16 %v2238, %v2233
    %v2304 = vpack.c.bf16 %v2239, %v2234
    %v2305 = vpack.c.bf16 %v2240, %v2235
    %v2306 = vpack.c.bf16 %v2241, %v2236
    %v2307 = vpack.c.bf16 %v2242, %v2237
    %v2308 = vpack.c.bf16 %v2248, %v2243
    %v2309 = vpack.c.bf16 %v2249, %v2244
    %v2310 = vpack.c.bf16 %v2250, %v2245
    %v2311 = vpack.c.bf16 %v2251, %v2246
    %v2312 = vpack.c.bf16 %v2252, %v2247
    %v2313 = vpack.c.bf16 %v2258, %v2253
    %v2314 = vpack.c.bf16 %v2259, %v2254
    %v2315 = vpack.c.bf16 %v2260, %v2255
    %v2316 = vpack.c.bf16 %v2261, %v2256
    %v2317 = vpack.c.bf16 %v2262, %v2257
    %v2318 = vpack.c.bf16 %v2268, %v2263
    %v2319 = vpack.c.bf16 %v2269, %v2264
    %v2320 = vpack.c.bf16 %v2270, %v2265
    %v2321 = vpack.c.bf16 %v2271, %v2266
    %v2322 = vpack.c.bf16 %v2272, %v2267
    %v2323 = vpack.c.bf16 %v2278, %v2273
    %v2324 = vpack.c.bf16 %v2279, %v2274
    %v2325 = vpack.c.bf16 %v2280, %v2275
    %v2326 = vpack.c.bf16 %v2281, %v2276
    %v2327 = vpack.c.bf16 %v2282, %v2277
    %v2328 = vpack.c.bf16 %v2288, %v2283
    %v2329 = vpack.c.bf16 %v2289, %v2284
    %v2330 = vpack.c.bf16 %v2290, %v2285
    %v2331 = vpack.c.bf16 %v2291, %v2286
    %v2332 = vpack.c.bf16 %v2292, %v2287
    %v2333 = vld [vmem:[%s5] sm:$0xf]
    %v2334 = vld [vmem:[%s5 + $0x4] sm:$0xf]
    %v2335 = vld [vmem:[%s5 + $0x8] sm:$0xf]
    %v2336 = vld [vmem:[%s5 + $0xc] sm:$0xf]
    %v2337 = vld [vmem:[%s5 + $0x10] sm:$0xf]
    %v2338 = vld [vmem:[%s5 + $0x14] sm:$0xf]
    %v2339 = vld [vmem:[%s5 + $0x18] sm:$0xf]
    %v2340 = vld [vmem:[%s5 + $0x1c] sm:$0xf]
    %v2341 = vld [vmem:[%s5 + $0x20] sm:$0xf]
    %v2342 = vld [vmem:[%s5 + $0x24] sm:$0xf]
    %v2343 = vld [vmem:[%s5 + $0x28] sm:$0xf]
    %v2344 = vld [vmem:[%s5 + $0x2c] sm:$0xf]
    %v2345 = vld [vmem:[%s5 + $0x30] sm:$0xf]
    %v2346 = vld [vmem:[%s5 + $0x34] sm:$0xf]
    %v2347 = vld [vmem:[%s5 + $0x38] sm:$0xf]
    %v2348 = vld [vmem:[%s5 + $0x3c] sm:$0xf]
    %v2349 = vld [vmem:[%s5 + $0x40] sm:$0xf]
    %v2350 = vld [vmem:[%s5 + $0x44] sm:$0xf]
    %v2351 = vld [vmem:[%s5 + $0x48] sm:$0xf]
    %v2352 = vld [vmem:[%s5 + $0x4c] sm:$0xf]
    %v2353 = vld [vmem:[%s5 + $0x50] sm:$0xf]
    %v2354 = vld [vmem:[%s5 + $0x54] sm:$0xf]
    %v2355 = vld [vmem:[%s5 + $0x58] sm:$0xf]
    %v2356 = vld [vmem:[%s5 + $0x5c] sm:$0xf]
    %v2357 = vld [vmem:[%s5 + $0x60] sm:$0xf]
    %v2358 = vld [vmem:[%s5 + $0x64] sm:$0xf]
    %v2359 = vld [vmem:[%s5 + $0x68] sm:$0xf]
    %v2360 = vld [vmem:[%s5 + $0x6c] sm:$0xf]
    %v2361 = vld [vmem:[%s5 + $0x70] sm:$0xf]
    %v2362 = vld [vmem:[%s5 + $0x74] sm:$0xf]
    %v2363 = vld [vmem:[%s5 + $0x78] sm:$0xf]
    %v2364 = vld [vmem:[%s5 + $0x7c] sm:$0xf]
    %v2365 = vld [vmem:[%s5 + $0x80] sm:$0xf]
    %v2366 = vld [vmem:[%s5 + $0x84] sm:$0xf]
    %v2367 = vld [vmem:[%s5 + $0x88] sm:$0xf]
    %v2368 = vld [vmem:[%s5 + $0x8c] sm:$0xf]
    %v2369 = vld [vmem:[%s5 + $0x90] sm:$0xf]
    %v2370 = vld [vmem:[%s5 + $0x94] sm:$0xf]
    %v2371 = vld [vmem:[%s5 + $0x98] sm:$0xf]
    %v2372 = vld [vmem:[%s5 + $0x9c] sm:$0xf]
    %v2373 = vld [vmem:[%s5 + $0xa0] sm:$0xf]
    %v2374 = vld [vmem:[%s5 + $0xa4] sm:$0xf]
    %v2375 = vld [vmem:[%s5 + $0xa8] sm:$0xf]
    %v2376 = vld [vmem:[%s5 + $0xac] sm:$0xf]
    %v2377 = vld [vmem:[%s5 + $0xb0] sm:$0xf]
    %v2378 = vld [vmem:[%s5 + $0xb4] sm:$0xf]
    %v2379 = vld [vmem:[%s5 + $0xb8] sm:$0xf]
    %v2380 = vld [vmem:[%s5 + $0xbc] sm:$0xf]
    %v2381 = vld [vmem:[%s5 + $0xc0] sm:$0xf]
    %v2382 = vld [vmem:[%s5 + $0xc4] sm:$0xf]
    %v2383 = vld [vmem:[%s5 + $0xc8] sm:$0xf]
    %v2384 = vld [vmem:[%s5 + $0xcc] sm:$0xf]
    %v2385 = vld [vmem:[%s5 + $0xd0] sm:$0xf]
    %v2386 = vld [vmem:[%s5 + $0xd4] sm:$0xf]
    %v2387 = vld [vmem:[%s5 + $0xd8] sm:$0xf]
    %v2388 = vld [vmem:[%s5 + $0xdc] sm:$0xf]
    %v2389 = vld [vmem:[%s5 + $0xe0] sm:$0xf]
    %v2390 = vld [vmem:[%s5 + $0xe4] sm:$0xf]
    %v2391 = vld [vmem:[%s5 + $0xe8] sm:$0xf]
    %v2392 = vld [vmem:[%s5 + $0xec] sm:$0xf]
    %v2393 = vld [vmem:[%s5 + $0xf0] sm:$0xf]
    %v2394 = vld [vmem:[%s5 + $0xf4] sm:$0xf]
    %v2395 = vld [vmem:[%s5 + $0xf8] sm:$0xf]
    %v2396 = vld [vmem:[%s5 + $0xfc] sm:$0xf]
    %v2397 = vld [vmem:[%s5 + $0x100] sm:$0xf]
    %v2398 = vld [vmem:[%s5 + $0x104] sm:$0xf]
    %v2399 = vld [vmem:[%s5 + $0x108] sm:$0xf]
    %v2400 = vld [vmem:[%s5 + $0x10c] sm:$0xf]
    %v2401 = vld [vmem:[%s5 + $0x110] sm:$0xf]
    %v2402 = vld [vmem:[%s5 + $0x114] sm:$0xf]
    %v2403 = vld [vmem:[%s5 + $0x118] sm:$0xf]
    %v2404 = vld [vmem:[%s5 + $0x11c] sm:$0xf]
    %v2405 = vld [vmem:[%s6] sm:$0x1]
    %v2407 = vlaneseq
    %v2408 = vshrl.u32 %v2407, 7
    %v2409 = vsub.s32 0, %v2408
    %v2410 = vrot.slane %v2405, %v2409
    %v2484 = vunpack.c.l.b16 %v2333
    %v2485 = vunpack.c.l.b16 %v2334
    %v2486 = vunpack.c.l.b16 %v2335
    %v2487 = vunpack.c.l.b16 %v2336
    %v2488 = vunpack.c.l.b16 %v2337
    %v2489 = vunpack.c.l.b16 %v2338
    %v2490 = vunpack.c.l.b16 %v2339
    %v2491 = vunpack.c.l.b16 %v2340
    %v2492 = vunpack.c.l.b16 %v2341
    %v2493 = vunpack.c.l.b16 %v2342
    %v2494 = vunpack.c.l.b16 %v2343
    %v2495 = vunpack.c.l.b16 %v2344
    %v2496 = vunpack.c.l.b16 %v2345
    %v2497 = vunpack.c.l.b16 %v2346
    %v2498 = vunpack.c.l.b16 %v2347
    %v2499 = vunpack.c.l.b16 %v2348
    %v2500 = vunpack.c.l.b16 %v2349
    %v2501 = vunpack.c.l.b16 %v2350
    %v2502 = vunpack.c.l.b16 %v2351
    %v2503 = vunpack.c.l.b16 %v2352
    %v2504 = vunpack.c.l.b16 %v2353
    %v2505 = vunpack.c.l.b16 %v2354
    %v2506 = vunpack.c.l.b16 %v2355
    %v2507 = vunpack.c.l.b16 %v2356
    %v2508 = vunpack.c.l.b16 %v2357
    %v2509 = vunpack.c.l.b16 %v2358
    %v2510 = vunpack.c.l.b16 %v2359
    %v2511 = vunpack.c.l.b16 %v2360
    %v2512 = vunpack.c.l.b16 %v2361
    %v2513 = vunpack.c.l.b16 %v2362
    %v2514 = vunpack.c.l.b16 %v2363
    %v2515 = vunpack.c.l.b16 %v2364
    %v2516 = vunpack.c.l.b16 %v2365
    %v2517 = vunpack.c.l.b16 %v2366
    %v2518 = vunpack.c.l.b16 %v2367
    %v2519 = vunpack.c.l.b16 %v2368
    %v2520 = vunpack.c.l.b16 %v2369
    %v2521 = vunpack.c.l.b16 %v2370
    %v2522 = vunpack.c.l.b16 %v2371
    %v2523 = vunpack.c.l.b16 %v2372
    %v2524 = vunpack.c.l.b16 %v2373
    %v2525 = vunpack.c.l.b16 %v2374
    %v2526 = vunpack.c.l.b16 %v2375
    %v2527 = vunpack.c.l.b16 %v2376
    %v2528 = vunpack.c.l.b16 %v2377
    %v2529 = vunpack.c.l.b16 %v2378
    %v2530 = vunpack.c.l.b16 %v2379
    %v2531 = vunpack.c.l.b16 %v2380
    %v2532 = vunpack.c.l.b16 %v2381
    %v2533 = vunpack.c.l.b16 %v2382
    %v2534 = vunpack.c.l.b16 %v2383
    %v2535 = vunpack.c.l.b16 %v2384
    %v2536 = vunpack.c.l.b16 %v2385
    %v2537 = vunpack.c.l.b16 %v2386
    %v2538 = vunpack.c.l.b16 %v2387
    %v2539 = vunpack.c.l.b16 %v2388
    %v2540 = vunpack.c.l.b16 %v2389
    %v2541 = vunpack.c.l.b16 %v2390
    %v2542 = vunpack.c.l.b16 %v2391
    %v2543 = vunpack.c.l.b16 %v2392
    %v2544 = vunpack.c.l.b16 %v2393
    %v2545 = vunpack.c.l.b16 %v2394
    %v2546 = vunpack.c.l.b16 %v2395
    %v2547 = vunpack.c.l.b16 %v2396
    %v2548 = vunpack.c.l.b16 %v2397
    %v2549 = vunpack.c.l.b16 %v2398
    %v2550 = vunpack.c.l.b16 %v2399
    %v2551 = vunpack.c.l.b16 %v2400
    %v2552 = vunpack.c.l.b16 %v2401
    %v2553 = vunpack.c.l.b16 %v2402
    %v2554 = vunpack.c.l.b16 %v2403
    %v2555 = vunpack.c.l.b16 %v2404
    %v2556 = vpack.c.b16 %v2485, %v2484
    %v2557 = vpack.c.b16 %v2487, %v2486
    %v2558 = vpack.c.b16 %v2489, %v2488
    %v2559 = vpack.c.b16 %v2491, %v2490
    %v2560 = vpack.c.b16 %v2493, %v2492
    %v2561 = vpack.c.b16 %v2495, %v2494
    %v2562 = vpack.c.b16 %v2497, %v2496
    %v2563 = vpack.c.b16 %v2499, %v2498
    %v2564 = vpack.c.b16 %v2501, %v2500
    %v2565 = vpack.c.b16 %v2503, %v2502
    %v2566 = vpack.c.b16 %v2505, %v2504
    %v2567 = vpack.c.b16 %v2507, %v2506
    %v2568 = vpack.c.b16 %v2509, %v2508
    %v2569 = vpack.c.b16 %v2511, %v2510
    %v2570 = vpack.c.b16 %v2513, %v2512
    %v2571 = vpack.c.b16 %v2515, %v2514
    %v2572 = vpack.c.b16 %v2517, %v2516
    %v2573 = vpack.c.b16 %v2519, %v2518
    %v2574 = vpack.c.b16 %v2521, %v2520
    %v2575 = vpack.c.b16 %v2523, %v2522
    %v2576 = vpack.c.b16 %v2525, %v2524
    %v2577 = vpack.c.b16 %v2527, %v2526
    %v2578 = vpack.c.b16 %v2529, %v2528
    %v2579 = vpack.c.b16 %v2531, %v2530
    %v2580 = vpack.c.b16 %v2533, %v2532
    %v2581 = vpack.c.b16 %v2535, %v2534
    %v2582 = vpack.c.b16 %v2537, %v2536
    %v2583 = vpack.c.b16 %v2539, %v2538
    %v2584 = vpack.c.b16 %v2541, %v2540
    %v2585 = vpack.c.b16 %v2543, %v2542
    %v2586 = vpack.c.b16 %v2545, %v2544
    %v2587 = vpack.c.b16 %v2547, %v2546
    %v2588 = vpack.c.b16 %v2549, %v2548
    %v2589 = vpack.c.b16 %v2551, %v2550
    %v2590 = vpack.c.b16 %v2553, %v2552
    %v2591 = vpack.c.b16 %v2555, %v2554
    %v2629 = vsel %vm245, %v2297, 0
    %v2632 = vsel %vm245, %v2302, 0
    %v2635 = vsel %vm245, %v2307, 0
    %v2638 = vsel %vm245, %v2312, 0
    %v2641 = vsel %vm245, %v2317, 0
    %v2644 = vsel %vm245, %v2322, 0
    %v2647 = vsel %vm245, %v2327, 0
    %v2650 = vsel %vm245, %v2332, 0
    %2652 = vmatprep.subr.bf16.mxu0 0
    %2653 = vmatpush1.bf16.msra.mxu0 %v2556
    %2654 = vmatprep.subr.bf16.mxu0 0
    %2655 = vmatpush1.bf16.msra.mxu0 %v2557
    %2656 = vmatprep.subr.bf16.mxu0 0
    %2657 = vmatpush1.bf16.msra.mxu0 %v2558
    %2658 = vmatprep.subr.bf16.mxu0 0
    %2659 = vmatpush1.bf16.msra.mxu0 %v2559
    %2660 = vmatprep.subr.bf16.mxu0 0
    %2661 = vmatpush1.bf16.msra.mxu0 %v2560
    %2662 = vmatprep.subr.bf16.mxu0 0
    %2663 = vmatpush1.bf16.msra.mxu0 %v2561
    %2664 = vmatprep.subr.bf16.mxu0 0
    %2665 = vmatpush1.bf16.msra.mxu0 %v2562
    %2666 = vmatprep.subr.bf16.mxu0 0
    %2667 = vmatpush1.bf16.msra.mxu0 %v2563
    %2668 = vmatprep.subr.bf16.mxu0 0
    %2669 = vmatpush1.bf16.msra.mxu0 %v2564
    %2670 = vmatprep.subr.bf16.mxu0 0
    %2671 = vmatpush1.bf16.msra.mxu0 %v2565
    %2672 = vmatprep.subr.bf16.mxu0 0
    %2673 = vmatpush1.bf16.msra.mxu0 %v2566
    %2674 = vmatprep.subr.bf16.mxu0 0
    %2675 = vmatpush1.bf16.msra.mxu0 %v2567
    %2676 = vmatprep.subr.bf16.mxu0 0
    %2677 = vmatpush1.bf16.msra.mxu0 %v2568
    %2678 = vmatprep.subr.bf16.mxu0 0
    %2679 = vmatpush1.bf16.msra.mxu0 %v2569
    %2680 = vmatprep.subr.bf16.mxu0 0
    %2681 = vmatpush1.bf16.msra.mxu0 %v2570
    %2682 = vmatprep.subr.bf16.mxu0 0
    %2683 = vmatpush1.bf16.msra.mxu0 %v2571
    %2684 = vmatprep.mubr.bf16.mxu0 %v2294
    %2685 = vmatmul.mubr.bf16.gmra.mrb[0].mxu0 %v2293
    %v2686 = vpop.f32.mrb[0].mxu0
    %v2687 = vadd.f32 %v2410, %v2686
    %v2688 = vpop.f32.mrb[0].mxu0
    %v2689 = vpop.f32.mrb[0].mxu0
    %v2690 = vadd.f32 %v2410, %v2689
    %v2691 = vpop.f32.mrb[0].mxu0
    %2692 = vmatprep.mubr.bf16.mxu0 %v2299
    %2693 = vmatmul.mubr.bf16.gmra.mrb[0].mxu0 %v2298
    %v2694 = vpop.f32.mrb[0].mxu0
    %v2695 = vadd.f32 %v2410, %v2694
    %v2696 = vpop.f32.mrb[0].mxu0
    %v2697 = vpop.f32.mrb[0].mxu0
    %v2698 = vadd.f32 %v2410, %v2697
    %v2699 = vpop.f32.mrb[0].mxu0
    %2700 = vmatprep.mubr.bf16.mxu0 %v2304
    %2701 = vmatmul.mubr.bf16.gmra.mrb[0].mxu0 %v2303
    %v2702 = vpop.f32.mrb[0].mxu0
    %v2703 = vadd.f32 %v2410, %v2702
    %v2704 = vpop.f32.mrb[0].mxu0
    %v2705 = vpop.f32.mrb[0].mxu0
    %v2706 = vadd.f32 %v2410, %v2705
    %v2707 = vpop.f32.mrb[0].mxu0
    %2708 = vmatprep.mubr.bf16.mxu0 %v2309
    %2709 = vmatmul.mubr.bf16.gmra.mrb[0].mxu0 %v2308
    %v2710 = vpop.f32.mrb[0].mxu0
    %v2711 = vadd.f32 %v2410, %v2710
    %v2712 = vpop.f32.mrb[0].mxu0
    %v2713 = vpop.f32.mrb[0].mxu0
    %v2714 = vadd.f32 %v2410, %v2713
    %v2715 = vpop.f32.mrb[0].mxu0
    %2716 = vmatprep.mubr.bf16.mxu0 %v2314
    %2717 = vmatmul.mubr.bf16.gmra.mrb[0].mxu0 %v2313
    %v2718 = vpop.f32.mrb[0].mxu0
    %v2719 = vadd.f32 %v2410, %v2718
    %v2720 = vpop.f32.mrb[0].mxu0
    %v2721 = vpop.f32.mrb[0].mxu0
    %v2722 = vadd.f32 %v2410, %v2721
    %v2723 = vpop.f32.mrb[0].mxu0
    %2724 = vmatprep.mubr.bf16.mxu0 %v2319
    %2725 = vmatmul.mubr.bf16.gmra.mrb[0].mxu0 %v2318
    %v2726 = vpop.f32.mrb[0].mxu0
    %v2727 = vadd.f32 %v2410, %v2726
    %v2728 = vpop.f32.mrb[0].mxu0
    %v2729 = vpop.f32.mrb[0].mxu0
    %v2730 = vadd.f32 %v2410, %v2729
    %v2731 = vpop.f32.mrb[0].mxu0
    %2732 = vmatprep.mubr.bf16.mxu0 %v2324
    %2733 = vmatmul.mubr.bf16.gmra.mrb[0].mxu0 %v2323
    %v2734 = vpop.f32.mrb[0].mxu0
    %v2735 = vadd.f32 %v2410, %v2734
    %v2736 = vpop.f32.mrb[0].mxu0
    %v2737 = vpop.f32.mrb[0].mxu0
    %v2738 = vadd.f32 %v2410, %v2737
    %v2739 = vpop.f32.mrb[0].mxu0
    %2740 = vmatprep.mubr.bf16.mxu0 %v2329
    %2741 = vmatmul.mubr.bf16.gmra.mrb[0].mxu0 %v2328
    %v2742 = vpop.f32.mrb[0].mxu0
    %v2743 = vadd.f32 %v2410, %v2742
    %v2744 = vpop.f32.mrb[0].mxu0
    %v2745 = vpop.f32.mrb[0].mxu0
    %v2746 = vadd.f32 %v2410, %v2745
    %v2747 = vpop.f32.mrb[0].mxu0
    %2748 = vdwg.mxu0
    %2749 = vmatprep.subr.bf16.mxu0 0
    %2750 = vmatpush1.bf16.msra.mxu0 %v2572
    %2751 = vmatprep.subr.bf16.mxu0 0
    %2752 = vmatpush1.bf16.msra.mxu0 %v2573
    %2753 = vmatprep.subr.bf16.mxu0 0
    %2754 = vmatpush1.bf16.msra.mxu0 %v2574
    %2755 = vmatprep.subr.bf16.mxu0 0
    %2756 = vmatpush1.bf16.msra.mxu0 %v2575
    %2757 = vmatprep.subr.bf16.mxu0 0
    %2758 = vmatpush1.bf16.msra.mxu0 %v2576
    %2759 = vmatprep.subr.bf16.mxu0 0
    %2760 = vmatpush1.bf16.msra.mxu0 %v2577
    %2761 = vmatprep.subr.bf16.mxu0 0
    %2762 = vmatpush1.bf16.msra.mxu0 %v2578
    %2763 = vmatprep.subr.bf16.mxu0 0
    %2764 = vmatpush1.bf16.msra.mxu0 %v2579
    %2765 = vmatprep.subr.bf16.mxu0 0
    %2766 = vmatpush1.bf16.msra.mxu0 %v2580
    %2767 = vmatprep.subr.bf16.mxu0 0
    %2768 = vmatpush1.bf16.msra.mxu0 %v2581
    %2769 = vmatprep.subr.bf16.mxu0 0
    %2770 = vmatpush1.bf16.msra.mxu0 %v2582
    %2771 = vmatprep.subr.bf16.mxu0 0
    %2772 = vmatpush1.bf16.msra.mxu0 %v2583
    %2773 = vmatprep.subr.bf16.mxu0 0
    %2774 = vmatpush1.bf16.msra.mxu0 %v2584
    %2775 = vmatprep.subr.bf16.mxu0 0
    %2776 = vmatpush1.bf16.msra.mxu0 %v2585
    %2777 = vmatprep.subr.bf16.mxu0 0
    %2778 = vmatpush1.bf16.msra.mxu0 %v2586
    %2779 = vmatprep.subr.bf16.mxu0 0
    %2780 = vmatpush1.bf16.msra.mxu0 %v2587
    %2781 = vmatprep.mubr.bf16.mxu0 %v2296
    %2782 = vmatmul.mubr.bf16.gmra.mrb[0].mxu0 %v2295
    %v2783 = vpop.f32.mrb[0].mxu0
    %v2784 = vadd.f32 %v2687, %v2783
    %v2785 = vpop.f32.mrb[0].mxu0
    %v2786 = vpop.f32.mrb[0].mxu0
    %v2787 = vadd.f32 %v2690, %v2786
    %v2788 = vpop.f32.mrb[0].mxu0
    %2789 = vmatprep.mubr.bf16.mxu0 %v2301
    %2790 = vmatmul.mubr.bf16.gmra.mrb[0].mxu0 %v2300
    %v2791 = vpop.f32.mrb[0].mxu0
    %v2792 = vadd.f32 %v2695, %v2791
    %v2793 = vpop.f32.mrb[0].mxu0
    %v2794 = vpop.f32.mrb[0].mxu0
    %v2795 = vadd.f32 %v2698, %v2794
    %v2796 = vpop.f32.mrb[0].mxu0
    %2797 = vmatprep.mubr.bf16.mxu0 %v2306
    %2798 = vmatmul.mubr.bf16.gmra.mrb[0].mxu0 %v2305
    %v2799 = vpop.f32.mrb[0].mxu0
    %v2800 = vadd.f32 %v2703, %v2799
    %v2801 = vpop.f32.mrb[0].mxu0
    %v2802 = vpop.f32.mrb[0].mxu0
    %v2803 = vadd.f32 %v2706, %v2802
    %v2804 = vpop.f32.mrb[0].mxu0
    %2805 = vmatprep.mubr.bf16.mxu0 %v2311
    %2806 = vmatmul.mubr.bf16.gmra.mrb[0].mxu0 %v2310
    %v2807 = vpop.f32.mrb[0].mxu0
    %v2808 = vadd.f32 %v2711, %v2807
    %v2809 = vpop.f32.mrb[0].mxu0
    %v2810 = vpop.f32.mrb[0].mxu0
    %v2811 = vadd.f32 %v2714, %v2810
    %v2812 = vpop.f32.mrb[0].mxu0
    %2813 = vmatprep.mubr.bf16.mxu0 %v2316
    %2814 = vmatmul.mubr.bf16.gmra.mrb[0].mxu0 %v2315
    %v2815 = vpop.f32.mrb[0].mxu0
    %v2816 = vadd.f32 %v2719, %v2815
    %v2817 = vpop.f32.mrb[0].mxu0
    %v2818 = vpop.f32.mrb[0].mxu0
    %v2819 = vadd.f32 %v2722, %v2818
    %v2820 = vpop.f32.mrb[0].mxu0
    %2821 = vmatprep.mubr.bf16.mxu0 %v2321
    %2822 = vmatmul.mubr.bf16.gmra.mrb[0].mxu0 %v2320
    %v2823 = vpop.f32.mrb[0].mxu0
    %v2824 = vadd.f32 %v2727, %v2823
    %v2825 = vpop.f32.mrb[0].mxu0
    %v2826 = vpop.f32.mrb[0].mxu0
    %v2827 = vadd.f32 %v2730, %v2826
    %v2828 = vpop.f32.mrb[0].mxu0
    %2829 = vmatprep.mubr.bf16.mxu0 %v2326
    %2830 = vmatmul.mubr.bf16.gmra.mrb[0].mxu0 %v2325
    %v2831 = vpop.f32.mrb[0].mxu0
    %v2832 = vadd.f32 %v2735, %v2831
    %v2833 = vpop.f32.mrb[0].mxu0
    %v2834 = vpop.f32.mrb[0].mxu0
    %v2835 = vadd.f32 %v2738, %v2834
    %v2836 = vpop.f32.mrb[0].mxu0
    %2837 = vmatprep.mubr.bf16.mxu0 %v2331
    %2838 = vmatmul.mubr.bf16.gmra.mrb[0].mxu0 %v2330
    %v2839 = vpop.f32.mrb[0].mxu0
    %v2840 = vadd.f32 %v2743, %v2839
    %v2841 = vpop.f32.mrb[0].mxu0
    %v2842 = vpop.f32.mrb[0].mxu0
    %v2843 = vadd.f32 %v2746, %v2842
    %v2844 = vpop.f32.mrb[0].mxu0
    %2845 = vdwg.mxu0
    %2846 = vmatprep.subr.bf16.mxu0 0
    %2847 = vmatpush1.bf16.msra.mxu0 %v2588
    %2848 = vmatprep.subr.bf16.mxu0 0
    %2849 = vmatpush1.bf16.msra.mxu0 %v2589
    %2850 = vmatprep.subr.bf16.mxu0 0
    %2851 = vmatpush1.bf16.msra.mxu0 %v2590
    %2852 = vmatprep.subr.bf16.mxu0 0
    %2853 = vmatpush1.bf16.msra.mxu0 %v2591
    %2854 = vmatprep.subr.bf16.mxu0 0
    %2855 = vmatpush1.bf16.msra.mxu0 0
    %2856 = vmatprep.subr.bf16.mxu0 0
    %2857 = vmatpush1.bf16.msra.mxu0 0
    %2858 = vmatprep.subr.bf16.mxu0 0
    %2859 = vmatpush1.bf16.msra.mxu0 0
    %2860 = vmatprep.subr.bf16.mxu0 0
    %2861 = vmatpush1.bf16.msra.mxu0 0
    %2862 = vmatprep.subr.bf16.mxu0 0
    %2863 = vmatpush1.bf16.msra.mxu0 0
    %2864 = vmatprep.subr.bf16.mxu0 0
    %2865 = vmatpush1.bf16.msra.mxu0 0
    %2866 = vmatprep.subr.bf16.mxu0 0
    %2867 = vmatpush1.bf16.msra.mxu0 0
    %2868 = vmatprep.subr.bf16.mxu0 0
    %2869 = vmatpush1.bf16.msra.mxu0 0
    %2870 = vmatprep.subr.bf16.mxu0 0
    %2871 = vmatpush1.bf16.msra.mxu0 0
    %2872 = vmatprep.subr.bf16.mxu0 0
    %2873 = vmatpush1.bf16.msra.mxu0 0
    %2874 = vmatprep.subr.bf16.mxu0 0
    %2875 = vmatpush1.bf16.msra.mxu0 0
    %2876 = vmatprep.subr.bf16.mxu0 0
    %2877 = vmatpush1.bf16.msra.mxu0 0
    %2878 = vmatprep.mubr.bf16.mxu0 0
    %2879 = vmatmul.mubr.bf16.gmra.mrb[0].mxu0 %v2629
    %v2880 = vpop.f32.mrb[0].mxu0
    %v2881 = vadd.f32 %v2784, %v2880
    %v2882 = vpop.f32.mrb[0].mxu0
    %v2883 = vpop.f32.mrb[0].mxu0
    %v2884 = vadd.f32 %v2787, %v2883
    %v2885 = vpop.f32.mrb[0].mxu0
    %2886 = vmatprep.mubr.bf16.mxu0 0
    %2887 = vmatmul.mubr.bf16.gmra.mrb[0].mxu0 %v2632
    %v2888 = vpop.f32.mrb[0].mxu0
    %v2889 = vadd.f32 %v2792, %v2888
    %v2890 = vpop.f32.mrb[0].mxu0
    %v2891 = vpop.f32.mrb[0].mxu0
    %v2892 = vadd.f32 %v2795, %v2891
    %v2893 = vpop.f32.mrb[0].mxu0
    %2894 = vmatprep.mubr.bf16.mxu0 0
    %2895 = vmatmul.mubr.bf16.gmra.mrb[0].mxu0 %v2635
    %v2896 = vpop.f32.mrb[0].mxu0
    %v2897 = vadd.f32 %v2800, %v2896
    %v2898 = vpop.f32.mrb[0].mxu0
    %v2899 = vpop.f32.mrb[0].mxu0
    %v2900 = vadd.f32 %v2803, %v2899
    %v2901 = vpop.f32.mrb[0].mxu0
    %2902 = vmatprep.mubr.bf16.mxu0 0
    %2903 = vmatmul.mubr.bf16.gmra.mrb[0].mxu0 %v2638
    %v2904 = vpop.f32.mrb[0].mxu0
    %v2905 = vadd.f32 %v2808, %v2904
    %v2906 = vpop.f32.mrb[0].mxu0
    %v2907 = vpop.f32.mrb[0].mxu0
    %v2908 = vadd.f32 %v2811, %v2907
    %v2909 = vpop.f32.mrb[0].mxu0
    %2910 = vmatprep.mubr.bf16.mxu0 0
    %2911 = vmatmul.mubr.bf16.gmra.mrb[0].mxu0 %v2641
    %v2912 = vpop.f32.mrb[0].mxu0
    %v2913 = vadd.f32 %v2816, %v2912
    %v2914 = vpop.f32.mrb[0].mxu0
    %v2915 = vpop.f32.mrb[0].mxu0
    %v2916 = vadd.f32 %v2819, %v2915
    %v2917 = vpop.f32.mrb[0].mxu0
    %2918 = vmatprep.mubr.bf16.mxu0 0
    %2919 = vmatmul.mubr.bf16.gmra.mrb[0].mxu0 %v2644
    %v2920 = vpop.f32.mrb[0].mxu0
    %v2921 = vadd.f32 %v2824, %v2920
    %v2922 = vpop.f32.mrb[0].mxu0
    %v2923 = vpop.f32.mrb[0].mxu0
    %v2924 = vadd.f32 %v2827, %v2923
    %v2925 = vpop.f32.mrb[0].mxu0
    %2926 = vmatprep.mubr.bf16.mxu0 0
    %2927 = vmatmul.mubr.bf16.gmra.mrb[0].mxu0 %v2647
    %v2928 = vpop.f32.mrb[0].mxu0
    %v2929 = vadd.f32 %v2832, %v2928
    %v2930 = vpop.f32.mrb[0].mxu0
    %v2931 = vpop.f32.mrb[0].mxu0
    %v2932 = vadd.f32 %v2835, %v2931
    %v2933 = vpop.f32.mrb[0].mxu0
    %2934 = vmatprep.mubr.bf16.mxu0 0
    %2935 = vmatmul.mubr.bf16.gmra.mrb[0].mxu0 %v2650
    %v2936 = vpop.f32.mrb[0].mxu0
    %v2937 = vadd.f32 %v2840, %v2936
    %v2938 = vpop.f32.mrb[0].mxu0
    %v2939 = vpop.f32.mrb[0].mxu0
    %v2940 = vadd.f32 %v2843, %v2939
    %v2941 = vpop.f32.mrb[0].mxu0
    %2942 = vdwg.mxu0
    %v2943 = vmax.f32 %v2881, 0.0
    %v2944 = vmax.f32 %v2884, 0.0
    %v2945 = vmax.f32 %v2889, 0.0
    %v2946 = vmax.f32 %v2892, 0.0
    %v2947 = vmax.f32 %v2897, 0.0
    %v2948 = vmax.f32 %v2900, 0.0
    %v2949 = vmax.f32 %v2905, 0.0
    %v2950 = vmax.f32 %v2908, 0.0
    %v2951 = vmax.f32 %v2913, 0.0
    %v2952 = vmax.f32 %v2916, 0.0
    %v2953 = vmax.f32 %v2921, 0.0
    %v2954 = vmax.f32 %v2924, 0.0
    %v2955 = vmax.f32 %v2929, 0.0
    %v2956 = vmax.f32 %v2932, 0.0
    %v2957 = vmax.f32 %v2937, 0.0
    %v2958 = vmax.f32 %v2940, 0.0
    %2959 = vst [vmem:[#allocation4] sm:$0xff] %v2943
    %s2960 = scalar_lea.vmem [#allocation4], 8
    %2961 = vst [vmem:[%s2960] sm:$0xff] %v2944
    %s2962 = scalar_lea.vmem [#allocation4], 16
    %2963 = vst [vmem:[%s2962] sm:$0xff] %v2945
    %s2964 = scalar_lea.vmem [#allocation4], 24
    %2965 = vst [vmem:[%s2964] sm:$0xff] %v2946
    %s2966 = scalar_lea.vmem [#allocation4], 32
    %2967 = vst [vmem:[%s2966] sm:$0xff] %v2947
    %s2968 = scalar_lea.vmem [#allocation4], 40
    %2969 = vst [vmem:[%s2968] sm:$0xff] %v2948
    %s2970 = scalar_lea.vmem [#allocation4], 48
    %2971 = vst [vmem:[%s2970] sm:$0xff] %v2949
    %s2972 = scalar_lea.vmem [#allocation4], 56
    %2973 = vst [vmem:[%s2972] sm:$0xff] %v2950
    %s2974 = scalar_lea.vmem [#allocation4], 64
    %2975 = vst [vmem:[%s2974] sm:$0xff] %v2951
    %s2976 = scalar_lea.vmem [#allocation4], 72
    %2977 = vst [vmem:[%s2976] sm:$0xff] %v2952
    %s2978 = scalar_lea.vmem [#allocation4], 80
    %2979 = vst [vmem:[%s2978] sm:$0xff] %v2953
    %s2980 = scalar_lea.vmem [#allocation4], 88
    %2981 = vst [vmem:[%s2980] sm:$0xff] %v2954
    %s2982 = scalar_lea.vmem [#allocation4], 96
    %2983 = vst [vmem:[%s2982] sm:$0xff] %v2955
    %s2984 = scalar_lea.vmem [#allocation4], 104
    %2985 = vst [vmem:[%s2984] sm:$0xff] %v2956
    %s2986 = scalar_lea.vmem [#allocation4], 112
    %2987 = vst [vmem:[%s2986] sm:$0xff] %v2957
    %s2988 = scalar_lea.vmem [#allocation4], 120
    %2989 = vst [vmem:[%s2988] sm:$0xff] %v2958
    %v2990 = vld [vmem:[#allocation4] sm:$0x3]
    %v2991 = vld [vmem:[#allocation4 + $0x8] sm:$0x3]
    %v2992 = vld [vmem:[#allocation4 + $0x40] sm:$0x3]
    %v2993 = vld [vmem:[#allocation4 + $0x48] sm:$0x3]
    %v2996 = vrot.slane %v2990, 1
    %v2997 = vrot.slane %v2992, 1
    %v3000 = vmax.f32 %v2990, %v2996
    %v3001 = vmax.f32 %v2992, %v2997
    %v3002 = vmax.f32 %v3000, %v2991
    %v3003 = vmax.f32 %v3001, %v2993
    %v3006 = vrot.slane %v2991, 1
    %v3007 = vrot.slane %v2993, 1
    %v3010 = vmax.f32 %v3002, %v3006
    %v3011 = vmax.f32 %v3003, %v3007
    %3012 = vst [vmem:[#allocation5] sm:$0x1] %v3010
    %3013 = vst [vmem:[#allocation5 + $0x10] sm:$0x1] %v3011
    %v3014 = vld [vmem:[#allocation4 + $0x1] sm:$0x7]
    %v3015 = vld [vmem:[#allocation4 + $0x9] sm:$0x7]
    %v3016 = vld [vmem:[#allocation4 + $0x41] sm:$0x7]
    %v3017 = vld [vmem:[#allocation4 + $0x49] sm:$0x7]
    %v3020 = vrot.slane %v3014, 1
    %v3021 = vrot.slane %v3016, 1
    %v3024 = vmax.f32 %v3014, %v3020
    %v3025 = vmax.f32 %v3016, %v3021
    %v3026 = vrot.slane %v3014, 2
    %v3027 = vrot.slane %v3016, 2
    %v3030 = vmax.f32 %v3024, %v3026
    %v3031 = vmax.f32 %v3025, %v3027
    %v3032 = vmax.f32 %v3030, %v3015
    %v3033 = vmax.f32 %v3031, %v3017
    %v3036 = vrot.slane %v3015, 1
    %v3037 = vrot.slane %v3017, 1
    %v3040 = vmax.f32 %v3032, %v3036
    %v3041 = vmax.f32 %v3033, %v3037
    %v3042 = vrot.slane %v3015, 2
    %v3043 = vrot.slane %v3017, 2
    %v3046 = vmax.f32 %v3040, %v3042
    %v3047 = vmax.f32 %v3041, %v3043
    %3048 = vst [vmem:[#allocation5 + $0x1] sm:$0x1] %v3046
    %3049 = vst [vmem:[#allocation5 + $0x11] sm:$0x1] %v3047
    %v3050 = vld [vmem:[#allocation4 + $0x3] sm:$0x7]
    %v3051 = vld [vmem:[#allocation4 + $0xb] sm:$0x7]
    %v3052 = vld [vmem:[#allocation4 + $0x43] sm:$0x7]
    %v3053 = vld [vmem:[#allocation4 + $0x4b] sm:$0x7]
    %v3056 = vrot.slane %v3050, 1
    %v3057 = vrot.slane %v3052, 1
    %v3060 = vmax.f32 %v3050, %v3056
    %v3061 = vmax.f32 %v3052, %v3057
    %v3062 = vrot.slane %v3050, 2
    %v3063 = vrot.slane %v3052, 2
    %v3066 = vmax.f32 %v3060, %v3062
    %v3067 = vmax.f32 %v3061, %v3063
    %v3068 = vmax.f32 %v3066, %v3051
    %v3069 = vmax.f32 %v3067, %v3053
    %v3072 = vrot.slane %v3051, 1
    %v3073 = vrot.slane %v3053, 1
    %v3076 = vmax.f32 %v3068, %v3072
    %v3077 = vmax.f32 %v3069, %v3073
    %v3078 = vrot.slane %v3051, 2
    %v3079 = vrot.slane %v3053, 2
    %v3082 = vmax.f32 %v3076, %v3078
    %v3083 = vmax.f32 %v3077, %v3079
    %3084 = vst [vmem:[#allocation5 + $0x2] sm:$0x1] %v3082
    %3085 = vst [vmem:[#allocation5 + $0x12] sm:$0x1] %v3083
    %v3086 = vld [vmem:[#allocation4 + $0x5] sm:$0x7]
    %v3087 = vld [vmem:[#allocation4 + $0xd] sm:$0x7]
    %v3088 = vld [vmem:[#allocation4 + $0x45] sm:$0x7]
    %v3089 = vld [vmem:[#allocation4 + $0x4d] sm:$0x7]
    %v3092 = vrot.slane %v3086, 1
    %v3093 = vrot.slane %v3088, 1
    %v3096 = vmax.f32 %v3086, %v3092
    %v3097 = vmax.f32 %v3088, %v3093
    %v3098 = vrot.slane %v3086, 2
    %v3099 = vrot.slane %v3088, 2
    %v3102 = vmax.f32 %v3096, %v3098
    %v3103 = vmax.f32 %v3097, %v3099
    %v3104 = vmax.f32 %v3102, %v3087
    %v3105 = vmax.f32 %v3103, %v3089
    %v3108 = vrot.slane %v3087, 1
    %v3109 = vrot.slane %v3089, 1
    %v3112 = vmax.f32 %v3104, %v3108
    %v3113 = vmax.f32 %v3105, %v3109
    %v3114 = vrot.slane %v3087, 2
    %v3115 = vrot.slane %v3089, 2
    %v3118 = vmax.f32 %v3112, %v3114
    %v3119 = vmax.f32 %v3113, %v3115
    %3120 = vst [vmem:[#allocation5 + $0x3] sm:$0x1] %v3118
    %3121 = vst [vmem:[#allocation5 + $0x13] sm:$0x1] %v3119
    %v3122 = vld [vmem:[%s2960] sm:$0x3]
    %v3123 = vld [vmem:[%s2960 + $0x8] sm:$0x3]
    %v3124 = vld [vmem:[%s2960 + $0x10] sm:$0x3]
    %v3125 = vld [vmem:[%s2960 + $0x40] sm:$0x3]
    %v3126 = vld [vmem:[%s2960 + $0x48] sm:$0x3]
    %v3127 = vld [vmem:[%s2960 + $0x50] sm:$0x3]
    %v3130 = vrot.slane %v3122, 1
    %v3131 = vrot.slane %v3125, 1
    %v3134 = vmax.f32 %v3122, %v3130
    %v3135 = vmax.f32 %v3125, %v3131
    %v3136 = vmax.f32 %v3134, %v3123
    %v3137 = vmax.f32 %v3135, %v3126
    %v3140 = vrot.slane %v3123, 1
    %v3141 = vrot.slane %v3126, 1
    %v3144 = vmax.f32 %v3136, %v3140
    %v3145 = vmax.f32 %v3137, %v3141
    %v3146 = vmax.f32 %v3144, %v3124
    %v3147 = vmax.f32 %v3145, %v3127
    %v3150 = vrot.slane %v3124, 1
    %v3151 = vrot.slane %v3127, 1
    %v3154 = vmax.f32 %v3146, %v3150
    %v3155 = vmax.f32 %v3147, %v3151
    %s3156 = scalar_lea.vmem [#allocation5], 4
    %3157 = vst [vmem:[%s3156] sm:$0x1] %v3154
    %3158 = vst [vmem:[%s3156 + $0x10] sm:$0x1] %v3155
    %v3159 = vld [vmem:[%s2960 + $0x1] sm:$0x7]
    %v3160 = vld [vmem:[%s2960 + $0x9] sm:$0x7]
    %v3161 = vld [vmem:[%s2960 + $0x11] sm:$0x7]
    %v3162 = vld [vmem:[%s2960 + $0x41] sm:$0x7]
    %v3163 = vld [vmem:[%s2960 + $0x49] sm:$0x7]
    %v3164 = vld [vmem:[%s2960 + $0x51] sm:$0x7]
    %v3167 = vrot.slane %v3159, 1
    %v3168 = vrot.slane %v3162, 1
    %v3171 = vmax.f32 %v3159, %v3167
    %v3172 = vmax.f32 %v3162, %v3168
    %v3173 = vrot.slane %v3159, 2
    %v3174 = vrot.slane %v3162, 2
    %v3177 = vmax.f32 %v3171, %v3173
    %v3178 = vmax.f32 %v3172, %v3174
    %v3179 = vmax.f32 %v3177, %v3160
    %v3180 = vmax.f32 %v3178, %v3163
    %v3183 = vrot.slane %v3160, 1
    %v3184 = vrot.slane %v3163, 1
    %v3187 = vmax.f32 %v3179, %v3183
    %v3188 = vmax.f32 %v3180, %v3184
    %v3189 = vrot.slane %v3160, 2
    %v3190 = vrot.slane %v3163, 2
    %v3193 = vmax.f32 %v3187, %v3189
    %v3194 = vmax.f32 %v3188, %v3190
    %v3195 = vmax.f32 %v3193, %v3161
    %v3196 = vmax.f32 %v3194, %v3164
    %v3199 = vrot.slane %v3161, 1
    %v3200 = vrot.slane %v3164, 1
    %v3203 = vmax.f32 %v3195, %v3199
    %v3204 = vmax.f32 %v3196, %v3200
    %v3205 = vrot.slane %v3161, 2
    %v3206 = vrot.slane %v3164, 2
    %v3209 = vmax.f32 %v3203, %v3205
    %v3210 = vmax.f32 %v3204, %v3206
    %3211 = vst [vmem:[%s3156 + $0x1] sm:$0x1] %v3209
    %3212 = vst [vmem:[%s3156 + $0x11] sm:$0x1] %v3210
    %v3213 = vld [vmem:[%s2960 + $0x3] sm:$0x7]
    %v3214 = vld [vmem:[%s2960 + $0xb] sm:$0x7]
    %v3215 = vld [vmem:[%s2960 + $0x13] sm:$0x7]
    %v3216 = vld [vmem:[%s2960 + $0x43] sm:$0x7]
    %v3217 = vld [vmem:[%s2960 + $0x4b] sm:$0x7]
    %v3218 = vld [vmem:[%s2960 + $0x53] sm:$0x7]
    %v3221 = vrot.slane %v3213, 1
    %v3222 = vrot.slane %v3216, 1
    %v3225 = vmax.f32 %v3213, %v3221
    %v3226 = vmax.f32 %v3216, %v3222
    %v3227 = vrot.slane %v3213, 2
    %v3228 = vrot.slane %v3216, 2
    %v3231 = vmax.f32 %v3225, %v3227
    %v3232 = vmax.f32 %v3226, %v3228
    %v3233 = vmax.f32 %v3231, %v3214
    %v3234 = vmax.f32 %v3232, %v3217
    %v3237 = vrot.slane %v3214, 1
    %v3238 = vrot.slane %v3217, 1
    %v3241 = vmax.f32 %v3233, %v3237
    %v3242 = vmax.f32 %v3234, %v3238
    %v3243 = vrot.slane %v3214, 2
    %v3244 = vrot.slane %v3217, 2
    %v3247 = vmax.f32 %v3241, %v3243
    %v3248 = vmax.f32 %v3242, %v3244
    %v3249 = vmax.f32 %v3247, %v3215
    %v3250 = vmax.f32 %v3248, %v3218
    %v3253 = vrot.slane %v3215, 1
    %v3254 = vrot.slane %v3218, 1
    %v3257 = vmax.f32 %v3249, %v3253
    %v3258 = vmax.f32 %v3250, %v3254
    %v3259 = vrot.slane %v3215, 2
    %v3260 = vrot.slane %v3218, 2
    %v3263 = vmax.f32 %v3257, %v3259
    %v3264 = vmax.f32 %v3258, %v3260
    %3265 = vst [vmem:[%s3156 + $0x2] sm:$0x1] %v3263
    %3266 = vst [vmem:[%s3156 + $0x12] sm:$0x1] %v3264
    %v3267 = vld [vmem:[%s2960 + $0x5] sm:$0x7]
    %v3268 = vld [vmem:[%s2960 + $0xd] sm:$0x7]
    %v3269 = vld [vmem:[%s2960 + $0x15] sm:$0x7]
    %v3270 = vld [vmem:[%s2960 + $0x45] sm:$0x7]
    %v3271 = vld [vmem:[%s2960 + $0x4d] sm:$0x7]
    %v3272 = vld [vmem:[%s2960 + $0x55] sm:$0x7]
    %v3275 = vrot.slane %v3267, 1
    %v3276 = vrot.slane %v3270, 1
    %v3279 = vmax.f32 %v3267, %v3275
    %v3280 = vmax.f32 %v3270, %v3276
    %v3281 = vrot.slane %v3267, 2
    %v3282 = vrot.slane %v3270, 2
    %v3285 = vmax.f32 %v3279, %v3281
    %v3286 = vmax.f32 %v3280, %v3282
    %v3287 = vmax.f32 %v3285, %v3268
    %v3288 = vmax.f32 %v3286, %v3271
    %v3291 = vrot.slane %v3268, 1
    %v3292 = vrot.slane %v3271, 1
    %v3295 = vmax.f32 %v3287, %v3291
    %v3296 = vmax.f32 %v3288, %v3292
    %v3297 = vrot.slane %v3268, 2
    %v3298 = vrot.slane %v3271, 2
    %v3301 = vmax.f32 %v3295, %v3297
    %v3302 = vmax.f32 %v3296, %v3298
    %v3303 = vmax.f32 %v3301, %v3269
    %v3304 = vmax.f32 %v3302, %v3272
    %v3307 = vrot.slane %v3269, 1
    %v3308 = vrot.slane %v3272, 1
    %v3311 = vmax.f32 %v3303, %v3307
    %v3312 = vmax.f32 %v3304, %v3308
    %v3313 = vrot.slane %v3269, 2
    %v3314 = vrot.slane %v3272, 2
    %v3317 = vmax.f32 %v3311, %v3313
    %v3318 = vmax.f32 %v3312, %v3314
    %3319 = vst [vmem:[%s3156 + $0x3] sm:$0x1] %v3317
    %3320 = vst [vmem:[%s3156 + $0x13] sm:$0x1] %v3318
    %v3321 = vld [vmem:[%s2964] sm:$0x3]
    %v3322 = vld [vmem:[%s2964 + $0x8] sm:$0x3]
    %v3323 = vld [vmem:[%s2964 + $0x10] sm:$0x3]
    %v3324 = vld [vmem:[%s2964 + $0x40] sm:$0x3]
    %v3325 = vld [vmem:[%s2964 + $0x48] sm:$0x3]
    %v3326 = vld [vmem:[%s2964 + $0x50] sm:$0x3]
    %v3329 = vrot.slane %v3321, 1
    %v3330 = vrot.slane %v3324, 1
    %v3333 = vmax.f32 %v3321, %v3329
    %v3334 = vmax.f32 %v3324, %v3330
    %v3335 = vmax.f32 %v3333, %v3322
    %v3336 = vmax.f32 %v3334, %v3325
    %v3339 = vrot.slane %v3322, 1
    %v3340 = vrot.slane %v3325, 1
    %v3343 = vmax.f32 %v3335, %v3339
    %v3344 = vmax.f32 %v3336, %v3340
    %v3345 = vmax.f32 %v3343, %v3323
    %v3346 = vmax.f32 %v3344, %v3326
    %v3349 = vrot.slane %v3323, 1
    %v3350 = vrot.slane %v3326, 1
    %v3353 = vmax.f32 %v3345, %v3349
    %v3354 = vmax.f32 %v3346, %v3350
    %s3355 = scalar_lea.vmem [#allocation5], 8
    %3356 = vst [vmem:[%s3355] sm:$0x1] %v3353
    %3357 = vst [vmem:[%s3355 + $0x10] sm:$0x1] %v3354
    %v3358 = vld [vmem:[%s2964 + $0x1] sm:$0x7]
    %v3359 = vld [vmem:[%s2964 + $0x9] sm:$0x7]
    %v3360 = vld [vmem:[%s2964 + $0x11] sm:$0x7]
    %v3361 = vld [vmem:[%s2964 + $0x41] sm:$0x7]
    %v3362 = vld [vmem:[%s2964 + $0x49] sm:$0x7]
    %v3363 = vld [vmem:[%s2964 + $0x51] sm:$0x7]
    %v3366 = vrot.slane %v3358, 1
    %v3367 = vrot.slane %v3361, 1
    %v3370 = vmax.f32 %v3358, %v3366
    %v3371 = vmax.f32 %v3361, %v3367
    %v3372 = vrot.slane %v3358, 2
    %v3373 = vrot.slane %v3361, 2
    %v3376 = vmax.f32 %v3370, %v3372
    %v3377 = vmax.f32 %v3371, %v3373
    %v3378 = vmax.f32 %v3376, %v3359
    %v3379 = vmax.f32 %v3377, %v3362
    %v3382 = vrot.slane %v3359, 1
    %v3383 = vrot.slane %v3362, 1
    %v3386 = vmax.f32 %v3378, %v3382
    %v3387 = vmax.f32 %v3379, %v3383
    %v3388 = vrot.slane %v3359, 2
    %v3389 = vrot.slane %v3362, 2
    %v3392 = vmax.f32 %v3386, %v3388
    %v3393 = vmax.f32 %v3387, %v3389
    %v3394 = vmax.f32 %v3392, %v3360
    %v3395 = vmax.f32 %v3393, %v3363
    %v3398 = vrot.slane %v3360, 1
    %v3399 = vrot.slane %v3363, 1
    %v3402 = vmax.f32 %v3394, %v3398
    %v3403 = vmax.f32 %v3395, %v3399
    %v3404 = vrot.slane %v3360, 2
    %v3405 = vrot.slane %v3363, 2
    %v3408 = vmax.f32 %v3402, %v3404
    %v3409 = vmax.f32 %v3403, %v3405
    %3410 = vst [vmem:[%s3355 + $0x1] sm:$0x1] %v3408
    %3411 = vst [vmem:[%s3355 + $0x11] sm:$0x1] %v3409
    %v3412 = vld [vmem:[%s2964 + $0x3] sm:$0x7]
    %v3413 = vld [vmem:[%s2964 + $0xb] sm:$0x7]
    %v3414 = vld [vmem:[%s2964 + $0x13] sm:$0x7]
    %v3415 = vld [vmem:[%s2964 + $0x43] sm:$0x7]
    %v3416 = vld [vmem:[%s2964 + $0x4b] sm:$0x7]
    %v3417 = vld [vmem:[%s2964 + $0x53] sm:$0x7]
    %v3420 = vrot.slane %v3412, 1
    %v3421 = vrot.slane %v3415, 1
    %v3424 = vmax.f32 %v3412, %v3420
    %v3425 = vmax.f32 %v3415, %v3421
    %v3426 = vrot.slane %v3412, 2
    %v3427 = vrot.slane %v3415, 2
    %v3430 = vmax.f32 %v3424, %v3426
    %v3431 = vmax.f32 %v3425, %v3427
    %v3432 = vmax.f32 %v3430, %v3413
    %v3433 = vmax.f32 %v3431, %v3416
    %v3436 = vrot.slane %v3413, 1
    %v3437 = vrot.slane %v3416, 1
    %v3440 = vmax.f32 %v3432, %v3436
    %v3441 = vmax.f32 %v3433, %v3437
    %v3442 = vrot.slane %v3413, 2
    %v3443 = vrot.slane %v3416, 2
    %v3446 = vmax.f32 %v3440, %v3442
    %v3447 = vmax.f32 %v3441, %v3443
    %v3448 = vmax.f32 %v3446, %v3414
    %v3449 = vmax.f32 %v3447, %v3417
    %v3452 = vrot.slane %v3414, 1
    %v3453 = vrot.slane %v3417, 1
    %v3456 = vmax.f32 %v3448, %v3452
    %v3457 = vmax.f32 %v3449, %v3453
    %v3458 = vrot.slane %v3414, 2
    %v3459 = vrot.slane %v3417, 2
    %v3462 = vmax.f32 %v3456, %v3458
    %v3463 = vmax.f32 %v3457, %v3459
    %3464 = vst [vmem:[%s3355 + $0x2] sm:$0x1] %v3462
    %3465 = vst [vmem:[%s3355 + $0x12] sm:$0x1] %v3463
    %v3466 = vld [vmem:[%s2964 + $0x5] sm:$0x7]
    %v3467 = vld [vmem:[%s2964 + $0xd] sm:$0x7]
    %v3468 = vld [vmem:[%s2964 + $0x15] sm:$0x7]
    %v3469 = vld [vmem:[%s2964 + $0x45] sm:$0x7]
    %v3470 = vld [vmem:[%s2964 + $0x4d] sm:$0x7]
    %v3471 = vld [vmem:[%s2964 + $0x55] sm:$0x7]
    %v3474 = vrot.slane %v3466, 1
    %v3475 = vrot.slane %v3469, 1
    %v3478 = vmax.f32 %v3466, %v3474
    %v3479 = vmax.f32 %v3469, %v3475
    %v3480 = vrot.slane %v3466, 2
    %v3481 = vrot.slane %v3469, 2
    %v3484 = vmax.f32 %v3478, %v3480
    %v3485 = vmax.f32 %v3479, %v3481
    %v3486 = vmax.f32 %v3484, %v3467
    %v3487 = vmax.f32 %v3485, %v3470
    %v3490 = vrot.slane %v3467, 1
    %v3491 = vrot.slane %v3470, 1
    %v3494 = vmax.f32 %v3486, %v3490
    %v3495 = vmax.f32 %v3487, %v3491
    %v3496 = vrot.slane %v3467, 2
    %v3497 = vrot.slane %v3470, 2
    %v3500 = vmax.f32 %v3494, %v3496
    %v3501 = vmax.f32 %v3495, %v3497
    %v3502 = vmax.f32 %v3500, %v3468
    %v3503 = vmax.f32 %v3501, %v3471
    %v3506 = vrot.slane %v3468, 1
    %v3507 = vrot.slane %v3471, 1
    %v3510 = vmax.f32 %v3502, %v3506
    %v3511 = vmax.f32 %v3503, %v3507
    %v3512 = vrot.slane %v3468, 2
    %v3513 = vrot.slane %v3471, 2
    %v3516 = vmax.f32 %v3510, %v3512
    %v3517 = vmax.f32 %v3511, %v3513
    %3518 = vst [vmem:[%s3355 + $0x3] sm:$0x1] %v3516
    %3519 = vst [vmem:[%s3355 + $0x13] sm:$0x1] %v3517
    %v3520 = vld [vmem:[%s2968] sm:$0x3]
    %v3521 = vld [vmem:[%s2968 + $0x8] sm:$0x3]
    %v3522 = vld [vmem:[%s2968 + $0x10] sm:$0x3]
    %v3523 = vld [vmem:[%s2968 + $0x40] sm:$0x3]
    %v3524 = vld [vmem:[%s2968 + $0x48] sm:$0x3]
    %v3525 = vld [vmem:[%s2968 + $0x50] sm:$0x3]
    %v3528 = vrot.slane %v3520, 1
    %v3529 = vrot.slane %v3523, 1
    %v3532 = vmax.f32 %v3520, %v3528
    %v3533 = vmax.f32 %v3523, %v3529
    %v3534 = vmax.f32 %v3532, %v3521
    %v3535 = vmax.f32 %v3533, %v3524
    %v3538 = vrot.slane %v3521, 1
    %v3539 = vrot.slane %v3524, 1
    %v3542 = vmax.f32 %v3534, %v3538
    %v3543 = vmax.f32 %v3535, %v3539
    %v3544 = vmax.f32 %v3542, %v3522
    %v3545 = vmax.f32 %v3543, %v3525
    %v3548 = vrot.slane %v3522, 1
    %v3549 = vrot.slane %v3525, 1
    %v3552 = vmax.f32 %v3544, %v3548
    %v3553 = vmax.f32 %v3545, %v3549
    %s3554 = scalar_lea.vmem [#allocation5], 12
    %3555 = vst [vmem:[%s3554] sm:$0x1] %v3552
    %3556 = vst [vmem:[%s3554 + $0x10] sm:$0x1] %v3553
    %v3557 = vld [vmem:[%s2968 + $0x1] sm:$0x7]
    %v3558 = vld [vmem:[%s2968 + $0x9] sm:$0x7]
    %v3559 = vld [vmem:[%s2968 + $0x11] sm:$0x7]
    %v3560 = vld [vmem:[%s2968 + $0x41] sm:$0x7]
    %v3561 = vld [vmem:[%s2968 + $0x49] sm:$0x7]
    %v3562 = vld [vmem:[%s2968 + $0x51] sm:$0x7]
    %v3565 = vrot.slane %v3557, 1
    %v3566 = vrot.slane %v3560, 1
    %v3569 = vmax.f32 %v3557, %v3565
    %v3570 = vmax.f32 %v3560, %v3566
    %v3571 = vrot.slane %v3557, 2
    %v3572 = vrot.slane %v3560, 2
    %v3575 = vmax.f32 %v3569, %v3571
    %v3576 = vmax.f32 %v3570, %v3572
    %v3577 = vmax.f32 %v3575, %v3558
    %v3578 = vmax.f32 %v3576, %v3561
    %v3581 = vrot.slane %v3558, 1
    %v3582 = vrot.slane %v3561, 1
    %v3585 = vmax.f32 %v3577, %v3581
    %v3586 = vmax.f32 %v3578, %v3582
    %v3587 = vrot.slane %v3558, 2
    %v3588 = vrot.slane %v3561, 2
    %v3591 = vmax.f32 %v3585, %v3587
    %v3592 = vmax.f32 %v3586, %v3588
    %v3593 = vmax.f32 %v3591, %v3559
    %v3594 = vmax.f32 %v3592, %v3562
    %v3597 = vrot.slane %v3559, 1
    %v3598 = vrot.slane %v3562, 1
    %v3601 = vmax.f32 %v3593, %v3597
    %v3602 = vmax.f32 %v3594, %v3598
    %v3603 = vrot.slane %v3559, 2
    %v3604 = vrot.slane %v3562, 2
    %v3607 = vmax.f32 %v3601, %v3603
    %v3608 = vmax.f32 %v3602, %v3604
    %3609 = vst [vmem:[%s3554 + $0x1] sm:$0x1] %v3607
    %3610 = vst [vmem:[%s3554 + $0x11] sm:$0x1] %v3608
    %v3611 = vld [vmem:[%s2968 + $0x3] sm:$0x7]
    %v3612 = vld [vmem:[%s2968 + $0xb] sm:$0x7]
    %v3613 = vld [vmem:[%s2968 + $0x13] sm:$0x7]
    %v3614 = vld [vmem:[%s2968 + $0x43] sm:$0x7]
    %v3615 = vld [vmem:[%s2968 + $0x4b] sm:$0x7]
    %v3616 = vld [vmem:[%s2968 + $0x53] sm:$0x7]
    %v3619 = vrot.slane %v3611, 1
    %v3620 = vrot.slane %v3614, 1
    %v3623 = vmax.f32 %v3611, %v3619
    %v3624 = vmax.f32 %v3614, %v3620
    %v3625 = vrot.slane %v3611, 2
    %v3626 = vrot.slane %v3614, 2
    %v3629 = vmax.f32 %v3623, %v3625
    %v3630 = vmax.f32 %v3624, %v3626
    %v3631 = vmax.f32 %v3629, %v3612
    %v3632 = vmax.f32 %v3630, %v3615
    %v3635 = vrot.slane %v3612, 1
    %v3636 = vrot.slane %v3615, 1
    %v3639 = vmax.f32 %v3631, %v3635
    %v3640 = vmax.f32 %v3632, %v3636
    %v3641 = vrot.slane %v3612, 2
    %v3642 = vrot.slane %v3615, 2
    %v3645 = vmax.f32 %v3639, %v3641
    %v3646 = vmax.f32 %v3640, %v3642
    %v3647 = vmax.f32 %v3645, %v3613
    %v3648 = vmax.f32 %v3646, %v3616
    %v3651 = vrot.slane %v3613, 1
    %v3652 = vrot.slane %v3616, 1
    %v3655 = vmax.f32 %v3647, %v3651
    %v3656 = vmax.f32 %v3648, %v3652
    %v3657 = vrot.slane %v3613, 2
    %v3658 = vrot.slane %v3616, 2
    %v3661 = vmax.f32 %v3655, %v3657
    %v3662 = vmax.f32 %v3656, %v3658
    %3663 = vst [vmem:[%s3554 + $0x2] sm:$0x1] %v3661
    %3664 = vst [vmem:[%s3554 + $0x12] sm:$0x1] %v3662
    %v3665 = vld [vmem:[%s2968 + $0x5] sm:$0x7]
    %v3666 = vld [vmem:[%s2968 + $0xd] sm:$0x7]
    %v3667 = vld [vmem:[%s2968 + $0x15] sm:$0x7]
    %v3668 = vld [vmem:[%s2968 + $0x45] sm:$0x7]
    %v3669 = vld [vmem:[%s2968 + $0x4d] sm:$0x7]
    %v3670 = vld [vmem:[%s2968 + $0x55] sm:$0x7]
    %v3673 = vrot.slane %v3665, 1
    %v3674 = vrot.slane %v3668, 1
    %v3677 = vmax.f32 %v3665, %v3673
    %v3678 = vmax.f32 %v3668, %v3674
    %v3679 = vrot.slane %v3665, 2
    %v3680 = vrot.slane %v3668, 2
    %v3683 = vmax.f32 %v3677, %v3679
    %v3684 = vmax.f32 %v3678, %v3680
    %v3685 = vmax.f32 %v3683, %v3666
    %v3686 = vmax.f32 %v3684, %v3669
    %v3689 = vrot.slane %v3666, 1
    %v3690 = vrot.slane %v3669, 1
    %v3693 = vmax.f32 %v3685, %v3689
    %v3694 = vmax.f32 %v3686, %v3690
    %v3695 = vrot.slane %v3666, 2
    %v3696 = vrot.slane %v3669, 2
    %v3699 = vmax.f32 %v3693, %v3695
    %v3700 = vmax.f32 %v3694, %v3696
    %v3701 = vmax.f32 %v3699, %v3667
    %v3702 = vmax.f32 %v3700, %v3670
    %v3705 = vrot.slane %v3667, 1
    %v3706 = vrot.slane %v3670, 1
    %v3709 = vmax.f32 %v3701, %v3705
    %v3710 = vmax.f32 %v3702, %v3706
    %v3711 = vrot.slane %v3667, 2
    %v3712 = vrot.slane %v3670, 2
    %v3715 = vmax.f32 %v3709, %v3711
    %v3716 = vmax.f32 %v3710, %v3712
    %3717 = vst [vmem:[%s3554 + $0x3] sm:$0x1] %v3715
    %3718 = vst [vmem:[%s3554 + $0x13] sm:$0x1] %v3716
    // Predicated region
    $region30: #{feature_map_convolution.1} parent=1 // pred_check
      _
    $region31: #{feature_map_convolution.1} parent=1 // pred_check_branch
      %3720 = sbr.rel (0) target = $region33
    $region32: #{feature_map_convolution.1} parent=1 // pred_region
      %s3722 = ssub.s32 512, 512
      %3723 = vsyncadd [#allocation6], %s3722
      %s3724 = sshll.u32 [#allocation5], 4
      %s3725 = int_to_ptr.vmem [resolvable:$true] %s3724
      %3730 = dma.vmem_to_hbm [thread:$0]  %s3725, 512, %s7, [#allocation6], 64, 64, 4
    $region33: #{feature_map_convolution.1} parent=1 // pred_fallthru
      _
    // Predicated region
    $region34: #{feature_map_convolution.1} parent=1 // pred_check
      _
    $region35: #{feature_map_convolution.1} parent=1 // pred_check_branch
      %3732 = sbr.rel (0) target = $region37
    $region36: #{feature_map_convolution.1} parent=1 // pred_region
      %3733 = dma.done [#allocation6], 512
    $region37: #{feature_map_convolution.1} parent=1 // pred_fallthru
      _
    %3734 = vsyncpa [#allocation6], 1

</llo_original>
